<compile_context>
chip_gen: v7x
topology: tpu7x:2x2x1
jax: 0.10.0
libtpu: 0.0.40
codegen_flags: <defaults>
</compile_context>

<pallas_src>
import numpy as np
import jax
import jax.numpy as jnp
from jax.experimental import pallas as pl
from jax.experimental.pallas import tpu as pltpu


# ----------------------------------------------------------------------------
# Pallas kernel: out = relu(x @ w + b), bf16 operands, f32 accumulation.
# Grid = (M_blocks, N_blocks, K_blocks); K innermost with a VMEM accumulator.
# ----------------------------------------------------------------------------
def _matmul_bias_relu_kernel(x_ref, w_ref, b_ref, o_ref, acc_ref):
    k = pl.program_id(2)

    @pl.when(k == 0)
    def _init():
        acc_ref[...] = jnp.zeros_like(acc_ref)

    acc_ref[...] += jnp.dot(x_ref[...], w_ref[...],
                            preferred_element_type=jnp.float32)

    @pl.when(k == pl.num_programs(2) - 1)
    def _finalize():
        o_ref[...] = jnp.maximum(acc_ref[...] + b_ref[...], 0.0).astype(o_ref.dtype)


def _round_up(x, m):
    return (x + m - 1) // m * m


def _pick_m_tile(M, max_tm=1024):
    """Largest multiple-of-8 divisor of M up to max_tm; full extent otherwise."""
    if M % 8 != 0 or M <= max_tm:
        return M                      # full-extent block is always legal
    best = 8
    for t in range(8, max_tm + 1, 8):
        if M % t == 0:
            best = t
    return best


def _pick_k_tile(K, max_tk=1536, min_k_to_tile=2048):
    """Tile K only when it is large and cleanly divisible by a 128-multiple."""
    if K % 128 != 0 or K <= min_k_to_tile:
        return K
    cands = [t for t in range(128, max_tk + 1, 128) if K % t == 0]
    return max(cands) if cands else K


def _pick_n_tile(N, max_tn=256):
    """Split wide outputs (layer 4: 512 -> 2x256) so v7x can use both cores."""
    if N % 128 != 0 or N <= max_tn:
        return N
    cands = [t for t in range(128, max_tn + 1, 128) if N % t == 0]
    return max(cands) if cands else N


def matmul_bias_relu(x, w, b2d, *, out_dtype):
    """x: (M, K) bf16, w: (K, N) bf16, b2d: (1, N) f32 -> relu(x @ w + b)."""
    M, K = x.shape
    Kw, N = w.shape
    assert K == Kw and b2d.shape == (1, N)

    tm = _pick_m_tile(M)
    tk = _pick_k_tile(K)
    tn = _pick_n_tile(N)
    grid = (M // tm, N // tn, K // tk)

    return pl.pallas_call(
        _matmul_bias_relu_kernel,
        out_shape=jax.ShapeDtypeStruct((M, N), out_dtype),
        grid_spec=pltpu.PrefetchScalarGridSpec(
            num_scalar_prefetch=0,
            grid=grid,
            in_specs=[
                pl.BlockSpec((tm, tk), lambda m, n, k: (m, k)),
                pl.BlockSpec((tk, tn), lambda m, n, k: (k, n)),
                pl.BlockSpec((1, tn), lambda m, n, k: (0, n)),
            ],
            out_specs=pl.BlockSpec((tm, tn), lambda m, n, k: (m, n)),
            scratch_shapes=[pltpu.VMEM((tm, tn), jnp.float32)],
        ),
        compiler_params=pltpu.CompilerParams(
            dimension_semantics=("parallel", "parallel", "arbitrary")),
    )(x, w, b2d)


# ----------------------------------------------------------------------------
# Conv layer = im2col (XLA glue, bf16) + Pallas matmul kernel (hot path)
# ----------------------------------------------------------------------------
def _im2col(x_nhwc, k, stride, k_pad_to):
    """Patches in (dh, dw, cin) order, zero-padded on K up to k_pad_to."""
    B, H, W, C = x_nhwc.shape
    Ho = (H - k) // stride + 1
    Wo = (W - k) // stride + 1
    cols = []
    for dh in range(k):
        for dw in range(k):
            cols.append(
                x_nhwc[:, dh:dh + stride * (Ho - 1) + 1:stride,
                          dw:dw + stride * (Wo - 1) + 1:stride, :])
    K = k * k * C
    if k_pad_to > K:
        cols.append(jnp.zeros((B, Ho, Wo, k_pad_to - K), x_nhwc.dtype))
        K = k_pad_to
    patches = jnp.concatenate(cols, axis=-1)          # (B, Ho, Wo, Kp)
    return patches.reshape(B * Ho * Wo, K), Ho, Wo


_STRIDES = (2, 2, 2, 1)
_KSIZE = 5


def prepare_params(params):
    """One-time weight prep: (O,I,kh,kw) f32 -> ((Kp, O) bf16, (1, O) f32)."""
    prepped = []
    for w_oihw, b in params:
        O, I, kh, kw = w_oihw.shape
        K = kh * kw * I
        Kp = _round_up(K, 128)
        # patch element order is (kh, kw, cin) -> reorder weight to match.
        w_mat = jnp.transpose(w_oihw, (2, 3, 1, 0)).reshape(K, O)
        if Kp > K:
            w_mat = jnp.concatenate(
                [w_mat, jnp.zeros((Kp - K, O), w_mat.dtype)], axis=0)
        prepped.append((w_mat.astype(jnp.bfloat16),
                        jnp.asarray(b, jnp.float32).reshape(1, O)))
    return tuple(prepped)


@jax.jit
def image_pair_encoder_v2(prepared_params, src_imgs, dst_imgs):
    """src_imgs, dst_imgs: (B, 3, H, W) NCHW float32 (PyTorch convention)."""
    imgs = jnp.concatenate([src_imgs, dst_imgs, src_imgs - dst_imgs], axis=1)
    x = jnp.transpose(imgs, (0, 2, 3, 1)).astype(jnp.bfloat16)   # NHWC bf16
    n_layers = len(prepared_params)
    for li, ((w_mat, b2d), s) in enumerate(zip(prepared_params, _STRIDES)):
        B = x.shape[0]
        patches, Ho, Wo = _im2col(x, _KSIZE, s, k_pad_to=w_mat.shape[0])
        out_dtype = jnp.float32 if li == n_layers - 1 else jnp.bfloat16
        y = matmul_bias_relu(patches, w_mat, b2d, out_dtype=out_dtype)
        x = y.reshape(B, Ho, Wo, w_mat.shape[1])
    # Reproduce PyTorch x.view(B, -1) on NCHW tensors.
    x_nchw = jnp.transpose(x, (0, 3, 1, 2))
    return x_nchw.reshape(x_nchw.shape[0], -1)


# ----------------------------------------------------------------------------
# Deterministic parameter init (matches module __init__ shapes / orthogonal_)
# ----------------------------------------------------------------------------
def _orthogonal(rng, shape, gain=1.0):
    rows = shape[0]
    cols = int(np.prod(shape[1:]))
    a = rng.normal(size=(max(rows, cols), min(rows, cols)))
    q, r = np.linalg.qr(a)
    q = q * np.sign(np.diag(r))
    if rows < cols:
        q = q.T
    return (gain * q).reshape(shape).astype(np.float32)


def make_params(init_scale=1.0, seed=0):
    rng = np.random.RandomState(seed)
    cfgs = [(64, 9, 5), (128, 64, 5), (256, 128, 5), (512, 256, 5)]
    params = []
    for (co, ci, k) in cfgs:
        w = _orthogonal(rng, (co, ci, k, k), init_scale)
        bound = 1.0 / np.sqrt(ci * k * k)              # default Conv2d bias init
        b = rng.uniform(-bound, bound, size=(co,)).astype(np.float32)
        params.append((jnp.asarray(w), jnp.asarray(b)))
    return params


# ----------------------------------------------------------------------------
# Reference (pure XLA, f32 HIGHEST) for a sanity check
# ----------------------------------------------------------------------------
def _reference(params, src, dst):
    x = jnp.concatenate([src, dst, src - dst], axis=1)
    for (w, b), s in zip(params, _STRIDES):
        x = jax.lax.conv_general_dilated(
            x, w, window_strides=(s, s), padding="VALID",
            dimension_numbers=("NCHW", "OIHW", "NCHW"),
            precision=jax.lax.Precision.HIGHEST)
        x = jax.nn.relu(x + b[None, :, None, None])
    return x.reshape(x.shape[0], -1)


if __name__ == "__main__":
    key = jax.random.PRNGKey(0)
    k1, k2 = jax.random.split(key)
    # 64x64 inputs -> conv stack reduces spatial to 1x1 -> (B, 512) features.
    src = jax.random.normal(k1, (2, 3, 64, 64), jnp.float32)
    dst = jax.random.normal(k2, (2, 3, 64, 64), jnp.float32)

    params = make_params(init_scale=1.0, seed=0)
    prepped = prepare_params(params)               # one-time weight prep

    out = image_pair_encoder_v2(prepped, src, dst)
    out = jax.block_until_ready(out)
    assert out.shape == (2, 512), out.shape

    ref = jax.block_until_ready(_reference(params, src, dst))
    # bf16 MXU operands vs f32 HIGHEST reference: tolerance loosened accordingly.
    np.testing.assert_allclose(np.asarray(out), np.asarray(ref),
                               rtol=5e-2, atol=5e-2)

    print("KERNEL_OK")
</pallas_src>

<mosaic_0001>
module attributes {stable_mosaic.version = 11 : i64} {
  func.func @_matmul_bias_relu_kernel(%arg0: i32, %arg1: i32, %arg2: i32, %arg3: memref<600x256xbf16, #tpu.memory_space<vmem>>, %arg4: memref<256x64xbf16, #tpu.memory_space<vmem>>, %arg5: memref<1x64xf32, #tpu.memory_space<vmem>>, %arg6: memref<600x64xbf16, #tpu.memory_space<vmem>>, %arg7: memref<600x64xf32, #tpu.memory_space<vmem>>) attributes {dimension_semantics = [#tpu.dimension_semantics<parallel>, #tpu.dimension_semantics<parallel>, #tpu.dimension_semantics<arbitrary>], iteration_bounds = array<i64: 3, 1, 1>, scalar_prefetch = 0 : i64, scratch_operands = 1 : i64, tpu.core_type = #tpu.core_type<tc>, window_params = [{transform_indices = @transform_0, window_bounds = array<i64: 600, 256>}, {transform_indices = @transform_1, window_bounds = array<i64: 256, 64>}, {transform_indices = @transform_2, window_bounds = array<i64: 1, 64>}, {transform_indices = @transform_3, window_bounds = array<i64: 600, 64>}]} {
    %c0_i32 = arith.constant 0 : i32
    %0 = arith.cmpi eq, %arg2, %c0_i32 : i32
    %1 = arith.extui %0 : i1 to i32
    %c0_i32_0 = arith.constant 0 : i32
    %2 = arith.cmpi ne, %1, %c0_i32_0 : i32
    scf.if %2 {
      %cst_10 = arith.constant 0.000000e+00 : f32
      %12 = vector.broadcast %cst_10 : f32 to vector<600x64xf32>
      %c0_11 = arith.constant 0 : index
      %c0_12 = arith.constant 0 : index
      %13 = vector.load %arg7[%c0_11, %c0_12] : memref<600x64xf32, #tpu.memory_space<vmem>>, vector<600x64xf32>
      tpu.vector_store %arg7[%c0_11, %c0_12], %12 {strides = array<i32>} : memref<600x64xf32, #tpu.memory_space<vmem>>, vector<600x64xf32>,
    } else {
    }
    %c0 = arith.constant 0 : index
    %c0_1 = arith.constant 0 : index
    %3 = vector.load %arg7[%c0, %c0_1] : memref<600x64xf32, #tpu.memory_space<vmem>>, vector<600x64xf32>
    %c0_2 = arith.constant 0 : index
    %c0_3 = arith.constant 0 : index
    %4 = vector.load %arg3[%c0_2, %c0_3] : memref<600x256xbf16, #tpu.memory_space<vmem>>, vector<600x256xbf16>
    %c0_4 = arith.constant 0 : index
    %c0_5 = arith.constant 0 : index
    %5 = vector.load %arg4[%c0_4, %c0_5] : memref<256x64xbf16, #tpu.memory_space<vmem>>, vector<256x64xbf16>
    %cst = arith.constant dense<0.000000e+00> : vector<600x64xf32>
    %6 = tpu.matmul %4, %5, %cst {dimension_numbers = #tpu.dot_dimension_numbers<[1], [0], [0], [1], [0, 0, 1, 1], [], []>} : vector<600x256xbf16>, vector<256x64xbf16>, vector<600x64xf32> -> vector<600x64xf32>
    %7 = arith.addf %3, %6 : vector<600x64xf32>
    %c0_6 = arith.constant 0 : index
    %c0_7 = arith.constant 0 : index
    %8 = vector.load %arg7[%c0_6, %c0_7] : memref<600x64xf32, #tpu.memory_space<vmem>>, vector<600x64xf32>
    tpu.vector_store %arg7[%c0_6, %c0_7], %7 {strides = array<i32>} : memref<600x64xf32, #tpu.memory_space<vmem>>, vector<600x64xf32>,
    %c0_i32_8 = arith.constant 0 : i32
    %9 = arith.cmpi eq, %arg2, %c0_i32_8 : i32
    %10 = arith.extui %9 : i1 to i32
    %c0_i32_9 = arith.constant 0 : i32
    %11 = arith.cmpi ne, %10, %c0_i32_9 : i32
    scf.if %11 {
      %c0_10 = arith.constant 0 : index
      %c0_11 = arith.constant 0 : index
      %12 = vector.load %arg7[%c0_10, %c0_11] : memref<600x64xf32, #tpu.memory_space<vmem>>, vector<600x64xf32>
      %c0_12 = arith.constant 0 : index
      %c0_13 = arith.constant 0 : index
      %13 = vector.load %arg5[%c0_12, %c0_13] : memref<1x64xf32, #tpu.memory_space<vmem>>, vector<1x64xf32>
      %14 = vector.broadcast %13 : vector<1x64xf32> to vector<600x64xf32>
      %15 = arith.addf %12, %14 : vector<600x64xf32>
      %cst_14 = arith.constant 0.000000e+00 : f32
      %16 = vector.broadcast %cst_14 : f32 to vector<600x64xf32>
      %17 = arith.maximumf %15, %16 : vector<600x64xf32>
      %18 = arith.truncf %17 : vector<600x64xf32> to vector<600x64xbf16>
      %c0_15 = arith.constant 0 : index
      %c0_16 = arith.constant 0 : index
      %19 = vector.load %arg6[%c0_15, %c0_16] : memref<600x64xbf16, #tpu.memory_space<vmem>>, vector<600x64xbf16>
      tpu.vector_store %arg6[%c0_15, %c0_16], %18 {strides = array<i32>} : memref<600x64xbf16, #tpu.memory_space<vmem>>, vector<600x64xbf16>,
    } else {
    }
    return
  }
  func.func @transform_0(%arg0: i32, %arg1: i32, %arg2: i32) -> (i32, i32) {
    %c0_i32 = arith.constant 0 : i32
    return %arg0, %arg2 : i32, i32
  }
  func.func @transform_1(%arg0: i32, %arg1: i32, %arg2: i32) -> (i32, i32) {
    %c0_i32 = arith.constant 0 : i32
    return %arg2, %arg1 : i32, i32
  }
  func.func @transform_2(%arg0: i32, %arg1: i32, %arg2: i32) -> (i32, i32) {
    %c0_i32 = arith.constant 0 : i32
    %c0_i32_0 = arith.constant 0 : i32
    return %c0_i32, %arg1 : i32, i32
  }
  func.func @transform_3(%arg0: i32, %arg1: i32, %arg2: i32) -> (i32, i32) {
    %c0_i32 = arith.constant 0 : i32
    return %arg0, %arg1 : i32, i32
  }
}

module attributes {stable_mosaic.version = 11 : i64} {
  func.func @_matmul_bias_relu_kernel(%arg0: i32, %arg1: i32, %arg2: i32, %arg3: memref<338x1664xbf16, #tpu.memory_space<vmem>>, %arg4: memref<1664x128xbf16, #tpu.memory_space<vmem>>, %arg5: memref<1x128xf32, #tpu.memory_space<vmem>>, %arg6: memref<338x128xbf16, #tpu.memory_space<vmem>>, %arg7: memref<338x128xf32, #tpu.memory_space<vmem>>) attributes {dimension_semantics = [#tpu.dimension_semantics<parallel>, #tpu.dimension_semantics<parallel>, #tpu.dimension_semantics<arbitrary>], iteration_bounds = array<i64: 1, 1, 1>, scalar_prefetch = 0 : i64, scratch_operands = 1 : i64, tpu.core_type = #tpu.core_type<tc>, window_params = [{transform_indices = @transform_0, window_bounds = array<i64: 338, 1664>}, {transform_indices = @transform_1, window_bounds = array<i64: 1664, 128>}, {transform_indices = @transform_2, window_bounds = array<i64: 1, 128>}, {transform_indices = @transform_3, window_bounds = array<i64: 338, 128>}]} {
    %c0_i32 = arith.constant 0 : i32
    %0 = arith.cmpi eq, %arg2, %c0_i32 : i32
    %1 = arith.extui %0 : i1 to i32
    %c0_i32_0 = arith.constant 0 : i32
    %2 = arith.cmpi ne, %1, %c0_i32_0 : i32
    scf.if %2 {
      %cst_10 = arith.constant 0.000000e+00 : f32
      %12 = vector.broadcast %cst_10 : f32 to vector<338x128xf32>
      %c0_11 = arith.constant 0 : index
      %c0_12 = arith.constant 0 : index
      %13 = vector.load %arg7[%c0_11, %c0_12] : memref<338x128xf32, #tpu.memory_space<vmem>>, vector<338x128xf32>
      tpu.vector_store %arg7[%c0_11, %c0_12], %12 {strides = array<i32>} : memref<338x128xf32, #tpu.memory_space<vmem>>, vector<338x128xf32>,
    } else {
    }
    %c0 = arith.constant 0 : index
    %c0_1 = arith.constant 0 : index
    %3 = vector.load %arg7[%c0, %c0_1] : memref<338x128xf32, #tpu.memory_space<vmem>>, vector<338x128xf32>
    %c0_2 = arith.constant 0 : index
    %c0_3 = arith.constant 0 : index
    %4 = vector.load %arg3[%c0_2, %c0_3] : memref<338x1664xbf16, #tpu.memory_space<vmem>>, vector<338x1664xbf16>
    %c0_4 = arith.constant 0 : index
    %c0_5 = arith.constant 0 : index
    %5 = vector.load %arg4[%c0_4, %c0_5] : memref<1664x128xbf16, #tpu.memory_space<vmem>>, vector<1664x128xbf16>
    %cst = arith.constant dense<0.000000e+00> : vector<338x128xf32>
    %6 = tpu.matmul %4, %5, %cst {dimension_numbers = #tpu.dot_dimension_numbers<[1], [0], [0], [1], [0, 0, 1, 1], [], []>} : vector<338x1664xbf16>, vector<1664x128xbf16>, vector<338x128xf32> -> vector<338x128xf32>
    %7 = arith.addf %3, %6 : vector<338x128xf32>
    %c0_6 = arith.constant 0 : index
    %c0_7 = arith.constant 0 : index
    %8 = vector.load %arg7[%c0_6, %c0_7] : memref<338x128xf32, #tpu.memory_space<vmem>>, vector<338x128xf32>
    tpu.vector_store %arg7[%c0_6, %c0_7], %7 {strides = array<i32>} : memref<338x128xf32, #tpu.memory_space<vmem>>, vector<338x128xf32>,
    %c0_i32_8 = arith.constant 0 : i32
    %9 = arith.cmpi eq, %arg2, %c0_i32_8 : i32
    %10 = arith.extui %9 : i1 to i32
    %c0_i32_9 = arith.constant 0 : i32
    %11 = arith.cmpi ne, %10, %c0_i32_9 : i32
    scf.if %11 {
      %c0_10 = arith.constant 0 : index
      %c0_11 = arith.constant 0 : index
      %12 = vector.load %arg7[%c0_10, %c0_11] : memref<338x128xf32, #tpu.memory_space<vmem>>, vector<338x128xf32>
      %c0_12 = arith.constant 0 : index
      %c0_13 = arith.constant 0 : index
      %13 = vector.load %arg5[%c0_12, %c0_13] : memref<1x128xf32, #tpu.memory_space<vmem>>, vector<1x128xf32>
      %14 = vector.broadcast %13 : vector<1x128xf32> to vector<338x128xf32>
      %15 = arith.addf %12, %14 : vector<338x128xf32>
      %cst_14 = arith.constant 0.000000e+00 : f32
      %16 = vector.broadcast %cst_14 : f32 to vector<338x128xf32>
      %17 = arith.maximumf %15, %16 : vector<338x128xf32>
      %18 = arith.truncf %17 : vector<338x128xf32> to vector<338x128xbf16>
      %c0_15 = arith.constant 0 : index
      %c0_16 = arith.constant 0 : index
      %19 = vector.load %arg6[%c0_15, %c0_16] : memref<338x128xbf16, #tpu.memory_space<vmem>>, vector<338x128xbf16>
      tpu.vector_store %arg6[%c0_15, %c0_16], %18 {strides = array<i32>} : memref<338x128xbf16, #tpu.memory_space<vmem>>, vector<338x128xbf16>,
    } else {
    }
    return
  }
  func.func @transform_0(%arg0: i32, %arg1: i32, %arg2: i32) -> (i32, i32) {
    %c0_i32 = arith.constant 0 : i32
    return %arg0, %arg2 : i32, i32
  }
  func.func @transform_1(%arg0: i32, %arg1: i32, %arg2: i32) -> (i32, i32) {
    %c0_i32 = arith.constant 0 : i32
    return %arg2, %arg1 : i32, i32
  }
  func.func @transform_2(%arg0: i32, %arg1: i32, %arg2: i32) -> (i32, i32) {
    %c0_i32 = arith.constant 0 : i32
    %c0_i32_0 = arith.constant 0 : i32
    return %c0_i32, %arg1 : i32, i32
  }
  func.func @transform_3(%arg0: i32, %arg1: i32, %arg2: i32) -> (i32, i32) {
    %c0_i32 = arith.constant 0 : i32
    return %arg0, %arg1 : i32, i32
  }
}

module attributes {stable_mosaic.version = 11 : i64} {
  func.func @_matmul_bias_relu_kernel(%arg0: i32, %arg1: i32, %arg2: i32, %arg3: memref<50x640xbf16, #tpu.memory_space<vmem>>, %arg4: memref<640x256xbf16, #tpu.memory_space<vmem>>, %arg5: memref<1x256xf32, #tpu.memory_space<vmem>>, %arg6: memref<50x256xbf16, #tpu.memory_space<vmem>>, %arg7: memref<50x256xf32, #tpu.memory_space<vmem>>) attributes {dimension_semantics = [#tpu.dimension_semantics<parallel>, #tpu.dimension_semantics<parallel>, #tpu.dimension_semantics<arbitrary>], iteration_bounds = array<i64: 1, 1, 5>, scalar_prefetch = 0 : i64, scratch_operands = 1 : i64, tpu.core_type = #tpu.core_type<tc>, window_params = [{transform_indices = @transform_0, window_bounds = array<i64: 50, 640>}, {transform_indices = @transform_1, window_bounds = array<i64: 640, 256>}, {transform_indices = @transform_2, window_bounds = array<i64: 1, 256>}, {transform_indices = @transform_3, window_bounds = array<i64: 50, 256>}]} {
    %c0_i32 = arith.constant 0 : i32
    %0 = arith.cmpi eq, %arg2, %c0_i32 : i32
    %1 = arith.extui %0 : i1 to i32
    %c0_i32_0 = arith.constant 0 : i32
    %2 = arith.cmpi ne, %1, %c0_i32_0 : i32
    scf.if %2 {
      %cst_9 = arith.constant 0.000000e+00 : f32
      %12 = vector.broadcast %cst_9 : f32 to vector<50x256xf32>
      %c0_10 = arith.constant 0 : index
      %c0_11 = arith.constant 0 : index
      %13 = vector.load %arg7[%c0_10, %c0_11] : memref<50x256xf32, #tpu.memory_space<vmem>>, vector<50x256xf32>
      tpu.vector_store %arg7[%c0_10, %c0_11], %12 {strides = array<i32>} : memref<50x256xf32, #tpu.memory_space<vmem>>, vector<50x256xf32>,
    } else {
    }
    %c0 = arith.constant 0 : index
    %c0_1 = arith.constant 0 : index
    %3 = vector.load %arg7[%c0, %c0_1] : memref<50x256xf32, #tpu.memory_space<vmem>>, vector<50x256xf32>
    %c0_2 = arith.constant 0 : index
    %c0_3 = arith.constant 0 : index
    %4 = vector.load %arg3[%c0_2, %c0_3] : memref<50x640xbf16, #tpu.memory_space<vmem>>, vector<50x640xbf16>
    %c0_4 = arith.constant 0 : index
    %c0_5 = arith.constant 0 : index
    %5 = vector.load %arg4[%c0_4, %c0_5] : memref<640x256xbf16, #tpu.memory_space<vmem>>, vector<640x256xbf16>
    %cst = arith.constant dense<0.000000e+00> : vector<50x256xf32>
    %6 = tpu.matmul %4, %5, %cst {dimension_numbers = #tpu.dot_dimension_numbers<[1], [0], [0], [1], [0, 0, 1, 1], [], []>} : vector<50x640xbf16>, vector<640x256xbf16>, vector<50x256xf32> -> vector<50x256xf32>
    %7 = arith.addf %3, %6 : vector<50x256xf32>
    %c0_6 = arith.constant 0 : index
    %c0_7 = arith.constant 0 : index
    %8 = vector.load %arg7[%c0_6, %c0_7] : memref<50x256xf32, #tpu.memory_space<vmem>>, vector<50x256xf32>
    tpu.vector_store %arg7[%c0_6, %c0_7], %7 {strides = array<i32>} : memref<50x256xf32, #tpu.memory_space<vmem>>, vector<50x256xf32>,
    %c4_i32 = arith.constant 4 : i32
    %9 = arith.cmpi eq, %arg2, %c4_i32 : i32
    %10 = arith.extui %9 : i1 to i32
    %c0_i32_8 = arith.constant 0 : i32
    %11 = arith.cmpi ne, %10, %c0_i32_8 : i32
    scf.if %11 {
      %c0_9 = arith.constant 0 : index
      %c0_10 = arith.constant 0 : index
      %12 = vector.load %arg7[%c0_9, %c0_10] : memref<50x256xf32, #tpu.memory_space<vmem>>, vector<50x256xf32>
      %c0_11 = arith.constant 0 : index
      %c0_12 = arith.constant 0 : index
      %13 = vector.load %arg5[%c0_11, %c0_12] : memref<1x256xf32, #tpu.memory_space<vmem>>, vector<1x256xf32>
      %14 = vector.broadcast %13 : vector<1x256xf32> to vector<50x256xf32>
      %15 = arith.addf %12, %14 : vector<50x256xf32>
      %cst_13 = arith.constant 0.000000e+00 : f32
      %16 = vector.broadcast %cst_13 : f32 to vector<50x256xf32>
      %17 = arith.maximumf %15, %16 : vector<50x256xf32>
      %18 = arith.truncf %17 : vector<50x256xf32> to vector<50x256xbf16>
      %c0_14 = arith.constant 0 : index
      %c0_15 = arith.constant 0 : index
      %19 = vector.load %arg6[%c0_14, %c0_15] : memref<50x256xbf16, #tpu.memory_space<vmem>>, vector<50x256xbf16>
      tpu.vector_store %arg6[%c0_14, %c0_15], %18 {strides = array<i32>} : memref<50x256xbf16, #tpu.memory_space<vmem>>, vector<50x256xbf16>,
    } else {
    }
    return
  }
  func.func @transform_0(%arg0: i32, %arg1: i32, %arg2: i32) -> (i32, i32) {
    %c0_i32 = arith.constant 0 : i32
    return %arg0, %arg2 : i32, i32
  }
  func.func @transform_1(%arg0: i32, %arg1: i32, %arg2: i32) -> (i32, i32) {
    %c0_i32 = arith.constant 0 : i32
    return %arg2, %arg1 : i32, i32
  }
  func.func @transform_2(%arg0: i32, %arg1: i32, %arg2: i32) -> (i32, i32) {
    %c0_i32 = arith.constant 0 : i32
    %c0_i32_0 = arith.constant 0 : i32
    return %c0_i32, %arg1 : i32, i32
  }
  func.func @transform_3(%arg0: i32, %arg1: i32, %arg2: i32) -> (i32, i32) {
    %c0_i32 = arith.constant 0 : i32
    return %arg0, %arg1 : i32, i32
  }
}

module attributes {stable_mosaic.version = 11 : i64} {
  func.func @_matmul_bias_relu_kernel(%arg0: i32, %arg1: i32, %arg2: i32, %arg3: memref<2x1280xbf16, #tpu.memory_space<vmem>>, %arg4: memref<1280x256xbf16, #tpu.memory_space<vmem>>, %arg5: memref<1x256xf32, #tpu.memory_space<vmem>>, %arg6: memref<2x256xf32, #tpu.memory_space<vmem>>, %arg7: memref<2x256xf32, #tpu.memory_space<vmem>>) attributes {dimension_semantics = [#tpu.dimension_semantics<parallel>, #tpu.dimension_semantics<parallel>, #tpu.dimension_semantics<arbitrary>], iteration_bounds = array<i64: 1, 2, 5>, scalar_prefetch = 0 : i64, scratch_operands = 1 : i64, tpu.core_type = #tpu.core_type<tc>, window_params = [{transform_indices = @transform_0, window_bounds = array<i64: 2, 1280>}, {transform_indices = @transform_1, window_bounds = array<i64: 1280, 256>}, {transform_indices = @transform_2, window_bounds = array<i64: 1, 256>}, {transform_indices = @transform_3, window_bounds = array<i64: 2, 256>}]} {
    %c0_i32 = arith.constant 0 : i32
    %0 = arith.cmpi eq, %arg2, %c0_i32 : i32
    %1 = arith.extui %0 : i1 to i32
    %c0_i32_0 = arith.constant 0 : i32
    %2 = arith.cmpi ne, %1, %c0_i32_0 : i32
    scf.if %2 {
      %cst_9 = arith.constant 0.000000e+00 : f32
      %12 = vector.broadcast %cst_9 : f32 to vector<2x256xf32>
      %c0_10 = arith.constant 0 : index
      %c0_11 = arith.constant 0 : index
      %13 = vector.load %arg7[%c0_10, %c0_11] : memref<2x256xf32, #tpu.memory_space<vmem>>, vector<2x256xf32>
      tpu.vector_store %arg7[%c0_10, %c0_11], %12 {strides = array<i32>} : memref<2x256xf32, #tpu.memory_space<vmem>>, vector<2x256xf32>,
    } else {
    }
    %c0 = arith.constant 0 : index
    %c0_1 = arith.constant 0 : index
    %3 = vector.load %arg7[%c0, %c0_1] : memref<2x256xf32, #tpu.memory_space<vmem>>, vector<2x256xf32>
    %c0_2 = arith.constant 0 : index
    %c0_3 = arith.constant 0 : index
    %4 = vector.load %arg3[%c0_2, %c0_3] : memref<2x1280xbf16, #tpu.memory_space<vmem>>, vector<2x1280xbf16>
    %c0_4 = arith.constant 0 : index
    %c0_5 = arith.constant 0 : index
    %5 = vector.load %arg4[%c0_4, %c0_5] : memref<1280x256xbf16, #tpu.memory_space<vmem>>, vector<1280x256xbf16>
    %cst = arith.constant dense<0.000000e+00> : vector<2x256xf32>
    %6 = tpu.matmul %4, %5, %cst {dimension_numbers = #tpu.dot_dimension_numbers<[1], [0], [0], [1], [0, 0, 1, 1], [], []>} : vector<2x1280xbf16>, vector<1280x256xbf16>, vector<2x256xf32> -> vector<2x256xf32>
    %7 = arith.addf %3, %6 : vector<2x256xf32>
    %c0_6 = arith.constant 0 : index
    %c0_7 = arith.constant 0 : index
    %8 = vector.load %arg7[%c0_6, %c0_7] : memref<2x256xf32, #tpu.memory_space<vmem>>, vector<2x256xf32>
    tpu.vector_store %arg7[%c0_6, %c0_7], %7 {strides = array<i32>} : memref<2x256xf32, #tpu.memory_space<vmem>>, vector<2x256xf32>,
    %c4_i32 = arith.constant 4 : i32
    %9 = arith.cmpi eq, %arg2, %c4_i32 : i32
    %10 = arith.extui %9 : i1 to i32
    %c0_i32_8 = arith.constant 0 : i32
    %11 = arith.cmpi ne, %10, %c0_i32_8 : i32
    scf.if %11 {
      %c0_9 = arith.constant 0 : index
      %c0_10 = arith.constant 0 : index
      %12 = vector.load %arg7[%c0_9, %c0_10] : memref<2x256xf32, #tpu.memory_space<vmem>>, vector<2x256xf32>
      %c0_11 = arith.constant 0 : index
      %c0_12 = arith.constant 0 : index
      %13 = vector.load %arg5[%c0_11, %c0_12] : memref<1x256xf32, #tpu.memory_space<vmem>>, vector<1x256xf32>
      %14 = vector.broadcast %13 : vector<1x256xf32> to vector<2x256xf32>
      %15 = arith.addf %12, %14 : vector<2x256xf32>
      %cst_13 = arith.constant 0.000000e+00 : f32
      %16 = vector.broadcast %cst_13 : f32 to vector<2x256xf32>
      %17 = arith.maximumf %15, %16 : vector<2x256xf32>
      %c0_14 = arith.constant 0 : index
      %c0_15 = arith.constant 0 : index
      %18 = vector.load %arg6[%c0_14, %c0_15] : memref<2x256xf32, #tpu.memory_space<vmem>>, vector<2x256xf32>
      tpu.vector_store %arg6[%c0_14, %c0_15], %17 {strides = array<i32>} : memref<2x256xf32, #tpu.memory_space<vmem>>, vector<2x256xf32>,
    } else {
    }
    return
  }
  func.func @transform_0(%arg0: i32, %arg1: i32, %arg2: i32) -> (i32, i32) {
    %c0_i32 = arith.constant 0 : i32
    return %arg0, %arg2 : i32, i32
  }
  func.func @transform_1(%arg0: i32, %arg1: i32, %arg2: i32) -> (i32, i32) {
    %c0_i32 = arith.constant 0 : i32
    return %arg2, %arg1 : i32, i32
  }
  func.func @transform_2(%arg0: i32, %arg1: i32, %arg2: i32) -> (i32, i32) {
    %c0_i32 = arith.constant 0 : i32
    %c0_i32_0 = arith.constant 0 : i32
    return %c0_i32, %arg1 : i32, i32
  }
  func.func @transform_3(%arg0: i32, %arg1: i32, %arg2: i32) -> (i32, i32) {
    %c0_i32 = arith.constant 0 : i32
    return %arg0, %arg1 : i32, i32
  }
}

</mosaic_0001>

<llo_original>
// kernel: image_pair_encoder_v2.4
$region0: #{image_pair_encoder_v2.4}
  #allocation0 [shape = 'u32[]', space=smem, size = 0x4, offset = 0x4, fixed_abs, tag = 'smem constant byte address 0x4 - core index']
  #allocation1 [shape = 'u32[144,128]{1,0:T(1,128)}', space=vmem, size = 0x12000, scoped, tag = 'internal scratch']
  #allocation2 [shape = 'f32[600,64]{1,0:T(8,128)}', space=vmem, size = 0x4b000, scoped, tag = 'scratch operand']
  %s0 = inlined_call_operand.vmem [shape: bf16[1800,256], index: 0, kind: input, shape index: {}]
  %s1 = inlined_call_operand.vmem [shape: bf16[256,64], index: 1, kind: input, shape index: {}]
  %s2 = inlined_call_operand.vmem [shape: f32[1,64], index: 2, kind: input, shape index: {}]
  %s3 = inlined_call_operand.vmem [shape: bf16[1800,64], index: 3, kind: output, shape index: {}]
  %s4 = sld [smem:[#allocation0]]
  $region53: #{image_pair_encoder_v2.4} parent=0
    _
  %s6 = ssub.s32 1, %s4
  %s7 = scalar_select 0, %s6, %s4
  loop: start=0, step=1, limit=5
  $region2: #{image_pair_encoder_v2.4} parent=0 // loop_pre_header
    _
  $region3: #{image_pair_encoder_v2.4} parent=0 // loop_header
    %s9 = sphi 0, %s13
    %p10 = scmp.ge.s32.totalorder %s9, 5
    %s16 = sphi 0, %s35
    %s17 = sphi 0, %s31
    %s18 = sphi 0, %s27
    %s19 = sphi 0, %s16
    %s20 = sphi 0, %s17
    %s21 = sphi 0, %s18
    %s22 = sphi 0, %s19
    %s23 = sphi 0, %s20
    %s24 = sphi 0, %s21
    %s40 = sphi 0, %s42
    %s43 = sphi 0, %s40
    %s44 = sphi 0, %s43
    %s60 = sphi 0, %s44
    %s68 = sphi 0, %s70
    %s71 = sphi 0, %s68
    %s72 = sphi 0, %s71
    %s88 = sphi 0, %s72
    %s94 = sphi 0, %s96
    %s97 = sphi 0, %s94
    %s98 = sphi 0, %s97
    %s114 = sphi 0, %s98
    %s122 = sphi 0, %s124
    %s125 = sphi 0, %s122
    %s126 = sphi 0, %s125
    %s142 = sphi 0, %s126
  $region4: #{image_pair_encoder_v2.4} parent=0 // loop_header_branch
    %12 = sbr.rel (%p10) target = $region8
  $region5: #{image_pair_encoder_v2.4} parent=0 // loop_body
    %s14 = ssub.s32 %s9, 1
    %s15 = ssub.s32 %s9, 2
    %s25 = sadd.s32 1, %s18
    %p26 = scmp.ge.s32.totalorder %s25, 1
    %s27 = scalar_select %p26, 0, %s25
    %s28 = sadd.s32 1, %s17
    %s29 = scalar_select %p26, %s28, %s17
    %p30 = scmp.ge.s32.totalorder %s29, 1
    %s31 = scalar_select %p30, 0, %s29
    %s32 = sadd.s32 1, %s16
    %s33 = scalar_select %p30, %s32, %s16
    %p34 = scmp.ge.s32.totalorder %s33, 3
    %s35 = scalar_select %p34, 0, %s33
    %s36 = ssub.s32 %s16, %s35
    %s37 = ssub.s32 %s18, %s27
    %s38 = sor.u32 %s36, %s37
    %p39 = scmp.eq.s32.totalorder %s38, 0
    %s41 = sadd.s32 %s40, 1
    %s42 = scalar_select %p39, %s40, %s41
    %p45 = pneg %p39
    %p46 = scmp.eq.s32.totalorder %s9, 2
    %p47 = por %p45, %p46
    %p48 = scmp.ne.s32.totalorder %s40, %s43
    %p49 = scmp.eq.s32.totalorder %s9, 0
    %p50 = por %p48, %p49
    %p51 = scmp.ne.s32.totalorder %s40, %s43
    %p52 = scmp.eq.s32.totalorder %s14, 2
    %p53 = por %p51, %p52
    %p54 = scmp.ne.s32.totalorder %s43, %s44
    %p55 = scmp.eq.s32.totalorder %s14, 0
    %p56 = por %p54, %p55
    %p57 = scmp.ne.s32.totalorder %s43, %s44
    %p58 = scmp.eq.s32.totalorder %s15, 2
    %p59 = por %p57, %p58
    %p61 = scmp.ne.s32.totalorder %s44, %s60
    %p62 = scmp.eq.s32.totalorder %s15, 0
    %p63 = por %p61, %p62
    %s64 = ssub.s32 %s18, %s27
    %s65 = ssub.s32 %s17, %s31
    %s66 = sor.u32 %s64, %s65
    %p67 = scmp.eq.s32.totalorder %s66, 0
    %s69 = sadd.s32 %s68, 1
    %s70 = scalar_select %p67, %s68, %s69
    %p73 = pneg %p67
    %p74 = scmp.eq.s32.totalorder %s9, 2
    %p75 = por %p73, %p74
    %p76 = scmp.ne.s32.totalorder %s68, %s71
    %p77 = scmp.eq.s32.totalorder %s9, 0
    %p78 = por %p76, %p77
    %p79 = scmp.ne.s32.totalorder %s68, %s71
    %p80 = scmp.eq.s32.totalorder %s14, 2
    %p81 = por %p79, %p80
    %p82 = scmp.ne.s32.totalorder %s71, %s72
    %p83 = scmp.eq.s32.totalorder %s14, 0
    %p84 = por %p82, %p83
    %p85 = scmp.ne.s32.totalorder %s71, %s72
    %p86 = scmp.eq.s32.totalorder %s15, 2
    %p87 = por %p85, %p86
    %p89 = scmp.ne.s32.totalorder %s72, %s88
    %p90 = scmp.eq.s32.totalorder %s15, 0
    %p91 = por %p89, %p90
    %s92 = ssub.s32 %s17, %s31
    %p93 = scmp.eq.s32.totalorder %s92, 0
    %s95 = sadd.s32 %s94, 1
    %s96 = scalar_select %p93, %s94, %s95
    %p99 = pneg %p93
    %p100 = scmp.eq.s32.totalorder %s9, 2
    %p101 = por %p99, %p100
    %p102 = scmp.ne.s32.totalorder %s94, %s97
    %p103 = scmp.eq.s32.totalorder %s9, 0
    %p104 = por %p102, %p103
    %p105 = scmp.ne.s32.totalorder %s94, %s97
    %p106 = scmp.eq.s32.totalorder %s14, 2
    %p107 = por %p105, %p106
    %p108 = scmp.ne.s32.totalorder %s97, %s98
    %p109 = scmp.eq.s32.totalorder %s14, 0
    %p110 = por %p108, %p109
    %p111 = scmp.ne.s32.totalorder %s97, %s98
    %p112 = scmp.eq.s32.totalorder %s15, 2
    %p113 = por %p111, %p112
    %p115 = scmp.ne.s32.totalorder %s98, %s114
    %p116 = scmp.eq.s32.totalorder %s15, 0
    %p117 = por %p115, %p116
    %s118 = ssub.s32 %s16, %s35
    %s119 = ssub.s32 %s17, %s31
    %s120 = sor.u32 %s118, %s119
    %p121 = scmp.eq.s32.totalorder %s120, 0
    %s123 = sadd.s32 %s122, 1
    %s124 = scalar_select %p121, %s122, %s123
    %p127 = pneg %p121
    %p128 = scmp.eq.s32.totalorder %s9, 2
    %p129 = por %p127, %p128
    %p130 = scmp.ne.s32.totalorder %s122, %s125
    %p131 = scmp.eq.s32.totalorder %s9, 0
    %p132 = por %p130, %p131
    %p133 = scmp.ne.s32.totalorder %s122, %s125
    %p134 = scmp.eq.s32.totalorder %s14, 2
    %p135 = por %p133, %p134
    %p136 = scmp.ne.s32.totalorder %s125, %s126
    %p137 = scmp.eq.s32.totalorder %s14, 0
    %p138 = por %p136, %p137
    %p139 = scmp.ne.s32.totalorder %s125, %s126
    %p140 = scmp.eq.s32.totalorder %s15, 2
    %p141 = por %p139, %p140
    %p143 = scmp.ne.s32.totalorder %s126, %s142
    %p144 = scmp.eq.s32.totalorder %s15, 0
    %p145 = por %p143, %p144
    %p146 = scmp.le.s32.totalorder 1, %s9
    %p147 = scmp.lt.s32.totalorder %s9, 4
    %p148 = pnand %p146, %p147
    %p149 = pneg %p148
    // Predicated region
    $region9: #{image_pair_encoder_v2.4} parent=5 // pred_check
      _
    $region10: #{image_pair_encoder_v2.4} parent=5 // pred_check_branch
      %151 = sbr.rel (%p148) target = $region12
    $region11: #{image_pair_encoder_v2.4} parent=5 // pred_region
      %s152 = ssub.s32 %s9, 1
      // Predicated region
      $region13: #{image_pair_encoder_v2.4} parent=11 // pred_check
        %p153 = pneg %p84
      $region14: #{image_pair_encoder_v2.4} parent=11 // pred_check_branch
        %155 = sbr.rel (%p153) target = $region16
      $region15: #{image_pair_encoder_v2.4} parent=11 // pred_region
        %s156 = smul.u32 32, %s21
        %p157 = scmp.lt.s32.totalorder %s156, 31
        %s158 = scalar_select %p157, %s156, 31
        %p159 = scmp.lt.s32.totalorder %s20, 0
        %s160 = scalar_select %p159, %s20, 0
        %s161 = sadd.s32 %s160, %s158
        %s162 = smul.addr %s161, 4
        %s163 = scalar_lea.vmem %s1, %s162
        %s164 = smul.u32 32, %s21
      $region16: #{image_pair_encoder_v2.4} parent=11 // pred_fallthru
        _
      // Predicated region
      $region17: #{image_pair_encoder_v2.4} parent=11 // pred_check
        %p165 = pneg %p110
      $region18: #{image_pair_encoder_v2.4} parent=11 // pred_check_branch
        %167 = sbr.rel (%p165) target = $region20
      $region19: #{image_pair_encoder_v2.4} parent=11 // pred_region
        %p168 = scmp.lt.s32.totalorder %s20, 0
        %s169 = scalar_select %p168, %s20, 0
        %s170 = scalar_lea.vmem %s2, %s169
      $region20: #{image_pair_encoder_v2.4} parent=11 // pred_fallthru
        _
    $region12: #{image_pair_encoder_v2.4} parent=5 // pred_fallthru
      _
    %p171 = scmp.lt.s32.totalorder %s9, 3
    // Predicated region
    $region21: #{image_pair_encoder_v2.4} parent=5 // pred_check
      %p172 = pneg %p171
    $region22: #{image_pair_encoder_v2.4} parent=5 // pred_check_branch
      %174 = sbr.rel (%p172) target = $region24
    $region23: #{image_pair_encoder_v2.4} parent=5 // pred_region
      // Predicated region
      $region25: #{image_pair_encoder_v2.4} parent=23 // pred_check
        %p175 = pneg %p50
      $region26: #{image_pair_encoder_v2.4} parent=23 // pred_check_branch
        %177 = sbr.rel (%p175) target = $region28
      $region27: #{image_pair_encoder_v2.4} parent=23 // pred_region
        %s178 = smul.u32 75, %s16
        %s179 = smul.u32 2, %s18
        %p180 = scmp.lt.s32.totalorder %s178, 224
        %s181 = scalar_select %p180, %s178, 224
        %p182 = scmp.lt.s32.totalorder %s179, 1
        %s183 = scalar_select %p182, %s179, 1
        %s184 = smul.addr %s181, 2
        %s185 = sadd.s32 %s183, %s184
        %s186 = smul.addr %s185, 4
        %s187 = scalar_lea.vmem %s0, %s186
        %s188 = smul.u32 75, %s16
        %s189 = smul.u32 2, %s18
      $region28: #{image_pair_encoder_v2.4} parent=23 // pred_fallthru
        _
    $region24: #{image_pair_encoder_v2.4} parent=5 // pred_fallthru
      _
    %p190 = scmp.le.s32.totalorder 1, %s9
    %p191 = scmp.lt.s32.totalorder %s9, 4
    %p192 = pnand %p190, %p191
    %p193 = pneg %p192
    // Predicated region
    $region29: #{image_pair_encoder_v2.4} parent=5 // pred_check
      _
    $region30: #{image_pair_encoder_v2.4} parent=5 // pred_check_branch
      %195 = sbr.rel (%p192) target = $region32
    $region31: #{image_pair_encoder_v2.4} parent=5 // pred_region
      %s196 = ssub.s32 %s9, 1
      %s197 = smul.u32 75, %s19
      %s198 = smul.u32 2, %s21
      %p199 = scmp.lt.s32.totalorder %s197, 224
      %s200 = scalar_select %p199, %s197, 224
      %p201 = scmp.lt.s32.totalorder %s198, 1
      %s202 = scalar_select %p201, %s198, 1
      %s203 = smul.addr %s200, 2
      %s204 = sadd.s32 %s202, %s203
      %s205 = smul.addr %s204, 4
      %s206 = scalar_lea.vmem %s0, %s205
      %p207 = pneg %p56
      %p208 = pneg %p53
      %s209 = smul.u32 32, %s21
      %p210 = scmp.lt.s32.totalorder %s209, 31
      %s211 = scalar_select %p210, %s209, 31
      %p212 = scmp.lt.s32.totalorder %s20, 0
      %s213 = scalar_select %p212, %s20, 0
      %s214 = sadd.s32 %s213, %s211
      %s215 = smul.addr %s214, 4
      %s216 = scalar_lea.vmem %s1, %s215
      %p217 = pneg %p84
      %p218 = pneg %p81
      %p219 = scmp.lt.s32.totalorder %s20, 0
      %s220 = scalar_select %p219, %s20, 0
      %s221 = scalar_lea.vmem %s2, %s220
      %p222 = pneg %p110
      %p223 = pneg %p107
      %p224 = pneg %p138
      %p225 = pneg %p135
      %s226 = smul.u32 75, %s19
      %p227 = scmp.lt.s32.totalorder %s226, 224
      %s228 = scalar_select %p227, %s226, 224
      %p229 = scmp.lt.s32.totalorder %s20, 0
      %s230 = scalar_select %p229, %s20, 0
      %s231 = sadd.s32 %s230, %s228
      %s232 = smul.addr %s231, 4
      %s233 = scalar_lea.vmem %s3, %s232
      %s234 = smul.u32 75, %s19
      %s235 = smul.u32 2, %s21
      %p236 = scmp.lt.s32.totalorder %s234, 224
      %s237 = scalar_select %p236, %s234, 224
      %p238 = scmp.lt.s32.totalorder %s235, 1
      %s239 = scalar_select %p238, %s235, 1
      %s240 = smul.addr %s237, 2
      %s241 = sadd.s32 %s239, %s240
      %s242 = smul.addr %s241, 4
      %s243 = scalar_lea.vmem %s0, %s242
      %s244 = smul.u32 75, %s19
      %s245 = smul.u32 2, %s21
      %s246 = smul.u32 32, %s21
      %p247 = scmp.lt.s32.totalorder %s246, 31
      %s248 = scalar_select %p247, %s246, 31
      %p249 = scmp.lt.s32.totalorder %s20, 0
      %s250 = scalar_select %p249, %s20, 0
      %s251 = sadd.s32 %s250, %s248
      %s252 = smul.addr %s251, 4
      %s253 = scalar_lea.vmem %s1, %s252
      %s254 = smul.u32 32, %s21
      %p255 = scmp.lt.s32.totalorder %s20, 0
      %s256 = scalar_select %p255, %s20, 0
      %s257 = scalar_lea.vmem %s2, %s256
      %s258 = smul.u32 75, %s19
      %p259 = scmp.lt.s32.totalorder %s258, 224
      %s260 = scalar_select %p259, %s258, 224
      %p261 = scmp.lt.s32.totalorder %s20, 0
      %s262 = scalar_select %p261, %s20, 0
      %s263 = sadd.s32 %s262, %s260
      %s264 = smul.addr %s263, 4
      %s265 = scalar_lea.vmem %s3, %s264
      %s266 = smul.u32 75, %s19
      %p268 = scmp.eq.s32.totalorder %s21, 0
      // Predicated region
      $region33: #{image_pair_encoder_v2.4} parent=31 // pred_check
        %p269 = pneg %p268
      $region34: #{image_pair_encoder_v2.4} parent=31 // pred_check_branch
        %271 = sbr.rel (%p269) target = $region36
      $region35: #{image_pair_encoder_v2.4} parent=31 // pred_region
        %vm272 = vcmask 523264
        %273 = vst.msk [vmem:[#allocation2] sm:$0xff] %vm272, 0.0
        %274 = vst.msk [vmem:[#allocation2 + $0x8] sm:$0xff] %vm272, 0.0
        %275 = vst.msk [vmem:[#allocation2 + $0x10] sm:$0xff] %vm272, 0.0
        %276 = vst.msk [vmem:[#allocation2 + $0x18] sm:$0xff] %vm272, 0.0
        %277 = vst.msk [vmem:[#allocation2 + $0x20] sm:$0xff] %vm272, 0.0
        %278 = vst.msk [vmem:[#allocation2 + $0x28] sm:$0xff] %vm272, 0.0
        %279 = vst.msk [vmem:[#allocation2 + $0x30] sm:$0xff] %vm272, 0.0
        %280 = vst.msk [vmem:[#allocation2 + $0x38] sm:$0xff] %vm272, 0.0
        %281 = vst.msk [vmem:[#allocation2 + $0x40] sm:$0xff] %vm272, 0.0
        %282 = vst.msk [vmem:[#allocation2 + $0x48] sm:$0xff] %vm272, 0.0
        %283 = vst.msk [vmem:[#allocation2 + $0x50] sm:$0xff] %vm272, 0.0
        %284 = vst.msk [vmem:[#allocation2 + $0x58] sm:$0xff] %vm272, 0.0
        %285 = vst.msk [vmem:[#allocation2 + $0x60] sm:$0xff] %vm272, 0.0
        %286 = vst.msk [vmem:[#allocation2 + $0x68] sm:$0xff] %vm272, 0.0
        %287 = vst.msk [vmem:[#allocation2 + $0x70] sm:$0xff] %vm272, 0.0
        %288 = vst.msk [vmem:[#allocation2 + $0x78] sm:$0xff] %vm272, 0.0
        %289 = vst.msk [vmem:[#allocation2 + $0x80] sm:$0xff] %vm272, 0.0
        %290 = vst.msk [vmem:[#allocation2 + $0x88] sm:$0xff] %vm272, 0.0
        %291 = vst.msk [vmem:[#allocation2 + $0x90] sm:$0xff] %vm272, 0.0
        %292 = vst.msk [vmem:[#allocation2 + $0x98] sm:$0xff] %vm272, 0.0
        %293 = vst.msk [vmem:[#allocation2 + $0xa0] sm:$0xff] %vm272, 0.0
        %294 = vst.msk [vmem:[#allocation2 + $0xa8] sm:$0xff] %vm272, 0.0
        %295 = vst.msk [vmem:[#allocation2 + $0xb0] sm:$0xff] %vm272, 0.0
        %296 = vst.msk [vmem:[#allocation2 + $0xb8] sm:$0xff] %vm272, 0.0
        %297 = vst.msk [vmem:[#allocation2 + $0xc0] sm:$0xff] %vm272, 0.0
        %298 = vst.msk [vmem:[#allocation2 + $0xc8] sm:$0xff] %vm272, 0.0
        %299 = vst.msk [vmem:[#allocation2 + $0xd0] sm:$0xff] %vm272, 0.0
        %300 = vst.msk [vmem:[#allocation2 + $0xd8] sm:$0xff] %vm272, 0.0
        %301 = vst.msk [vmem:[#allocation2 + $0xe0] sm:$0xff] %vm272, 0.0
        %302 = vst.msk [vmem:[#allocation2 + $0xe8] sm:$0xff] %vm272, 0.0
        %303 = vst.msk [vmem:[#allocation2 + $0xf0] sm:$0xff] %vm272, 0.0
        %304 = vst.msk [vmem:[#allocation2 + $0xf8] sm:$0xff] %vm272, 0.0
        %305 = vst.msk [vmem:[#allocation2 + $0x100] sm:$0xff] %vm272, 0.0
        %306 = vst.msk [vmem:[#allocation2 + $0x108] sm:$0xff] %vm272, 0.0
        %307 = vst.msk [vmem:[#allocation2 + $0x110] sm:$0xff] %vm272, 0.0
        %308 = vst.msk [vmem:[#allocation2 + $0x118] sm:$0xff] %vm272, 0.0
        %309 = vst.msk [vmem:[#allocation2 + $0x120] sm:$0xff] %vm272, 0.0
        %310 = vst.msk [vmem:[#allocation2 + $0x128] sm:$0xff] %vm272, 0.0
        %311 = vst.msk [vmem:[#allocation2 + $0x130] sm:$0xff] %vm272, 0.0
        %312 = vst.msk [vmem:[#allocation2 + $0x138] sm:$0xff] %vm272, 0.0
        %313 = vst.msk [vmem:[#allocation2 + $0x140] sm:$0xff] %vm272, 0.0
        %314 = vst.msk [vmem:[#allocation2 + $0x148] sm:$0xff] %vm272, 0.0
        %315 = vst.msk [vmem:[#allocation2 + $0x150] sm:$0xff] %vm272, 0.0
        %316 = vst.msk [vmem:[#allocation2 + $0x158] sm:$0xff] %vm272, 0.0
        %317 = vst.msk [vmem:[#allocation2 + $0x160] sm:$0xff] %vm272, 0.0
        %318 = vst.msk [vmem:[#allocation2 + $0x168] sm:$0xff] %vm272, 0.0
        %319 = vst.msk [vmem:[#allocation2 + $0x170] sm:$0xff] %vm272, 0.0
        %320 = vst.msk [vmem:[#allocation2 + $0x178] sm:$0xff] %vm272, 0.0
        %321 = vst.msk [vmem:[#allocation2 + $0x180] sm:$0xff] %vm272, 0.0
        %322 = vst.msk [vmem:[#allocation2 + $0x188] sm:$0xff] %vm272, 0.0
        %323 = vst.msk [vmem:[#allocation2 + $0x190] sm:$0xff] %vm272, 0.0
        %324 = vst.msk [vmem:[#allocation2 + $0x198] sm:$0xff] %vm272, 0.0
        %325 = vst.msk [vmem:[#allocation2 + $0x1a0] sm:$0xff] %vm272, 0.0
        %326 = vst.msk [vmem:[#allocation2 + $0x1a8] sm:$0xff] %vm272, 0.0
        %327 = vst.msk [vmem:[#allocation2 + $0x1b0] sm:$0xff] %vm272, 0.0
        %328 = vst.msk [vmem:[#allocation2 + $0x1b8] sm:$0xff] %vm272, 0.0
        %329 = vst.msk [vmem:[#allocation2 + $0x1c0] sm:$0xff] %vm272, 0.0
        %330 = vst.msk [vmem:[#allocation2 + $0x1c8] sm:$0xff] %vm272, 0.0
        %331 = vst.msk [vmem:[#allocation2 + $0x1d0] sm:$0xff] %vm272, 0.0
        %332 = vst.msk [vmem:[#allocation2 + $0x1d8] sm:$0xff] %vm272, 0.0
        %333 = vst.msk [vmem:[#allocation2 + $0x1e0] sm:$0xff] %vm272, 0.0
        %334 = vst.msk [vmem:[#allocation2 + $0x1e8] sm:$0xff] %vm272, 0.0
        %335 = vst.msk [vmem:[#allocation2 + $0x1f0] sm:$0xff] %vm272, 0.0
        %336 = vst.msk [vmem:[#allocation2 + $0x1f8] sm:$0xff] %vm272, 0.0
        %337 = vst.msk [vmem:[#allocation2 + $0x200] sm:$0xff] %vm272, 0.0
        %338 = vst.msk [vmem:[#allocation2 + $0x208] sm:$0xff] %vm272, 0.0
        %339 = vst.msk [vmem:[#allocation2 + $0x210] sm:$0xff] %vm272, 0.0
        %340 = vst.msk [vmem:[#allocation2 + $0x218] sm:$0xff] %vm272, 0.0
        %341 = vst.msk [vmem:[#allocation2 + $0x220] sm:$0xff] %vm272, 0.0
        %342 = vst.msk [vmem:[#allocation2 + $0x228] sm:$0xff] %vm272, 0.0
        %343 = vst.msk [vmem:[#allocation2 + $0x230] sm:$0xff] %vm272, 0.0
        %344 = vst.msk [vmem:[#allocation2 + $0x238] sm:$0xff] %vm272, 0.0
        %345 = vst.msk [vmem:[#allocation2 + $0x240] sm:$0xff] %vm272, 0.0
        %346 = vst.msk [vmem:[#allocation2 + $0x248] sm:$0xff] %vm272, 0.0
        %347 = vst.msk [vmem:[#allocation2 + $0x250] sm:$0xff] %vm272, 0.0
      $region36: #{image_pair_encoder_v2.4} parent=31 // pred_fallthru
        _
      %v348 = vld [vmem:[#allocation2] sm:$0xff]
      %v349 = vld [vmem:[#allocation2 + $0x8] sm:$0xff]
      %v350 = vld [vmem:[#allocation2 + $0x10] sm:$0xff]
      %v351 = vld [vmem:[#allocation2 + $0x18] sm:$0xff]
      %v352 = vld [vmem:[#allocation2 + $0x20] sm:$0xff]
      %v353 = vld [vmem:[#allocation2 + $0x28] sm:$0xff]
      %v354 = vld [vmem:[#allocation2 + $0x30] sm:$0xff]
      %v355 = vld [vmem:[#allocation2 + $0x38] sm:$0xff]
      %v356 = vld [vmem:[#allocation2 + $0x40] sm:$0xff]
      %v357 = vld [vmem:[#allocation2 + $0x48] sm:$0xff]
      %v358 = vld [vmem:[#allocation2 + $0x50] sm:$0xff]
      %v359 = vld [vmem:[#allocation2 + $0x58] sm:$0xff]
      %v360 = vld [vmem:[#allocation2 + $0x60] sm:$0xff]
      %v361 = vld [vmem:[#allocation2 + $0x68] sm:$0xff]
      %v362 = vld [vmem:[#allocation2 + $0x70] sm:$0xff]
      %v363 = vld [vmem:[#allocation2 + $0x78] sm:$0xff]
      %v364 = vld [vmem:[#allocation2 + $0x80] sm:$0xff]
      %v365 = vld [vmem:[#allocation2 + $0x88] sm:$0xff]
      %v366 = vld [vmem:[#allocation2 + $0x90] sm:$0xff]
      %v367 = vld [vmem:[#allocation2 + $0x98] sm:$0xff]
      %v368 = vld [vmem:[#allocation2 + $0xa0] sm:$0xff]
      %v369 = vld [vmem:[#allocation2 + $0xa8] sm:$0xff]
      %v370 = vld [vmem:[#allocation2 + $0xb0] sm:$0xff]
      %v371 = vld [vmem:[#allocation2 + $0xb8] sm:$0xff]
      %v372 = vld [vmem:[#allocation2 + $0xc0] sm:$0xff]
      %v373 = vld [vmem:[#allocation2 + $0xc8] sm:$0xff]
      %v374 = vld [vmem:[#allocation2 + $0xd0] sm:$0xff]
      %v375 = vld [vmem:[#allocation2 + $0xd8] sm:$0xff]
      %v376 = vld [vmem:[#allocation2 + $0xe0] sm:$0xff]
      %v377 = vld [vmem:[#allocation2 + $0xe8] sm:$0xff]
      %v378 = vld [vmem:[#allocation2 + $0xf0] sm:$0xff]
      %v379 = vld [vmem:[#allocation2 + $0xf8] sm:$0xff]
      %v380 = vld [vmem:[#allocation2 + $0x100] sm:$0xff]
      %v381 = vld [vmem:[#allocation2 + $0x108] sm:$0xff]
      %v382 = vld [vmem:[#allocation2 + $0x110] sm:$0xff]
      %v383 = vld [vmem:[#allocation2 + $0x118] sm:$0xff]
      %v384 = vld [vmem:[#allocation2 + $0x120] sm:$0xff]
      %v385 = vld [vmem:[#allocation2 + $0x128] sm:$0xff]
      %v386 = vld [vmem:[#allocation2 + $0x130] sm:$0xff]
      %v387 = vld [vmem:[#allocation2 + $0x138] sm:$0xff]
      %v388 = vld [vmem:[#allocation2 + $0x140] sm:$0xff]
      %v389 = vld [vmem:[#allocation2 + $0x148] sm:$0xff]
      %v390 = vld [vmem:[#allocation2 + $0x150] sm:$0xff]
      %v391 = vld [vmem:[#allocation2 + $0x158] sm:$0xff]
      %v392 = vld [vmem:[#allocation2 + $0x160] sm:$0xff]
      %v393 = vld [vmem:[#allocation2 + $0x168] sm:$0xff]
      %v394 = vld [vmem:[#allocation2 + $0x170] sm:$0xff]
      %v395 = vld [vmem:[#allocation2 + $0x178] sm:$0xff]
      %v396 = vld [vmem:[#allocation2 + $0x180] sm:$0xff]
      %v397 = vld [vmem:[#allocation2 + $0x188] sm:$0xff]
      %v398 = vld [vmem:[#allocation2 + $0x190] sm:$0xff]
      %v399 = vld [vmem:[#allocation2 + $0x198] sm:$0xff]
      %v400 = vld [vmem:[#allocation2 + $0x1a0] sm:$0xff]
      %v401 = vld [vmem:[#allocation2 + $0x1a8] sm:$0xff]
      %v402 = vld [vmem:[#allocation2 + $0x1b0] sm:$0xff]
      %v403 = vld [vmem:[#allocation2 + $0x1b8] sm:$0xff]
      %v404 = vld [vmem:[#allocation2 + $0x1c0] sm:$0xff]
      %v405 = vld [vmem:[#allocation2 + $0x1c8] sm:$0xff]
      %v406 = vld [vmem:[#allocation2 + $0x1d0] sm:$0xff]
      %v407 = vld [vmem:[#allocation2 + $0x1d8] sm:$0xff]
      %v408 = vld [vmem:[#allocation2 + $0x1e0] sm:$0xff]
      %v409 = vld [vmem:[#allocation2 + $0x1e8] sm:$0xff]
      %v410 = vld [vmem:[#allocation2 + $0x1f0] sm:$0xff]
      %v411 = vld [vmem:[#allocation2 + $0x1f8] sm:$0xff]
      %v412 = vld [vmem:[#allocation2 + $0x200] sm:$0xff]
      %v413 = vld [vmem:[#allocation2 + $0x208] sm:$0xff]
      %v414 = vld [vmem:[#allocation2 + $0x210] sm:$0xff]
      %v415 = vld [vmem:[#allocation2 + $0x218] sm:$0xff]
      %v416 = vld [vmem:[#allocation2 + $0x220] sm:$0xff]
      %v417 = vld [vmem:[#allocation2 + $0x228] sm:$0xff]
      %v418 = vld [vmem:[#allocation2 + $0x230] sm:$0xff]
      %v419 = vld [vmem:[#allocation2 + $0x238] sm:$0xff]
      %v420 = vld [vmem:[#allocation2 + $0x240] sm:$0xff]
      %v421 = vld [vmem:[#allocation2 + $0x248] sm:$0xff]
      %v422 = vld [vmem:[#allocation2 + $0x250] sm:$0xff]
      %v423 = vld [vmem:[%s243] sm:$0xff]
      %v424 = vld [vmem:[%s243 + $0x8] sm:$0xff]
      %v425 = vld [vmem:[%s243 + $0x10] sm:$0xff]
      %v426 = vld [vmem:[%s243 + $0x18] sm:$0xff]
      %v427 = vld [vmem:[%s243 + $0x20] sm:$0xff]
      %v428 = vld [vmem:[%s243 + $0x28] sm:$0xff]
      %v429 = vld [vmem:[%s243 + $0x30] sm:$0xff]
      %v430 = vld [vmem:[%s243 + $0x38] sm:$0xff]
      %v431 = vld [vmem:[%s243 + $0x40] sm:$0xff]
      %v432 = vld [vmem:[%s243 + $0x48] sm:$0xff]
      %v433 = vld [vmem:[%s243 + $0x50] sm:$0xff]
      %v434 = vld [vmem:[%s243 + $0x58] sm:$0xff]
      %v435 = vld [vmem:[%s243 + $0x60] sm:$0xff]
      %v436 = vld [vmem:[%s243 + $0x68] sm:$0xff]
      %v437 = vld [vmem:[%s243 + $0x70] sm:$0xff]
      %v438 = vld [vmem:[%s243 + $0x78] sm:$0xff]
      %v439 = vld [vmem:[%s243 + $0x80] sm:$0xff]
      %v440 = vld [vmem:[%s243 + $0x88] sm:$0xff]
      %v441 = vld [vmem:[%s243 + $0x90] sm:$0xff]
      %v442 = vld [vmem:[%s243 + $0x98] sm:$0xff]
      %v443 = vld [vmem:[%s243 + $0xa0] sm:$0xff]
      %v444 = vld [vmem:[%s243 + $0xa8] sm:$0xff]
      %v445 = vld [vmem:[%s243 + $0xb0] sm:$0xff]
      %v446 = vld [vmem:[%s243 + $0xb8] sm:$0xff]
      %v447 = vld [vmem:[%s243 + $0xc0] sm:$0xff]
      %v448 = vld [vmem:[%s243 + $0xc8] sm:$0xff]
      %v449 = vld [vmem:[%s243 + $0xd0] sm:$0xff]
      %v450 = vld [vmem:[%s243 + $0xd8] sm:$0xff]
      %v451 = vld [vmem:[%s243 + $0xe0] sm:$0xff]
      %v452 = vld [vmem:[%s243 + $0xe8] sm:$0xff]
      %v453 = vld [vmem:[%s243 + $0xf0] sm:$0xff]
      %v454 = vld [vmem:[%s243 + $0xf8] sm:$0xff]
      %v455 = vld [vmem:[%s243 + $0x100] sm:$0xff]
      %v456 = vld [vmem:[%s243 + $0x108] sm:$0xff]
      %v457 = vld [vmem:[%s243 + $0x110] sm:$0xff]
      %v458 = vld [vmem:[%s243 + $0x118] sm:$0xff]
      %v459 = vld [vmem:[%s243 + $0x120] sm:$0xff]
      %v460 = vld [vmem:[%s243 + $0x128] sm:$0xff]
      %v461 = vld [vmem:[%s243 + $0x130] sm:$0xff]
      %v462 = vld [vmem:[%s243 + $0x138] sm:$0xff]
      %v463 = vld [vmem:[%s243 + $0x140] sm:$0xff]
      %v464 = vld [vmem:[%s243 + $0x148] sm:$0xff]
      %v465 = vld [vmem:[%s243 + $0x150] sm:$0xff]
      %v466 = vld [vmem:[%s243 + $0x158] sm:$0xff]
      %v467 = vld [vmem:[%s243 + $0x160] sm:$0xff]
      %v468 = vld [vmem:[%s243 + $0x168] sm:$0xff]
      %v469 = vld [vmem:[%s243 + $0x170] sm:$0xff]
      %v470 = vld [vmem:[%s243 + $0x178] sm:$0xff]
      %v471 = vld [vmem:[%s243 + $0x180] sm:$0xff]
      %v472 = vld [vmem:[%s243 + $0x188] sm:$0xff]
      %v473 = vld [vmem:[%s243 + $0x190] sm:$0xff]
      %v474 = vld [vmem:[%s243 + $0x198] sm:$0xff]
      %v475 = vld [vmem:[%s243 + $0x1a0] sm:$0xff]
      %v476 = vld [vmem:[%s243 + $0x1a8] sm:$0xff]
      %v477 = vld [vmem:[%s243 + $0x1b0] sm:$0xff]
      %v478 = vld [vmem:[%s243 + $0x1b8] sm:$0xff]
      %v479 = vld [vmem:[%s243 + $0x1c0] sm:$0xff]
      %v480 = vld [vmem:[%s243 + $0x1c8] sm:$0xff]
      %v481 = vld [vmem:[%s243 + $0x1d0] sm:$0xff]
      %v482 = vld [vmem:[%s243 + $0x1d8] sm:$0xff]
      %v483 = vld [vmem:[%s243 + $0x1e0] sm:$0xff]
      %v484 = vld [vmem:[%s243 + $0x1e8] sm:$0xff]
      %v485 = vld [vmem:[%s243 + $0x1f0] sm:$0xff]
      %v486 = vld [vmem:[%s243 + $0x1f8] sm:$0xff]
      %v487 = vld [vmem:[%s243 + $0x200] sm:$0xff]
      %v488 = vld [vmem:[%s243 + $0x208] sm:$0xff]
      %v489 = vld [vmem:[%s243 + $0x210] sm:$0xff]
      %v490 = vld [vmem:[%s243 + $0x218] sm:$0xff]
      %v491 = vld [vmem:[%s243 + $0x220] sm:$0xff]
      %v492 = vld [vmem:[%s243 + $0x228] sm:$0xff]
      %v493 = vld [vmem:[%s243 + $0x230] sm:$0xff]
      %v494 = vld [vmem:[%s243 + $0x238] sm:$0xff]
      %v495 = vld [vmem:[%s243 + $0x240] sm:$0xff]
      %v496 = vld [vmem:[%s243 + $0x248] sm:$0xff]
      %v497 = vld [vmem:[%s243 + $0x250] sm:$0xff]
      %v498 = vld [vmem:[%s253] sm:$0xf]
      %v499 = vld [vmem:[%s253 + $0x4] sm:$0xf]
      %v500 = vld [vmem:[%s253 + $0x8] sm:$0xf]
      %v501 = vld [vmem:[%s253 + $0xc] sm:$0xf]
      %v502 = vld [vmem:[%s253 + $0x10] sm:$0xf]
      %v503 = vld [vmem:[%s253 + $0x14] sm:$0xf]
      %v504 = vld [vmem:[%s253 + $0x18] sm:$0xf]
      %v505 = vld [vmem:[%s253 + $0x1c] sm:$0xf]
      %v506 = vld [vmem:[%s253 + $0x20] sm:$0xf]
      %v507 = vld [vmem:[%s253 + $0x24] sm:$0xf]
      %v508 = vld [vmem:[%s253 + $0x28] sm:$0xf]
      %v509 = vld [vmem:[%s253 + $0x2c] sm:$0xf]
      %v510 = vld [vmem:[%s253 + $0x30] sm:$0xf]
      %v511 = vld [vmem:[%s253 + $0x34] sm:$0xf]
      %v512 = vld [vmem:[%s253 + $0x38] sm:$0xf]
      %v513 = vld [vmem:[%s253 + $0x3c] sm:$0xf]
      %v514 = vld [vmem:[%s253 + $0x40] sm:$0xf]
      %v515 = vld [vmem:[%s253 + $0x44] sm:$0xf]
      %v516 = vld [vmem:[%s253 + $0x48] sm:$0xf]
      %v517 = vld [vmem:[%s253 + $0x4c] sm:$0xf]
      %v518 = vld [vmem:[%s253 + $0x50] sm:$0xf]
      %v519 = vld [vmem:[%s253 + $0x54] sm:$0xf]
      %v520 = vld [vmem:[%s253 + $0x58] sm:$0xf]
      %v521 = vld [vmem:[%s253 + $0x5c] sm:$0xf]
      %v522 = vld [vmem:[%s253 + $0x60] sm:$0xf]
      %v523 = vld [vmem:[%s253 + $0x64] sm:$0xf]
      %v524 = vld [vmem:[%s253 + $0x68] sm:$0xf]
      %v525 = vld [vmem:[%s253 + $0x6c] sm:$0xf]
      %v526 = vld [vmem:[%s253 + $0x70] sm:$0xf]
      %v527 = vld [vmem:[%s253 + $0x74] sm:$0xf]
      %v528 = vld [vmem:[%s253 + $0x78] sm:$0xf]
      %v529 = vld [vmem:[%s253 + $0x7c] sm:$0xf]
      %v605 = vunpack.c.l.b16 %v423
      %v606 = vunpack.c.h.b16 %v423
      %v607 = vunpack.c.l.b16 %v424
      %v608 = vunpack.c.h.b16 %v424
      %v609 = vunpack.c.l.b16 %v425
      %v610 = vunpack.c.h.b16 %v425
      %v611 = vunpack.c.l.b16 %v426
      %v612 = vunpack.c.h.b16 %v426
      %v613 = vunpack.c.l.b16 %v427
      %v614 = vunpack.c.h.b16 %v427
      %v615 = vunpack.c.l.b16 %v428
      %v616 = vunpack.c.h.b16 %v428
      %v617 = vunpack.c.l.b16 %v429
      %v618 = vunpack.c.h.b16 %v429
      %v619 = vunpack.c.l.b16 %v430
      %v620 = vunpack.c.h.b16 %v430
      %v621 = vunpack.c.l.b16 %v431
      %v622 = vunpack.c.h.b16 %v431
      %v623 = vunpack.c.l.b16 %v432
      %v624 = vunpack.c.h.b16 %v432
      %v625 = vunpack.c.l.b16 %v433
      %v626 = vunpack.c.h.b16 %v433
      %v627 = vunpack.c.l.b16 %v434
      %v628 = vunpack.c.h.b16 %v434
      %v629 = vunpack.c.l.b16 %v435
      %v630 = vunpack.c.h.b16 %v435
      %v631 = vunpack.c.l.b16 %v436
      %v632 = vunpack.c.h.b16 %v436
      %v633 = vunpack.c.l.b16 %v437
      %v634 = vunpack.c.h.b16 %v437
      %v635 = vunpack.c.l.b16 %v438
      %v636 = vunpack.c.h.b16 %v438
      %v637 = vunpack.c.l.b16 %v439
      %v638 = vunpack.c.h.b16 %v439
      %v639 = vunpack.c.l.b16 %v440
      %v640 = vunpack.c.h.b16 %v440
      %v641 = vunpack.c.l.b16 %v441
      %v642 = vunpack.c.h.b16 %v441
      %v643 = vunpack.c.l.b16 %v442
      %v644 = vunpack.c.h.b16 %v442
      %v645 = vunpack.c.l.b16 %v443
      %v646 = vunpack.c.h.b16 %v443
      %v647 = vunpack.c.l.b16 %v444
      %v648 = vunpack.c.h.b16 %v444
      %v649 = vunpack.c.l.b16 %v445
      %v650 = vunpack.c.h.b16 %v445
      %v651 = vunpack.c.l.b16 %v446
      %v652 = vunpack.c.h.b16 %v446
      %v653 = vunpack.c.l.b16 %v447
      %v654 = vunpack.c.h.b16 %v447
      %v655 = vunpack.c.l.b16 %v448
      %v656 = vunpack.c.h.b16 %v448
      %v657 = vunpack.c.l.b16 %v449
      %v658 = vunpack.c.h.b16 %v449
      %v659 = vunpack.c.l.b16 %v450
      %v660 = vunpack.c.h.b16 %v450
      %v661 = vunpack.c.l.b16 %v451
      %v662 = vunpack.c.h.b16 %v451
      %v663 = vunpack.c.l.b16 %v452
      %v664 = vunpack.c.h.b16 %v452
      %v665 = vunpack.c.l.b16 %v453
      %v666 = vunpack.c.h.b16 %v453
      %v667 = vunpack.c.l.b16 %v454
      %v668 = vunpack.c.h.b16 %v454
      %v669 = vunpack.c.l.b16 %v455
      %v670 = vunpack.c.h.b16 %v455
      %v671 = vunpack.c.l.b16 %v456
      %v672 = vunpack.c.h.b16 %v456
      %v673 = vunpack.c.l.b16 %v457
      %v674 = vunpack.c.h.b16 %v457
      %v675 = vunpack.c.l.b16 %v458
      %v676 = vunpack.c.h.b16 %v458
      %v677 = vunpack.c.l.b16 %v459
      %v678 = vunpack.c.h.b16 %v459
      %v679 = vunpack.c.l.b16 %v460
      %v680 = vunpack.c.h.b16 %v460
      %v681 = vunpack.c.l.b16 %v461
      %v682 = vunpack.c.h.b16 %v461
      %v683 = vunpack.c.l.b16 %v462
      %v684 = vunpack.c.h.b16 %v462
      %v685 = vunpack.c.l.b16 %v463
      %v686 = vunpack.c.h.b16 %v463
      %v687 = vunpack.c.l.b16 %v464
      %v688 = vunpack.c.h.b16 %v464
      %v689 = vunpack.c.l.b16 %v465
      %v690 = vunpack.c.h.b16 %v465
      %v691 = vunpack.c.l.b16 %v466
      %v692 = vunpack.c.h.b16 %v466
      %v693 = vunpack.c.l.b16 %v467
      %v694 = vunpack.c.h.b16 %v467
      %v695 = vunpack.c.l.b16 %v468
      %v696 = vunpack.c.h.b16 %v468
      %v697 = vunpack.c.l.b16 %v469
      %v698 = vunpack.c.h.b16 %v469
      %v699 = vunpack.c.l.b16 %v470
      %v700 = vunpack.c.h.b16 %v470
      %v701 = vunpack.c.l.b16 %v471
      %v702 = vunpack.c.h.b16 %v471
      %v703 = vunpack.c.l.b16 %v472
      %v704 = vunpack.c.h.b16 %v472
      %v705 = vunpack.c.l.b16 %v473
      %v706 = vunpack.c.h.b16 %v473
      %v707 = vunpack.c.l.b16 %v474
      %v708 = vunpack.c.h.b16 %v474
      %v709 = vunpack.c.l.b16 %v475
      %v710 = vunpack.c.h.b16 %v475
      %v711 = vunpack.c.l.b16 %v476
      %v712 = vunpack.c.h.b16 %v476
      %v713 = vunpack.c.l.b16 %v477
      %v714 = vunpack.c.h.b16 %v477
      %v715 = vunpack.c.l.b16 %v478
      %v716 = vunpack.c.h.b16 %v478
      %v717 = vunpack.c.l.b16 %v479
      %v718 = vunpack.c.h.b16 %v479
      %v719 = vunpack.c.l.b16 %v480
      %v720 = vunpack.c.h.b16 %v480
      %v721 = vunpack.c.l.b16 %v481
      %v722 = vunpack.c.h.b16 %v481
      %v723 = vunpack.c.l.b16 %v482
      %v724 = vunpack.c.h.b16 %v482
      %v725 = vunpack.c.l.b16 %v483
      %v726 = vunpack.c.h.b16 %v483
      %v727 = vunpack.c.l.b16 %v484
      %v728 = vunpack.c.h.b16 %v484
      %v729 = vunpack.c.l.b16 %v485
      %v730 = vunpack.c.h.b16 %v485
      %v731 = vunpack.c.l.b16 %v486
      %v732 = vunpack.c.h.b16 %v486
      %v733 = vunpack.c.l.b16 %v487
      %v734 = vunpack.c.h.b16 %v487
      %v735 = vunpack.c.l.b16 %v488
      %v736 = vunpack.c.h.b16 %v488
      %v737 = vunpack.c.l.b16 %v489
      %v738 = vunpack.c.h.b16 %v489
      %v739 = vunpack.c.l.b16 %v490
      %v740 = vunpack.c.h.b16 %v490
      %v741 = vunpack.c.l.b16 %v491
      %v742 = vunpack.c.h.b16 %v491
      %v743 = vunpack.c.l.b16 %v492
      %v744 = vunpack.c.h.b16 %v492
      %v745 = vunpack.c.l.b16 %v493
      %v746 = vunpack.c.h.b16 %v493
      %v747 = vunpack.c.l.b16 %v494
      %v748 = vunpack.c.h.b16 %v494
      %v749 = vunpack.c.l.b16 %v495
      %v750 = vunpack.c.h.b16 %v495
      %v751 = vunpack.c.l.b16 %v496
      %v752 = vunpack.c.h.b16 %v496
      %v753 = vunpack.c.l.b16 %v497
      %v754 = vunpack.c.h.b16 %v497
      %v755 = vpack.c.b16 %v607, %v605
      %v756 = vpack.c.b16 %v608, %v606
      %v757 = vpack.c.b16 %v611, %v609
      %v758 = vpack.c.b16 %v612, %v610
      %v759 = vpack.c.b16 %v615, %v613
      %v760 = vpack.c.b16 %v616, %v614
      %v761 = vpack.c.b16 %v619, %v617
      %v762 = vpack.c.b16 %v620, %v618
      %v763 = vpack.c.b16 %v623, %v621
      %v764 = vpack.c.b16 %v624, %v622
      %v765 = vpack.c.b16 %v627, %v625
      %v766 = vpack.c.b16 %v628, %v626
      %v767 = vpack.c.b16 %v631, %v629
      %v768 = vpack.c.b16 %v632, %v630
      %v769 = vpack.c.b16 %v635, %v633
      %v770 = vpack.c.b16 %v636, %v634
      %v771 = vpack.c.b16 %v639, %v637
      %v772 = vpack.c.b16 %v640, %v638
      %v773 = vpack.c.b16 %v643, %v641
      %v774 = vpack.c.b16 %v644, %v642
      %v775 = vpack.c.b16 %v647, %v645
      %v776 = vpack.c.b16 %v648, %v646
      %v777 = vpack.c.b16 %v651, %v649
      %v778 = vpack.c.b16 %v652, %v650
      %v779 = vpack.c.b16 %v655, %v653
      %v780 = vpack.c.b16 %v656, %v654
      %v781 = vpack.c.b16 %v659, %v657
      %v782 = vpack.c.b16 %v660, %v658
      %v783 = vpack.c.b16 %v663, %v661
      %v784 = vpack.c.b16 %v664, %v662
      %v785 = vpack.c.b16 %v667, %v665
      %v786 = vpack.c.b16 %v668, %v666
      %v787 = vpack.c.b16 %v671, %v669
      %v788 = vpack.c.b16 %v672, %v670
      %v789 = vpack.c.b16 %v675, %v673
      %v790 = vpack.c.b16 %v676, %v674
      %v791 = vpack.c.b16 %v679, %v677
      %v792 = vpack.c.b16 %v680, %v678
      %v793 = vpack.c.b16 %v683, %v681
      %v794 = vpack.c.b16 %v684, %v682
      %v795 = vpack.c.b16 %v687, %v685
      %v796 = vpack.c.b16 %v688, %v686
      %v797 = vpack.c.b16 %v691, %v689
      %v798 = vpack.c.b16 %v692, %v690
      %v799 = vpack.c.b16 %v695, %v693
      %v800 = vpack.c.b16 %v696, %v694
      %v801 = vpack.c.b16 %v699, %v697
      %v802 = vpack.c.b16 %v700, %v698
      %v803 = vpack.c.b16 %v703, %v701
      %v804 = vpack.c.b16 %v704, %v702
      %v805 = vpack.c.b16 %v707, %v705
      %v806 = vpack.c.b16 %v708, %v706
      %v807 = vpack.c.b16 %v711, %v709
      %v808 = vpack.c.b16 %v712, %v710
      %v809 = vpack.c.b16 %v715, %v713
      %v810 = vpack.c.b16 %v716, %v714
      %v811 = vpack.c.b16 %v719, %v717
      %v812 = vpack.c.b16 %v720, %v718
      %v813 = vpack.c.b16 %v723, %v721
      %v814 = vpack.c.b16 %v724, %v722
      %v815 = vpack.c.b16 %v727, %v725
      %v816 = vpack.c.b16 %v728, %v726
      %v817 = vpack.c.b16 %v731, %v729
      %v818 = vpack.c.b16 %v732, %v730
      %v819 = vpack.c.b16 %v735, %v733
      %v820 = vpack.c.b16 %v736, %v734
      %v821 = vpack.c.b16 %v739, %v737
      %v822 = vpack.c.b16 %v740, %v738
      %v823 = vpack.c.b16 %v743, %v741
      %v824 = vpack.c.b16 %v744, %v742
      %v825 = vpack.c.b16 %v747, %v745
      %v826 = vpack.c.b16 %v748, %v746
      %v827 = vpack.c.b16 %v751, %v749
      %v828 = vpack.c.b16 %v752, %v750
      %v829 = vpack.c.b16 %v753, %v753
      %v830 = vpack.c.b16 %v754, %v754
      %v939 = vunpack.c.l.b16 %v498
      %v940 = vunpack.c.l.b16 %v499
      %v941 = vunpack.c.l.b16 %v500
      %v942 = vunpack.c.l.b16 %v501
      %v943 = vunpack.c.l.b16 %v502
      %v944 = vunpack.c.l.b16 %v503
      %v945 = vunpack.c.l.b16 %v504
      %v946 = vunpack.c.l.b16 %v505
      %v947 = vunpack.c.l.b16 %v506
      %v948 = vunpack.c.l.b16 %v507
      %v949 = vunpack.c.l.b16 %v508
      %v950 = vunpack.c.l.b16 %v509
      %v951 = vunpack.c.l.b16 %v510
      %v952 = vunpack.c.l.b16 %v511
      %v953 = vunpack.c.l.b16 %v512
      %v954 = vunpack.c.l.b16 %v513
      %v955 = vunpack.c.l.b16 %v514
      %v956 = vunpack.c.l.b16 %v515
      %v957 = vunpack.c.l.b16 %v516
      %v958 = vunpack.c.l.b16 %v517
      %v959 = vunpack.c.l.b16 %v518
      %v960 = vunpack.c.l.b16 %v519
      %v961 = vunpack.c.l.b16 %v520
      %v962 = vunpack.c.l.b16 %v521
      %v963 = vunpack.c.l.b16 %v522
      %v964 = vunpack.c.l.b16 %v523
      %v965 = vunpack.c.l.b16 %v524
      %v966 = vunpack.c.l.b16 %v525
      %v967 = vunpack.c.l.b16 %v526
      %v968 = vunpack.c.l.b16 %v527
      %v969 = vunpack.c.l.b16 %v528
      %v970 = vunpack.c.l.b16 %v529
      %v971 = vpack.c.b16 %v940, %v939
      %v972 = vpack.c.b16 %v942, %v941
      %v973 = vpack.c.b16 %v944, %v943
      %v974 = vpack.c.b16 %v946, %v945
      %v975 = vpack.c.b16 %v948, %v947
      %v976 = vpack.c.b16 %v950, %v949
      %v977 = vpack.c.b16 %v952, %v951
      %v978 = vpack.c.b16 %v954, %v953
      %v979 = vpack.c.b16 %v956, %v955
      %v980 = vpack.c.b16 %v958, %v957
      %v981 = vpack.c.b16 %v960, %v959
      %v982 = vpack.c.b16 %v962, %v961
      %v983 = vpack.c.b16 %v964, %v963
      %v984 = vpack.c.b16 %v966, %v965
      %v985 = vpack.c.b16 %v968, %v967
      %v986 = vpack.c.b16 %v970, %v969
      %1003 = vmatprep.subr.bf16.mxu0 0
      %1004 = vmatpush1.bf16.msra.mxu0 %v971
      %1005 = vmatprep.subr.bf16.mxu0 0
      %1006 = vmatpush1.bf16.msra.mxu0 %v972
      %1007 = vmatprep.subr.bf16.mxu0 0
      %1008 = vmatpush1.bf16.msra.mxu0 %v973
      %1009 = vmatprep.subr.bf16.mxu0 0
      %1010 = vmatpush1.bf16.msra.mxu0 %v974
      %1011 = vmatprep.subr.bf16.mxu0 0
      %1012 = vmatpush1.bf16.msra.mxu0 %v975
      %1013 = vmatprep.subr.bf16.mxu0 0
      %1014 = vmatpush1.bf16.msra.mxu0 %v976
      %1015 = vmatprep.subr.bf16.mxu0 0
      %1016 = vmatpush1.bf16.msra.mxu0 %v977
      %1017 = vmatprep.subr.bf16.mxu0 0
      %1018 = vmatpush1.bf16.msra.mxu0 %v978
      %1019 = vmatprep.subr.bf16.mxu0 0
      %1020 = vmatpush1.bf16.msra.mxu0 %v979
      %1021 = vmatprep.subr.bf16.mxu0 0
      %1022 = vmatpush1.bf16.msra.mxu0 %v980
      %1023 = vmatprep.subr.bf16.mxu0 0
      %1024 = vmatpush1.bf16.msra.mxu0 %v981
      %1025 = vmatprep.subr.bf16.mxu0 0
      %1026 = vmatpush1.bf16.msra.mxu0 %v982
      %1027 = vmatprep.subr.bf16.mxu0 0
      %1028 = vmatpush1.bf16.msra.mxu0 %v983
      %1029 = vmatprep.subr.bf16.mxu0 0
      %1030 = vmatpush1.bf16.msra.mxu0 %v984
      %1031 = vmatprep.subr.bf16.mxu0 0
      %1032 = vmatpush1.bf16.msra.mxu0 %v985
      %1033 = vmatprep.subr.bf16.mxu0 0
      %1034 = vmatpush1.bf16.msra.mxu0 %v986
      %1035 = vmatprep.mubr.bf16.mxu0 %v756
      %1036 = vmatmul.mubr.bf16.gmra.mrb[0].mxu0 %v755
      %v1037 = vpop.f32.mrb[0].mxu0
      %v1038 = vadd.f32 0.0, %v1037
      %v1039 = vpop.f32.mrb[0].mxu0
      %v1040 = vpop.f32.mrb[0].mxu0
      %v1041 = vadd.f32 0.0, %v1040
      %v1042 = vpop.f32.mrb[0].mxu0
      %1043 = vmatprep.mubr.bf16.mxu0 %v758
      %1044 = vmatmul.mubr.bf16.gmra.mrb[0].mxu0 %v757
      %v1045 = vpop.f32.mrb[0].mxu0
      %v1046 = vadd.f32 0.0, %v1045
      %v1047 = vpop.f32.mrb[0].mxu0
      %v1048 = vpop.f32.mrb[0].mxu0
      %v1049 = vadd.f32 0.0, %v1048
      %v1050 = vpop.f32.mrb[0].mxu0
      %1051 = vmatprep.mubr.bf16.mxu0 %v760
      %1052 = vmatmul.mubr.bf16.gmra.mrb[0].mxu0 %v759
      %v1053 = vpop.f32.mrb[0].mxu0
      %v1054 = vadd.f32 0.0, %v1053
      %v1055 = vpop.f32.mrb[0].mxu0
      %v1056 = vpop.f32.mrb[0].mxu0
      %v1057 = vadd.f32 0.0, %v1056
      %v1058 = vpop.f32.mrb[0].mxu0
      %1059 = vmatprep.mubr.bf16.mxu0 %v762
      %1060 = vmatmul.mubr.bf16.gmra.mrb[0].mxu0 %v761
      %v1061 = vpop.f32.mrb[0].mxu0
      %v1062 = vadd.f32 0.0, %v1061
      %v1063 = vpop.f32.mrb[0].mxu0
      %v1064 = vpop.f32.mrb[0].mxu0
      %v1065 = vadd.f32 0.0, %v1064
      %v1066 = vpop.f32.mrb[0].mxu0
      %1067 = vmatprep.mubr.bf16.mxu0 %v764
      %1068 = vmatmul.mubr.bf16.gmra.mrb[0].mxu0 %v763
      %v1069 = vpop.f32.mrb[0].mxu0
      %v1070 = vadd.f32 0.0, %v1069
      %v1071 = vpop.f32.mrb[0].mxu0
      %v1072 = vpop.f32.mrb[0].mxu0
      %v1073 = vadd.f32 0.0, %v1072
      %v1074 = vpop.f32.mrb[0].mxu0
      %1075 = vmatprep.mubr.bf16.mxu0 %v766
      %1076 = vmatmul.mubr.bf16.gmra.mrb[0].mxu0 %v765
      %v1077 = vpop.f32.mrb[0].mxu0
      %v1078 = vadd.f32 0.0, %v1077
      %v1079 = vpop.f32.mrb[0].mxu0
      %v1080 = vpop.f32.mrb[0].mxu0
      %v1081 = vadd.f32 0.0, %v1080
      %v1082 = vpop.f32.mrb[0].mxu0
      %1083 = vmatprep.mubr.bf16.mxu0 %v768
      %1084 = vmatmul.mubr.bf16.gmra.mrb[0].mxu0 %v767
      %v1085 = vpop.f32.mrb[0].mxu0
      %v1086 = vadd.f32 0.0, %v1085
      %v1087 = vpop.f32.mrb[0].mxu0
      %v1088 = vpop.f32.mrb[0].mxu0
      %v1089 = vadd.f32 0.0, %v1088
      %v1090 = vpop.f32.mrb[0].mxu0
      %1091 = vmatprep.mubr.bf16.mxu0 %v770
      %1092 = vmatmul.mubr.bf16.gmra.mrb[0].mxu0 %v769
      %v1093 = vpop.f32.mrb[0].mxu0
      %v1094 = vadd.f32 0.0, %v1093
      %v1095 = vpop.f32.mrb[0].mxu0
      %v1096 = vpop.f32.mrb[0].mxu0
      %v1097 = vadd.f32 0.0, %v1096
      %v1098 = vpop.f32.mrb[0].mxu0
      %1099 = vmatprep.mubr.bf16.mxu0 %v772
      %1100 = vmatmul.mubr.bf16.gmra.mrb[0].mxu0 %v771
      %v1101 = vpop.f32.mrb[0].mxu0
      %v1102 = vadd.f32 0.0, %v1101
      %v1103 = vpop.f32.mrb[0].mxu0
      %v1104 = vpop.f32.mrb[0].mxu0
      %v1105 = vadd.f32 0.0, %v1104
      %v1106 = vpop.f32.mrb[0].mxu0
      %1107 = vmatprep.mubr.bf16.mxu0 %v774
      %1108 = vmatmul.mubr.bf16.gmra.mrb[0].mxu0 %v773
      %v1109 = vpop.f32.mrb[0].mxu0
      %v1110 = vadd.f32 0.0, %v1109
      %v1111 = vpop.f32.mrb[0].mxu0
      %v1112 = vpop.f32.mrb[0].mxu0
      %v1113 = vadd.f32 0.0, %v1112
      %v1114 = vpop.f32.mrb[0].mxu0
      %1115 = vmatprep.mubr.bf16.mxu0 %v776
      %1116 = vmatmul.mubr.bf16.gmra.mrb[0].mxu0 %v775
      %v1117 = vpop.f32.mrb[0].mxu0
      %v1118 = vadd.f32 0.0, %v1117
      %v1119 = vpop.f32.mrb[0].mxu0
      %v1120 = vpop.f32.mrb[0].mxu0
      %v1121 = vadd.f32 0.0, %v1120
      %v1122 = vpop.f32.mrb[0].mxu0
      %1123 = vmatprep.mubr.bf16.mxu0 %v778
      %1124 = vmatmul.mubr.bf16.gmra.mrb[0].mxu0 %v777
      %v1125 = vpop.f32.mrb[0].mxu0
      %v1126 = vadd.f32 0.0, %v1125
      %v1127 = vpop.f32.mrb[0].mxu0
      %v1128 = vpop.f32.mrb[0].mxu0
      %v1129 = vadd.f32 0.0, %v1128
      %v1130 = vpop.f32.mrb[0].mxu0
      %1131 = vmatprep.mubr.bf16.mxu0 %v780
      %1132 = vmatmul.mubr.bf16.gmra.mrb[0].mxu0 %v779
      %v1133 = vpop.f32.mrb[0].mxu0
      %v1134 = vadd.f32 0.0, %v1133
      %v1135 = vpop.f32.mrb[0].mxu0
      %v1136 = vpop.f32.mrb[0].mxu0
      %v1137 = vadd.f32 0.0, %v1136
      %v1138 = vpop.f32.mrb[0].mxu0
      %1139 = vmatprep.mubr.bf16.mxu0 %v782
      %1140 = vmatmul.mubr.bf16.gmra.mrb[0].mxu0 %v781
      %v1141 = vpop.f32.mrb[0].mxu0
      %v1142 = vadd.f32 0.0, %v1141
      %v1143 = vpop.f32.mrb[0].mxu0
      %v1144 = vpop.f32.mrb[0].mxu0
      %v1145 = vadd.f32 0.0, %v1144
      %v1146 = vpop.f32.mrb[0].mxu0
      %1147 = vmatprep.mubr.bf16.mxu0 %v784
      %1148 = vmatmul.mubr.bf16.gmra.mrb[0].mxu0 %v783
      %v1149 = vpop.f32.mrb[0].mxu0
      %v1150 = vadd.f32 0.0, %v1149
      %v1151 = vpop.f32.mrb[0].mxu0
      %v1152 = vpop.f32.mrb[0].mxu0
      %v1153 = vadd.f32 0.0, %v1152
      %v1154 = vpop.f32.mrb[0].mxu0
      %1155 = vmatprep.mubr.bf16.mxu0 %v786
      %1156 = vmatmul.mubr.bf16.gmra.mrb[0].mxu0 %v785
      %v1157 = vpop.f32.mrb[0].mxu0
      %v1158 = vadd.f32 0.0, %v1157
      %v1159 = vpop.f32.mrb[0].mxu0
      %v1160 = vpop.f32.mrb[0].mxu0
      %v1161 = vadd.f32 0.0, %v1160
      %v1162 = vpop.f32.mrb[0].mxu0
      %1163 = vmatprep.mubr.bf16.mxu0 %v788
      %1164 = vmatmul.mubr.bf16.gmra.mrb[0].mxu0 %v787
      %v1165 = vpop.f32.mrb[0].mxu0
      %v1166 = vadd.f32 0.0, %v1165
      %v1167 = vpop.f32.mrb[0].mxu0
      %v1168 = vpop.f32.mrb[0].mxu0
      %v1169 = vadd.f32 0.0, %v1168
      %v1170 = vpop.f32.mrb[0].mxu0
      %1171 = vmatprep.mubr.bf16.mxu0 %v790
      %1172 = vmatmul.mubr.bf16.gmra.mrb[0].mxu0 %v789
      %v1173 = vpop.f32.mrb[0].mxu0
      %v1174 = vadd.f32 0.0, %v1173
      %v1175 = vpop.f32.mrb[0].mxu0
      %v1176 = vpop.f32.mrb[0].mxu0
      %v1177 = vadd.f32 0.0, %v1176
      %v1178 = vpop.f32.mrb[0].mxu0
      %1179 = vmatprep.mubr.bf16.mxu0 %v792
      %1180 = vmatmul.mubr.bf16.gmra.mrb[0].mxu0 %v791
      %v1181 = vpop.f32.mrb[0].mxu0
      %v1182 = vadd.f32 0.0, %v1181
      %v1183 = vpop.f32.mrb[0].mxu0
      %v1184 = vpop.f32.mrb[0].mxu0
      %v1185 = vadd.f32 0.0, %v1184
      %v1186 = vpop.f32.mrb[0].mxu0
      %1187 = vmatprep.mubr.bf16.mxu0 %v794
      %1188 = vmatmul.mubr.bf16.gmra.mrb[0].mxu0 %v793
      %v1189 = vpop.f32.mrb[0].mxu0
      %v1190 = vadd.f32 0.0, %v1189
      %v1191 = vpop.f32.mrb[0].mxu0
      %v1192 = vpop.f32.mrb[0].mxu0
      %v1193 = vadd.f32 0.0, %v1192
      %v1194 = vpop.f32.mrb[0].mxu0
      %1195 = vmatprep.mubr.bf16.mxu0 %v796
      %1196 = vmatmul.mubr.bf16.gmra.mrb[0].mxu0 %v795
      %v1197 = vpop.f32.mrb[0].mxu0
      %v1198 = vadd.f32 0.0, %v1197
      %v1199 = vpop.f32.mrb[0].mxu0
      %v1200 = vpop.f32.mrb[0].mxu0
      %v1201 = vadd.f32 0.0, %v1200
      %v1202 = vpop.f32.mrb[0].mxu0
      %1203 = vmatprep.mubr.bf16.mxu0 %v798
      %1204 = vmatmul.mubr.bf16.gmra.mrb[0].mxu0 %v797
      %v1205 = vpop.f32.mrb[0].mxu0
      %v1206 = vadd.f32 0.0, %v1205
      %v1207 = vpop.f32.mrb[0].mxu0
      %v1208 = vpop.f32.mrb[0].mxu0
      %v1209 = vadd.f32 0.0, %v1208
      %v1210 = vpop.f32.mrb[0].mxu0
      %1211 = vmatprep.mubr.bf16.mxu0 %v800
      %1212 = vmatmul.mubr.bf16.gmra.mrb[0].mxu0 %v799
      %v1213 = vpop.f32.mrb[0].mxu0
      %v1214 = vadd.f32 0.0, %v1213
      %v1215 = vpop.f32.mrb[0].mxu0
      %v1216 = vpop.f32.mrb[0].mxu0
      %v1217 = vadd.f32 0.0, %v1216
      %v1218 = vpop.f32.mrb[0].mxu0
      %1219 = vmatprep.mubr.bf16.mxu0 %v802
      %1220 = vmatmul.mubr.bf16.gmra.mrb[0].mxu0 %v801
      %v1221 = vpop.f32.mrb[0].mxu0
      %v1222 = vadd.f32 0.0, %v1221
      %v1223 = vpop.f32.mrb[0].mxu0
      %v1224 = vpop.f32.mrb[0].mxu0
      %v1225 = vadd.f32 0.0, %v1224
      %v1226 = vpop.f32.mrb[0].mxu0
      %1227 = vmatprep.mubr.bf16.mxu0 %v804
      %1228 = vmatmul.mubr.bf16.gmra.mrb[0].mxu0 %v803
      %v1229 = vpop.f32.mrb[0].mxu0
      %v1230 = vadd.f32 0.0, %v1229
      %v1231 = vpop.f32.mrb[0].mxu0
      %v1232 = vpop.f32.mrb[0].mxu0
      %v1233 = vadd.f32 0.0, %v1232
      %v1234 = vpop.f32.mrb[0].mxu0
      %1235 = vmatprep.mubr.bf16.mxu0 %v806
      %1236 = vmatmul.mubr.bf16.gmra.mrb[0].mxu0 %v805
      %v1237 = vpop.f32.mrb[0].mxu0
      %v1238 = vadd.f32 0.0, %v1237
      %v1239 = vpop.f32.mrb[0].mxu0
      %v1240 = vpop.f32.mrb[0].mxu0
      %v1241 = vadd.f32 0.0, %v1240
      %v1242 = vpop.f32.mrb[0].mxu0
      %1243 = vmatprep.mubr.bf16.mxu0 %v808
      %1244 = vmatmul.mubr.bf16.gmra.mrb[0].mxu0 %v807
      %v1245 = vpop.f32.mrb[0].mxu0
      %v1246 = vadd.f32 0.0, %v1245
      %v1247 = vpop.f32.mrb[0].mxu0
      %v1248 = vpop.f32.mrb[0].mxu0
      %v1249 = vadd.f32 0.0, %v1248
      %v1250 = vpop.f32.mrb[0].mxu0
      %1251 = vmatprep.mubr.bf16.mxu0 %v810
      %1252 = vmatmul.mubr.bf16.gmra.mrb[0].mxu0 %v809
      %v1253 = vpop.f32.mrb[0].mxu0
      %v1254 = vadd.f32 0.0, %v1253
      %v1255 = vpop.f32.mrb[0].mxu0
      %v1256 = vpop.f32.mrb[0].mxu0
      %v1257 = vadd.f32 0.0, %v1256
      %v1258 = vpop.f32.mrb[0].mxu0
      %1259 = vmatprep.mubr.bf16.mxu0 %v812
      %1260 = vmatmul.mubr.bf16.gmra.mrb[0].mxu0 %v811
      %v1261 = vpop.f32.mrb[0].mxu0
      %v1262 = vadd.f32 0.0, %v1261
      %v1263 = vpop.f32.mrb[0].mxu0
      %v1264 = vpop.f32.mrb[0].mxu0
      %v1265 = vadd.f32 0.0, %v1264
      %v1266 = vpop.f32.mrb[0].mxu0
      %1267 = vmatprep.mubr.bf16.mxu0 %v814
      %1268 = vmatmul.mubr.bf16.gmra.mrb[0].mxu0 %v813
      %v1269 = vpop.f32.mrb[0].mxu0
      %v1270 = vadd.f32 0.0, %v1269
      %v1271 = vpop.f32.mrb[0].mxu0
      %v1272 = vpop.f32.mrb[0].mxu0
      %v1273 = vadd.f32 0.0, %v1272
      %v1274 = vpop.f32.mrb[0].mxu0
      %1275 = vmatprep.mubr.bf16.mxu0 %v816
      %1276 = vmatmul.mubr.bf16.gmra.mrb[0].mxu0 %v815
      %v1277 = vpop.f32.mrb[0].mxu0
      %v1278 = vadd.f32 0.0, %v1277
      %v1279 = vpop.f32.mrb[0].mxu0
      %v1280 = vpop.f32.mrb[0].mxu0
      %v1281 = vadd.f32 0.0, %v1280
      %v1282 = vpop.f32.mrb[0].mxu0
      %1283 = vmatprep.mubr.bf16.mxu0 %v818
      %1284 = vmatmul.mubr.bf16.gmra.mrb[0].mxu0 %v817
      %v1285 = vpop.f32.mrb[0].mxu0
      %v1286 = vadd.f32 0.0, %v1285
      %v1287 = vpop.f32.mrb[0].mxu0
      %v1288 = vpop.f32.mrb[0].mxu0
      %v1289 = vadd.f32 0.0, %v1288
      %v1290 = vpop.f32.mrb[0].mxu0
      %1291 = vmatprep.mubr.bf16.mxu0 %v820
      %1292 = vmatmul.mubr.bf16.gmra.mrb[0].mxu0 %v819
      %v1293 = vpop.f32.mrb[0].mxu0
      %v1294 = vadd.f32 0.0, %v1293
      %v1295 = vpop.f32.mrb[0].mxu0
      %v1296 = vpop.f32.mrb[0].mxu0
      %v1297 = vadd.f32 0.0, %v1296
      %v1298 = vpop.f32.mrb[0].mxu0
      %1299 = vmatprep.mubr.bf16.mxu0 %v822
      %1300 = vmatmul.mubr.bf16.gmra.mrb[0].mxu0 %v821
      %v1301 = vpop.f32.mrb[0].mxu0
      %v1302 = vadd.f32 0.0, %v1301
      %v1303 = vpop.f32.mrb[0].mxu0
      %v1304 = vpop.f32.mrb[0].mxu0
      %v1305 = vadd.f32 0.0, %v1304
      %v1306 = vpop.f32.mrb[0].mxu0
      %1307 = vmatprep.mubr.bf16.mxu0 %v824
      %1308 = vmatmul.mubr.bf16.gmra.mrb[0].mxu0 %v823
      %v1309 = vpop.f32.mrb[0].mxu0
      %v1310 = vadd.f32 0.0, %v1309
      %v1311 = vpop.f32.mrb[0].mxu0
      %v1312 = vpop.f32.mrb[0].mxu0
      %v1313 = vadd.f32 0.0, %v1312
      %v1314 = vpop.f32.mrb[0].mxu0
      %1315 = vmatprep.mubr.bf16.mxu0 %v826
      %1316 = vmatmul.mubr.bf16.gmra.mrb[0].mxu0 %v825
      %v1317 = vpop.f32.mrb[0].mxu0
      %v1318 = vadd.f32 0.0, %v1317
      %v1319 = vpop.f32.mrb[0].mxu0
      %v1320 = vpop.f32.mrb[0].mxu0
      %v1321 = vadd.f32 0.0, %v1320
      %v1322 = vpop.f32.mrb[0].mxu0
      %1323 = vmatprep.mubr.bf16.mxu0 %v828
      %1324 = vmatmul.mubr.bf16.gmra.mrb[0].mxu0 %v827
      %v1325 = vpop.f32.mrb[0].mxu0
      %v1326 = vadd.f32 0.0, %v1325
      %v1327 = vpop.f32.mrb[0].mxu0
      %v1328 = vpop.f32.mrb[0].mxu0
      %v1329 = vadd.f32 0.0, %v1328
      %v1330 = vpop.f32.mrb[0].mxu0
      %1331 = vmatprep.mubr.bf16.mxu0 %v830
      %1332 = vmatmul.mubr.bf16.gmra.mrb[0].mxu0 %v829
      %v1333 = vpop.f32.mrb[0].mxu0
      %v1334 = vadd.f32 0.0, %v1333
      %v1335 = vpop.f32.mrb[0].mxu0
      %v1336 = vpop.f32.mrb[0].mxu0
      %v1337 = vpop.f32.mrb[0].mxu0
      %1338 = vdwg.mxu0
      %v1339 = vadd.f32 %v348, %v1038
      %v1340 = vadd.f32 %v349, %v1041
      %v1341 = vadd.f32 %v350, %v1046
      %v1342 = vadd.f32 %v351, %v1049
      %v1343 = vadd.f32 %v352, %v1054
      %v1344 = vadd.f32 %v353, %v1057
      %v1345 = vadd.f32 %v354, %v1062
      %v1346 = vadd.f32 %v355, %v1065
      %v1347 = vadd.f32 %v356, %v1070
      %v1348 = vadd.f32 %v357, %v1073
      %v1349 = vadd.f32 %v358, %v1078
      %v1350 = vadd.f32 %v359, %v1081
      %v1351 = vadd.f32 %v360, %v1086
      %v1352 = vadd.f32 %v361, %v1089
      %v1353 = vadd.f32 %v362, %v1094
      %v1354 = vadd.f32 %v363, %v1097
      %v1355 = vadd.f32 %v364, %v1102
      %v1356 = vadd.f32 %v365, %v1105
      %v1357 = vadd.f32 %v366, %v1110
      %v1358 = vadd.f32 %v367, %v1113
      %v1359 = vadd.f32 %v368, %v1118
      %v1360 = vadd.f32 %v369, %v1121
      %v1361 = vadd.f32 %v370, %v1126
      %v1362 = vadd.f32 %v371, %v1129
      %v1363 = vadd.f32 %v372, %v1134
      %v1364 = vadd.f32 %v373, %v1137
      %v1365 = vadd.f32 %v374, %v1142
      %v1366 = vadd.f32 %v375, %v1145
      %v1367 = vadd.f32 %v376, %v1150
      %v1368 = vadd.f32 %v377, %v1153
      %v1369 = vadd.f32 %v378, %v1158
      %v1370 = vadd.f32 %v379, %v1161
      %v1371 = vadd.f32 %v380, %v1166
      %v1372 = vadd.f32 %v381, %v1169
      %v1373 = vadd.f32 %v382, %v1174
      %v1374 = vadd.f32 %v383, %v1177
      %v1375 = vadd.f32 %v384, %v1182
      %v1376 = vadd.f32 %v385, %v1185
      %v1377 = vadd.f32 %v386, %v1190
      %v1378 = vadd.f32 %v387, %v1193
      %v1379 = vadd.f32 %v388, %v1198
      %v1380 = vadd.f32 %v389, %v1201
      %v1381 = vadd.f32 %v390, %v1206
      %v1382 = vadd.f32 %v391, %v1209
      %v1383 = vadd.f32 %v392, %v1214
      %v1384 = vadd.f32 %v393, %v1217
      %v1385 = vadd.f32 %v394, %v1222
      %v1386 = vadd.f32 %v395, %v1225
      %v1387 = vadd.f32 %v396, %v1230
      %v1388 = vadd.f32 %v397, %v1233
      %v1389 = vadd.f32 %v398, %v1238
      %v1390 = vadd.f32 %v399, %v1241
      %v1391 = vadd.f32 %v400, %v1246
      %v1392 = vadd.f32 %v401, %v1249
      %v1393 = vadd.f32 %v402, %v1254
      %v1394 = vadd.f32 %v403, %v1257
      %v1395 = vadd.f32 %v404, %v1262
      %v1396 = vadd.f32 %v405, %v1265
      %v1397 = vadd.f32 %v406, %v1270
      %v1398 = vadd.f32 %v407, %v1273
      %v1399 = vadd.f32 %v408, %v1278
      %v1400 = vadd.f32 %v409, %v1281
      %v1401 = vadd.f32 %v410, %v1286
      %v1402 = vadd.f32 %v411, %v1289
      %v1403 = vadd.f32 %v412, %v1294
      %v1404 = vadd.f32 %v413, %v1297
      %v1405 = vadd.f32 %v414, %v1302
      %v1406 = vadd.f32 %v415, %v1305
      %v1407 = vadd.f32 %v416, %v1310
      %v1408 = vadd.f32 %v417, %v1313
      %v1409 = vadd.f32 %v418, %v1318
      %v1410 = vadd.f32 %v419, %v1321
      %v1411 = vadd.f32 %v420, %v1326
      %v1412 = vadd.f32 %v421, %v1329
      %v1413 = vadd.f32 %v422, %v1334
      %vm1414 = vcmask 523264
      %1415 = vst.msk [vmem:[#allocation2] sm:$0xff] %vm1414, %v1339
      %1416 = vst.msk [vmem:[#allocation2 + $0x8] sm:$0xff] %vm1414, %v1340
      %1417 = vst.msk [vmem:[#allocation2 + $0x10] sm:$0xff] %vm1414, %v1341
      %1418 = vst.msk [vmem:[#allocation2 + $0x18] sm:$0xff] %vm1414, %v1342
      %1419 = vst.msk [vmem:[#allocation2 + $0x20] sm:$0xff] %vm1414, %v1343
      %1420 = vst.msk [vmem:[#allocation2 + $0x28] sm:$0xff] %vm1414, %v1344
      %1421 = vst.msk [vmem:[#allocation2 + $0x30] sm:$0xff] %vm1414, %v1345
      %1422 = vst.msk [vmem:[#allocation2 + $0x38] sm:$0xff] %vm1414, %v1346
      %1423 = vst.msk [vmem:[#allocation2 + $0x40] sm:$0xff] %vm1414, %v1347
      %1424 = vst.msk [vmem:[#allocation2 + $0x48] sm:$0xff] %vm1414, %v1348
      %1425 = vst.msk [vmem:[#allocation2 + $0x50] sm:$0xff] %vm1414, %v1349
      %1426 = vst.msk [vmem:[#allocation2 + $0x58] sm:$0xff] %vm1414, %v1350
      %1427 = vst.msk [vmem:[#allocation2 + $0x60] sm:$0xff] %vm1414, %v1351
      %1428 = vst.msk [vmem:[#allocation2 + $0x68] sm:$0xff] %vm1414, %v1352
      %1429 = vst.msk [vmem:[#allocation2 + $0x70] sm:$0xff] %vm1414, %v1353
      %1430 = vst.msk [vmem:[#allocation2 + $0x78] sm:$0xff] %vm1414, %v1354
      %1431 = vst.msk [vmem:[#allocation2 + $0x80] sm:$0xff] %vm1414, %v1355
      %1432 = vst.msk [vmem:[#allocation2 + $0x88] sm:$0xff] %vm1414, %v1356
      %1433 = vst.msk [vmem:[#allocation2 + $0x90] sm:$0xff] %vm1414, %v1357
      %1434 = vst.msk [vmem:[#allocation2 + $0x98] sm:$0xff] %vm1414, %v1358
      %1435 = vst.msk [vmem:[#allocation2 + $0xa0] sm:$0xff] %vm1414, %v1359
      %1436 = vst.msk [vmem:[#allocation2 + $0xa8] sm:$0xff] %vm1414, %v1360
      %1437 = vst.msk [vmem:[#allocation2 + $0xb0] sm:$0xff] %vm1414, %v1361
      %1438 = vst.msk [vmem:[#allocation2 + $0xb8] sm:$0xff] %vm1414, %v1362
      %1439 = vst.msk [vmem:[#allocation2 + $0xc0] sm:$0xff] %vm1414, %v1363
      %1440 = vst.msk [vmem:[#allocation2 + $0xc8] sm:$0xff] %vm1414, %v1364
      %1441 = vst.msk [vmem:[#allocation2 + $0xd0] sm:$0xff] %vm1414, %v1365
      %1442 = vst.msk [vmem:[#allocation2 + $0xd8] sm:$0xff] %vm1414, %v1366
      %1443 = vst.msk [vmem:[#allocation2 + $0xe0] sm:$0xff] %vm1414, %v1367
      %1444 = vst.msk [vmem:[#allocation2 + $0xe8] sm:$0xff] %vm1414, %v1368
      %1445 = vst.msk [vmem:[#allocation2 + $0xf0] sm:$0xff] %vm1414, %v1369
      %1446 = vst.msk [vmem:[#allocation2 + $0xf8] sm:$0xff] %vm1414, %v1370
      %1447 = vst.msk [vmem:[#allocation2 + $0x100] sm:$0xff] %vm1414, %v1371
      %1448 = vst.msk [vmem:[#allocation2 + $0x108] sm:$0xff] %vm1414, %v1372
      %1449 = vst.msk [vmem:[#allocation2 + $0x110] sm:$0xff] %vm1414, %v1373
      %1450 = vst.msk [vmem:[#allocation2 + $0x118] sm:$0xff] %vm1414, %v1374
      %1451 = vst.msk [vmem:[#allocation2 + $0x120] sm:$0xff] %vm1414, %v1375
      %1452 = vst.msk [vmem:[#allocation2 + $0x128] sm:$0xff] %vm1414, %v1376
      %1453 = vst.msk [vmem:[#allocation2 + $0x130] sm:$0xff] %vm1414, %v1377
      %1454 = vst.msk [vmem:[#allocation2 + $0x138] sm:$0xff] %vm1414, %v1378
      %1455 = vst.msk [vmem:[#allocation2 + $0x140] sm:$0xff] %vm1414, %v1379
      %1456 = vst.msk [vmem:[#allocation2 + $0x148] sm:$0xff] %vm1414, %v1380
      %1457 = vst.msk [vmem:[#allocation2 + $0x150] sm:$0xff] %vm1414, %v1381
      %1458 = vst.msk [vmem:[#allocation2 + $0x158] sm:$0xff] %vm1414, %v1382
      %1459 = vst.msk [vmem:[#allocation2 + $0x160] sm:$0xff] %vm1414, %v1383
      %1460 = vst.msk [vmem:[#allocation2 + $0x168] sm:$0xff] %vm1414, %v1384
      %1461 = vst.msk [vmem:[#allocation2 + $0x170] sm:$0xff] %vm1414, %v1385
      %1462 = vst.msk [vmem:[#allocation2 + $0x178] sm:$0xff] %vm1414, %v1386
      %1463 = vst.msk [vmem:[#allocation2 + $0x180] sm:$0xff] %vm1414, %v1387
      %1464 = vst.msk [vmem:[#allocation2 + $0x188] sm:$0xff] %vm1414, %v1388
      %1465 = vst.msk [vmem:[#allocation2 + $0x190] sm:$0xff] %vm1414, %v1389
      %1466 = vst.msk [vmem:[#allocation2 + $0x198] sm:$0xff] %vm1414, %v1390
      %1467 = vst.msk [vmem:[#allocation2 + $0x1a0] sm:$0xff] %vm1414, %v1391
      %1468 = vst.msk [vmem:[#allocation2 + $0x1a8] sm:$0xff] %vm1414, %v1392
      %1469 = vst.msk [vmem:[#allocation2 + $0x1b0] sm:$0xff] %vm1414, %v1393
      %1470 = vst.msk [vmem:[#allocation2 + $0x1b8] sm:$0xff] %vm1414, %v1394
      %1471 = vst.msk [vmem:[#allocation2 + $0x1c0] sm:$0xff] %vm1414, %v1395
      %1472 = vst.msk [vmem:[#allocation2 + $0x1c8] sm:$0xff] %vm1414, %v1396
      %1473 = vst.msk [vmem:[#allocation2 + $0x1d0] sm:$0xff] %vm1414, %v1397
      %1474 = vst.msk [vmem:[#allocation2 + $0x1d8] sm:$0xff] %vm1414, %v1398
      %1475 = vst.msk [vmem:[#allocation2 + $0x1e0] sm:$0xff] %vm1414, %v1399
      %1476 = vst.msk [vmem:[#allocation2 + $0x1e8] sm:$0xff] %vm1414, %v1400
      %1477 = vst.msk [vmem:[#allocation2 + $0x1f0] sm:$0xff] %vm1414, %v1401
      %1478 = vst.msk [vmem:[#allocation2 + $0x1f8] sm:$0xff] %vm1414, %v1402
      %1479 = vst.msk [vmem:[#allocation2 + $0x200] sm:$0xff] %vm1414, %v1403
      %1480 = vst.msk [vmem:[#allocation2 + $0x208] sm:$0xff] %vm1414, %v1404
      %1481 = vst.msk [vmem:[#allocation2 + $0x210] sm:$0xff] %vm1414, %v1405
      %1482 = vst.msk [vmem:[#allocation2 + $0x218] sm:$0xff] %vm1414, %v1406
      %1483 = vst.msk [vmem:[#allocation2 + $0x220] sm:$0xff] %vm1414, %v1407
      %1484 = vst.msk [vmem:[#allocation2 + $0x228] sm:$0xff] %vm1414, %v1408
      %1485 = vst.msk [vmem:[#allocation2 + $0x230] sm:$0xff] %vm1414, %v1409
      %1486 = vst.msk [vmem:[#allocation2 + $0x238] sm:$0xff] %vm1414, %v1410
      %1487 = vst.msk [vmem:[#allocation2 + $0x240] sm:$0xff] %vm1414, %v1411
      %1488 = vst.msk [vmem:[#allocation2 + $0x248] sm:$0xff] %vm1414, %v1412
      %1489 = vst.msk [vmem:[#allocation2 + $0x250] sm:$0xff] %vm1414, %v1413
      // Predicated region
      $region37: #{image_pair_encoder_v2.4} parent=31 // pred_check
        %p1490 = pneg %p268
      $region38: #{image_pair_encoder_v2.4} parent=31 // pred_check_branch
        %1492 = sbr.rel (%p1490) target = $region40
      $region39: #{image_pair_encoder_v2.4} parent=31 // pred_region
        %v1493 = vld [vmem:[#allocation2] sm:$0xff]
        %v1494 = vld [vmem:[#allocation2 + $0x8] sm:$0xff]
        %v1495 = vld [vmem:[#allocation2 + $0x10] sm:$0xff]
        %v1496 = vld [vmem:[#allocation2 + $0x18] sm:$0xff]
        %v1497 = vld [vmem:[#allocation2 + $0x20] sm:$0xff]
        %v1498 = vld [vmem:[#allocation2 + $0x28] sm:$0xff]
        %v1499 = vld [vmem:[#allocation2 + $0x30] sm:$0xff]
        %v1500 = vld [vmem:[#allocation2 + $0x38] sm:$0xff]
        %v1501 = vld [vmem:[#allocation2 + $0x40] sm:$0xff]
        %v1502 = vld [vmem:[#allocation2 + $0x48] sm:$0xff]
        %v1503 = vld [vmem:[#allocation2 + $0x50] sm:$0xff]
        %v1504 = vld [vmem:[#allocation2 + $0x58] sm:$0xff]
        %v1505 = vld [vmem:[#allocation2 + $0x60] sm:$0xff]
        %v1506 = vld [vmem:[#allocation2 + $0x68] sm:$0xff]
        %v1507 = vld [vmem:[#allocation2 + $0x70] sm:$0xff]
        %v1508 = vld [vmem:[#allocation2 + $0x78] sm:$0xff]
        %v1509 = vld [vmem:[#allocation2 + $0x80] sm:$0xff]
        %v1510 = vld [vmem:[#allocation2 + $0x88] sm:$0xff]
        %v1511 = vld [vmem:[#allocation2 + $0x90] sm:$0xff]
        %v1512 = vld [vmem:[#allocation2 + $0x98] sm:$0xff]
        %v1513 = vld [vmem:[#allocation2 + $0xa0] sm:$0xff]
        %v1514 = vld [vmem:[#allocation2 + $0xa8] sm:$0xff]
        %v1515 = vld [vmem:[#allocation2 + $0xb0] sm:$0xff]
        %v1516 = vld [vmem:[#allocation2 + $0xb8] sm:$0xff]
        %v1517 = vld [vmem:[#allocation2 + $0xc0] sm:$0xff]
        %v1518 = vld [vmem:[#allocation2 + $0xc8] sm:$0xff]
        %v1519 = vld [vmem:[#allocation2 + $0xd0] sm:$0xff]
        %v1520 = vld [vmem:[#allocation2 + $0xd8] sm:$0xff]
        %v1521 = vld [vmem:[#allocation2 + $0xe0] sm:$0xff]
        %v1522 = vld [vmem:[#allocation2 + $0xe8] sm:$0xff]
        %v1523 = vld [vmem:[#allocation2 + $0xf0] sm:$0xff]
        %v1524 = vld [vmem:[#allocation2 + $0xf8] sm:$0xff]
        %v1525 = vld [vmem:[#allocation2 + $0x100] sm:$0xff]
        %v1526 = vld [vmem:[#allocation2 + $0x108] sm:$0xff]
        %v1527 = vld [vmem:[#allocation2 + $0x110] sm:$0xff]
        %v1528 = vld [vmem:[#allocation2 + $0x118] sm:$0xff]
        %v1529 = vld [vmem:[#allocation2 + $0x120] sm:$0xff]
        %v1530 = vld [vmem:[#allocation2 + $0x128] sm:$0xff]
        %v1531 = vld [vmem:[#allocation2 + $0x130] sm:$0xff]
        %v1532 = vld [vmem:[#allocation2 + $0x138] sm:$0xff]
        %v1533 = vld [vmem:[#allocation2 + $0x140] sm:$0xff]
        %v1534 = vld [vmem:[#allocation2 + $0x148] sm:$0xff]
        %v1535 = vld [vmem:[#allocation2 + $0x150] sm:$0xff]
        %v1536 = vld [vmem:[#allocation2 + $0x158] sm:$0xff]
        %v1537 = vld [vmem:[#allocation2 + $0x160] sm:$0xff]
        %v1538 = vld [vmem:[#allocation2 + $0x168] sm:$0xff]
        %v1539 = vld [vmem:[#allocation2 + $0x170] sm:$0xff]
        %v1540 = vld [vmem:[#allocation2 + $0x178] sm:$0xff]
        %v1541 = vld [vmem:[#allocation2 + $0x180] sm:$0xff]
        %v1542 = vld [vmem:[#allocation2 + $0x188] sm:$0xff]
        %v1543 = vld [vmem:[#allocation2 + $0x190] sm:$0xff]
        %v1544 = vld [vmem:[#allocation2 + $0x198] sm:$0xff]
        %v1545 = vld [vmem:[#allocation2 + $0x1a0] sm:$0xff]
        %v1546 = vld [vmem:[#allocation2 + $0x1a8] sm:$0xff]
        %v1547 = vld [vmem:[#allocation2 + $0x1b0] sm:$0xff]
        %v1548 = vld [vmem:[#allocation2 + $0x1b8] sm:$0xff]
        %v1549 = vld [vmem:[#allocation2 + $0x1c0] sm:$0xff]
        %v1550 = vld [vmem:[#allocation2 + $0x1c8] sm:$0xff]
        %v1551 = vld [vmem:[#allocation2 + $0x1d0] sm:$0xff]
        %v1552 = vld [vmem:[#allocation2 + $0x1d8] sm:$0xff]
        %v1553 = vld [vmem:[#allocation2 + $0x1e0] sm:$0xff]
        %v1554 = vld [vmem:[#allocation2 + $0x1e8] sm:$0xff]
        %v1555 = vld [vmem:[#allocation2 + $0x1f0] sm:$0xff]
        %v1556 = vld [vmem:[#allocation2 + $0x1f8] sm:$0xff]
        %v1557 = vld [vmem:[#allocation2 + $0x200] sm:$0xff]
        %v1558 = vld [vmem:[#allocation2 + $0x208] sm:$0xff]
        %v1559 = vld [vmem:[#allocation2 + $0x210] sm:$0xff]
        %v1560 = vld [vmem:[#allocation2 + $0x218] sm:$0xff]
        %v1561 = vld [vmem:[#allocation2 + $0x220] sm:$0xff]
        %v1562 = vld [vmem:[#allocation2 + $0x228] sm:$0xff]
        %v1563 = vld [vmem:[#allocation2 + $0x230] sm:$0xff]
        %v1564 = vld [vmem:[#allocation2 + $0x238] sm:$0xff]
        %v1565 = vld [vmem:[#allocation2 + $0x240] sm:$0xff]
        %v1566 = vld [vmem:[#allocation2 + $0x248] sm:$0xff]
        %v1567 = vld [vmem:[#allocation2 + $0x250] sm:$0xff]
        %v1568 = vld [vmem:[%s257] sm:$0x1]
        %v1570 = vlaneseq
        %v1571 = vshrl.u32 %v1570, 7
        %v1572 = vsub.s32 0, %v1571
        %v1573 = vrot.slane %v1568, %v1572
        %v1575 = vadd.f32 %v1493, %v1573
        %v1576 = vadd.f32 %v1494, %v1573
        %v1577 = vadd.f32 %v1495, %v1573
        %v1578 = vadd.f32 %v1496, %v1573
        %v1579 = vadd.f32 %v1497, %v1573
        %v1580 = vadd.f32 %v1498, %v1573
        %v1581 = vadd.f32 %v1499, %v1573
        %v1582 = vadd.f32 %v1500, %v1573
        %v1583 = vadd.f32 %v1501, %v1573
        %v1584 = vadd.f32 %v1502, %v1573
        %v1585 = vadd.f32 %v1503, %v1573
        %v1586 = vadd.f32 %v1504, %v1573
        %v1587 = vadd.f32 %v1505, %v1573
        %v1588 = vadd.f32 %v1506, %v1573
        %v1589 = vadd.f32 %v1507, %v1573
        %v1590 = vadd.f32 %v1508, %v1573
        %v1591 = vadd.f32 %v1509, %v1573
        %v1592 = vadd.f32 %v1510, %v1573
        %v1593 = vadd.f32 %v1511, %v1573
        %v1594 = vadd.f32 %v1512, %v1573
        %v1595 = vadd.f32 %v1513, %v1573
        %v1596 = vadd.f32 %v1514, %v1573
        %v1597 = vadd.f32 %v1515, %v1573
        %v1598 = vadd.f32 %v1516, %v1573
        %v1599 = vadd.f32 %v1517, %v1573
        %v1600 = vadd.f32 %v1518, %v1573
        %v1601 = vadd.f32 %v1519, %v1573
        %v1602 = vadd.f32 %v1520, %v1573
        %v1603 = vadd.f32 %v1521, %v1573
        %v1604 = vadd.f32 %v1522, %v1573
        %v1605 = vadd.f32 %v1523, %v1573
        %v1606 = vadd.f32 %v1524, %v1573
        %v1607 = vadd.f32 %v1525, %v1573
        %v1608 = vadd.f32 %v1526, %v1573
        %v1609 = vadd.f32 %v1527, %v1573
        %v1610 = vadd.f32 %v1528, %v1573
        %v1611 = vadd.f32 %v1529, %v1573
        %v1612 = vadd.f32 %v1530, %v1573
        %v1613 = vadd.f32 %v1531, %v1573
        %v1614 = vadd.f32 %v1532, %v1573
        %v1615 = vadd.f32 %v1533, %v1573
        %v1616 = vadd.f32 %v1534, %v1573
        %v1617 = vadd.f32 %v1535, %v1573
        %v1618 = vadd.f32 %v1536, %v1573
        %v1619 = vadd.f32 %v1537, %v1573
        %v1620 = vadd.f32 %v1538, %v1573
        %v1621 = vadd.f32 %v1539, %v1573
        %v1622 = vadd.f32 %v1540, %v1573
        %v1623 = vadd.f32 %v1541, %v1573
        %v1624 = vadd.f32 %v1542, %v1573
        %v1625 = vadd.f32 %v1543, %v1573
        %v1626 = vadd.f32 %v1544, %v1573
        %v1627 = vadd.f32 %v1545, %v1573
        %v1628 = vadd.f32 %v1546, %v1573
        %v1629 = vadd.f32 %v1547, %v1573
        %v1630 = vadd.f32 %v1548, %v1573
        %v1631 = vadd.f32 %v1549, %v1573
        %v1632 = vadd.f32 %v1550, %v1573
        %v1633 = vadd.f32 %v1551, %v1573
        %v1634 = vadd.f32 %v1552, %v1573
        %v1635 = vadd.f32 %v1553, %v1573
        %v1636 = vadd.f32 %v1554, %v1573
        %v1637 = vadd.f32 %v1555, %v1573
        %v1638 = vadd.f32 %v1556, %v1573
        %v1639 = vadd.f32 %v1557, %v1573
        %v1640 = vadd.f32 %v1558, %v1573
        %v1641 = vadd.f32 %v1559, %v1573
        %v1642 = vadd.f32 %v1560, %v1573
        %v1643 = vadd.f32 %v1561, %v1573
        %v1644 = vadd.f32 %v1562, %v1573
        %v1645 = vadd.f32 %v1563, %v1573
        %v1646 = vadd.f32 %v1564, %v1573
        %v1647 = vadd.f32 %v1565, %v1573
        %v1648 = vadd.f32 %v1566, %v1573
        %v1649 = vadd.f32 %v1567, %v1573
        %v1650 = vmax.f32 %v1575, 0.0
        %v1651 = vmax.f32 %v1576, 0.0
        %v1652 = vmax.f32 %v1577, 0.0
        %v1653 = vmax.f32 %v1578, 0.0
        %v1654 = vmax.f32 %v1579, 0.0
        %v1655 = vmax.f32 %v1580, 0.0
        %v1656 = vmax.f32 %v1581, 0.0
        %v1657 = vmax.f32 %v1582, 0.0
        %v1658 = vmax.f32 %v1583, 0.0
        %v1659 = vmax.f32 %v1584, 0.0
        %v1660 = vmax.f32 %v1585, 0.0
        %v1661 = vmax.f32 %v1586, 0.0
        %v1662 = vmax.f32 %v1587, 0.0
        %v1663 = vmax.f32 %v1588, 0.0
        %v1664 = vmax.f32 %v1589, 0.0
        %v1665 = vmax.f32 %v1590, 0.0
        %v1666 = vmax.f32 %v1591, 0.0
        %v1667 = vmax.f32 %v1592, 0.0
        %v1668 = vmax.f32 %v1593, 0.0
        %v1669 = vmax.f32 %v1594, 0.0
        %v1670 = vmax.f32 %v1595, 0.0
        %v1671 = vmax.f32 %v1596, 0.0
        %v1672 = vmax.f32 %v1597, 0.0
        %v1673 = vmax.f32 %v1598, 0.0
        %v1674 = vmax.f32 %v1599, 0.0
        %v1675 = vmax.f32 %v1600, 0.0
        %v1676 = vmax.f32 %v1601, 0.0
        %v1677 = vmax.f32 %v1602, 0.0
        %v1678 = vmax.f32 %v1603, 0.0
        %v1679 = vmax.f32 %v1604, 0.0
        %v1680 = vmax.f32 %v1605, 0.0
        %v1681 = vmax.f32 %v1606, 0.0
        %v1682 = vmax.f32 %v1607, 0.0
        %v1683 = vmax.f32 %v1608, 0.0
        %v1684 = vmax.f32 %v1609, 0.0
        %v1685 = vmax.f32 %v1610, 0.0
        %v1686 = vmax.f32 %v1611, 0.0
        %v1687 = vmax.f32 %v1612, 0.0
        %v1688 = vmax.f32 %v1613, 0.0
        %v1689 = vmax.f32 %v1614, 0.0
        %v1690 = vmax.f32 %v1615, 0.0
        %v1691 = vmax.f32 %v1616, 0.0
        %v1692 = vmax.f32 %v1617, 0.0
        %v1693 = vmax.f32 %v1618, 0.0
        %v1694 = vmax.f32 %v1619, 0.0
        %v1695 = vmax.f32 %v1620, 0.0
        %v1696 = vmax.f32 %v1621, 0.0
        %v1697 = vmax.f32 %v1622, 0.0
        %v1698 = vmax.f32 %v1623, 0.0
        %v1699 = vmax.f32 %v1624, 0.0
        %v1700 = vmax.f32 %v1625, 0.0
        %v1701 = vmax.f32 %v1626, 0.0
        %v1702 = vmax.f32 %v1627, 0.0
        %v1703 = vmax.f32 %v1628, 0.0
        %v1704 = vmax.f32 %v1629, 0.0
        %v1705 = vmax.f32 %v1630, 0.0
        %v1706 = vmax.f32 %v1631, 0.0
        %v1707 = vmax.f32 %v1632, 0.0
        %v1708 = vmax.f32 %v1633, 0.0
        %v1709 = vmax.f32 %v1634, 0.0
        %v1710 = vmax.f32 %v1635, 0.0
        %v1711 = vmax.f32 %v1636, 0.0
        %v1712 = vmax.f32 %v1637, 0.0
        %v1713 = vmax.f32 %v1638, 0.0
        %v1714 = vmax.f32 %v1639, 0.0
        %v1715 = vmax.f32 %v1640, 0.0
        %v1716 = vmax.f32 %v1641, 0.0
        %v1717 = vmax.f32 %v1642, 0.0
        %v1718 = vmax.f32 %v1643, 0.0
        %v1719 = vmax.f32 %v1644, 0.0
        %v1720 = vmax.f32 %v1645, 0.0
        %v1721 = vmax.f32 %v1646, 0.0
        %v1722 = vmax.f32 %v1647, 0.0
        %v1723 = vmax.f32 %v1648, 0.0
        %v1724 = vmax.f32 %v1649, 0.0
        %v1725 = vpack.c.bf16 %v1651, %v1650
        %v1726 = vpack.c.bf16 %v1653, %v1652
        %v1727 = vpack.c.bf16 %v1655, %v1654
        %v1728 = vpack.c.bf16 %v1657, %v1656
        %v1729 = vpack.c.bf16 %v1659, %v1658
        %v1730 = vpack.c.bf16 %v1661, %v1660
        %v1731 = vpack.c.bf16 %v1663, %v1662
        %v1732 = vpack.c.bf16 %v1665, %v1664
        %v1733 = vpack.c.bf16 %v1667, %v1666
        %v1734 = vpack.c.bf16 %v1669, %v1668
        %v1735 = vpack.c.bf16 %v1671, %v1670
        %v1736 = vpack.c.bf16 %v1673, %v1672
        %v1737 = vpack.c.bf16 %v1675, %v1674
        %v1738 = vpack.c.bf16 %v1677, %v1676
        %v1739 = vpack.c.bf16 %v1679, %v1678
        %v1740 = vpack.c.bf16 %v1681, %v1680
        %v1741 = vpack.c.bf16 %v1683, %v1682
        %v1742 = vpack.c.bf16 %v1685, %v1684
        %v1743 = vpack.c.bf16 %v1687, %v1686
        %v1744 = vpack.c.bf16 %v1689, %v1688
        %v1745 = vpack.c.bf16 %v1691, %v1690
        %v1746 = vpack.c.bf16 %v1693, %v1692
        %v1747 = vpack.c.bf16 %v1695, %v1694
        %v1748 = vpack.c.bf16 %v1697, %v1696
        %v1749 = vpack.c.bf16 %v1699, %v1698
        %v1750 = vpack.c.bf16 %v1701, %v1700
        %v1751 = vpack.c.bf16 %v1703, %v1702
        %v1752 = vpack.c.bf16 %v1705, %v1704
        %v1753 = vpack.c.bf16 %v1707, %v1706
        %v1754 = vpack.c.bf16 %v1709, %v1708
        %v1755 = vpack.c.bf16 %v1711, %v1710
        %v1756 = vpack.c.bf16 %v1713, %v1712
        %v1757 = vpack.c.bf16 %v1715, %v1714
        %v1758 = vpack.c.bf16 %v1717, %v1716
        %v1759 = vpack.c.bf16 %v1719, %v1718
        %v1760 = vpack.c.bf16 %v1721, %v1720
        %v1761 = vpack.c.bf16 %v1723, %v1722
        %v1762 = vpack.c.bf16 %v1724, %v1724
        %v1801 = vunpack.c.l.b16 %v1725
        %v1802 = vunpack.c.h.b16 %v1725
        %v1803 = vunpack.c.l.b16 %v1726
        %v1804 = vunpack.c.h.b16 %v1726
        %v1805 = vunpack.c.l.b16 %v1727
        %v1806 = vunpack.c.h.b16 %v1727
        %v1807 = vunpack.c.l.b16 %v1728
        %v1808 = vunpack.c.h.b16 %v1728
        %v1809 = vunpack.c.l.b16 %v1729
        %v1810 = vunpack.c.h.b16 %v1729
        %v1811 = vunpack.c.l.b16 %v1730
        %v1812 = vunpack.c.h.b16 %v1730
        %v1813 = vunpack.c.l.b16 %v1731
        %v1814 = vunpack.c.h.b16 %v1731
        %v1815 = vunpack.c.l.b16 %v1732
        %v1816 = vunpack.c.h.b16 %v1732
        %v1817 = vunpack.c.l.b16 %v1733
        %v1818 = vunpack.c.h.b16 %v1733
        %v1819 = vunpack.c.l.b16 %v1734
        %v1820 = vunpack.c.h.b16 %v1734
        %v1821 = vunpack.c.l.b16 %v1735
        %v1822 = vunpack.c.h.b16 %v1735
        %v1823 = vunpack.c.l.b16 %v1736
        %v1824 = vunpack.c.h.b16 %v1736
        %v1825 = vunpack.c.l.b16 %v1737
        %v1826 = vunpack.c.h.b16 %v1737
        %v1827 = vunpack.c.l.b16 %v1738
        %v1828 = vunpack.c.h.b16 %v1738
        %v1829 = vunpack.c.l.b16 %v1739
        %v1830 = vunpack.c.h.b16 %v1739
        %v1831 = vunpack.c.l.b16 %v1740
        %v1832 = vunpack.c.h.b16 %v1740
        %v1833 = vunpack.c.l.b16 %v1741
        %v1834 = vunpack.c.h.b16 %v1741
        %v1835 = vunpack.c.l.b16 %v1742
        %v1836 = vunpack.c.h.b16 %v1742
        %v1837 = vunpack.c.l.b16 %v1743
        %v1838 = vunpack.c.h.b16 %v1743
        %v1839 = vunpack.c.l.b16 %v1744
        %v1840 = vunpack.c.h.b16 %v1744
        %v1841 = vunpack.c.l.b16 %v1745
        %v1842 = vunpack.c.h.b16 %v1745
        %v1843 = vunpack.c.l.b16 %v1746
        %v1844 = vunpack.c.h.b16 %v1746
        %v1845 = vunpack.c.l.b16 %v1747
        %v1846 = vunpack.c.h.b16 %v1747
        %v1847 = vunpack.c.l.b16 %v1748
        %v1848 = vunpack.c.h.b16 %v1748
        %v1849 = vunpack.c.l.b16 %v1749
        %v1850 = vunpack.c.h.b16 %v1749
        %v1851 = vunpack.c.l.b16 %v1750
        %v1852 = vunpack.c.h.b16 %v1750
        %v1853 = vunpack.c.l.b16 %v1751
        %v1854 = vunpack.c.h.b16 %v1751
        %v1855 = vunpack.c.l.b16 %v1752
        %v1856 = vunpack.c.h.b16 %v1752
        %v1857 = vunpack.c.l.b16 %v1753
        %v1858 = vunpack.c.h.b16 %v1753
        %v1859 = vunpack.c.l.b16 %v1754
        %v1860 = vunpack.c.h.b16 %v1754
        %v1861 = vunpack.c.l.b16 %v1755
        %v1862 = vunpack.c.h.b16 %v1755
        %v1863 = vunpack.c.l.b16 %v1756
        %v1864 = vunpack.c.h.b16 %v1756
        %v1865 = vunpack.c.l.b16 %v1757
        %v1866 = vunpack.c.h.b16 %v1757
        %v1867 = vunpack.c.l.b16 %v1758
        %v1868 = vunpack.c.h.b16 %v1758
        %v1869 = vunpack.c.l.b16 %v1759
        %v1870 = vunpack.c.h.b16 %v1759
        %v1871 = vunpack.c.l.b16 %v1760
        %v1872 = vunpack.c.h.b16 %v1760
        %v1873 = vunpack.c.l.b16 %v1761
        %v1874 = vunpack.c.h.b16 %v1761
        %v1875 = vunpack.c.l.b16 %v1762
        %v1876 = vpack.c.b16 %v1801, %v1801
        %v1877 = vpack.c.b16 %v1802, %v1802
        %v1878 = vpack.c.b16 %v1803, %v1803
        %v1879 = vpack.c.b16 %v1804, %v1804
        %v1880 = vpack.c.b16 %v1805, %v1805
        %v1881 = vpack.c.b16 %v1806, %v1806
        %v1882 = vpack.c.b16 %v1807, %v1807
        %v1883 = vpack.c.b16 %v1808, %v1808
        %v1884 = vpack.c.b16 %v1809, %v1809
        %v1885 = vpack.c.b16 %v1810, %v1810
        %v1886 = vpack.c.b16 %v1811, %v1811
        %v1887 = vpack.c.b16 %v1812, %v1812
        %v1888 = vpack.c.b16 %v1813, %v1813
        %v1889 = vpack.c.b16 %v1814, %v1814
        %v1890 = vpack.c.b16 %v1815, %v1815
        %v1891 = vpack.c.b16 %v1816, %v1816
        %v1892 = vpack.c.b16 %v1817, %v1817
        %v1893 = vpack.c.b16 %v1818, %v1818
        %v1894 = vpack.c.b16 %v1819, %v1819
        %v1895 = vpack.c.b16 %v1820, %v1820
        %v1896 = vpack.c.b16 %v1821, %v1821
        %v1897 = vpack.c.b16 %v1822, %v1822
        %v1898 = vpack.c.b16 %v1823, %v1823
        %v1899 = vpack.c.b16 %v1824, %v1824
        %v1900 = vpack.c.b16 %v1825, %v1825
        %v1901 = vpack.c.b16 %v1826, %v1826
        %v1902 = vpack.c.b16 %v1827, %v1827
        %v1903 = vpack.c.b16 %v1828, %v1828
        %v1904 = vpack.c.b16 %v1829, %v1829
        %v1905 = vpack.c.b16 %v1830, %v1830
        %v1906 = vpack.c.b16 %v1831, %v1831
        %v1907 = vpack.c.b16 %v1832, %v1832
        %v1908 = vpack.c.b16 %v1833, %v1833
        %v1909 = vpack.c.b16 %v1834, %v1834
        %v1910 = vpack.c.b16 %v1835, %v1835
        %v1911 = vpack.c.b16 %v1836, %v1836
        %v1912 = vpack.c.b16 %v1837, %v1837
        %v1913 = vpack.c.b16 %v1838, %v1838
        %v1914 = vpack.c.b16 %v1839, %v1839
        %v1915 = vpack.c.b16 %v1840, %v1840
        %v1916 = vpack.c.b16 %v1841, %v1841
        %v1917 = vpack.c.b16 %v1842, %v1842
        %v1918 = vpack.c.b16 %v1843, %v1843
        %v1919 = vpack.c.b16 %v1844, %v1844
        %v1920 = vpack.c.b16 %v1845, %v1845
        %v1921 = vpack.c.b16 %v1846, %v1846
        %v1922 = vpack.c.b16 %v1847, %v1847
        %v1923 = vpack.c.b16 %v1848, %v1848
        %v1924 = vpack.c.b16 %v1849, %v1849
        %v1925 = vpack.c.b16 %v1850, %v1850
        %v1926 = vpack.c.b16 %v1851, %v1851
        %v1927 = vpack.c.b16 %v1852, %v1852
        %v1928 = vpack.c.b16 %v1853, %v1853
        %v1929 = vpack.c.b16 %v1854, %v1854
        %v1930 = vpack.c.b16 %v1855, %v1855
        %v1931 = vpack.c.b16 %v1856, %v1856
        %v1932 = vpack.c.b16 %v1857, %v1857
        %v1933 = vpack.c.b16 %v1858, %v1858
        %v1934 = vpack.c.b16 %v1859, %v1859
        %v1935 = vpack.c.b16 %v1860, %v1860
        %v1936 = vpack.c.b16 %v1861, %v1861
        %v1937 = vpack.c.b16 %v1862, %v1862
        %v1938 = vpack.c.b16 %v1863, %v1863
        %v1939 = vpack.c.b16 %v1864, %v1864
        %v1940 = vpack.c.b16 %v1865, %v1865
        %v1941 = vpack.c.b16 %v1866, %v1866
        %v1942 = vpack.c.b16 %v1867, %v1867
        %v1943 = vpack.c.b16 %v1868, %v1868
        %v1944 = vpack.c.b16 %v1869, %v1869
        %v1945 = vpack.c.b16 %v1870, %v1870
        %v1946 = vpack.c.b16 %v1871, %v1871
        %v1947 = vpack.c.b16 %v1872, %v1872
        %v1948 = vpack.c.b16 %v1873, %v1873
        %v1949 = vpack.c.b16 %v1874, %v1874
        %v1950 = vpack.c.b16 %v1875, %v1875
        %vm2026 = vcmask 519168
        %2027 = vst.msk [vmem:[%s265] sm:$0xf] %vm2026, %v1876
        %2028 = vst.msk [vmem:[%s265 + $0x4] sm:$0xf] %vm2026, %v1877
        %2029 = vst.msk [vmem:[%s265 + $0x8] sm:$0xf] %vm2026, %v1878
        %2030 = vst.msk [vmem:[%s265 + $0xc] sm:$0xf] %vm2026, %v1879
        %2031 = vst.msk [vmem:[%s265 + $0x10] sm:$0xf] %vm2026, %v1880
        %2032 = vst.msk [vmem:[%s265 + $0x14] sm:$0xf] %vm2026, %v1881
        %2033 = vst.msk [vmem:[%s265 + $0x18] sm:$0xf] %vm2026, %v1882
        %2034 = vst.msk [vmem:[%s265 + $0x1c] sm:$0xf] %vm2026, %v1883
        %2035 = vst.msk [vmem:[%s265 + $0x20] sm:$0xf] %vm2026, %v1884
        %2036 = vst.msk [vmem:[%s265 + $0x24] sm:$0xf] %vm2026, %v1885
        %2037 = vst.msk [vmem:[%s265 + $0x28] sm:$0xf] %vm2026, %v1886
        %2038 = vst.msk [vmem:[%s265 + $0x2c] sm:$0xf] %vm2026, %v1887
        %2039 = vst.msk [vmem:[%s265 + $0x30] sm:$0xf] %vm2026, %v1888
        %2040 = vst.msk [vmem:[%s265 + $0x34] sm:$0xf] %vm2026, %v1889
        %2041 = vst.msk [vmem:[%s265 + $0x38] sm:$0xf] %vm2026, %v1890
        %2042 = vst.msk [vmem:[%s265 + $0x3c] sm:$0xf] %vm2026, %v1891
        %2043 = vst.msk [vmem:[%s265 + $0x40] sm:$0xf] %vm2026, %v1892
        %2044 = vst.msk [vmem:[%s265 + $0x44] sm:$0xf] %vm2026, %v1893
        %2045 = vst.msk [vmem:[%s265 + $0x48] sm:$0xf] %vm2026, %v1894
        %2046 = vst.msk [vmem:[%s265 + $0x4c] sm:$0xf] %vm2026, %v1895
        %2047 = vst.msk [vmem:[%s265 + $0x50] sm:$0xf] %vm2026, %v1896
        %2048 = vst.msk [vmem:[%s265 + $0x54] sm:$0xf] %vm2026, %v1897
        %2049 = vst.msk [vmem:[%s265 + $0x58] sm:$0xf] %vm2026, %v1898
        %2050 = vst.msk [vmem:[%s265 + $0x5c] sm:$0xf] %vm2026, %v1899
        %2051 = vst.msk [vmem:[%s265 + $0x60] sm:$0xf] %vm2026, %v1900
        %2052 = vst.msk [vmem:[%s265 + $0x64] sm:$0xf] %vm2026, %v1901
        %2053 = vst.msk [vmem:[%s265 + $0x68] sm:$0xf] %vm2026, %v1902
        %2054 = vst.msk [vmem:[%s265 + $0x6c] sm:$0xf] %vm2026, %v1903
        %2055 = vst.msk [vmem:[%s265 + $0x70] sm:$0xf] %vm2026, %v1904
        %2056 = vst.msk [vmem:[%s265 + $0x74] sm:$0xf] %vm2026, %v1905
        %2057 = vst.msk [vmem:[%s265 + $0x78] sm:$0xf] %vm2026, %v1906
        %2058 = vst.msk [vmem:[%s265 + $0x7c] sm:$0xf] %vm2026, %v1907
        %2059 = vst.msk [vmem:[%s265 + $0x80] sm:$0xf] %vm2026, %v1908
        %2060 = vst.msk [vmem:[%s265 + $0x84] sm:$0xf] %vm2026, %v1909
        %2061 = vst.msk [vmem:[%s265 + $0x88] sm:$0xf] %vm2026, %v1910
        %2062 = vst.msk [vmem:[%s265 + $0x8c] sm:$0xf] %vm2026, %v1911
        %2063 = vst.msk [vmem:[%s265 + $0x90] sm:$0xf] %vm2026, %v1912
        %2064 = vst.msk [vmem:[%s265 + $0x94] sm:$0xf] %vm2026, %v1913
        %2065 = vst.msk [vmem:[%s265 + $0x98] sm:$0xf] %vm2026, %v1914
        %2066 = vst.msk [vmem:[%s265 + $0x9c] sm:$0xf] %vm2026, %v1915
        %2067 = vst.msk [vmem:[%s265 + $0xa0] sm:$0xf] %vm2026, %v1916
        %2068 = vst.msk [vmem:[%s265 + $0xa4] sm:$0xf] %vm2026, %v1917
        %2069 = vst.msk [vmem:[%s265 + $0xa8] sm:$0xf] %vm2026, %v1918
        %2070 = vst.msk [vmem:[%s265 + $0xac] sm:$0xf] %vm2026, %v1919
        %2071 = vst.msk [vmem:[%s265 + $0xb0] sm:$0xf] %vm2026, %v1920
        %2072 = vst.msk [vmem:[%s265 + $0xb4] sm:$0xf] %vm2026, %v1921
        %2073 = vst.msk [vmem:[%s265 + $0xb8] sm:$0xf] %vm2026, %v1922
        %2074 = vst.msk [vmem:[%s265 + $0xbc] sm:$0xf] %vm2026, %v1923
        %2075 = vst.msk [vmem:[%s265 + $0xc0] sm:$0xf] %vm2026, %v1924
        %2076 = vst.msk [vmem:[%s265 + $0xc4] sm:$0xf] %vm2026, %v1925
        %2077 = vst.msk [vmem:[%s265 + $0xc8] sm:$0xf] %vm2026, %v1926
        %2078 = vst.msk [vmem:[%s265 + $0xcc] sm:$0xf] %vm2026, %v1927
        %2079 = vst.msk [vmem:[%s265 + $0xd0] sm:$0xf] %vm2026, %v1928
        %2080 = vst.msk [vmem:[%s265 + $0xd4] sm:$0xf] %vm2026, %v1929
        %2081 = vst.msk [vmem:[%s265 + $0xd8] sm:$0xf] %vm2026, %v1930
        %2082 = vst.msk [vmem:[%s265 + $0xdc] sm:$0xf] %vm2026, %v1931
        %2083 = vst.msk [vmem:[%s265 + $0xe0] sm:$0xf] %vm2026, %v1932
        %2084 = vst.msk [vmem:[%s265 + $0xe4] sm:$0xf] %vm2026, %v1933
        %2085 = vst.msk [vmem:[%s265 + $0xe8] sm:$0xf] %vm2026, %v1934
        %2086 = vst.msk [vmem:[%s265 + $0xec] sm:$0xf] %vm2026, %v1935
        %2087 = vst.msk [vmem:[%s265 + $0xf0] sm:$0xf] %vm2026, %v1936
        %2088 = vst.msk [vmem:[%s265 + $0xf4] sm:$0xf] %vm2026, %v1937
        %2089 = vst.msk [vmem:[%s265 + $0xf8] sm:$0xf] %vm2026, %v1938
        %2090 = vst.msk [vmem:[%s265 + $0xfc] sm:$0xf] %vm2026, %v1939
        %2091 = vst.msk [vmem:[%s265 + $0x100] sm:$0xf] %vm2026, %v1940
        %2092 = vst.msk [vmem:[%s265 + $0x104] sm:$0xf] %vm2026, %v1941
        %2093 = vst.msk [vmem:[%s265 + $0x108] sm:$0xf] %vm2026, %v1942
        %2094 = vst.msk [vmem:[%s265 + $0x10c] sm:$0xf] %vm2026, %v1943
        %2095 = vst.msk [vmem:[%s265 + $0x110] sm:$0xf] %vm2026, %v1944
        %2096 = vst.msk [vmem:[%s265 + $0x114] sm:$0xf] %vm2026, %v1945
        %2097 = vst.msk [vmem:[%s265 + $0x118] sm:$0xf] %vm2026, %v1946
        %2098 = vst.msk [vmem:[%s265 + $0x11c] sm:$0xf] %vm2026, %v1947
        %2099 = vst.msk [vmem:[%s265 + $0x120] sm:$0xf] %vm2026, %v1948
        %2100 = vst.msk [vmem:[%s265 + $0x124] sm:$0xf] %vm2026, %v1949
        %2101 = vst.msk [vmem:[%s265 + $0x128] sm:$0xf] %vm2026, %v1950
      $region40: #{image_pair_encoder_v2.4} parent=31 // pred_fallthru
        _
      %s2102 = smul.u32 75, %s19
      %p2103 = scmp.lt.s32.totalorder %s2102, 224
      %s2104 = scalar_select %p2103, %s2102, 224
      %p2105 = scmp.lt.s32.totalorder %s20, 0
      %s2106 = scalar_select %p2105, %s20, 0
      %s2107 = sadd.s32 %s2106, %s2104
      %s2108 = smul.addr %s2107, 4
      %s2109 = scalar_lea.vmem %s3, %s2108
      // Predicated region
      $region41: #{image_pair_encoder_v2.4} parent=31 // pred_check
        %p2110 = pneg %p135
      $region42: #{image_pair_encoder_v2.4} parent=31 // pred_check_branch
        %2112 = sbr.rel (%p2110) target = $region44
      $region43: #{image_pair_encoder_v2.4} parent=31 // pred_region
        %s2113 = smul.u32 75, %s19
      $region44: #{image_pair_encoder_v2.4} parent=31 // pred_fallthru
        _
    $region32: #{image_pair_encoder_v2.4} parent=5 // pred_fallthru
      _
    %p2114 = scmp.le.s32.totalorder 2, %s9
    // Predicated region
    $region45: #{image_pair_encoder_v2.4} parent=5 // pred_check
      %p2115 = pneg %p2114
    $region46: #{image_pair_encoder_v2.4} parent=5 // pred_check_branch
      %2117 = sbr.rel (%p2115) target = $region48
    $region47: #{image_pair_encoder_v2.4} parent=5 // pred_region
      %s2118 = ssub.s32 %s9, 2
      // Predicated region
      $region49: #{image_pair_encoder_v2.4} parent=47 // pred_check
        %p2119 = pneg %p141
      $region50: #{image_pair_encoder_v2.4} parent=47 // pred_check_branch
        %2121 = sbr.rel (%p2119) target = $region52
      $region51: #{image_pair_encoder_v2.4} parent=47 // pred_region
        %s2122 = smul.u32 75, %s22
        %p2123 = scmp.lt.s32.totalorder %s2122, 224
        %s2124 = scalar_select %p2123, %s2122, 224
        %p2125 = scmp.lt.s32.totalorder %s23, 0
        %s2126 = scalar_select %p2125, %s23, 0
        %s2127 = sadd.s32 %s2126, %s2124
        %s2128 = smul.addr %s2127, 4
        %s2129 = scalar_lea.vmem %s3, %s2128
      $region52: #{image_pair_encoder_v2.4} parent=47 // pred_fallthru
        _
    $region48: #{image_pair_encoder_v2.4} parent=5 // pred_fallthru
      _
  $region6: #{image_pair_encoder_v2.4} parent=0 // loop_footer
    %s13 = sadd.s32 1, %s9
  $region7: #{image_pair_encoder_v2.4} parent=0 // loop_footer_branch
    %8 = sbr.rel target = $region3
  $region8: #{image_pair_encoder_v2.4} parent=0 // loop_exit
    _

// kernel: image_pair_encoder_v2.5
$region0: #{image_pair_encoder_v2.5}
  #allocation0 [shape = 'u32[]', space=smem, size = 0x4, offset = 0x4, fixed_abs, tag = 'smem constant byte address 0x4 - core index']
  #allocation1 [shape = 'u32[144,128]{1,0:T(1,128)}', space=vmem, size = 0x12000, scoped, tag = 'internal scratch']
  #allocation2 [shape = 'f32[338,128]{1,0:T(8,128)}', space=vmem, size = 0x2b000, scoped, tag = 'scratch operand']
  %s0 = inlined_call_operand.vmem [shape: bf16[338,1664], index: 0, kind: input, shape index: {}]
  %s1 = inlined_call_operand.vmem [shape: bf16[1664,128], index: 1, kind: input, shape index: {}]
  %s2 = inlined_call_operand.vmem [shape: f32[1,128], index: 2, kind: input, shape index: {}]
  %s3 = inlined_call_operand.vmem [shape: bf16[338,128], index: 3, kind: output, shape index: {}]
  %s4 = sld [smem:[#allocation0]]
  $region30: #{image_pair_encoder_v2.5} parent=0
    _
  %s6 = ssub.s32 1, %s4
  %s7 = scalar_select 0, %s6, %s4
  // Predicated region
  $region2: #{image_pair_encoder_v2.5} parent=0 // pred_check
    _
  $region3: #{image_pair_encoder_v2.5} parent=0 // pred_check_branch
    %9 = sbr.rel (0) target = $region5
  $region4: #{image_pair_encoder_v2.5} parent=0 // pred_region
    _
  $region5: #{image_pair_encoder_v2.5} parent=0 // pred_fallthru
    _
  // Predicated region
  $region6: #{image_pair_encoder_v2.5} parent=0 // pred_check
    _
  $region7: #{image_pair_encoder_v2.5} parent=0 // pred_check_branch
    %11 = sbr.rel (0) target = $region9
  $region8: #{image_pair_encoder_v2.5} parent=0 // pred_region
    _
  $region9: #{image_pair_encoder_v2.5} parent=0 // pred_fallthru
    _
  // Predicated region
  $region10: #{image_pair_encoder_v2.5} parent=0 // pred_check
    _
  $region11: #{image_pair_encoder_v2.5} parent=0 // pred_check_branch
    %13 = sbr.rel (0) target = $region13
  $region12: #{image_pair_encoder_v2.5} parent=0 // pred_region
    _
  $region13: #{image_pair_encoder_v2.5} parent=0 // pred_fallthru
    _
  %p15 = scmp.eq.s32.totalorder 0, 0
  // Predicated region
  $region14: #{image_pair_encoder_v2.5} parent=0 // pred_check
    %p16 = pneg %p15
  $region15: #{image_pair_encoder_v2.5} parent=0 // pred_check_branch
    %18 = sbr.rel (%p16) target = $region17
  $region16: #{image_pair_encoder_v2.5} parent=0 // pred_region
    %19 = vst [vmem:[#allocation2] sm:$0xff] 0.0
    %20 = vst [vmem:[#allocation2 + $0x8] sm:$0xff] 0.0
    %21 = vst [vmem:[#allocation2 + $0x10] sm:$0xff] 0.0
    %22 = vst [vmem:[#allocation2 + $0x18] sm:$0xff] 0.0
    %23 = vst [vmem:[#allocation2 + $0x20] sm:$0xff] 0.0
    %24 = vst [vmem:[#allocation2 + $0x28] sm:$0xff] 0.0
    %25 = vst [vmem:[#allocation2 + $0x30] sm:$0xff] 0.0
    %26 = vst [vmem:[#allocation2 + $0x38] sm:$0xff] 0.0
    %27 = vst [vmem:[#allocation2 + $0x40] sm:$0xff] 0.0
    %28 = vst [vmem:[#allocation2 + $0x48] sm:$0xff] 0.0
    %29 = vst [vmem:[#allocation2 + $0x50] sm:$0xff] 0.0
    %30 = vst [vmem:[#allocation2 + $0x58] sm:$0xff] 0.0
    %31 = vst [vmem:[#allocation2 + $0x60] sm:$0xff] 0.0
    %32 = vst [vmem:[#allocation2 + $0x68] sm:$0xff] 0.0
    %33 = vst [vmem:[#allocation2 + $0x70] sm:$0xff] 0.0
    %34 = vst [vmem:[#allocation2 + $0x78] sm:$0xff] 0.0
    %35 = vst [vmem:[#allocation2 + $0x80] sm:$0xff] 0.0
    %36 = vst [vmem:[#allocation2 + $0x88] sm:$0xff] 0.0
    %37 = vst [vmem:[#allocation2 + $0x90] sm:$0xff] 0.0
    %38 = vst [vmem:[#allocation2 + $0x98] sm:$0xff] 0.0
    %39 = vst [vmem:[#allocation2 + $0xa0] sm:$0xff] 0.0
    %40 = vst [vmem:[#allocation2 + $0xa8] sm:$0xff] 0.0
    %41 = vst [vmem:[#allocation2 + $0xb0] sm:$0xff] 0.0
    %42 = vst [vmem:[#allocation2 + $0xb8] sm:$0xff] 0.0
    %43 = vst [vmem:[#allocation2 + $0xc0] sm:$0xff] 0.0
    %44 = vst [vmem:[#allocation2 + $0xc8] sm:$0xff] 0.0
    %45 = vst [vmem:[#allocation2 + $0xd0] sm:$0xff] 0.0
    %46 = vst [vmem:[#allocation2 + $0xd8] sm:$0xff] 0.0
    %47 = vst [vmem:[#allocation2 + $0xe0] sm:$0xff] 0.0
    %48 = vst [vmem:[#allocation2 + $0xe8] sm:$0xff] 0.0
    %49 = vst [vmem:[#allocation2 + $0xf0] sm:$0xff] 0.0
    %50 = vst [vmem:[#allocation2 + $0xf8] sm:$0xff] 0.0
    %51 = vst [vmem:[#allocation2 + $0x100] sm:$0xff] 0.0
    %52 = vst [vmem:[#allocation2 + $0x108] sm:$0xff] 0.0
    %53 = vst [vmem:[#allocation2 + $0x110] sm:$0xff] 0.0
    %54 = vst [vmem:[#allocation2 + $0x118] sm:$0xff] 0.0
    %55 = vst [vmem:[#allocation2 + $0x120] sm:$0xff] 0.0
    %56 = vst [vmem:[#allocation2 + $0x128] sm:$0xff] 0.0
    %57 = vst [vmem:[#allocation2 + $0x130] sm:$0xff] 0.0
    %58 = vst [vmem:[#allocation2 + $0x138] sm:$0xff] 0.0
    %59 = vst [vmem:[#allocation2 + $0x140] sm:$0xff] 0.0
    %60 = vst [vmem:[#allocation2 + $0x148] sm:$0xff] 0.0
    %61 = vst [vmem:[#allocation2 + $0x150] sm:$0x3] 0.0
  $region17: #{image_pair_encoder_v2.5} parent=0 // pred_fallthru
    _
  %v62 = vld [vmem:[#allocation2] sm:$0xff]
  %v63 = vld [vmem:[#allocation2 + $0x8] sm:$0xff]
  %v64 = vld [vmem:[#allocation2 + $0x10] sm:$0xff]
  %v65 = vld [vmem:[#allocation2 + $0x18] sm:$0xff]
  %v66 = vld [vmem:[#allocation2 + $0x20] sm:$0xff]
  %v67 = vld [vmem:[#allocation2 + $0x28] sm:$0xff]
  %v68 = vld [vmem:[#allocation2 + $0x30] sm:$0xff]
  %v69 = vld [vmem:[#allocation2 + $0x38] sm:$0xff]
  %v70 = vld [vmem:[#allocation2 + $0x40] sm:$0xff]
  %v71 = vld [vmem:[#allocation2 + $0x48] sm:$0xff]
  %v72 = vld [vmem:[#allocation2 + $0x50] sm:$0xff]
  %v73 = vld [vmem:[#allocation2 + $0x58] sm:$0xff]
  %v74 = vld [vmem:[#allocation2 + $0x60] sm:$0xff]
  %v75 = vld [vmem:[#allocation2 + $0x68] sm:$0xff]
  %v76 = vld [vmem:[#allocation2 + $0x70] sm:$0xff]
  %v77 = vld [vmem:[#allocation2 + $0x78] sm:$0xff]
  %v78 = vld [vmem:[#allocation2 + $0x80] sm:$0xff]
  %v79 = vld [vmem:[#allocation2 + $0x88] sm:$0xff]
  %v80 = vld [vmem:[#allocation2 + $0x90] sm:$0xff]
  %v81 = vld [vmem:[#allocation2 + $0x98] sm:$0xff]
  %v82 = vld [vmem:[#allocation2 + $0xa0] sm:$0xff]
  %v83 = vld [vmem:[#allocation2 + $0xa8] sm:$0xff]
  %v84 = vld [vmem:[#allocation2 + $0xb0] sm:$0xff]
  %v85 = vld [vmem:[#allocation2 + $0xb8] sm:$0xff]
  %v86 = vld [vmem:[#allocation2 + $0xc0] sm:$0xff]
  %v87 = vld [vmem:[#allocation2 + $0xc8] sm:$0xff]
  %v88 = vld [vmem:[#allocation2 + $0xd0] sm:$0xff]
  %v89 = vld [vmem:[#allocation2 + $0xd8] sm:$0xff]
  %v90 = vld [vmem:[#allocation2 + $0xe0] sm:$0xff]
  %v91 = vld [vmem:[#allocation2 + $0xe8] sm:$0xff]
  %v92 = vld [vmem:[#allocation2 + $0xf0] sm:$0xff]
  %v93 = vld [vmem:[#allocation2 + $0xf8] sm:$0xff]
  %v94 = vld [vmem:[#allocation2 + $0x100] sm:$0xff]
  %v95 = vld [vmem:[#allocation2 + $0x108] sm:$0xff]
  %v96 = vld [vmem:[#allocation2 + $0x110] sm:$0xff]
  %v97 = vld [vmem:[#allocation2 + $0x118] sm:$0xff]
  %v98 = vld [vmem:[#allocation2 + $0x120] sm:$0xff]
  %v99 = vld [vmem:[#allocation2 + $0x128] sm:$0xff]
  %v100 = vld [vmem:[#allocation2 + $0x130] sm:$0xff]
  %v101 = vld [vmem:[#allocation2 + $0x138] sm:$0xff]
  %v102 = vld [vmem:[#allocation2 + $0x140] sm:$0xff]
  %v103 = vld [vmem:[#allocation2 + $0x148] sm:$0xff]
  %v104 = vld [vmem:[#allocation2 + $0x150] sm:$0x3]
  %v105 = vld [vmem:[%s0] sm:$0xff]
  %v106 = vld [vmem:[%s0 + $0x8] sm:$0xff]
  %v107 = vld [vmem:[%s0 + $0x10] sm:$0xff]
  %v108 = vld [vmem:[%s0 + $0x18] sm:$0xff]
  %v109 = vld [vmem:[%s0 + $0x20] sm:$0xff]
  %v110 = vld [vmem:[%s0 + $0x28] sm:$0xff]
  %v111 = vld [vmem:[%s0 + $0x30] sm:$0xf]
  %v112 = vld [vmem:[%s0 + $0x34] sm:$0xff]
  %v113 = vld [vmem:[%s0 + $0x3c] sm:$0xff]
  %v114 = vld [vmem:[%s0 + $0x44] sm:$0xff]
  %v115 = vld [vmem:[%s0 + $0x4c] sm:$0xff]
  %v116 = vld [vmem:[%s0 + $0x54] sm:$0xff]
  %v117 = vld [vmem:[%s0 + $0x5c] sm:$0xff]
  %v118 = vld [vmem:[%s0 + $0x64] sm:$0xf]
  %v119 = vld [vmem:[%s0 + $0x68] sm:$0xff]
  %v120 = vld [vmem:[%s0 + $0x70] sm:$0xff]
  %v121 = vld [vmem:[%s0 + $0x78] sm:$0xff]
  %v122 = vld [vmem:[%s0 + $0x80] sm:$0xff]
  %v123 = vld [vmem:[%s0 + $0x88] sm:$0xff]
  %v124 = vld [vmem:[%s0 + $0x90] sm:$0xff]
  %v125 = vld [vmem:[%s0 + $0x98] sm:$0xf]
  %v126 = vld [vmem:[%s0 + $0x9c] sm:$0xff]
  %v127 = vld [vmem:[%s0 + $0xa4] sm:$0xff]
  %v128 = vld [vmem:[%s0 + $0xac] sm:$0xff]
  %v129 = vld [vmem:[%s0 + $0xb4] sm:$0xff]
  %v130 = vld [vmem:[%s0 + $0xbc] sm:$0xff]
  %v131 = vld [vmem:[%s0 + $0xc4] sm:$0xff]
  %v132 = vld [vmem:[%s0 + $0xcc] sm:$0xf]
  %v133 = vld [vmem:[%s0 + $0xd0] sm:$0xff]
  %v134 = vld [vmem:[%s0 + $0xd8] sm:$0xff]
  %v135 = vld [vmem:[%s0 + $0xe0] sm:$0xff]
  %v136 = vld [vmem:[%s0 + $0xe8] sm:$0xff]
  %v137 = vld [vmem:[%s0 + $0xf0] sm:$0xff]
  %v138 = vld [vmem:[%s0 + $0xf8] sm:$0xff]
  %v139 = vld [vmem:[%s0 + $0x100] sm:$0xf]
  %v140 = vld [vmem:[%s0 + $0x104] sm:$0xff]
  %v141 = vld [vmem:[%s0 + $0x10c] sm:$0xff]
  %v142 = vld [vmem:[%s0 + $0x114] sm:$0xff]
  %v143 = vld [vmem:[%s0 + $0x11c] sm:$0xff]
  %v144 = vld [vmem:[%s0 + $0x124] sm:$0xff]
  %v145 = vld [vmem:[%s0 + $0x12c] sm:$0xff]
  %v146 = vld [vmem:[%s0 + $0x134] sm:$0xf]
  %v147 = vld [vmem:[%s0 + $0x138] sm:$0xff]
  %v148 = vld [vmem:[%s0 + $0x140] sm:$0xff]
  %v149 = vld [vmem:[%s0 + $0x148] sm:$0xff]
  %v150 = vld [vmem:[%s0 + $0x150] sm:$0xff]
  %v151 = vld [vmem:[%s0 + $0x158] sm:$0xff]
  %v152 = vld [vmem:[%s0 + $0x160] sm:$0xff]
  %v153 = vld [vmem:[%s0 + $0x168] sm:$0xf]
  %v154 = vld [vmem:[%s0 + $0x16c] sm:$0xff]
  %v155 = vld [vmem:[%s0 + $0x174] sm:$0xff]
  %v156 = vld [vmem:[%s0 + $0x17c] sm:$0xff]
  %v157 = vld [vmem:[%s0 + $0x184] sm:$0xff]
  %v158 = vld [vmem:[%s0 + $0x18c] sm:$0xff]
  %v159 = vld [vmem:[%s0 + $0x194] sm:$0xff]
  %v160 = vld [vmem:[%s0 + $0x19c] sm:$0xf]
  %v161 = vld [vmem:[%s0 + $0x1a0] sm:$0xff]
  %v162 = vld [vmem:[%s0 + $0x1a8] sm:$0xff]
  %v163 = vld [vmem:[%s0 + $0x1b0] sm:$0xff]
  %v164 = vld [vmem:[%s0 + $0x1b8] sm:$0xff]
  %v165 = vld [vmem:[%s0 + $0x1c0] sm:$0xff]
  %v166 = vld [vmem:[%s0 + $0x1c8] sm:$0xff]
  %v167 = vld [vmem:[%s0 + $0x1d0] sm:$0xf]
  %v168 = vld [vmem:[%s0 + $0x1d4] sm:$0xff]
  %v169 = vld [vmem:[%s0 + $0x1dc] sm:$0xff]
  %v170 = vld [vmem:[%s0 + $0x1e4] sm:$0xff]
  %v171 = vld [vmem:[%s0 + $0x1ec] sm:$0xff]
  %v172 = vld [vmem:[%s0 + $0x1f4] sm:$0xff]
  %v173 = vld [vmem:[%s0 + $0x1fc] sm:$0xff]
  %v174 = vld [vmem:[%s0 + $0x204] sm:$0xf]
  %v175 = vld [vmem:[%s0 + $0x208] sm:$0xff]
  %v176 = vld [vmem:[%s0 + $0x210] sm:$0xff]
  %v177 = vld [vmem:[%s0 + $0x218] sm:$0xff]
  %v178 = vld [vmem:[%s0 + $0x220] sm:$0xff]
  %v179 = vld [vmem:[%s0 + $0x228] sm:$0xff]
  %v180 = vld [vmem:[%s0 + $0x230] sm:$0xff]
  %v181 = vld [vmem:[%s0 + $0x238] sm:$0xf]
  %v182 = vld [vmem:[%s0 + $0x23c] sm:$0xff]
  %v183 = vld [vmem:[%s0 + $0x244] sm:$0xff]
  %v184 = vld [vmem:[%s0 + $0x24c] sm:$0xff]
  %v185 = vld [vmem:[%s0 + $0x254] sm:$0xff]
  %v186 = vld [vmem:[%s0 + $0x25c] sm:$0xff]
  %v187 = vld [vmem:[%s0 + $0x264] sm:$0xff]
  %v188 = vld [vmem:[%s0 + $0x26c] sm:$0xf]
  %v189 = vld [vmem:[%s0 + $0x270] sm:$0xff]
  %v190 = vld [vmem:[%s0 + $0x278] sm:$0xff]
  %v191 = vld [vmem:[%s0 + $0x280] sm:$0xff]
  %v192 = vld [vmem:[%s0 + $0x288] sm:$0xff]
  %v193 = vld [vmem:[%s0 + $0x290] sm:$0xff]
  %v194 = vld [vmem:[%s0 + $0x298] sm:$0xff]
  %v195 = vld [vmem:[%s0 + $0x2a0] sm:$0xf]
  %v196 = vld [vmem:[%s0 + $0x2a4] sm:$0xff]
  %v197 = vld [vmem:[%s0 + $0x2ac] sm:$0xff]
  %v198 = vld [vmem:[%s0 + $0x2b4] sm:$0xff]
  %v199 = vld [vmem:[%s0 + $0x2bc] sm:$0xff]
  %v200 = vld [vmem:[%s0 + $0x2c4] sm:$0xff]
  %v201 = vld [vmem:[%s0 + $0x2cc] sm:$0xff]
  %v202 = vld [vmem:[%s0 + $0x2d4] sm:$0xf]
  %v203 = vld [vmem:[%s0 + $0x2d8] sm:$0xff]
  %v204 = vld [vmem:[%s0 + $0x2e0] sm:$0xff]
  %v205 = vld [vmem:[%s0 + $0x2e8] sm:$0xff]
  %v206 = vld [vmem:[%s0 + $0x2f0] sm:$0xff]
  %v207 = vld [vmem:[%s0 + $0x2f8] sm:$0xff]
  %v208 = vld [vmem:[%s0 + $0x300] sm:$0xff]
  %v209 = vld [vmem:[%s0 + $0x308] sm:$0xf]
  %v210 = vld [vmem:[%s0 + $0x30c] sm:$0xff]
  %v211 = vld [vmem:[%s0 + $0x314] sm:$0xff]
  %v212 = vld [vmem:[%s0 + $0x31c] sm:$0xff]
  %v213 = vld [vmem:[%s0 + $0x324] sm:$0xff]
  %v214 = vld [vmem:[%s0 + $0x32c] sm:$0xff]
  %v215 = vld [vmem:[%s0 + $0x334] sm:$0xff]
  %v216 = vld [vmem:[%s0 + $0x33c] sm:$0xf]
  %v217 = vld [vmem:[%s0 + $0x340] sm:$0xff]
  %v218 = vld [vmem:[%s0 + $0x348] sm:$0xff]
  %v219 = vld [vmem:[%s0 + $0x350] sm:$0xff]
  %v220 = vld [vmem:[%s0 + $0x358] sm:$0xff]
  %v221 = vld [vmem:[%s0 + $0x360] sm:$0xff]
  %v222 = vld [vmem:[%s0 + $0x368] sm:$0xff]
  %v223 = vld [vmem:[%s0 + $0x370] sm:$0xf]
  %v224 = vld [vmem:[%s0 + $0x374] sm:$0xff]
  %v225 = vld [vmem:[%s0 + $0x37c] sm:$0xff]
  %v226 = vld [vmem:[%s0 + $0x384] sm:$0xff]
  %v227 = vld [vmem:[%s0 + $0x38c] sm:$0xff]
  %v228 = vld [vmem:[%s0 + $0x394] sm:$0xff]
  %v229 = vld [vmem:[%s0 + $0x39c] sm:$0xff]
  %v230 = vld [vmem:[%s0 + $0x3a4] sm:$0xf]
  %v231 = vld [vmem:[%s0 + $0x3a8] sm:$0xff]
  %v232 = vld [vmem:[%s0 + $0x3b0] sm:$0xff]
  %v233 = vld [vmem:[%s0 + $0x3b8] sm:$0xff]
  %v234 = vld [vmem:[%s0 + $0x3c0] sm:$0xff]
  %v235 = vld [vmem:[%s0 + $0x3c8] sm:$0xff]
  %v236 = vld [vmem:[%s0 + $0x3d0] sm:$0xff]
  %v237 = vld [vmem:[%s0 + $0x3d8] sm:$0xf]
  %v238 = vld [vmem:[%s0 + $0x3dc] sm:$0xff]
  %v239 = vld [vmem:[%s0 + $0x3e4] sm:$0xff]
  %v240 = vld [vmem:[%s0 + $0x3ec] sm:$0xff]
  %v241 = vld [vmem:[%s0 + $0x3f4] sm:$0xff]
  %v242 = vld [vmem:[%s0 + $0x3fc] sm:$0xff]
  %v243 = vld [vmem:[%s0 + $0x404] sm:$0xff]
  %v244 = vld [vmem:[%s0 + $0x40c] sm:$0xf]
  %v245 = vld [vmem:[%s0 + $0x410] sm:$0xff]
  %v246 = vld [vmem:[%s0 + $0x418] sm:$0xff]
  %v247 = vld [vmem:[%s0 + $0x420] sm:$0xff]
  %v248 = vld [vmem:[%s0 + $0x428] sm:$0xff]
  %v249 = vld [vmem:[%s0 + $0x430] sm:$0xff]
  %v250 = vld [vmem:[%s0 + $0x438] sm:$0xff]
  %v251 = vld [vmem:[%s0 + $0x440] sm:$0xf]
  %v252 = vld [vmem:[%s0 + $0x444] sm:$0xff]
  %v253 = vld [vmem:[%s0 + $0x44c] sm:$0xff]
  %v254 = vld [vmem:[%s0 + $0x454] sm:$0xff]
  %v255 = vld [vmem:[%s0 + $0x45c] sm:$0xff]
  %v256 = vld [vmem:[%s0 + $0x464] sm:$0xff]
  %v257 = vld [vmem:[%s0 + $0x46c] sm:$0xff]
  %v258 = vld [vmem:[%s0 + $0x474] sm:$0xf]
  %v259 = vld [vmem:[%s0 + $0x478] sm:$0xff]
  %v260 = vld [vmem:[%s0 + $0x480] sm:$0xff]
  %v261 = vld [vmem:[%s0 + $0x488] sm:$0xff]
  %v262 = vld [vmem:[%s0 + $0x490] sm:$0xff]
  %v263 = vld [vmem:[%s0 + $0x498] sm:$0xff]
  %v264 = vld [vmem:[%s0 + $0x4a0] sm:$0xff]
  %v265 = vld [vmem:[%s0 + $0x4a8] sm:$0xf]
  %v266 = vld [vmem:[%s0 + $0x4ac] sm:$0xff]
  %v267 = vld [vmem:[%s0 + $0x4b4] sm:$0xff]
  %v268 = vld [vmem:[%s0 + $0x4bc] sm:$0xff]
  %v269 = vld [vmem:[%s0 + $0x4c4] sm:$0xff]
  %v270 = vld [vmem:[%s0 + $0x4cc] sm:$0xff]
  %v271 = vld [vmem:[%s0 + $0x4d4] sm:$0xff]
  %v272 = vld [vmem:[%s0 + $0x4dc] sm:$0xf]
  %v273 = vld [vmem:[%s0 + $0x4e0] sm:$0xff]
  %v274 = vld [vmem:[%s0 + $0x4e8] sm:$0xff]
  %v275 = vld [vmem:[%s0 + $0x4f0] sm:$0xff]
  %v276 = vld [vmem:[%s0 + $0x4f8] sm:$0xff]
  %v277 = vld [vmem:[%s0 + $0x500] sm:$0xff]
  %v278 = vld [vmem:[%s0 + $0x508] sm:$0xff]
  %v279 = vld [vmem:[%s0 + $0x510] sm:$0xf]
  %v280 = vld [vmem:[%s0 + $0x514] sm:$0xff]
  %v281 = vld [vmem:[%s0 + $0x51c] sm:$0xff]
  %v282 = vld [vmem:[%s0 + $0x524] sm:$0xff]
  %v283 = vld [vmem:[%s0 + $0x52c] sm:$0xff]
  %v284 = vld [vmem:[%s0 + $0x534] sm:$0xff]
  %v285 = vld [vmem:[%s0 + $0x53c] sm:$0xff]
  %v286 = vld [vmem:[%s0 + $0x544] sm:$0xf]
  %v287 = vld [vmem:[%s0 + $0x548] sm:$0xff]
  %v288 = vld [vmem:[%s0 + $0x550] sm:$0xff]
  %v289 = vld [vmem:[%s0 + $0x558] sm:$0xff]
  %v290 = vld [vmem:[%s0 + $0x560] sm:$0xff]
  %v291 = vld [vmem:[%s0 + $0x568] sm:$0xff]
  %v292 = vld [vmem:[%s0 + $0x570] sm:$0xff]
  %v293 = vld [vmem:[%s0 + $0x578] sm:$0xf]
  %v294 = vld [vmem:[%s0 + $0x57c] sm:$0xff]
  %v295 = vld [vmem:[%s0 + $0x584] sm:$0xff]
  %v296 = vld [vmem:[%s0 + $0x58c] sm:$0xff]
  %v297 = vld [vmem:[%s0 + $0x594] sm:$0xff]
  %v298 = vld [vmem:[%s0 + $0x59c] sm:$0xff]
  %v299 = vld [vmem:[%s0 + $0x5a4] sm:$0xff]
  %v300 = vld [vmem:[%s0 + $0x5ac] sm:$0xf]
  %v301 = vld [vmem:[%s0 + $0x5b0] sm:$0xff]
  %v302 = vld [vmem:[%s0 + $0x5b8] sm:$0xff]
  %v303 = vld [vmem:[%s0 + $0x5c0] sm:$0xff]
  %v304 = vld [vmem:[%s0 + $0x5c8] sm:$0xff]
  %v305 = vld [vmem:[%s0 + $0x5d0] sm:$0xff]
  %v306 = vld [vmem:[%s0 + $0x5d8] sm:$0xff]
  %v307 = vld [vmem:[%s0 + $0x5e0] sm:$0xf]
  %v308 = vld [vmem:[%s0 + $0x5e4] sm:$0xff]
  %v309 = vld [vmem:[%s0 + $0x5ec] sm:$0xff]
  %v310 = vld [vmem:[%s0 + $0x5f4] sm:$0xff]
  %v311 = vld [vmem:[%s0 + $0x5fc] sm:$0xff]
  %v312 = vld [vmem:[%s0 + $0x604] sm:$0xff]
  %v313 = vld [vmem:[%s0 + $0x60c] sm:$0xff]
  %v314 = vld [vmem:[%s0 + $0x614] sm:$0xf]
  %v315 = vld [vmem:[%s0 + $0x618] sm:$0xff]
  %v316 = vld [vmem:[%s0 + $0x620] sm:$0xff]
  %v317 = vld [vmem:[%s0 + $0x628] sm:$0xff]
  %v318 = vld [vmem:[%s0 + $0x630] sm:$0xff]
  %v319 = vld [vmem:[%s0 + $0x638] sm:$0xff]
  %v320 = vld [vmem:[%s0 + $0x640] sm:$0xff]
  %v321 = vld [vmem:[%s0 + $0x648] sm:$0xf]
  %v322 = vld [vmem:[%s0 + $0x64c] sm:$0xff]
  %v323 = vld [vmem:[%s0 + $0x654] sm:$0xff]
  %v324 = vld [vmem:[%s0 + $0x65c] sm:$0xff]
  %v325 = vld [vmem:[%s0 + $0x664] sm:$0xff]
  %v326 = vld [vmem:[%s0 + $0x66c] sm:$0xff]
  %v327 = vld [vmem:[%s0 + $0x674] sm:$0xff]
  %v328 = vld [vmem:[%s0 + $0x67c] sm:$0xf]
  %v329 = vld [vmem:[%s0 + $0x680] sm:$0xff]
  %v330 = vld [vmem:[%s0 + $0x688] sm:$0xff]
  %v331 = vld [vmem:[%s0 + $0x690] sm:$0xff]
  %v332 = vld [vmem:[%s0 + $0x698] sm:$0xff]
  %v333 = vld [vmem:[%s0 + $0x6a0] sm:$0xff]
  %v334 = vld [vmem:[%s0 + $0x6a8] sm:$0xff]
  %v335 = vld [vmem:[%s0 + $0x6b0] sm:$0xf]
  %v336 = vld [vmem:[%s0 + $0x6b4] sm:$0xff]
  %v337 = vld [vmem:[%s0 + $0x6bc] sm:$0xff]
  %v338 = vld [vmem:[%s0 + $0x6c4] sm:$0xff]
  %v339 = vld [vmem:[%s0 + $0x6cc] sm:$0xff]
  %v340 = vld [vmem:[%s0 + $0x6d4] sm:$0xff]
  %v341 = vld [vmem:[%s0 + $0x6dc] sm:$0xff]
  %v342 = vld [vmem:[%s0 + $0x6e4] sm:$0xf]
  %v343 = vld [vmem:[%s0 + $0x6e8] sm:$0xff]
  %v344 = vld [vmem:[%s0 + $0x6f0] sm:$0xff]
  %v345 = vld [vmem:[%s0 + $0x6f8] sm:$0xff]
  %v346 = vld [vmem:[%s0 + $0x700] sm:$0xff]
  %v347 = vld [vmem:[%s0 + $0x708] sm:$0xff]
  %v348 = vld [vmem:[%s0 + $0x710] sm:$0xff]
  %v349 = vld [vmem:[%s0 + $0x718] sm:$0xf]
  %v350 = vld [vmem:[%s0 + $0x71c] sm:$0xff]
  %v351 = vld [vmem:[%s0 + $0x724] sm:$0xff]
  %v352 = vld [vmem:[%s0 + $0x72c] sm:$0xff]
  %v353 = vld [vmem:[%s0 + $0x734] sm:$0xff]
  %v354 = vld [vmem:[%s0 + $0x73c] sm:$0xff]
  %v355 = vld [vmem:[%s0 + $0x744] sm:$0xff]
  %v356 = vld [vmem:[%s0 + $0x74c] sm:$0xf]
  %v357 = vld [vmem:[%s0 + $0x750] sm:$0xff]
  %v358 = vld [vmem:[%s0 + $0x758] sm:$0xff]
  %v359 = vld [vmem:[%s0 + $0x760] sm:$0xff]
  %v360 = vld [vmem:[%s0 + $0x768] sm:$0xff]
  %v361 = vld [vmem:[%s0 + $0x770] sm:$0xff]
  %v362 = vld [vmem:[%s0 + $0x778] sm:$0xff]
  %v363 = vld [vmem:[%s0 + $0x780] sm:$0xf]
  %v364 = vld [vmem:[%s0 + $0x784] sm:$0xff]
  %v365 = vld [vmem:[%s0 + $0x78c] sm:$0xff]
  %v366 = vld [vmem:[%s0 + $0x794] sm:$0xff]
  %v367 = vld [vmem:[%s0 + $0x79c] sm:$0xff]
  %v368 = vld [vmem:[%s0 + $0x7a4] sm:$0xff]
  %v369 = vld [vmem:[%s0 + $0x7ac] sm:$0xff]
  %v370 = vld [vmem:[%s0 + $0x7b4] sm:$0xf]
  %v371 = vld [vmem:[%s0 + $0x7b8] sm:$0xff]
  %v372 = vld [vmem:[%s0 + $0x7c0] sm:$0xff]
  %v373 = vld [vmem:[%s0 + $0x7c8] sm:$0xff]
  %v374 = vld [vmem:[%s0 + $0x7d0] sm:$0xff]
  %v375 = vld [vmem:[%s0 + $0x7d8] sm:$0xff]
  %v376 = vld [vmem:[%s0 + $0x7e0] sm:$0xff]
  %v377 = vld [vmem:[%s0 + $0x7e8] sm:$0xf]
  %v378 = vld [vmem:[%s0 + $0x7ec] sm:$0xff]
  %v379 = vld [vmem:[%s0 + $0x7f4] sm:$0xff]
  %v380 = vld [vmem:[%s0 + $0x7fc] sm:$0xff]
  %v381 = vld [vmem:[%s0 + $0x804] sm:$0xff]
  %v382 = vld [vmem:[%s0 + $0x80c] sm:$0xff]
  %v383 = vld [vmem:[%s0 + $0x814] sm:$0xff]
  %v384 = vld [vmem:[%s0 + $0x81c] sm:$0xf]
  %v385 = vld [vmem:[%s0 + $0x820] sm:$0xff]
  %v386 = vld [vmem:[%s0 + $0x828] sm:$0xff]
  %v387 = vld [vmem:[%s0 + $0x830] sm:$0xff]
  %v388 = vld [vmem:[%s0 + $0x838] sm:$0xff]
  %v389 = vld [vmem:[%s0 + $0x840] sm:$0xff]
  %v390 = vld [vmem:[%s0 + $0x848] sm:$0xff]
  %v391 = vld [vmem:[%s0 + $0x850] sm:$0xf]
  %v392 = vld [vmem:[%s0 + $0x854] sm:$0xff]
  %v393 = vld [vmem:[%s0 + $0x85c] sm:$0xff]
  %v394 = vld [vmem:[%s0 + $0x864] sm:$0xff]
  %v395 = vld [vmem:[%s0 + $0x86c] sm:$0xff]
  %v396 = vld [vmem:[%s0 + $0x874] sm:$0xff]
  %v397 = vld [vmem:[%s0 + $0x87c] sm:$0xff]
  %v398 = vld [vmem:[%s0 + $0x884] sm:$0xf]
  %v399 = vld [vmem:[%s0 + $0x888] sm:$0x11]
  %v400 = vld [vmem:[%s0 + $0x890] sm:$0x11]
  %v401 = vld [vmem:[%s0 + $0x898] sm:$0x11]
  %v402 = vld [vmem:[%s0 + $0x8a0] sm:$0x11]
  %v403 = vld [vmem:[%s0 + $0x8a8] sm:$0x11]
  %v404 = vld [vmem:[%s0 + $0x8b0] sm:$0x11]
  %v405 = vld [vmem:[%s0 + $0x8b8] sm:$0x1]
  %v406 = vld [vmem:[%s1] sm:$0xf]
  %v407 = vld [vmem:[%s1 + $0x4] sm:$0xf]
  %v408 = vld [vmem:[%s1 + $0x8] sm:$0xf]
  %v409 = vld [vmem:[%s1 + $0xc] sm:$0xf]
  %v410 = vld [vmem:[%s1 + $0x10] sm:$0xf]
  %v411 = vld [vmem:[%s1 + $0x14] sm:$0xf]
  %v412 = vld [vmem:[%s1 + $0x18] sm:$0xf]
  %v413 = vld [vmem:[%s1 + $0x1c] sm:$0xf]
  %v414 = vld [vmem:[%s1 + $0x20] sm:$0xf]
  %v415 = vld [vmem:[%s1 + $0x24] sm:$0xf]
  %v416 = vld [vmem:[%s1 + $0x28] sm:$0xf]
  %v417 = vld [vmem:[%s1 + $0x2c] sm:$0xf]
  %v418 = vld [vmem:[%s1 + $0x30] sm:$0xf]
  %v419 = vld [vmem:[%s1 + $0x34] sm:$0xf]
  %v420 = vld [vmem:[%s1 + $0x38] sm:$0xf]
  %v421 = vld [vmem:[%s1 + $0x3c] sm:$0xf]
  %v422 = vld [vmem:[%s1 + $0x40] sm:$0xf]
  %v423 = vld [vmem:[%s1 + $0x44] sm:$0xf]
  %v424 = vld [vmem:[%s1 + $0x48] sm:$0xf]
  %v425 = vld [vmem:[%s1 + $0x4c] sm:$0xf]
  %v426 = vld [vmem:[%s1 + $0x50] sm:$0xf]
  %v427 = vld [vmem:[%s1 + $0x54] sm:$0xf]
  %v428 = vld [vmem:[%s1 + $0x58] sm:$0xf]
  %v429 = vld [vmem:[%s1 + $0x5c] sm:$0xf]
  %v430 = vld [vmem:[%s1 + $0x60] sm:$0xf]
  %v431 = vld [vmem:[%s1 + $0x64] sm:$0xf]
  %v432 = vld [vmem:[%s1 + $0x68] sm:$0xf]
  %v433 = vld [vmem:[%s1 + $0x6c] sm:$0xf]
  %v434 = vld [vmem:[%s1 + $0x70] sm:$0xf]
  %v435 = vld [vmem:[%s1 + $0x74] sm:$0xf]
  %v436 = vld [vmem:[%s1 + $0x78] sm:$0xf]
  %v437 = vld [vmem:[%s1 + $0x7c] sm:$0xf]
  %v438 = vld [vmem:[%s1 + $0x80] sm:$0xf]
  %v439 = vld [vmem:[%s1 + $0x84] sm:$0xf]
  %v440 = vld [vmem:[%s1 + $0x88] sm:$0xf]
  %v441 = vld [vmem:[%s1 + $0x8c] sm:$0xf]
  %v442 = vld [vmem:[%s1 + $0x90] sm:$0xf]
  %v443 = vld [vmem:[%s1 + $0x94] sm:$0xf]
  %v444 = vld [vmem:[%s1 + $0x98] sm:$0xf]
  %v445 = vld [vmem:[%s1 + $0x9c] sm:$0xf]
  %v446 = vld [vmem:[%s1 + $0xa0] sm:$0xf]
  %v447 = vld [vmem:[%s1 + $0xa4] sm:$0xf]
  %v448 = vld [vmem:[%s1 + $0xa8] sm:$0xf]
  %v449 = vld [vmem:[%s1 + $0xac] sm:$0xf]
  %v450 = vld [vmem:[%s1 + $0xb0] sm:$0xf]
  %v451 = vld [vmem:[%s1 + $0xb4] sm:$0xf]
  %v452 = vld [vmem:[%s1 + $0xb8] sm:$0xf]
  %v453 = vld [vmem:[%s1 + $0xbc] sm:$0xf]
  %v454 = vld [vmem:[%s1 + $0xc0] sm:$0xf]
  %v455 = vld [vmem:[%s1 + $0xc4] sm:$0xf]
  %v456 = vld [vmem:[%s1 + $0xc8] sm:$0xf]
  %v457 = vld [vmem:[%s1 + $0xcc] sm:$0xf]
  %v458 = vld [vmem:[%s1 + $0xd0] sm:$0xf]
  %v459 = vld [vmem:[%s1 + $0xd4] sm:$0xf]
  %v460 = vld [vmem:[%s1 + $0xd8] sm:$0xf]
  %v461 = vld [vmem:[%s1 + $0xdc] sm:$0xf]
  %v462 = vld [vmem:[%s1 + $0xe0] sm:$0xf]
  %v463 = vld [vmem:[%s1 + $0xe4] sm:$0xf]
  %v464 = vld [vmem:[%s1 + $0xe8] sm:$0xf]
  %v465 = vld [vmem:[%s1 + $0xec] sm:$0xf]
  %v466 = vld [vmem:[%s1 + $0xf0] sm:$0xf]
  %v467 = vld [vmem:[%s1 + $0xf4] sm:$0xf]
  %v468 = vld [vmem:[%s1 + $0xf8] sm:$0xf]
  %v469 = vld [vmem:[%s1 + $0xfc] sm:$0xf]
  %v470 = vld [vmem:[%s1 + $0x100] sm:$0xf]
  %v471 = vld [vmem:[%s1 + $0x104] sm:$0xf]
  %v472 = vld [vmem:[%s1 + $0x108] sm:$0xf]
  %v473 = vld [vmem:[%s1 + $0x10c] sm:$0xf]
  %v474 = vld [vmem:[%s1 + $0x110] sm:$0xf]
  %v475 = vld [vmem:[%s1 + $0x114] sm:$0xf]
  %v476 = vld [vmem:[%s1 + $0x118] sm:$0xf]
  %v477 = vld [vmem:[%s1 + $0x11c] sm:$0xf]
  %v478 = vld [vmem:[%s1 + $0x120] sm:$0xf]
  %v479 = vld [vmem:[%s1 + $0x124] sm:$0xf]
  %v480 = vld [vmem:[%s1 + $0x128] sm:$0xf]
  %v481 = vld [vmem:[%s1 + $0x12c] sm:$0xf]
  %v482 = vld [vmem:[%s1 + $0x130] sm:$0xf]
  %v483 = vld [vmem:[%s1 + $0x134] sm:$0xf]
  %v484 = vld [vmem:[%s1 + $0x138] sm:$0xf]
  %v485 = vld [vmem:[%s1 + $0x13c] sm:$0xf]
  %v486 = vld [vmem:[%s1 + $0x140] sm:$0xf]
  %v487 = vld [vmem:[%s1 + $0x144] sm:$0xf]
  %v488 = vld [vmem:[%s1 + $0x148] sm:$0xf]
  %v489 = vld [vmem:[%s1 + $0x14c] sm:$0xf]
  %v490 = vld [vmem:[%s1 + $0x150] sm:$0xf]
  %v491 = vld [vmem:[%s1 + $0x154] sm:$0xf]
  %v492 = vld [vmem:[%s1 + $0x158] sm:$0xf]
  %v493 = vld [vmem:[%s1 + $0x15c] sm:$0xf]
  %v494 = vld [vmem:[%s1 + $0x160] sm:$0xf]
  %v495 = vld [vmem:[%s1 + $0x164] sm:$0xf]
  %v496 = vld [vmem:[%s1 + $0x168] sm:$0xf]
  %v497 = vld [vmem:[%s1 + $0x16c] sm:$0xf]
  %v498 = vld [vmem:[%s1 + $0x170] sm:$0xf]
  %v499 = vld [vmem:[%s1 + $0x174] sm:$0xf]
  %v500 = vld [vmem:[%s1 + $0x178] sm:$0xf]
  %v501 = vld [vmem:[%s1 + $0x17c] sm:$0xf]
  %v502 = vld [vmem:[%s1 + $0x180] sm:$0xf]
  %v503 = vld [vmem:[%s1 + $0x184] sm:$0xf]
  %v504 = vld [vmem:[%s1 + $0x188] sm:$0xf]
  %v505 = vld [vmem:[%s1 + $0x18c] sm:$0xf]
  %v506 = vld [vmem:[%s1 + $0x190] sm:$0xf]
  %v507 = vld [vmem:[%s1 + $0x194] sm:$0xf]
  %v508 = vld [vmem:[%s1 + $0x198] sm:$0xf]
  %v509 = vld [vmem:[%s1 + $0x19c] sm:$0xf]
  %v510 = vld [vmem:[%s1 + $0x1a0] sm:$0xf]
  %v511 = vld [vmem:[%s1 + $0x1a4] sm:$0xf]
  %v512 = vld [vmem:[%s1 + $0x1a8] sm:$0xf]
  %v513 = vld [vmem:[%s1 + $0x1ac] sm:$0xf]
  %v514 = vld [vmem:[%s1 + $0x1b0] sm:$0xf]
  %v515 = vld [vmem:[%s1 + $0x1b4] sm:$0xf]
  %v516 = vld [vmem:[%s1 + $0x1b8] sm:$0xf]
  %v517 = vld [vmem:[%s1 + $0x1bc] sm:$0xf]
  %v518 = vld [vmem:[%s1 + $0x1c0] sm:$0xf]
  %v519 = vld [vmem:[%s1 + $0x1c4] sm:$0xf]
  %v520 = vld [vmem:[%s1 + $0x1c8] sm:$0xf]
  %v521 = vld [vmem:[%s1 + $0x1cc] sm:$0xf]
  %v522 = vld [vmem:[%s1 + $0x1d0] sm:$0xf]
  %v523 = vld [vmem:[%s1 + $0x1d4] sm:$0xf]
  %v524 = vld [vmem:[%s1 + $0x1d8] sm:$0xf]
  %v525 = vld [vmem:[%s1 + $0x1dc] sm:$0xf]
  %v526 = vld [vmem:[%s1 + $0x1e0] sm:$0xf]
  %v527 = vld [vmem:[%s1 + $0x1e4] sm:$0xf]
  %v528 = vld [vmem:[%s1 + $0x1e8] sm:$0xf]
  %v529 = vld [vmem:[%s1 + $0x1ec] sm:$0xf]
  %v530 = vld [vmem:[%s1 + $0x1f0] sm:$0xf]
  %v531 = vld [vmem:[%s1 + $0x1f4] sm:$0xf]
  %v532 = vld [vmem:[%s1 + $0x1f8] sm:$0xf]
  %v533 = vld [vmem:[%s1 + $0x1fc] sm:$0xf]
  %v534 = vld [vmem:[%s1 + $0x200] sm:$0xf]
  %v535 = vld [vmem:[%s1 + $0x204] sm:$0xf]
  %v536 = vld [vmem:[%s1 + $0x208] sm:$0xf]
  %v537 = vld [vmem:[%s1 + $0x20c] sm:$0xf]
  %v538 = vld [vmem:[%s1 + $0x210] sm:$0xf]
  %v539 = vld [vmem:[%s1 + $0x214] sm:$0xf]
  %v540 = vld [vmem:[%s1 + $0x218] sm:$0xf]
  %v541 = vld [vmem:[%s1 + $0x21c] sm:$0xf]
  %v542 = vld [vmem:[%s1 + $0x220] sm:$0xf]
  %v543 = vld [vmem:[%s1 + $0x224] sm:$0xf]
  %v544 = vld [vmem:[%s1 + $0x228] sm:$0xf]
  %v545 = vld [vmem:[%s1 + $0x22c] sm:$0xf]
  %v546 = vld [vmem:[%s1 + $0x230] sm:$0xf]
  %v547 = vld [vmem:[%s1 + $0x234] sm:$0xf]
  %v548 = vld [vmem:[%s1 + $0x238] sm:$0xf]
  %v549 = vld [vmem:[%s1 + $0x23c] sm:$0xf]
  %v550 = vld [vmem:[%s1 + $0x240] sm:$0xf]
  %v551 = vld [vmem:[%s1 + $0x244] sm:$0xf]
  %v552 = vld [vmem:[%s1 + $0x248] sm:$0xf]
  %v553 = vld [vmem:[%s1 + $0x24c] sm:$0xf]
  %v554 = vld [vmem:[%s1 + $0x250] sm:$0xf]
  %v555 = vld [vmem:[%s1 + $0x254] sm:$0xf]
  %v556 = vld [vmem:[%s1 + $0x258] sm:$0xf]
  %v557 = vld [vmem:[%s1 + $0x25c] sm:$0xf]
  %v558 = vld [vmem:[%s1 + $0x260] sm:$0xf]
  %v559 = vld [vmem:[%s1 + $0x264] sm:$0xf]
  %v560 = vld [vmem:[%s1 + $0x268] sm:$0xf]
  %v561 = vld [vmem:[%s1 + $0x26c] sm:$0xf]
  %v562 = vld [vmem:[%s1 + $0x270] sm:$0xf]
  %v563 = vld [vmem:[%s1 + $0x274] sm:$0xf]
  %v564 = vld [vmem:[%s1 + $0x278] sm:$0xf]
  %v565 = vld [vmem:[%s1 + $0x27c] sm:$0xf]
  %v566 = vld [vmem:[%s1 + $0x280] sm:$0xf]
  %v567 = vld [vmem:[%s1 + $0x284] sm:$0xf]
  %v568 = vld [vmem:[%s1 + $0x288] sm:$0xf]
  %v569 = vld [vmem:[%s1 + $0x28c] sm:$0xf]
  %v570 = vld [vmem:[%s1 + $0x290] sm:$0xf]
  %v571 = vld [vmem:[%s1 + $0x294] sm:$0xf]
  %v572 = vld [vmem:[%s1 + $0x298] sm:$0xf]
  %v573 = vld [vmem:[%s1 + $0x29c] sm:$0xf]
  %v574 = vld [vmem:[%s1 + $0x2a0] sm:$0xf]
  %v575 = vld [vmem:[%s1 + $0x2a4] sm:$0xf]
  %v576 = vld [vmem:[%s1 + $0x2a8] sm:$0xf]
  %v577 = vld [vmem:[%s1 + $0x2ac] sm:$0xf]
  %v578 = vld [vmem:[%s1 + $0x2b0] sm:$0xf]
  %v579 = vld [vmem:[%s1 + $0x2b4] sm:$0xf]
  %v580 = vld [vmem:[%s1 + $0x2b8] sm:$0xf]
  %v581 = vld [vmem:[%s1 + $0x2bc] sm:$0xf]
  %v582 = vld [vmem:[%s1 + $0x2c0] sm:$0xf]
  %v583 = vld [vmem:[%s1 + $0x2c4] sm:$0xf]
  %v584 = vld [vmem:[%s1 + $0x2c8] sm:$0xf]
  %v585 = vld [vmem:[%s1 + $0x2cc] sm:$0xf]
  %v586 = vld [vmem:[%s1 + $0x2d0] sm:$0xf]
  %v587 = vld [vmem:[%s1 + $0x2d4] sm:$0xf]
  %v588 = vld [vmem:[%s1 + $0x2d8] sm:$0xf]
  %v589 = vld [vmem:[%s1 + $0x2dc] sm:$0xf]
  %v590 = vld [vmem:[%s1 + $0x2e0] sm:$0xf]
  %v591 = vld [vmem:[%s1 + $0x2e4] sm:$0xf]
  %v592 = vld [vmem:[%s1 + $0x2e8] sm:$0xf]
  %v593 = vld [vmem:[%s1 + $0x2ec] sm:$0xf]
  %v594 = vld [vmem:[%s1 + $0x2f0] sm:$0xf]
  %v595 = vld [vmem:[%s1 + $0x2f4] sm:$0xf]
  %v596 = vld [vmem:[%s1 + $0x2f8] sm:$0xf]
  %v597 = vld [vmem:[%s1 + $0x2fc] sm:$0xf]
  %v598 = vld [vmem:[%s1 + $0x300] sm:$0xf]
  %v599 = vld [vmem:[%s1 + $0x304] sm:$0xf]
  %v600 = vld [vmem:[%s1 + $0x308] sm:$0xf]
  %v601 = vld [vmem:[%s1 + $0x30c] sm:$0xf]
  %v602 = vld [vmem:[%s1 + $0x310] sm:$0xf]
  %v603 = vld [vmem:[%s1 + $0x314] sm:$0xf]
  %v604 = vld [vmem:[%s1 + $0x318] sm:$0xf]
  %v605 = vld [vmem:[%s1 + $0x31c] sm:$0xf]
  %v606 = vld [vmem:[%s1 + $0x320] sm:$0xf]
  %v607 = vld [vmem:[%s1 + $0x324] sm:$0xf]
  %v608 = vld [vmem:[%s1 + $0x328] sm:$0xf]
  %v609 = vld [vmem:[%s1 + $0x32c] sm:$0xf]
  %v610 = vld [vmem:[%s1 + $0x330] sm:$0xf]
  %v611 = vld [vmem:[%s1 + $0x334] sm:$0xf]
  %v612 = vld [vmem:[%s1 + $0x338] sm:$0xf]
  %v613 = vld [vmem:[%s1 + $0x33c] sm:$0xf]
  %v915 = vunpack.c.l.b16 %v105
  %v916 = vunpack.c.h.b16 %v105
  %v917 = vunpack.c.l.b16 %v106
  %v918 = vunpack.c.h.b16 %v106
  %v919 = vunpack.c.l.b16 %v107
  %v920 = vunpack.c.h.b16 %v107
  %v921 = vunpack.c.l.b16 %v108
  %v922 = vunpack.c.h.b16 %v108
  %v923 = vunpack.c.l.b16 %v109
  %v924 = vunpack.c.h.b16 %v109
  %v925 = vunpack.c.l.b16 %v110
  %v926 = vunpack.c.h.b16 %v110
  %v927 = vunpack.c.l.b16 %v111
  %v928 = vunpack.c.l.b16 %v112
  %v929 = vunpack.c.h.b16 %v112
  %v930 = vunpack.c.l.b16 %v113
  %v931 = vunpack.c.h.b16 %v113
  %v932 = vunpack.c.l.b16 %v114
  %v933 = vunpack.c.h.b16 %v114
  %v934 = vunpack.c.l.b16 %v115
  %v935 = vunpack.c.h.b16 %v115
  %v936 = vunpack.c.l.b16 %v116
  %v937 = vunpack.c.h.b16 %v116
  %v938 = vunpack.c.l.b16 %v117
  %v939 = vunpack.c.h.b16 %v117
  %v940 = vunpack.c.l.b16 %v118
  %v941 = vunpack.c.l.b16 %v119
  %v942 = vunpack.c.h.b16 %v119
  %v943 = vunpack.c.l.b16 %v120
  %v944 = vunpack.c.h.b16 %v120
  %v945 = vunpack.c.l.b16 %v121
  %v946 = vunpack.c.h.b16 %v121
  %v947 = vunpack.c.l.b16 %v122
  %v948 = vunpack.c.h.b16 %v122
  %v949 = vunpack.c.l.b16 %v123
  %v950 = vunpack.c.h.b16 %v123
  %v951 = vunpack.c.l.b16 %v124
  %v952 = vunpack.c.h.b16 %v124
  %v953 = vunpack.c.l.b16 %v125
  %v954 = vunpack.c.l.b16 %v126
  %v955 = vunpack.c.h.b16 %v126
  %v956 = vunpack.c.l.b16 %v127
  %v957 = vunpack.c.h.b16 %v127
  %v958 = vunpack.c.l.b16 %v128
  %v959 = vunpack.c.h.b16 %v128
  %v960 = vunpack.c.l.b16 %v129
  %v961 = vunpack.c.h.b16 %v129
  %v962 = vunpack.c.l.b16 %v130
  %v963 = vunpack.c.h.b16 %v130
  %v964 = vunpack.c.l.b16 %v131
  %v965 = vunpack.c.h.b16 %v131
  %v966 = vunpack.c.l.b16 %v132
  %v967 = vunpack.c.l.b16 %v133
  %v968 = vunpack.c.h.b16 %v133
  %v969 = vunpack.c.l.b16 %v134
  %v970 = vunpack.c.h.b16 %v134
  %v971 = vunpack.c.l.b16 %v135
  %v972 = vunpack.c.h.b16 %v135
  %v973 = vunpack.c.l.b16 %v136
  %v974 = vunpack.c.h.b16 %v136
  %v975 = vunpack.c.l.b16 %v137
  %v976 = vunpack.c.h.b16 %v137
  %v977 = vunpack.c.l.b16 %v138
  %v978 = vunpack.c.h.b16 %v138
  %v979 = vunpack.c.l.b16 %v139
  %v980 = vunpack.c.l.b16 %v140
  %v981 = vunpack.c.h.b16 %v140
  %v982 = vunpack.c.l.b16 %v141
  %v983 = vunpack.c.h.b16 %v141
  %v984 = vunpack.c.l.b16 %v142
  %v985 = vunpack.c.h.b16 %v142
  %v986 = vunpack.c.l.b16 %v143
  %v987 = vunpack.c.h.b16 %v143
  %v988 = vunpack.c.l.b16 %v144
  %v989 = vunpack.c.h.b16 %v144
  %v990 = vunpack.c.l.b16 %v145
  %v991 = vunpack.c.h.b16 %v145
  %v992 = vunpack.c.l.b16 %v146
  %v993 = vunpack.c.l.b16 %v147
  %v994 = vunpack.c.h.b16 %v147
  %v995 = vunpack.c.l.b16 %v148
  %v996 = vunpack.c.h.b16 %v148
  %v997 = vunpack.c.l.b16 %v149
  %v998 = vunpack.c.h.b16 %v149
  %v999 = vunpack.c.l.b16 %v150
  %v1000 = vunpack.c.h.b16 %v150
  %v1001 = vunpack.c.l.b16 %v151
  %v1002 = vunpack.c.h.b16 %v151
  %v1003 = vunpack.c.l.b16 %v152
  %v1004 = vunpack.c.h.b16 %v152
  %v1005 = vunpack.c.l.b16 %v153
  %v1006 = vunpack.c.l.b16 %v154
  %v1007 = vunpack.c.h.b16 %v154
  %v1008 = vunpack.c.l.b16 %v155
  %v1009 = vunpack.c.h.b16 %v155
  %v1010 = vunpack.c.l.b16 %v156
  %v1011 = vunpack.c.h.b16 %v156
  %v1012 = vunpack.c.l.b16 %v157
  %v1013 = vunpack.c.h.b16 %v157
  %v1014 = vunpack.c.l.b16 %v158
  %v1015 = vunpack.c.h.b16 %v158
  %v1016 = vunpack.c.l.b16 %v159
  %v1017 = vunpack.c.h.b16 %v159
  %v1018 = vunpack.c.l.b16 %v160
  %v1019 = vunpack.c.l.b16 %v161
  %v1020 = vunpack.c.h.b16 %v161
  %v1021 = vunpack.c.l.b16 %v162
  %v1022 = vunpack.c.h.b16 %v162
  %v1023 = vunpack.c.l.b16 %v163
  %v1024 = vunpack.c.h.b16 %v163
  %v1025 = vunpack.c.l.b16 %v164
  %v1026 = vunpack.c.h.b16 %v164
  %v1027 = vunpack.c.l.b16 %v165
  %v1028 = vunpack.c.h.b16 %v165
  %v1029 = vunpack.c.l.b16 %v166
  %v1030 = vunpack.c.h.b16 %v166
  %v1031 = vunpack.c.l.b16 %v167
  %v1032 = vunpack.c.l.b16 %v168
  %v1033 = vunpack.c.h.b16 %v168
  %v1034 = vunpack.c.l.b16 %v169
  %v1035 = vunpack.c.h.b16 %v169
  %v1036 = vunpack.c.l.b16 %v170
  %v1037 = vunpack.c.h.b16 %v170
  %v1038 = vunpack.c.l.b16 %v171
  %v1039 = vunpack.c.h.b16 %v171
  %v1040 = vunpack.c.l.b16 %v172
  %v1041 = vunpack.c.h.b16 %v172
  %v1042 = vunpack.c.l.b16 %v173
  %v1043 = vunpack.c.h.b16 %v173
  %v1044 = vunpack.c.l.b16 %v174
  %v1045 = vunpack.c.l.b16 %v175
  %v1046 = vunpack.c.h.b16 %v175
  %v1047 = vunpack.c.l.b16 %v176
  %v1048 = vunpack.c.h.b16 %v176
  %v1049 = vunpack.c.l.b16 %v177
  %v1050 = vunpack.c.h.b16 %v177
  %v1051 = vunpack.c.l.b16 %v178
  %v1052 = vunpack.c.h.b16 %v178
  %v1053 = vunpack.c.l.b16 %v179
  %v1054 = vunpack.c.h.b16 %v179
  %v1055 = vunpack.c.l.b16 %v180
  %v1056 = vunpack.c.h.b16 %v180
  %v1057 = vunpack.c.l.b16 %v181
  %v1058 = vunpack.c.l.b16 %v182
  %v1059 = vunpack.c.h.b16 %v182
  %v1060 = vunpack.c.l.b16 %v183
  %v1061 = vunpack.c.h.b16 %v183
  %v1062 = vunpack.c.l.b16 %v184
  %v1063 = vunpack.c.h.b16 %v184
  %v1064 = vunpack.c.l.b16 %v185
  %v1065 = vunpack.c.h.b16 %v185
  %v1066 = vunpack.c.l.b16 %v186
  %v1067 = vunpack.c.h.b16 %v186
  %v1068 = vunpack.c.l.b16 %v187
  %v1069 = vunpack.c.h.b16 %v187
  %v1070 = vunpack.c.l.b16 %v188
  %v1071 = vunpack.c.l.b16 %v189
  %v1072 = vunpack.c.h.b16 %v189
  %v1073 = vunpack.c.l.b16 %v190
  %v1074 = vunpack.c.h.b16 %v190
  %v1075 = vunpack.c.l.b16 %v191
  %v1076 = vunpack.c.h.b16 %v191
  %v1077 = vunpack.c.l.b16 %v192
  %v1078 = vunpack.c.h.b16 %v192
  %v1079 = vunpack.c.l.b16 %v193
  %v1080 = vunpack.c.h.b16 %v193
  %v1081 = vunpack.c.l.b16 %v194
  %v1082 = vunpack.c.h.b16 %v194
  %v1083 = vunpack.c.l.b16 %v195
  %v1084 = vunpack.c.l.b16 %v196
  %v1085 = vunpack.c.h.b16 %v196
  %v1086 = vunpack.c.l.b16 %v197
  %v1087 = vunpack.c.h.b16 %v197
  %v1088 = vunpack.c.l.b16 %v198
  %v1089 = vunpack.c.h.b16 %v198
  %v1090 = vunpack.c.l.b16 %v199
  %v1091 = vunpack.c.h.b16 %v199
  %v1092 = vunpack.c.l.b16 %v200
  %v1093 = vunpack.c.h.b16 %v200
  %v1094 = vunpack.c.l.b16 %v201
  %v1095 = vunpack.c.h.b16 %v201
  %v1096 = vunpack.c.l.b16 %v202
  %v1097 = vunpack.c.l.b16 %v203
  %v1098 = vunpack.c.h.b16 %v203
  %v1099 = vunpack.c.l.b16 %v204
  %v1100 = vunpack.c.h.b16 %v204
  %v1101 = vunpack.c.l.b16 %v205
  %v1102 = vunpack.c.h.b16 %v205
  %v1103 = vunpack.c.l.b16 %v206
  %v1104 = vunpack.c.h.b16 %v206
  %v1105 = vunpack.c.l.b16 %v207
  %v1106 = vunpack.c.h.b16 %v207
  %v1107 = vunpack.c.l.b16 %v208
  %v1108 = vunpack.c.h.b16 %v208
  %v1109 = vunpack.c.l.b16 %v209
  %v1110 = vunpack.c.l.b16 %v210
  %v1111 = vunpack.c.h.b16 %v210
  %v1112 = vunpack.c.l.b16 %v211
  %v1113 = vunpack.c.h.b16 %v211
  %v1114 = vunpack.c.l.b16 %v212
  %v1115 = vunpack.c.h.b16 %v212
  %v1116 = vunpack.c.l.b16 %v213
  %v1117 = vunpack.c.h.b16 %v213
  %v1118 = vunpack.c.l.b16 %v214
  %v1119 = vunpack.c.h.b16 %v214
  %v1120 = vunpack.c.l.b16 %v215
  %v1121 = vunpack.c.h.b16 %v215
  %v1122 = vunpack.c.l.b16 %v216
  %v1123 = vunpack.c.l.b16 %v217
  %v1124 = vunpack.c.h.b16 %v217
  %v1125 = vunpack.c.l.b16 %v218
  %v1126 = vunpack.c.h.b16 %v218
  %v1127 = vunpack.c.l.b16 %v219
  %v1128 = vunpack.c.h.b16 %v219
  %v1129 = vunpack.c.l.b16 %v220
  %v1130 = vunpack.c.h.b16 %v220
  %v1131 = vunpack.c.l.b16 %v221
  %v1132 = vunpack.c.h.b16 %v221
  %v1133 = vunpack.c.l.b16 %v222
  %v1134 = vunpack.c.h.b16 %v222
  %v1135 = vunpack.c.l.b16 %v223
  %v1136 = vunpack.c.l.b16 %v224
  %v1137 = vunpack.c.h.b16 %v224
  %v1138 = vunpack.c.l.b16 %v225
  %v1139 = vunpack.c.h.b16 %v225
  %v1140 = vunpack.c.l.b16 %v226
  %v1141 = vunpack.c.h.b16 %v226
  %v1142 = vunpack.c.l.b16 %v227
  %v1143 = vunpack.c.h.b16 %v227
  %v1144 = vunpack.c.l.b16 %v228
  %v1145 = vunpack.c.h.b16 %v228
  %v1146 = vunpack.c.l.b16 %v229
  %v1147 = vunpack.c.h.b16 %v229
  %v1148 = vunpack.c.l.b16 %v230
  %v1149 = vunpack.c.l.b16 %v231
  %v1150 = vunpack.c.h.b16 %v231
  %v1151 = vunpack.c.l.b16 %v232
  %v1152 = vunpack.c.h.b16 %v232
  %v1153 = vunpack.c.l.b16 %v233
  %v1154 = vunpack.c.h.b16 %v233
  %v1155 = vunpack.c.l.b16 %v234
  %v1156 = vunpack.c.h.b16 %v234
  %v1157 = vunpack.c.l.b16 %v235
  %v1158 = vunpack.c.h.b16 %v235
  %v1159 = vunpack.c.l.b16 %v236
  %v1160 = vunpack.c.h.b16 %v236
  %v1161 = vunpack.c.l.b16 %v237
  %v1162 = vunpack.c.l.b16 %v238
  %v1163 = vunpack.c.h.b16 %v238
  %v1164 = vunpack.c.l.b16 %v239
  %v1165 = vunpack.c.h.b16 %v239
  %v1166 = vunpack.c.l.b16 %v240
  %v1167 = vunpack.c.h.b16 %v240
  %v1168 = vunpack.c.l.b16 %v241
  %v1169 = vunpack.c.h.b16 %v241
  %v1170 = vunpack.c.l.b16 %v242
  %v1171 = vunpack.c.h.b16 %v242
  %v1172 = vunpack.c.l.b16 %v243
  %v1173 = vunpack.c.h.b16 %v243
  %v1174 = vunpack.c.l.b16 %v244
  %v1175 = vunpack.c.l.b16 %v245
  %v1176 = vunpack.c.h.b16 %v245
  %v1177 = vunpack.c.l.b16 %v246
  %v1178 = vunpack.c.h.b16 %v246
  %v1179 = vunpack.c.l.b16 %v247
  %v1180 = vunpack.c.h.b16 %v247
  %v1181 = vunpack.c.l.b16 %v248
  %v1182 = vunpack.c.h.b16 %v248
  %v1183 = vunpack.c.l.b16 %v249
  %v1184 = vunpack.c.h.b16 %v249
  %v1185 = vunpack.c.l.b16 %v250
  %v1186 = vunpack.c.h.b16 %v250
  %v1187 = vunpack.c.l.b16 %v251
  %v1188 = vunpack.c.l.b16 %v252
  %v1189 = vunpack.c.h.b16 %v252
  %v1190 = vunpack.c.l.b16 %v253
  %v1191 = vunpack.c.h.b16 %v253
  %v1192 = vunpack.c.l.b16 %v254
  %v1193 = vunpack.c.h.b16 %v254
  %v1194 = vunpack.c.l.b16 %v255
  %v1195 = vunpack.c.h.b16 %v255
  %v1196 = vunpack.c.l.b16 %v256
  %v1197 = vunpack.c.h.b16 %v256
  %v1198 = vunpack.c.l.b16 %v257
  %v1199 = vunpack.c.h.b16 %v257
  %v1200 = vunpack.c.l.b16 %v258
  %v1201 = vunpack.c.l.b16 %v259
  %v1202 = vunpack.c.h.b16 %v259
  %v1203 = vunpack.c.l.b16 %v260
  %v1204 = vunpack.c.h.b16 %v260
  %v1205 = vunpack.c.l.b16 %v261
  %v1206 = vunpack.c.h.b16 %v261
  %v1207 = vunpack.c.l.b16 %v262
  %v1208 = vunpack.c.h.b16 %v262
  %v1209 = vunpack.c.l.b16 %v263
  %v1210 = vunpack.c.h.b16 %v263
  %v1211 = vunpack.c.l.b16 %v264
  %v1212 = vunpack.c.h.b16 %v264
  %v1213 = vunpack.c.l.b16 %v265
  %v1214 = vunpack.c.l.b16 %v266
  %v1215 = vunpack.c.h.b16 %v266
  %v1216 = vunpack.c.l.b16 %v267
  %v1217 = vunpack.c.h.b16 %v267
  %v1218 = vunpack.c.l.b16 %v268
  %v1219 = vunpack.c.h.b16 %v268
  %v1220 = vunpack.c.l.b16 %v269
  %v1221 = vunpack.c.h.b16 %v269
  %v1222 = vunpack.c.l.b16 %v270
  %v1223 = vunpack.c.h.b16 %v270
  %v1224 = vunpack.c.l.b16 %v271
  %v1225 = vunpack.c.h.b16 %v271
  %v1226 = vunpack.c.l.b16 %v272
  %v1227 = vunpack.c.l.b16 %v273
  %v1228 = vunpack.c.h.b16 %v273
  %v1229 = vunpack.c.l.b16 %v274
  %v1230 = vunpack.c.h.b16 %v274
  %v1231 = vunpack.c.l.b16 %v275
  %v1232 = vunpack.c.h.b16 %v275
  %v1233 = vunpack.c.l.b16 %v276
  %v1234 = vunpack.c.h.b16 %v276
  %v1235 = vunpack.c.l.b16 %v277
  %v1236 = vunpack.c.h.b16 %v277
  %v1237 = vunpack.c.l.b16 %v278
  %v1238 = vunpack.c.h.b16 %v278
  %v1239 = vunpack.c.l.b16 %v279
  %v1240 = vunpack.c.l.b16 %v280
  %v1241 = vunpack.c.h.b16 %v280
  %v1242 = vunpack.c.l.b16 %v281
  %v1243 = vunpack.c.h.b16 %v281
  %v1244 = vunpack.c.l.b16 %v282
  %v1245 = vunpack.c.h.b16 %v282
  %v1246 = vunpack.c.l.b16 %v283
  %v1247 = vunpack.c.h.b16 %v283
  %v1248 = vunpack.c.l.b16 %v284
  %v1249 = vunpack.c.h.b16 %v284
  %v1250 = vunpack.c.l.b16 %v285
  %v1251 = vunpack.c.h.b16 %v285
  %v1252 = vunpack.c.l.b16 %v286
  %v1253 = vunpack.c.l.b16 %v287
  %v1254 = vunpack.c.h.b16 %v287
  %v1255 = vunpack.c.l.b16 %v288
  %v1256 = vunpack.c.h.b16 %v288
  %v1257 = vunpack.c.l.b16 %v289
  %v1258 = vunpack.c.h.b16 %v289
  %v1259 = vunpack.c.l.b16 %v290
  %v1260 = vunpack.c.h.b16 %v290
  %v1261 = vunpack.c.l.b16 %v291
  %v1262 = vunpack.c.h.b16 %v291
  %v1263 = vunpack.c.l.b16 %v292
  %v1264 = vunpack.c.h.b16 %v292
  %v1265 = vunpack.c.l.b16 %v293
  %v1266 = vunpack.c.l.b16 %v294
  %v1267 = vunpack.c.h.b16 %v294
  %v1268 = vunpack.c.l.b16 %v295
  %v1269 = vunpack.c.h.b16 %v295
  %v1270 = vunpack.c.l.b16 %v296
  %v1271 = vunpack.c.h.b16 %v296
  %v1272 = vunpack.c.l.b16 %v297
  %v1273 = vunpack.c.h.b16 %v297
  %v1274 = vunpack.c.l.b16 %v298
  %v1275 = vunpack.c.h.b16 %v298
  %v1276 = vunpack.c.l.b16 %v299
  %v1277 = vunpack.c.h.b16 %v299
  %v1278 = vunpack.c.l.b16 %v300
  %v1279 = vunpack.c.l.b16 %v301
  %v1280 = vunpack.c.h.b16 %v301
  %v1281 = vunpack.c.l.b16 %v302
  %v1282 = vunpack.c.h.b16 %v302
  %v1283 = vunpack.c.l.b16 %v303
  %v1284 = vunpack.c.h.b16 %v303
  %v1285 = vunpack.c.l.b16 %v304
  %v1286 = vunpack.c.h.b16 %v304
  %v1287 = vunpack.c.l.b16 %v305
  %v1288 = vunpack.c.h.b16 %v305
  %v1289 = vunpack.c.l.b16 %v306
  %v1290 = vunpack.c.h.b16 %v306
  %v1291 = vunpack.c.l.b16 %v307
  %v1292 = vunpack.c.l.b16 %v308
  %v1293 = vunpack.c.h.b16 %v308
  %v1294 = vunpack.c.l.b16 %v309
  %v1295 = vunpack.c.h.b16 %v309
  %v1296 = vunpack.c.l.b16 %v310
  %v1297 = vunpack.c.h.b16 %v310
  %v1298 = vunpack.c.l.b16 %v311
  %v1299 = vunpack.c.h.b16 %v311
  %v1300 = vunpack.c.l.b16 %v312
  %v1301 = vunpack.c.h.b16 %v312
  %v1302 = vunpack.c.l.b16 %v313
  %v1303 = vunpack.c.h.b16 %v313
  %v1304 = vunpack.c.l.b16 %v314
  %v1305 = vunpack.c.l.b16 %v315
  %v1306 = vunpack.c.h.b16 %v315
  %v1307 = vunpack.c.l.b16 %v316
  %v1308 = vunpack.c.h.b16 %v316
  %v1309 = vunpack.c.l.b16 %v317
  %v1310 = vunpack.c.h.b16 %v317
  %v1311 = vunpack.c.l.b16 %v318
  %v1312 = vunpack.c.h.b16 %v318
  %v1313 = vunpack.c.l.b16 %v319
  %v1314 = vunpack.c.h.b16 %v319
  %v1315 = vunpack.c.l.b16 %v320
  %v1316 = vunpack.c.h.b16 %v320
  %v1317 = vunpack.c.l.b16 %v321
  %v1318 = vunpack.c.l.b16 %v322
  %v1319 = vunpack.c.h.b16 %v322
  %v1320 = vunpack.c.l.b16 %v323
  %v1321 = vunpack.c.h.b16 %v323
  %v1322 = vunpack.c.l.b16 %v324
  %v1323 = vunpack.c.h.b16 %v324
  %v1324 = vunpack.c.l.b16 %v325
  %v1325 = vunpack.c.h.b16 %v325
  %v1326 = vunpack.c.l.b16 %v326
  %v1327 = vunpack.c.h.b16 %v326
  %v1328 = vunpack.c.l.b16 %v327
  %v1329 = vunpack.c.h.b16 %v327
  %v1330 = vunpack.c.l.b16 %v328
  %v1331 = vunpack.c.l.b16 %v329
  %v1332 = vunpack.c.h.b16 %v329
  %v1333 = vunpack.c.l.b16 %v330
  %v1334 = vunpack.c.h.b16 %v330
  %v1335 = vunpack.c.l.b16 %v331
  %v1336 = vunpack.c.h.b16 %v331
  %v1337 = vunpack.c.l.b16 %v332
  %v1338 = vunpack.c.h.b16 %v332
  %v1339 = vunpack.c.l.b16 %v333
  %v1340 = vunpack.c.h.b16 %v333
  %v1341 = vunpack.c.l.b16 %v334
  %v1342 = vunpack.c.h.b16 %v334
  %v1343 = vunpack.c.l.b16 %v335
  %v1344 = vunpack.c.l.b16 %v336
  %v1345 = vunpack.c.h.b16 %v336
  %v1346 = vunpack.c.l.b16 %v337
  %v1347 = vunpack.c.h.b16 %v337
  %v1348 = vunpack.c.l.b16 %v338
  %v1349 = vunpack.c.h.b16 %v338
  %v1350 = vunpack.c.l.b16 %v339
  %v1351 = vunpack.c.h.b16 %v339
  %v1352 = vunpack.c.l.b16 %v340
  %v1353 = vunpack.c.h.b16 %v340
  %v1354 = vunpack.c.l.b16 %v341
  %v1355 = vunpack.c.h.b16 %v341
  %v1356 = vunpack.c.l.b16 %v342
  %v1357 = vunpack.c.l.b16 %v343
  %v1358 = vunpack.c.h.b16 %v343
  %v1359 = vunpack.c.l.b16 %v344
  %v1360 = vunpack.c.h.b16 %v344
  %v1361 = vunpack.c.l.b16 %v345
  %v1362 = vunpack.c.h.b16 %v345
  %v1363 = vunpack.c.l.b16 %v346
  %v1364 = vunpack.c.h.b16 %v346
  %v1365 = vunpack.c.l.b16 %v347
  %v1366 = vunpack.c.h.b16 %v347
  %v1367 = vunpack.c.l.b16 %v348
  %v1368 = vunpack.c.h.b16 %v348
  %v1369 = vunpack.c.l.b16 %v349
  %v1370 = vunpack.c.l.b16 %v350
  %v1371 = vunpack.c.h.b16 %v350
  %v1372 = vunpack.c.l.b16 %v351
  %v1373 = vunpack.c.h.b16 %v351
  %v1374 = vunpack.c.l.b16 %v352
  %v1375 = vunpack.c.h.b16 %v352
  %v1376 = vunpack.c.l.b16 %v353
  %v1377 = vunpack.c.h.b16 %v353
  %v1378 = vunpack.c.l.b16 %v354
  %v1379 = vunpack.c.h.b16 %v354
  %v1380 = vunpack.c.l.b16 %v355
  %v1381 = vunpack.c.h.b16 %v355
  %v1382 = vunpack.c.l.b16 %v356
  %v1383 = vunpack.c.l.b16 %v357
  %v1384 = vunpack.c.h.b16 %v357
  %v1385 = vunpack.c.l.b16 %v358
  %v1386 = vunpack.c.h.b16 %v358
  %v1387 = vunpack.c.l.b16 %v359
  %v1388 = vunpack.c.h.b16 %v359
  %v1389 = vunpack.c.l.b16 %v360
  %v1390 = vunpack.c.h.b16 %v360
  %v1391 = vunpack.c.l.b16 %v361
  %v1392 = vunpack.c.h.b16 %v361
  %v1393 = vunpack.c.l.b16 %v362
  %v1394 = vunpack.c.h.b16 %v362
  %v1395 = vunpack.c.l.b16 %v363
  %v1396 = vunpack.c.l.b16 %v364
  %v1397 = vunpack.c.h.b16 %v364
  %v1398 = vunpack.c.l.b16 %v365
  %v1399 = vunpack.c.h.b16 %v365
  %v1400 = vunpack.c.l.b16 %v366
  %v1401 = vunpack.c.h.b16 %v366
  %v1402 = vunpack.c.l.b16 %v367
  %v1403 = vunpack.c.h.b16 %v367
  %v1404 = vunpack.c.l.b16 %v368
  %v1405 = vunpack.c.h.b16 %v368
  %v1406 = vunpack.c.l.b16 %v369
  %v1407 = vunpack.c.h.b16 %v369
  %v1408 = vunpack.c.l.b16 %v370
  %v1409 = vunpack.c.l.b16 %v371
  %v1410 = vunpack.c.h.b16 %v371
  %v1411 = vunpack.c.l.b16 %v372
  %v1412 = vunpack.c.h.b16 %v372
  %v1413 = vunpack.c.l.b16 %v373
  %v1414 = vunpack.c.h.b16 %v373
  %v1415 = vunpack.c.l.b16 %v374
  %v1416 = vunpack.c.h.b16 %v374
  %v1417 = vunpack.c.l.b16 %v375
  %v1418 = vunpack.c.h.b16 %v375
  %v1419 = vunpack.c.l.b16 %v376
  %v1420 = vunpack.c.h.b16 %v376
  %v1421 = vunpack.c.l.b16 %v377
  %v1422 = vunpack.c.l.b16 %v378
  %v1423 = vunpack.c.h.b16 %v378
  %v1424 = vunpack.c.l.b16 %v379
  %v1425 = vunpack.c.h.b16 %v379
  %v1426 = vunpack.c.l.b16 %v380
  %v1427 = vunpack.c.h.b16 %v380
  %v1428 = vunpack.c.l.b16 %v381
  %v1429 = vunpack.c.h.b16 %v381
  %v1430 = vunpack.c.l.b16 %v382
  %v1431 = vunpack.c.h.b16 %v382
  %v1432 = vunpack.c.l.b16 %v383
  %v1433 = vunpack.c.h.b16 %v383
  %v1434 = vunpack.c.l.b16 %v384
  %v1435 = vunpack.c.l.b16 %v385
  %v1436 = vunpack.c.h.b16 %v385
  %v1437 = vunpack.c.l.b16 %v386
  %v1438 = vunpack.c.h.b16 %v386
  %v1439 = vunpack.c.l.b16 %v387
  %v1440 = vunpack.c.h.b16 %v387
  %v1441 = vunpack.c.l.b16 %v388
  %v1442 = vunpack.c.h.b16 %v388
  %v1443 = vunpack.c.l.b16 %v389
  %v1444 = vunpack.c.h.b16 %v389
  %v1445 = vunpack.c.l.b16 %v390
  %v1446 = vunpack.c.h.b16 %v390
  %v1447 = vunpack.c.l.b16 %v391
  %v1448 = vunpack.c.l.b16 %v392
  %v1449 = vunpack.c.h.b16 %v392
  %v1450 = vunpack.c.l.b16 %v393
  %v1451 = vunpack.c.h.b16 %v393
  %v1452 = vunpack.c.l.b16 %v394
  %v1453 = vunpack.c.h.b16 %v394
  %v1454 = vunpack.c.l.b16 %v395
  %v1455 = vunpack.c.h.b16 %v395
  %v1456 = vunpack.c.l.b16 %v396
  %v1457 = vunpack.c.h.b16 %v396
  %v1458 = vunpack.c.l.b16 %v397
  %v1459 = vunpack.c.h.b16 %v397
  %v1460 = vunpack.c.l.b16 %v398
  %v1461 = vunpack.c.l.b16 %v399
  %v1462 = vunpack.c.h.b16 %v399
  %v1463 = vunpack.c.l.b16 %v400
  %v1464 = vunpack.c.h.b16 %v400
  %v1465 = vunpack.c.l.b16 %v401
  %v1466 = vunpack.c.h.b16 %v401
  %v1467 = vunpack.c.l.b16 %v402
  %v1468 = vunpack.c.h.b16 %v402
  %v1469 = vunpack.c.l.b16 %v403
  %v1470 = vunpack.c.h.b16 %v403
  %v1471 = vunpack.c.l.b16 %v404
  %v1472 = vunpack.c.h.b16 %v404
  %v1473 = vunpack.c.l.b16 %v405
  %v1474 = vpack.c.b16 %v928, %v915
  %v1475 = vpack.c.b16 %v929, %v916
  %v1476 = vpack.c.b16 %v930, %v917
  %v1477 = vpack.c.b16 %v931, %v918
  %v1478 = vpack.c.b16 %v932, %v919
  %v1479 = vpack.c.b16 %v933, %v920
  %v1480 = vpack.c.b16 %v934, %v921
  %v1481 = vpack.c.b16 %v935, %v922
  %v1482 = vpack.c.b16 %v936, %v923
  %v1483 = vpack.c.b16 %v937, %v924
  %v1484 = vpack.c.b16 %v938, %v925
  %v1485 = vpack.c.b16 %v939, %v926
  %v1486 = vpack.c.b16 %v940, %v927
  %v1487 = vpack.c.b16 %v954, %v941
  %v1488 = vpack.c.b16 %v955, %v942
  %v1489 = vpack.c.b16 %v956, %v943
  %v1490 = vpack.c.b16 %v957, %v944
  %v1491 = vpack.c.b16 %v958, %v945
  %v1492 = vpack.c.b16 %v959, %v946
  %v1493 = vpack.c.b16 %v960, %v947
  %v1494 = vpack.c.b16 %v961, %v948
  %v1495 = vpack.c.b16 %v962, %v949
  %v1496 = vpack.c.b16 %v963, %v950
  %v1497 = vpack.c.b16 %v964, %v951
  %v1498 = vpack.c.b16 %v965, %v952
  %v1499 = vpack.c.b16 %v966, %v953
  %v1500 = vpack.c.b16 %v980, %v967
  %v1501 = vpack.c.b16 %v981, %v968
  %v1502 = vpack.c.b16 %v982, %v969
  %v1503 = vpack.c.b16 %v983, %v970
  %v1504 = vpack.c.b16 %v984, %v971
  %v1505 = vpack.c.b16 %v985, %v972
  %v1506 = vpack.c.b16 %v986, %v973
  %v1507 = vpack.c.b16 %v987, %v974
  %v1508 = vpack.c.b16 %v988, %v975
  %v1509 = vpack.c.b16 %v989, %v976
  %v1510 = vpack.c.b16 %v990, %v977
  %v1511 = vpack.c.b16 %v991, %v978
  %v1512 = vpack.c.b16 %v992, %v979
  %v1513 = vpack.c.b16 %v1006, %v993
  %v1514 = vpack.c.b16 %v1007, %v994
  %v1515 = vpack.c.b16 %v1008, %v995
  %v1516 = vpack.c.b16 %v1009, %v996
  %v1517 = vpack.c.b16 %v1010, %v997
  %v1518 = vpack.c.b16 %v1011, %v998
  %v1519 = vpack.c.b16 %v1012, %v999
  %v1520 = vpack.c.b16 %v1013, %v1000
  %v1521 = vpack.c.b16 %v1014, %v1001
  %v1522 = vpack.c.b16 %v1015, %v1002
  %v1523 = vpack.c.b16 %v1016, %v1003
  %v1524 = vpack.c.b16 %v1017, %v1004
  %v1525 = vpack.c.b16 %v1018, %v1005
  %v1526 = vpack.c.b16 %v1032, %v1019
  %v1527 = vpack.c.b16 %v1033, %v1020
  %v1528 = vpack.c.b16 %v1034, %v1021
  %v1529 = vpack.c.b16 %v1035, %v1022
  %v1530 = vpack.c.b16 %v1036, %v1023
  %v1531 = vpack.c.b16 %v1037, %v1024
  %v1532 = vpack.c.b16 %v1038, %v1025
  %v1533 = vpack.c.b16 %v1039, %v1026
  %v1534 = vpack.c.b16 %v1040, %v1027
  %v1535 = vpack.c.b16 %v1041, %v1028
  %v1536 = vpack.c.b16 %v1042, %v1029
  %v1537 = vpack.c.b16 %v1043, %v1030
  %v1538 = vpack.c.b16 %v1044, %v1031
  %v1539 = vpack.c.b16 %v1058, %v1045
  %v1540 = vpack.c.b16 %v1059, %v1046
  %v1541 = vpack.c.b16 %v1060, %v1047
  %v1542 = vpack.c.b16 %v1061, %v1048
  %v1543 = vpack.c.b16 %v1062, %v1049
  %v1544 = vpack.c.b16 %v1063, %v1050
  %v1545 = vpack.c.b16 %v1064, %v1051
  %v1546 = vpack.c.b16 %v1065, %v1052
  %v1547 = vpack.c.b16 %v1066, %v1053
  %v1548 = vpack.c.b16 %v1067, %v1054
  %v1549 = vpack.c.b16 %v1068, %v1055
  %v1550 = vpack.c.b16 %v1069, %v1056
  %v1551 = vpack.c.b16 %v1070, %v1057
  %v1552 = vpack.c.b16 %v1084, %v1071
  %v1553 = vpack.c.b16 %v1085, %v1072
  %v1554 = vpack.c.b16 %v1086, %v1073
  %v1555 = vpack.c.b16 %v1087, %v1074
  %v1556 = vpack.c.b16 %v1088, %v1075
  %v1557 = vpack.c.b16 %v1089, %v1076
  %v1558 = vpack.c.b16 %v1090, %v1077
  %v1559 = vpack.c.b16 %v1091, %v1078
  %v1560 = vpack.c.b16 %v1092, %v1079
  %v1561 = vpack.c.b16 %v1093, %v1080
  %v1562 = vpack.c.b16 %v1094, %v1081
  %v1563 = vpack.c.b16 %v1095, %v1082
  %v1564 = vpack.c.b16 %v1096, %v1083
  %v1565 = vpack.c.b16 %v1110, %v1097
  %v1566 = vpack.c.b16 %v1111, %v1098
  %v1567 = vpack.c.b16 %v1112, %v1099
  %v1568 = vpack.c.b16 %v1113, %v1100
  %v1569 = vpack.c.b16 %v1114, %v1101
  %v1570 = vpack.c.b16 %v1115, %v1102
  %v1571 = vpack.c.b16 %v1116, %v1103
  %v1572 = vpack.c.b16 %v1117, %v1104
  %v1573 = vpack.c.b16 %v1118, %v1105
  %v1574 = vpack.c.b16 %v1119, %v1106
  %v1575 = vpack.c.b16 %v1120, %v1107
  %v1576 = vpack.c.b16 %v1121, %v1108
  %v1577 = vpack.c.b16 %v1122, %v1109
  %v1578 = vpack.c.b16 %v1136, %v1123
  %v1579 = vpack.c.b16 %v1137, %v1124
  %v1580 = vpack.c.b16 %v1138, %v1125
  %v1581 = vpack.c.b16 %v1139, %v1126
  %v1582 = vpack.c.b16 %v1140, %v1127
  %v1583 = vpack.c.b16 %v1141, %v1128
  %v1584 = vpack.c.b16 %v1142, %v1129
  %v1585 = vpack.c.b16 %v1143, %v1130
  %v1586 = vpack.c.b16 %v1144, %v1131
  %v1587 = vpack.c.b16 %v1145, %v1132
  %v1588 = vpack.c.b16 %v1146, %v1133
  %v1589 = vpack.c.b16 %v1147, %v1134
  %v1590 = vpack.c.b16 %v1148, %v1135
  %v1591 = vpack.c.b16 %v1162, %v1149
  %v1592 = vpack.c.b16 %v1163, %v1150
  %v1593 = vpack.c.b16 %v1164, %v1151
  %v1594 = vpack.c.b16 %v1165, %v1152
  %v1595 = vpack.c.b16 %v1166, %v1153
  %v1596 = vpack.c.b16 %v1167, %v1154
  %v1597 = vpack.c.b16 %v1168, %v1155
  %v1598 = vpack.c.b16 %v1169, %v1156
  %v1599 = vpack.c.b16 %v1170, %v1157
  %v1600 = vpack.c.b16 %v1171, %v1158
  %v1601 = vpack.c.b16 %v1172, %v1159
  %v1602 = vpack.c.b16 %v1173, %v1160
  %v1603 = vpack.c.b16 %v1174, %v1161
  %v1604 = vpack.c.b16 %v1188, %v1175
  %v1605 = vpack.c.b16 %v1189, %v1176
  %v1606 = vpack.c.b16 %v1190, %v1177
  %v1607 = vpack.c.b16 %v1191, %v1178
  %v1608 = vpack.c.b16 %v1192, %v1179
  %v1609 = vpack.c.b16 %v1193, %v1180
  %v1610 = vpack.c.b16 %v1194, %v1181
  %v1611 = vpack.c.b16 %v1195, %v1182
  %v1612 = vpack.c.b16 %v1196, %v1183
  %v1613 = vpack.c.b16 %v1197, %v1184
  %v1614 = vpack.c.b16 %v1198, %v1185
  %v1615 = vpack.c.b16 %v1199, %v1186
  %v1616 = vpack.c.b16 %v1200, %v1187
  %v1617 = vpack.c.b16 %v1214, %v1201
  %v1618 = vpack.c.b16 %v1215, %v1202
  %v1619 = vpack.c.b16 %v1216, %v1203
  %v1620 = vpack.c.b16 %v1217, %v1204
  %v1621 = vpack.c.b16 %v1218, %v1205
  %v1622 = vpack.c.b16 %v1219, %v1206
  %v1623 = vpack.c.b16 %v1220, %v1207
  %v1624 = vpack.c.b16 %v1221, %v1208
  %v1625 = vpack.c.b16 %v1222, %v1209
  %v1626 = vpack.c.b16 %v1223, %v1210
  %v1627 = vpack.c.b16 %v1224, %v1211
  %v1628 = vpack.c.b16 %v1225, %v1212
  %v1629 = vpack.c.b16 %v1226, %v1213
  %v1630 = vpack.c.b16 %v1240, %v1227
  %v1631 = vpack.c.b16 %v1241, %v1228
  %v1632 = vpack.c.b16 %v1242, %v1229
  %v1633 = vpack.c.b16 %v1243, %v1230
  %v1634 = vpack.c.b16 %v1244, %v1231
  %v1635 = vpack.c.b16 %v1245, %v1232
  %v1636 = vpack.c.b16 %v1246, %v1233
  %v1637 = vpack.c.b16 %v1247, %v1234
  %v1638 = vpack.c.b16 %v1248, %v1235
  %v1639 = vpack.c.b16 %v1249, %v1236
  %v1640 = vpack.c.b16 %v1250, %v1237
  %v1641 = vpack.c.b16 %v1251, %v1238
  %v1642 = vpack.c.b16 %v1252, %v1239
  %v1643 = vpack.c.b16 %v1266, %v1253
  %v1644 = vpack.c.b16 %v1267, %v1254
  %v1645 = vpack.c.b16 %v1268, %v1255
  %v1646 = vpack.c.b16 %v1269, %v1256
  %v1647 = vpack.c.b16 %v1270, %v1257
  %v1648 = vpack.c.b16 %v1271, %v1258
  %v1649 = vpack.c.b16 %v1272, %v1259
  %v1650 = vpack.c.b16 %v1273, %v1260
  %v1651 = vpack.c.b16 %v1274, %v1261
  %v1652 = vpack.c.b16 %v1275, %v1262
  %v1653 = vpack.c.b16 %v1276, %v1263
  %v1654 = vpack.c.b16 %v1277, %v1264
  %v1655 = vpack.c.b16 %v1278, %v1265
  %v1656 = vpack.c.b16 %v1292, %v1279
  %v1657 = vpack.c.b16 %v1293, %v1280
  %v1658 = vpack.c.b16 %v1294, %v1281
  %v1659 = vpack.c.b16 %v1295, %v1282
  %v1660 = vpack.c.b16 %v1296, %v1283
  %v1661 = vpack.c.b16 %v1297, %v1284
  %v1662 = vpack.c.b16 %v1298, %v1285
  %v1663 = vpack.c.b16 %v1299, %v1286
  %v1664 = vpack.c.b16 %v1300, %v1287
  %v1665 = vpack.c.b16 %v1301, %v1288
  %v1666 = vpack.c.b16 %v1302, %v1289
  %v1667 = vpack.c.b16 %v1303, %v1290
  %v1668 = vpack.c.b16 %v1304, %v1291
  %v1669 = vpack.c.b16 %v1318, %v1305
  %v1670 = vpack.c.b16 %v1319, %v1306
  %v1671 = vpack.c.b16 %v1320, %v1307
  %v1672 = vpack.c.b16 %v1321, %v1308
  %v1673 = vpack.c.b16 %v1322, %v1309
  %v1674 = vpack.c.b16 %v1323, %v1310
  %v1675 = vpack.c.b16 %v1324, %v1311
  %v1676 = vpack.c.b16 %v1325, %v1312
  %v1677 = vpack.c.b16 %v1326, %v1313
  %v1678 = vpack.c.b16 %v1327, %v1314
  %v1679 = vpack.c.b16 %v1328, %v1315
  %v1680 = vpack.c.b16 %v1329, %v1316
  %v1681 = vpack.c.b16 %v1330, %v1317
  %v1682 = vpack.c.b16 %v1344, %v1331
  %v1683 = vpack.c.b16 %v1345, %v1332
  %v1684 = vpack.c.b16 %v1346, %v1333
  %v1685 = vpack.c.b16 %v1347, %v1334
  %v1686 = vpack.c.b16 %v1348, %v1335
  %v1687 = vpack.c.b16 %v1349, %v1336
  %v1688 = vpack.c.b16 %v1350, %v1337
  %v1689 = vpack.c.b16 %v1351, %v1338
  %v1690 = vpack.c.b16 %v1352, %v1339
  %v1691 = vpack.c.b16 %v1353, %v1340
  %v1692 = vpack.c.b16 %v1354, %v1341
  %v1693 = vpack.c.b16 %v1355, %v1342
  %v1694 = vpack.c.b16 %v1356, %v1343
  %v1695 = vpack.c.b16 %v1370, %v1357
  %v1696 = vpack.c.b16 %v1371, %v1358
  %v1697 = vpack.c.b16 %v1372, %v1359
  %v1698 = vpack.c.b16 %v1373, %v1360
  %v1699 = vpack.c.b16 %v1374, %v1361
  %v1700 = vpack.c.b16 %v1375, %v1362
  %v1701 = vpack.c.b16 %v1376, %v1363
  %v1702 = vpack.c.b16 %v1377, %v1364
  %v1703 = vpack.c.b16 %v1378, %v1365
  %v1704 = vpack.c.b16 %v1379, %v1366
  %v1705 = vpack.c.b16 %v1380, %v1367
  %v1706 = vpack.c.b16 %v1381, %v1368
  %v1707 = vpack.c.b16 %v1382, %v1369
  %v1708 = vpack.c.b16 %v1396, %v1383
  %v1709 = vpack.c.b16 %v1397, %v1384
  %v1710 = vpack.c.b16 %v1398, %v1385
  %v1711 = vpack.c.b16 %v1399, %v1386
  %v1712 = vpack.c.b16 %v1400, %v1387
  %v1713 = vpack.c.b16 %v1401, %v1388
  %v1714 = vpack.c.b16 %v1402, %v1389
  %v1715 = vpack.c.b16 %v1403, %v1390
  %v1716 = vpack.c.b16 %v1404, %v1391
  %v1717 = vpack.c.b16 %v1405, %v1392
  %v1718 = vpack.c.b16 %v1406, %v1393
  %v1719 = vpack.c.b16 %v1407, %v1394
  %v1720 = vpack.c.b16 %v1408, %v1395
  %v1721 = vpack.c.b16 %v1422, %v1409
  %v1722 = vpack.c.b16 %v1423, %v1410
  %v1723 = vpack.c.b16 %v1424, %v1411
  %v1724 = vpack.c.b16 %v1425, %v1412
  %v1725 = vpack.c.b16 %v1426, %v1413
  %v1726 = vpack.c.b16 %v1427, %v1414
  %v1727 = vpack.c.b16 %v1428, %v1415
  %v1728 = vpack.c.b16 %v1429, %v1416
  %v1729 = vpack.c.b16 %v1430, %v1417
  %v1730 = vpack.c.b16 %v1431, %v1418
  %v1731 = vpack.c.b16 %v1432, %v1419
  %v1732 = vpack.c.b16 %v1433, %v1420
  %v1733 = vpack.c.b16 %v1434, %v1421
  %v1734 = vpack.c.b16 %v1448, %v1435
  %v1735 = vpack.c.b16 %v1449, %v1436
  %v1736 = vpack.c.b16 %v1450, %v1437
  %v1737 = vpack.c.b16 %v1451, %v1438
  %v1738 = vpack.c.b16 %v1452, %v1439
  %v1739 = vpack.c.b16 %v1453, %v1440
  %v1740 = vpack.c.b16 %v1454, %v1441
  %v1741 = vpack.c.b16 %v1455, %v1442
  %v1742 = vpack.c.b16 %v1456, %v1443
  %v1743 = vpack.c.b16 %v1457, %v1444
  %v1744 = vpack.c.b16 %v1458, %v1445
  %v1745 = vpack.c.b16 %v1459, %v1446
  %v1746 = vpack.c.b16 %v1460, %v1447
  %v1747 = vpack.c.b16 %v1461, %v1461
  %v1748 = vpack.c.b16 %v1462, %v1462
  %v1749 = vpack.c.b16 %v1463, %v1463
  %v1750 = vpack.c.b16 %v1464, %v1464
  %v1751 = vpack.c.b16 %v1465, %v1465
  %v1752 = vpack.c.b16 %v1466, %v1466
  %v1753 = vpack.c.b16 %v1467, %v1467
  %v1754 = vpack.c.b16 %v1468, %v1468
  %v1755 = vpack.c.b16 %v1469, %v1469
  %v1756 = vpack.c.b16 %v1470, %v1470
  %v1757 = vpack.c.b16 %v1471, %v1471
  %v1758 = vpack.c.b16 %v1472, %v1472
  %v1759 = vpack.c.b16 %v1473, %v1473
  %v2254 = vunpack.c.l.b16 %v406
  %v2255 = vunpack.c.l.b16 %v407
  %v2256 = vunpack.c.l.b16 %v408
  %v2257 = vunpack.c.l.b16 %v409
  %v2258 = vunpack.c.l.b16 %v410
  %v2259 = vunpack.c.l.b16 %v411
  %v2260 = vunpack.c.l.b16 %v412
  %v2261 = vunpack.c.l.b16 %v413
  %v2262 = vunpack.c.l.b16 %v414
  %v2263 = vunpack.c.l.b16 %v415
  %v2264 = vunpack.c.l.b16 %v416
  %v2265 = vunpack.c.l.b16 %v417
  %v2266 = vunpack.c.l.b16 %v418
  %v2267 = vunpack.c.l.b16 %v419
  %v2268 = vunpack.c.l.b16 %v420
  %v2269 = vunpack.c.l.b16 %v421
  %v2270 = vunpack.c.l.b16 %v422
  %v2271 = vunpack.c.l.b16 %v423
  %v2272 = vunpack.c.l.b16 %v424
  %v2273 = vunpack.c.l.b16 %v425
  %v2274 = vunpack.c.l.b16 %v426
  %v2275 = vunpack.c.l.b16 %v427
  %v2276 = vunpack.c.l.b16 %v428
  %v2277 = vunpack.c.l.b16 %v429
  %v2278 = vunpack.c.l.b16 %v430
  %v2279 = vunpack.c.l.b16 %v431
  %v2280 = vunpack.c.l.b16 %v432
  %v2281 = vunpack.c.l.b16 %v433
  %v2282 = vunpack.c.l.b16 %v434
  %v2283 = vunpack.c.l.b16 %v435
  %v2284 = vunpack.c.l.b16 %v436
  %v2285 = vunpack.c.l.b16 %v437
  %v2286 = vunpack.c.l.b16 %v438
  %v2287 = vunpack.c.l.b16 %v439
  %v2288 = vunpack.c.l.b16 %v440
  %v2289 = vunpack.c.l.b16 %v441
  %v2290 = vunpack.c.l.b16 %v442
  %v2291 = vunpack.c.l.b16 %v443
  %v2292 = vunpack.c.l.b16 %v444
  %v2293 = vunpack.c.l.b16 %v445
  %v2294 = vunpack.c.l.b16 %v446
  %v2295 = vunpack.c.l.b16 %v447
  %v2296 = vunpack.c.l.b16 %v448
  %v2297 = vunpack.c.l.b16 %v449
  %v2298 = vunpack.c.l.b16 %v450
  %v2299 = vunpack.c.l.b16 %v451
  %v2300 = vunpack.c.l.b16 %v452
  %v2301 = vunpack.c.l.b16 %v453
  %v2302 = vunpack.c.l.b16 %v454
  %v2303 = vunpack.c.l.b16 %v455
  %v2304 = vunpack.c.l.b16 %v456
  %v2305 = vunpack.c.l.b16 %v457
  %v2306 = vunpack.c.l.b16 %v458
  %v2307 = vunpack.c.l.b16 %v459
  %v2308 = vunpack.c.l.b16 %v460
  %v2309 = vunpack.c.l.b16 %v461
  %v2310 = vunpack.c.l.b16 %v462
  %v2311 = vunpack.c.l.b16 %v463
  %v2312 = vunpack.c.l.b16 %v464
  %v2313 = vunpack.c.l.b16 %v465
  %v2314 = vunpack.c.l.b16 %v466
  %v2315 = vunpack.c.l.b16 %v467
  %v2316 = vunpack.c.l.b16 %v468
  %v2317 = vunpack.c.l.b16 %v469
  %v2318 = vunpack.c.l.b16 %v470
  %v2319 = vunpack.c.l.b16 %v471
  %v2320 = vunpack.c.l.b16 %v472
  %v2321 = vunpack.c.l.b16 %v473
  %v2322 = vunpack.c.l.b16 %v474
  %v2323 = vunpack.c.l.b16 %v475
  %v2324 = vunpack.c.l.b16 %v476
  %v2325 = vunpack.c.l.b16 %v477
  %v2326 = vunpack.c.l.b16 %v478
  %v2327 = vunpack.c.l.b16 %v479
  %v2328 = vunpack.c.l.b16 %v480
  %v2329 = vunpack.c.l.b16 %v481
  %v2330 = vunpack.c.l.b16 %v482
  %v2331 = vunpack.c.l.b16 %v483
  %v2332 = vunpack.c.l.b16 %v484
  %v2333 = vunpack.c.l.b16 %v485
  %v2334 = vunpack.c.l.b16 %v486
  %v2335 = vunpack.c.l.b16 %v487
  %v2336 = vunpack.c.l.b16 %v488
  %v2337 = vunpack.c.l.b16 %v489
  %v2338 = vunpack.c.l.b16 %v490
  %v2339 = vunpack.c.l.b16 %v491
  %v2340 = vunpack.c.l.b16 %v492
  %v2341 = vunpack.c.l.b16 %v493
  %v2342 = vunpack.c.l.b16 %v494
  %v2343 = vunpack.c.l.b16 %v495
  %v2344 = vunpack.c.l.b16 %v496
  %v2345 = vunpack.c.l.b16 %v497
  %v2346 = vunpack.c.l.b16 %v498
  %v2347 = vunpack.c.l.b16 %v499
  %v2348 = vunpack.c.l.b16 %v500
  %v2349 = vunpack.c.l.b16 %v501
  %v2350 = vunpack.c.l.b16 %v502
  %v2351 = vunpack.c.l.b16 %v503
  %v2352 = vunpack.c.l.b16 %v504
  %v2353 = vunpack.c.l.b16 %v505
  %v2354 = vunpack.c.l.b16 %v506
  %v2355 = vunpack.c.l.b16 %v507
  %v2356 = vunpack.c.l.b16 %v508
  %v2357 = vunpack.c.l.b16 %v509
  %v2358 = vunpack.c.l.b16 %v510
  %v2359 = vunpack.c.l.b16 %v511
  %v2360 = vunpack.c.l.b16 %v512
  %v2361 = vunpack.c.l.b16 %v513
  %v2362 = vunpack.c.l.b16 %v514
  %v2363 = vunpack.c.l.b16 %v515
  %v2364 = vunpack.c.l.b16 %v516
  %v2365 = vunpack.c.l.b16 %v517
  %v2366 = vunpack.c.l.b16 %v518
  %v2367 = vunpack.c.l.b16 %v519
  %v2368 = vunpack.c.l.b16 %v520
  %v2369 = vunpack.c.l.b16 %v521
  %v2370 = vunpack.c.l.b16 %v522
  %v2371 = vunpack.c.l.b16 %v523
  %v2372 = vunpack.c.l.b16 %v524
  %v2373 = vunpack.c.l.b16 %v525
  %v2374 = vunpack.c.l.b16 %v526
  %v2375 = vunpack.c.l.b16 %v527
  %v2376 = vunpack.c.l.b16 %v528
  %v2377 = vunpack.c.l.b16 %v529
  %v2378 = vunpack.c.l.b16 %v530
  %v2379 = vunpack.c.l.b16 %v531
  %v2380 = vunpack.c.l.b16 %v532
  %v2381 = vunpack.c.l.b16 %v533
  %v2382 = vunpack.c.l.b16 %v534
  %v2383 = vunpack.c.l.b16 %v535
  %v2384 = vunpack.c.l.b16 %v536
  %v2385 = vunpack.c.l.b16 %v537
  %v2386 = vunpack.c.l.b16 %v538
  %v2387 = vunpack.c.l.b16 %v539
  %v2388 = vunpack.c.l.b16 %v540
  %v2389 = vunpack.c.l.b16 %v541
  %v2390 = vunpack.c.l.b16 %v542
  %v2391 = vunpack.c.l.b16 %v543
  %v2392 = vunpack.c.l.b16 %v544
  %v2393 = vunpack.c.l.b16 %v545
  %v2394 = vunpack.c.l.b16 %v546
  %v2395 = vunpack.c.l.b16 %v547
  %v2396 = vunpack.c.l.b16 %v548
  %v2397 = vunpack.c.l.b16 %v549
  %v2398 = vunpack.c.l.b16 %v550
  %v2399 = vunpack.c.l.b16 %v551
  %v2400 = vunpack.c.l.b16 %v552
  %v2401 = vunpack.c.l.b16 %v553
  %v2402 = vunpack.c.l.b16 %v554
  %v2403 = vunpack.c.l.b16 %v555
  %v2404 = vunpack.c.l.b16 %v556
  %v2405 = vunpack.c.l.b16 %v557
  %v2406 = vunpack.c.l.b16 %v558
  %v2407 = vunpack.c.l.b16 %v559
  %v2408 = vunpack.c.l.b16 %v560
  %v2409 = vunpack.c.l.b16 %v561
  %v2410 = vunpack.c.l.b16 %v562
  %v2411 = vunpack.c.l.b16 %v563
  %v2412 = vunpack.c.l.b16 %v564
  %v2413 = vunpack.c.l.b16 %v565
  %v2414 = vunpack.c.l.b16 %v566
  %v2415 = vunpack.c.l.b16 %v567
  %v2416 = vunpack.c.l.b16 %v568
  %v2417 = vunpack.c.l.b16 %v569
  %v2418 = vunpack.c.l.b16 %v570
  %v2419 = vunpack.c.l.b16 %v571
  %v2420 = vunpack.c.l.b16 %v572
  %v2421 = vunpack.c.l.b16 %v573
  %v2422 = vunpack.c.l.b16 %v574
  %v2423 = vunpack.c.l.b16 %v575
  %v2424 = vunpack.c.l.b16 %v576
  %v2425 = vunpack.c.l.b16 %v577
  %v2426 = vunpack.c.l.b16 %v578
  %v2427 = vunpack.c.l.b16 %v579
  %v2428 = vunpack.c.l.b16 %v580
  %v2429 = vunpack.c.l.b16 %v581
  %v2430 = vunpack.c.l.b16 %v582
  %v2431 = vunpack.c.l.b16 %v583
  %v2432 = vunpack.c.l.b16 %v584
  %v2433 = vunpack.c.l.b16 %v585
  %v2434 = vunpack.c.l.b16 %v586
  %v2435 = vunpack.c.l.b16 %v587
  %v2436 = vunpack.c.l.b16 %v588
  %v2437 = vunpack.c.l.b16 %v589
  %v2438 = vunpack.c.l.b16 %v590
  %v2439 = vunpack.c.l.b16 %v591
  %v2440 = vunpack.c.l.b16 %v592
  %v2441 = vunpack.c.l.b16 %v593
  %v2442 = vunpack.c.l.b16 %v594
  %v2443 = vunpack.c.l.b16 %v595
  %v2444 = vunpack.c.l.b16 %v596
  %v2445 = vunpack.c.l.b16 %v597
  %v2446 = vunpack.c.l.b16 %v598
  %v2447 = vunpack.c.l.b16 %v599
  %v2448 = vunpack.c.l.b16 %v600
  %v2449 = vunpack.c.l.b16 %v601
  %v2450 = vunpack.c.l.b16 %v602
  %v2451 = vunpack.c.l.b16 %v603
  %v2452 = vunpack.c.l.b16 %v604
  %v2453 = vunpack.c.l.b16 %v605
  %v2454 = vunpack.c.l.b16 %v606
  %v2455 = vunpack.c.l.b16 %v607
  %v2456 = vunpack.c.l.b16 %v608
  %v2457 = vunpack.c.l.b16 %v609
  %v2458 = vunpack.c.l.b16 %v610
  %v2459 = vunpack.c.l.b16 %v611
  %v2460 = vunpack.c.l.b16 %v612
  %v2461 = vunpack.c.l.b16 %v613
  %v2462 = vpack.c.b16 %v2255, %v2254
  %v2463 = vpack.c.b16 %v2257, %v2256
  %v2464 = vpack.c.b16 %v2259, %v2258
  %v2465 = vpack.c.b16 %v2261, %v2260
  %v2466 = vpack.c.b16 %v2263, %v2262
  %v2467 = vpack.c.b16 %v2265, %v2264
  %v2468 = vpack.c.b16 %v2267, %v2266
  %v2469 = vpack.c.b16 %v2269, %v2268
  %v2470 = vpack.c.b16 %v2271, %v2270
  %v2471 = vpack.c.b16 %v2273, %v2272
  %v2472 = vpack.c.b16 %v2275, %v2274
  %v2473 = vpack.c.b16 %v2277, %v2276
  %v2474 = vpack.c.b16 %v2279, %v2278
  %v2475 = vpack.c.b16 %v2281, %v2280
  %v2476 = vpack.c.b16 %v2283, %v2282
  %v2477 = vpack.c.b16 %v2285, %v2284
  %v2478 = vpack.c.b16 %v2287, %v2286
  %v2479 = vpack.c.b16 %v2289, %v2288
  %v2480 = vpack.c.b16 %v2291, %v2290
  %v2481 = vpack.c.b16 %v2293, %v2292
  %v2482 = vpack.c.b16 %v2295, %v2294
  %v2483 = vpack.c.b16 %v2297, %v2296
  %v2484 = vpack.c.b16 %v2299, %v2298
  %v2485 = vpack.c.b16 %v2301, %v2300
  %v2486 = vpack.c.b16 %v2303, %v2302
  %v2487 = vpack.c.b16 %v2305, %v2304
  %v2488 = vpack.c.b16 %v2307, %v2306
  %v2489 = vpack.c.b16 %v2309, %v2308
  %v2490 = vpack.c.b16 %v2311, %v2310
  %v2491 = vpack.c.b16 %v2313, %v2312
  %v2492 = vpack.c.b16 %v2315, %v2314
  %v2493 = vpack.c.b16 %v2317, %v2316
  %v2494 = vpack.c.b16 %v2319, %v2318
  %v2495 = vpack.c.b16 %v2321, %v2320
  %v2496 = vpack.c.b16 %v2323, %v2322
  %v2497 = vpack.c.b16 %v2325, %v2324
  %v2498 = vpack.c.b16 %v2327, %v2326
  %v2499 = vpack.c.b16 %v2329, %v2328
  %v2500 = vpack.c.b16 %v2331, %v2330
  %v2501 = vpack.c.b16 %v2333, %v2332
  %v2502 = vpack.c.b16 %v2335, %v2334
  %v2503 = vpack.c.b16 %v2337, %v2336
  %v2504 = vpack.c.b16 %v2339, %v2338
  %v2505 = vpack.c.b16 %v2341, %v2340
  %v2506 = vpack.c.b16 %v2343, %v2342
  %v2507 = vpack.c.b16 %v2345, %v2344
  %v2508 = vpack.c.b16 %v2347, %v2346
  %v2509 = vpack.c.b16 %v2349, %v2348
  %v2510 = vpack.c.b16 %v2351, %v2350
  %v2511 = vpack.c.b16 %v2353, %v2352
  %v2512 = vpack.c.b16 %v2355, %v2354
  %v2513 = vpack.c.b16 %v2357, %v2356
  %v2514 = vpack.c.b16 %v2359, %v2358
  %v2515 = vpack.c.b16 %v2361, %v2360
  %v2516 = vpack.c.b16 %v2363, %v2362
  %v2517 = vpack.c.b16 %v2365, %v2364
  %v2518 = vpack.c.b16 %v2367, %v2366
  %v2519 = vpack.c.b16 %v2369, %v2368
  %v2520 = vpack.c.b16 %v2371, %v2370
  %v2521 = vpack.c.b16 %v2373, %v2372
  %v2522 = vpack.c.b16 %v2375, %v2374
  %v2523 = vpack.c.b16 %v2377, %v2376
  %v2524 = vpack.c.b16 %v2379, %v2378
  %v2525 = vpack.c.b16 %v2381, %v2380
  %v2526 = vpack.c.b16 %v2383, %v2382
  %v2527 = vpack.c.b16 %v2385, %v2384
  %v2528 = vpack.c.b16 %v2387, %v2386
  %v2529 = vpack.c.b16 %v2389, %v2388
  %v2530 = vpack.c.b16 %v2391, %v2390
  %v2531 = vpack.c.b16 %v2393, %v2392
  %v2532 = vpack.c.b16 %v2395, %v2394
  %v2533 = vpack.c.b16 %v2397, %v2396
  %v2534 = vpack.c.b16 %v2399, %v2398
  %v2535 = vpack.c.b16 %v2401, %v2400
  %v2536 = vpack.c.b16 %v2403, %v2402
  %v2537 = vpack.c.b16 %v2405, %v2404
  %v2538 = vpack.c.b16 %v2407, %v2406
  %v2539 = vpack.c.b16 %v2409, %v2408
  %v2540 = vpack.c.b16 %v2411, %v2410
  %v2541 = vpack.c.b16 %v2413, %v2412
  %v2542 = vpack.c.b16 %v2415, %v2414
  %v2543 = vpack.c.b16 %v2417, %v2416
  %v2544 = vpack.c.b16 %v2419, %v2418
  %v2545 = vpack.c.b16 %v2421, %v2420
  %v2546 = vpack.c.b16 %v2423, %v2422
  %v2547 = vpack.c.b16 %v2425, %v2424
  %v2548 = vpack.c.b16 %v2427, %v2426
  %v2549 = vpack.c.b16 %v2429, %v2428
  %v2550 = vpack.c.b16 %v2431, %v2430
  %v2551 = vpack.c.b16 %v2433, %v2432
  %v2552 = vpack.c.b16 %v2435, %v2434
  %v2553 = vpack.c.b16 %v2437, %v2436
  %v2554 = vpack.c.b16 %v2439, %v2438
  %v2555 = vpack.c.b16 %v2441, %v2440
  %v2556 = vpack.c.b16 %v2443, %v2442
  %v2557 = vpack.c.b16 %v2445, %v2444
  %v2558 = vpack.c.b16 %v2447, %v2446
  %v2559 = vpack.c.b16 %v2449, %v2448
  %v2560 = vpack.c.b16 %v2451, %v2450
  %v2561 = vpack.c.b16 %v2453, %v2452
  %v2562 = vpack.c.b16 %v2455, %v2454
  %v2563 = vpack.c.b16 %v2457, %v2456
  %v2564 = vpack.c.b16 %v2459, %v2458
  %v2565 = vpack.c.b16 %v2461, %v2460
  %2670 = vmatprep.subr.bf16.mxu0 0
  %2671 = vmatpush1.bf16.msra.mxu0 %v2462
  %2672 = vmatprep.subr.bf16.mxu0 0
  %2673 = vmatpush1.bf16.msra.mxu0 %v2463
  %2674 = vmatprep.subr.bf16.mxu0 0
  %2675 = vmatpush1.bf16.msra.mxu0 %v2464
  %2676 = vmatprep.subr.bf16.mxu0 0
  %2677 = vmatpush1.bf16.msra.mxu0 %v2465
  %2678 = vmatprep.subr.bf16.mxu0 0
  %2679 = vmatpush1.bf16.msra.mxu0 %v2466
  %2680 = vmatprep.subr.bf16.mxu0 0
  %2681 = vmatpush1.bf16.msra.mxu0 %v2467
  %2682 = vmatprep.subr.bf16.mxu0 0
  %2683 = vmatpush1.bf16.msra.mxu0 %v2468
  %2684 = vmatprep.subr.bf16.mxu0 0
  %2685 = vmatpush1.bf16.msra.mxu0 %v2469
  %2686 = vmatprep.subr.bf16.mxu0 0
  %2687 = vmatpush1.bf16.msra.mxu0 %v2470
  %2688 = vmatprep.subr.bf16.mxu0 0
  %2689 = vmatpush1.bf16.msra.mxu0 %v2471
  %2690 = vmatprep.subr.bf16.mxu0 0
  %2691 = vmatpush1.bf16.msra.mxu0 %v2472
  %2692 = vmatprep.subr.bf16.mxu0 0
  %2693 = vmatpush1.bf16.msra.mxu0 %v2473
  %2694 = vmatprep.subr.bf16.mxu0 0
  %2695 = vmatpush1.bf16.msra.mxu0 %v2474
  %2696 = vmatprep.subr.bf16.mxu0 0
  %2697 = vmatpush1.bf16.msra.mxu0 %v2475
  %2698 = vmatprep.subr.bf16.mxu0 0
  %2699 = vmatpush1.bf16.msra.mxu0 %v2476
  %2700 = vmatprep.subr.bf16.mxu0 0
  %2701 = vmatpush1.bf16.msra.mxu0 %v2477
  %2702 = vmatprep.mubr.bf16.mxu0 %v1475
  %2703 = vmatmul.mubr.bf16.gmra.mrb[0].mxu0 %v1474
  %v2704 = vpop.f32.mrb[0].mxu0
  %v2705 = vadd.f32 0.0, %v2704
  %v2706 = vpop.f32.mrb[0].mxu0
  %v2707 = vpop.f32.mrb[0].mxu0
  %v2708 = vadd.f32 0.0, %v2707
  %v2709 = vpop.f32.mrb[0].mxu0
  %2710 = vmatprep.mubr.bf16.mxu0 %v1488
  %2711 = vmatmul.mubr.bf16.gmra.mrb[0].mxu0 %v1487
  %v2712 = vpop.f32.mrb[0].mxu0
  %v2713 = vadd.f32 0.0, %v2712
  %v2714 = vpop.f32.mrb[0].mxu0
  %v2715 = vpop.f32.mrb[0].mxu0
  %v2716 = vadd.f32 0.0, %v2715
  %v2717 = vpop.f32.mrb[0].mxu0
  %2718 = vmatprep.mubr.bf16.mxu0 %v1501
  %2719 = vmatmul.mubr.bf16.gmra.mrb[0].mxu0 %v1500
  %v2720 = vpop.f32.mrb[0].mxu0
  %v2721 = vadd.f32 0.0, %v2720
  %v2722 = vpop.f32.mrb[0].mxu0
  %v2723 = vpop.f32.mrb[0].mxu0
  %v2724 = vadd.f32 0.0, %v2723
  %v2725 = vpop.f32.mrb[0].mxu0
  %2726 = vmatprep.mubr.bf16.mxu0 %v1514
  %2727 = vmatmul.mubr.bf16.gmra.mrb[0].mxu0 %v1513
  %v2728 = vpop.f32.mrb[0].mxu0
  %v2729 = vadd.f32 0.0, %v2728
  %v2730 = vpop.f32.mrb[0].mxu0
  %v2731 = vpop.f32.mrb[0].mxu0
  %v2732 = vadd.f32 0.0, %v2731
  %v2733 = vpop.f32.mrb[0].mxu0
  %2734 = vmatprep.mubr.bf16.mxu0 %v1527
  %2735 = vmatmul.mubr.bf16.gmra.mrb[0].mxu0 %v1526
  %v2736 = vpop.f32.mrb[0].mxu0
  %v2737 = vadd.f32 0.0, %v2736
  %v2738 = vpop.f32.mrb[0].mxu0
  %v2739 = vpop.f32.mrb[0].mxu0
  %v2740 = vadd.f32 0.0, %v2739
  %v2741 = vpop.f32.mrb[0].mxu0
  %2742 = vmatprep.mubr.bf16.mxu0 %v1540
  %2743 = vmatmul.mubr.bf16.gmra.mrb[0].mxu0 %v1539
  %v2744 = vpop.f32.mrb[0].mxu0
  %v2745 = vadd.f32 0.0, %v2744
  %v2746 = vpop.f32.mrb[0].mxu0
  %v2747 = vpop.f32.mrb[0].mxu0
  %v2748 = vadd.f32 0.0, %v2747
  %v2749 = vpop.f32.mrb[0].mxu0
  %2750 = vmatprep.mubr.bf16.mxu0 %v1553
  %2751 = vmatmul.mubr.bf16.gmra.mrb[0].mxu0 %v1552
  %v2752 = vpop.f32.mrb[0].mxu0
  %v2753 = vadd.f32 0.0, %v2752
  %v2754 = vpop.f32.mrb[0].mxu0
  %v2755 = vpop.f32.mrb[0].mxu0
  %v2756 = vadd.f32 0.0, %v2755
  %v2757 = vpop.f32.mrb[0].mxu0
  %2758 = vmatprep.mubr.bf16.mxu0 %v1566
  %2759 = vmatmul.mubr.bf16.gmra.mrb[0].mxu0 %v1565
  %v2760 = vpop.f32.mrb[0].mxu0
  %v2761 = vadd.f32 0.0, %v2760
  %v2762 = vpop.f32.mrb[0].mxu0
  %v2763 = vpop.f32.mrb[0].mxu0
  %v2764 = vadd.f32 0.0, %v2763
  %v2765 = vpop.f32.mrb[0].mxu0
  %2766 = vmatprep.mubr.bf16.mxu0 %v1579
  %2767 = vmatmul.mubr.bf16.gmra.mrb[0].mxu0 %v1578
  %v2768 = vpop.f32.mrb[0].mxu0
  %v2769 = vadd.f32 0.0, %v2768
  %v2770 = vpop.f32.mrb[0].mxu0
  %v2771 = vpop.f32.mrb[0].mxu0
  %v2772 = vadd.f32 0.0, %v2771
  %v2773 = vpop.f32.mrb[0].mxu0
  %2774 = vmatprep.mubr.bf16.mxu0 %v1592
  %2775 = vmatmul.mubr.bf16.gmra.mrb[0].mxu0 %v1591
  %v2776 = vpop.f32.mrb[0].mxu0
  %v2777 = vadd.f32 0.0, %v2776
  %v2778 = vpop.f32.mrb[0].mxu0
  %v2779 = vpop.f32.mrb[0].mxu0
  %v2780 = vadd.f32 0.0, %v2779
  %v2781 = vpop.f32.mrb[0].mxu0
  %2782 = vmatprep.mubr.bf16.mxu0 %v1605
  %2783 = vmatmul.mubr.bf16.gmra.mrb[0].mxu0 %v1604
  %v2784 = vpop.f32.mrb[0].mxu0
  %v2785 = vadd.f32 0.0, %v2784
  %v2786 = vpop.f32.mrb[0].mxu0
  %v2787 = vpop.f32.mrb[0].mxu0
  %v2788 = vadd.f32 0.0, %v2787
  %v2789 = vpop.f32.mrb[0].mxu0
  %2790 = vmatprep.mubr.bf16.mxu0 %v1618
  %2791 = vmatmul.mubr.bf16.gmra.mrb[0].mxu0 %v1617
  %v2792 = vpop.f32.mrb[0].mxu0
  %v2793 = vadd.f32 0.0, %v2792
  %v2794 = vpop.f32.mrb[0].mxu0
  %v2795 = vpop.f32.mrb[0].mxu0
  %v2796 = vadd.f32 0.0, %v2795
  %v2797 = vpop.f32.mrb[0].mxu0
  %2798 = vmatprep.mubr.bf16.mxu0 %v1631
  %2799 = vmatmul.mubr.bf16.gmra.mrb[0].mxu0 %v1630
  %v2800 = vpop.f32.mrb[0].mxu0
  %v2801 = vadd.f32 0.0, %v2800
  %v2802 = vpop.f32.mrb[0].mxu0
  %v2803 = vpop.f32.mrb[0].mxu0
  %v2804 = vadd.f32 0.0, %v2803
  %v2805 = vpop.f32.mrb[0].mxu0
  %2806 = vmatprep.mubr.bf16.mxu0 %v1644
  %2807 = vmatmul.mubr.bf16.gmra.mrb[0].mxu0 %v1643
  %v2808 = vpop.f32.mrb[0].mxu0
  %v2809 = vadd.f32 0.0, %v2808
  %v2810 = vpop.f32.mrb[0].mxu0
  %v2811 = vpop.f32.mrb[0].mxu0
  %v2812 = vadd.f32 0.0, %v2811
  %v2813 = vpop.f32.mrb[0].mxu0
  %2814 = vmatprep.mubr.bf16.mxu0 %v1657
  %2815 = vmatmul.mubr.bf16.gmra.mrb[0].mxu0 %v1656
  %v2816 = vpop.f32.mrb[0].mxu0
  %v2817 = vadd.f32 0.0, %v2816
  %v2818 = vpop.f32.mrb[0].mxu0
  %v2819 = vpop.f32.mrb[0].mxu0
  %v2820 = vadd.f32 0.0, %v2819
  %v2821 = vpop.f32.mrb[0].mxu0
  %2822 = vmatprep.mubr.bf16.mxu0 %v1670
  %2823 = vmatmul.mubr.bf16.gmra.mrb[0].mxu0 %v1669
  %v2824 = vpop.f32.mrb[0].mxu0
  %v2825 = vadd.f32 0.0, %v2824
  %v2826 = vpop.f32.mrb[0].mxu0
  %v2827 = vpop.f32.mrb[0].mxu0
  %v2828 = vadd.f32 0.0, %v2827
  %v2829 = vpop.f32.mrb[0].mxu0
  %2830 = vmatprep.mubr.bf16.mxu0 %v1683
  %2831 = vmatmul.mubr.bf16.gmra.mrb[0].mxu0 %v1682
  %v2832 = vpop.f32.mrb[0].mxu0
  %v2833 = vadd.f32 0.0, %v2832
  %v2834 = vpop.f32.mrb[0].mxu0
  %v2835 = vpop.f32.mrb[0].mxu0
  %v2836 = vadd.f32 0.0, %v2835
  %v2837 = vpop.f32.mrb[0].mxu0
  %2838 = vmatprep.mubr.bf16.mxu0 %v1696
  %2839 = vmatmul.mubr.bf16.gmra.mrb[0].mxu0 %v1695
  %v2840 = vpop.f32.mrb[0].mxu0
  %v2841 = vadd.f32 0.0, %v2840
  %v2842 = vpop.f32.mrb[0].mxu0
  %v2843 = vpop.f32.mrb[0].mxu0
  %v2844 = vadd.f32 0.0, %v2843
  %v2845 = vpop.f32.mrb[0].mxu0
  %2846 = vmatprep.mubr.bf16.mxu0 %v1709
  %2847 = vmatmul.mubr.bf16.gmra.mrb[0].mxu0 %v1708
  %v2848 = vpop.f32.mrb[0].mxu0
  %v2849 = vadd.f32 0.0, %v2848
  %v2850 = vpop.f32.mrb[0].mxu0
  %v2851 = vpop.f32.mrb[0].mxu0
  %v2852 = vadd.f32 0.0, %v2851
  %v2853 = vpop.f32.mrb[0].mxu0
  %2854 = vmatprep.mubr.bf16.mxu0 %v1722
  %2855 = vmatmul.mubr.bf16.gmra.mrb[0].mxu0 %v1721
  %v2856 = vpop.f32.mrb[0].mxu0
  %v2857 = vadd.f32 0.0, %v2856
  %v2858 = vpop.f32.mrb[0].mxu0
  %v2859 = vpop.f32.mrb[0].mxu0
  %v2860 = vadd.f32 0.0, %v2859
  %v2861 = vpop.f32.mrb[0].mxu0
  %2862 = vmatprep.mubr.bf16.mxu0 %v1735
  %2863 = vmatmul.mubr.bf16.gmra.mrb[0].mxu0 %v1734
  %v2864 = vpop.f32.mrb[0].mxu0
  %v2865 = vadd.f32 0.0, %v2864
  %v2866 = vpop.f32.mrb[0].mxu0
  %v2867 = vpop.f32.mrb[0].mxu0
  %v2868 = vadd.f32 0.0, %v2867
  %v2869 = vpop.f32.mrb[0].mxu0
  %2870 = vmatprep.mubr.bf16.mxu0 %v1748
  %2871 = vmatmul.mubr.bf16.gmra.mrb[0].mxu0 %v1747
  %v2872 = vpop.f32.mrb[0].mxu0
  %v2873 = vadd.f32 0.0, %v2872
  %v2874 = vpop.f32.mrb[0].mxu0
  %v2875 = vpop.f32.mrb[0].mxu0
  %v2876 = vpop.f32.mrb[0].mxu0
  %2877 = vdwg.mxu0
  %2878 = vmatprep.subr.bf16.mxu0 0
  %2879 = vmatpush1.bf16.msra.mxu0 %v2478
  %2880 = vmatprep.subr.bf16.mxu0 0
  %2881 = vmatpush1.bf16.msra.mxu0 %v2479
  %2882 = vmatprep.subr.bf16.mxu0 0
  %2883 = vmatpush1.bf16.msra.mxu0 %v2480
  %2884 = vmatprep.subr.bf16.mxu0 0
  %2885 = vmatpush1.bf16.msra.mxu0 %v2481
  %2886 = vmatprep.subr.bf16.mxu0 0
  %2887 = vmatpush1.bf16.msra.mxu0 %v2482
  %2888 = vmatprep.subr.bf16.mxu0 0
  %2889 = vmatpush1.bf16.msra.mxu0 %v2483
  %2890 = vmatprep.subr.bf16.mxu0 0
  %2891 = vmatpush1.bf16.msra.mxu0 %v2484
  %2892 = vmatprep.subr.bf16.mxu0 0
  %2893 = vmatpush1.bf16.msra.mxu0 %v2485
  %2894 = vmatprep.subr.bf16.mxu0 0
  %2895 = vmatpush1.bf16.msra.mxu0 %v2486
  %2896 = vmatprep.subr.bf16.mxu0 0
  %2897 = vmatpush1.bf16.msra.mxu0 %v2487
  %2898 = vmatprep.subr.bf16.mxu0 0
  %2899 = vmatpush1.bf16.msra.mxu0 %v2488
  %2900 = vmatprep.subr.bf16.mxu0 0
  %2901 = vmatpush1.bf16.msra.mxu0 %v2489
  %2902 = vmatprep.subr.bf16.mxu0 0
  %2903 = vmatpush1.bf16.msra.mxu0 %v2490
  %2904 = vmatprep.subr.bf16.mxu0 0
  %2905 = vmatpush1.bf16.msra.mxu0 %v2491
  %2906 = vmatprep.subr.bf16.mxu0 0
  %2907 = vmatpush1.bf16.msra.mxu0 %v2492
  %2908 = vmatprep.subr.bf16.mxu0 0
  %2909 = vmatpush1.bf16.msra.mxu0 %v2493
  %2910 = vmatprep.mubr.bf16.mxu0 %v1477
  %2911 = vmatmul.mubr.bf16.gmra.mrb[0].mxu0 %v1476
  %v2912 = vpop.f32.mrb[0].mxu0
  %v2913 = vadd.f32 %v2705, %v2912
  %v2914 = vpop.f32.mrb[0].mxu0
  %v2915 = vpop.f32.mrb[0].mxu0
  %v2916 = vadd.f32 %v2708, %v2915
  %v2917 = vpop.f32.mrb[0].mxu0
  %2918 = vmatprep.mubr.bf16.mxu0 %v1490
  %2919 = vmatmul.mubr.bf16.gmra.mrb[0].mxu0 %v1489
  %v2920 = vpop.f32.mrb[0].mxu0
  %v2921 = vadd.f32 %v2713, %v2920
  %v2922 = vpop.f32.mrb[0].mxu0
  %v2923 = vpop.f32.mrb[0].mxu0
  %v2924 = vadd.f32 %v2716, %v2923
  %v2925 = vpop.f32.mrb[0].mxu0
  %2926 = vmatprep.mubr.bf16.mxu0 %v1503
  %2927 = vmatmul.mubr.bf16.gmra.mrb[0].mxu0 %v1502
  %v2928 = vpop.f32.mrb[0].mxu0
  %v2929 = vadd.f32 %v2721, %v2928
  %v2930 = vpop.f32.mrb[0].mxu0
  %v2931 = vpop.f32.mrb[0].mxu0
  %v2932 = vadd.f32 %v2724, %v2931
  %v2933 = vpop.f32.mrb[0].mxu0
  %2934 = vmatprep.mubr.bf16.mxu0 %v1516
  %2935 = vmatmul.mubr.bf16.gmra.mrb[0].mxu0 %v1515
  %v2936 = vpop.f32.mrb[0].mxu0
  %v2937 = vadd.f32 %v2729, %v2936
  %v2938 = vpop.f32.mrb[0].mxu0
  %v2939 = vpop.f32.mrb[0].mxu0
  %v2940 = vadd.f32 %v2732, %v2939
  %v2941 = vpop.f32.mrb[0].mxu0
  %2942 = vmatprep.mubr.bf16.mxu0 %v1529
  %2943 = vmatmul.mubr.bf16.gmra.mrb[0].mxu0 %v1528
  %v2944 = vpop.f32.mrb[0].mxu0
  %v2945 = vadd.f32 %v2737, %v2944
  %v2946 = vpop.f32.mrb[0].mxu0
  %v2947 = vpop.f32.mrb[0].mxu0
  %v2948 = vadd.f32 %v2740, %v2947
  %v2949 = vpop.f32.mrb[0].mxu0
  %2950 = vmatprep.mubr.bf16.mxu0 %v1542
  %2951 = vmatmul.mubr.bf16.gmra.mrb[0].mxu0 %v1541
  %v2952 = vpop.f32.mrb[0].mxu0
  %v2953 = vadd.f32 %v2745, %v2952
  %v2954 = vpop.f32.mrb[0].mxu0
  %v2955 = vpop.f32.mrb[0].mxu0
  %v2956 = vadd.f32 %v2748, %v2955
  %v2957 = vpop.f32.mrb[0].mxu0
  %2958 = vmatprep.mubr.bf16.mxu0 %v1555
  %2959 = vmatmul.mubr.bf16.gmra.mrb[0].mxu0 %v1554
  %v2960 = vpop.f32.mrb[0].mxu0
  %v2961 = vadd.f32 %v2753, %v2960
  %v2962 = vpop.f32.mrb[0].mxu0
  %v2963 = vpop.f32.mrb[0].mxu0
  %v2964 = vadd.f32 %v2756, %v2963
  %v2965 = vpop.f32.mrb[0].mxu0
  %2966 = vmatprep.mubr.bf16.mxu0 %v1568
  %2967 = vmatmul.mubr.bf16.gmra.mrb[0].mxu0 %v1567
  %v2968 = vpop.f32.mrb[0].mxu0
  %v2969 = vadd.f32 %v2761, %v2968
  %v2970 = vpop.f32.mrb[0].mxu0
  %v2971 = vpop.f32.mrb[0].mxu0
  %v2972 = vadd.f32 %v2764, %v2971
  %v2973 = vpop.f32.mrb[0].mxu0
  %2974 = vmatprep.mubr.bf16.mxu0 %v1581
  %2975 = vmatmul.mubr.bf16.gmra.mrb[0].mxu0 %v1580
  %v2976 = vpop.f32.mrb[0].mxu0
  %v2977 = vadd.f32 %v2769, %v2976
  %v2978 = vpop.f32.mrb[0].mxu0
  %v2979 = vpop.f32.mrb[0].mxu0
  %v2980 = vadd.f32 %v2772, %v2979
  %v2981 = vpop.f32.mrb[0].mxu0
  %2982 = vmatprep.mubr.bf16.mxu0 %v1594
  %2983 = vmatmul.mubr.bf16.gmra.mrb[0].mxu0 %v1593
  %v2984 = vpop.f32.mrb[0].mxu0
  %v2985 = vadd.f32 %v2777, %v2984
  %v2986 = vpop.f32.mrb[0].mxu0
  %v2987 = vpop.f32.mrb[0].mxu0
  %v2988 = vadd.f32 %v2780, %v2987
  %v2989 = vpop.f32.mrb[0].mxu0
  %2990 = vmatprep.mubr.bf16.mxu0 %v1607
  %2991 = vmatmul.mubr.bf16.gmra.mrb[0].mxu0 %v1606
  %v2992 = vpop.f32.mrb[0].mxu0
  %v2993 = vadd.f32 %v2785, %v2992
  %v2994 = vpop.f32.mrb[0].mxu0
  %v2995 = vpop.f32.mrb[0].mxu0
  %v2996 = vadd.f32 %v2788, %v2995
  %v2997 = vpop.f32.mrb[0].mxu0
  %2998 = vmatprep.mubr.bf16.mxu0 %v1620
  %2999 = vmatmul.mubr.bf16.gmra.mrb[0].mxu0 %v1619
  %v3000 = vpop.f32.mrb[0].mxu0
  %v3001 = vadd.f32 %v2793, %v3000
  %v3002 = vpop.f32.mrb[0].mxu0
  %v3003 = vpop.f32.mrb[0].mxu0
  %v3004 = vadd.f32 %v2796, %v3003
  %v3005 = vpop.f32.mrb[0].mxu0
  %3006 = vmatprep.mubr.bf16.mxu0 %v1633
  %3007 = vmatmul.mubr.bf16.gmra.mrb[0].mxu0 %v1632
  %v3008 = vpop.f32.mrb[0].mxu0
  %v3009 = vadd.f32 %v2801, %v3008
  %v3010 = vpop.f32.mrb[0].mxu0
  %v3011 = vpop.f32.mrb[0].mxu0
  %v3012 = vadd.f32 %v2804, %v3011
  %v3013 = vpop.f32.mrb[0].mxu0
  %3014 = vmatprep.mubr.bf16.mxu0 %v1646
  %3015 = vmatmul.mubr.bf16.gmra.mrb[0].mxu0 %v1645
  %v3016 = vpop.f32.mrb[0].mxu0
  %v3017 = vadd.f32 %v2809, %v3016
  %v3018 = vpop.f32.mrb[0].mxu0
  %v3019 = vpop.f32.mrb[0].mxu0
  %v3020 = vadd.f32 %v2812, %v3019
  %v3021 = vpop.f32.mrb[0].mxu0
  %3022 = vmatprep.mubr.bf16.mxu0 %v1659
  %3023 = vmatmul.mubr.bf16.gmra.mrb[0].mxu0 %v1658
  %v3024 = vpop.f32.mrb[0].mxu0
  %v3025 = vadd.f32 %v2817, %v3024
  %v3026 = vpop.f32.mrb[0].mxu0
  %v3027 = vpop.f32.mrb[0].mxu0
  %v3028 = vadd.f32 %v2820, %v3027
  %v3029 = vpop.f32.mrb[0].mxu0
  %3030 = vmatprep.mubr.bf16.mxu0 %v1672
  %3031 = vmatmul.mubr.bf16.gmra.mrb[0].mxu0 %v1671
  %v3032 = vpop.f32.mrb[0].mxu0
  %v3033 = vadd.f32 %v2825, %v3032
  %v3034 = vpop.f32.mrb[0].mxu0
  %v3035 = vpop.f32.mrb[0].mxu0
  %v3036 = vadd.f32 %v2828, %v3035
  %v3037 = vpop.f32.mrb[0].mxu0
  %3038 = vmatprep.mubr.bf16.mxu0 %v1685
  %3039 = vmatmul.mubr.bf16.gmra.mrb[0].mxu0 %v1684
  %v3040 = vpop.f32.mrb[0].mxu0
  %v3041 = vadd.f32 %v2833, %v3040
  %v3042 = vpop.f32.mrb[0].mxu0
  %v3043 = vpop.f32.mrb[0].mxu0
  %v3044 = vadd.f32 %v2836, %v3043
  %v3045 = vpop.f32.mrb[0].mxu0
  %3046 = vmatprep.mubr.bf16.mxu0 %v1698
  %3047 = vmatmul.mubr.bf16.gmra.mrb[0].mxu0 %v1697
  %v3048 = vpop.f32.mrb[0].mxu0
  %v3049 = vadd.f32 %v2841, %v3048
  %v3050 = vpop.f32.mrb[0].mxu0
  %v3051 = vpop.f32.mrb[0].mxu0
  %v3052 = vadd.f32 %v2844, %v3051
  %v3053 = vpop.f32.mrb[0].mxu0
  %3054 = vmatprep.mubr.bf16.mxu0 %v1711
  %3055 = vmatmul.mubr.bf16.gmra.mrb[0].mxu0 %v1710
  %v3056 = vpop.f32.mrb[0].mxu0
  %v3057 = vadd.f32 %v2849, %v3056
  %v3058 = vpop.f32.mrb[0].mxu0
  %v3059 = vpop.f32.mrb[0].mxu0
  %v3060 = vadd.f32 %v2852, %v3059
  %v3061 = vpop.f32.mrb[0].mxu0
  %3062 = vmatprep.mubr.bf16.mxu0 %v1724
  %3063 = vmatmul.mubr.bf16.gmra.mrb[0].mxu0 %v1723
  %v3064 = vpop.f32.mrb[0].mxu0
  %v3065 = vadd.f32 %v2857, %v3064
  %v3066 = vpop.f32.mrb[0].mxu0
  %v3067 = vpop.f32.mrb[0].mxu0
  %v3068 = vadd.f32 %v2860, %v3067
  %v3069 = vpop.f32.mrb[0].mxu0
  %3070 = vmatprep.mubr.bf16.mxu0 %v1737
  %3071 = vmatmul.mubr.bf16.gmra.mrb[0].mxu0 %v1736
  %v3072 = vpop.f32.mrb[0].mxu0
  %v3073 = vadd.f32 %v2865, %v3072
  %v3074 = vpop.f32.mrb[0].mxu0
  %v3075 = vpop.f32.mrb[0].mxu0
  %v3076 = vadd.f32 %v2868, %v3075
  %v3077 = vpop.f32.mrb[0].mxu0
  %3078 = vmatprep.mubr.bf16.mxu0 %v1750
  %3079 = vmatmul.mubr.bf16.gmra.mrb[0].mxu0 %v1749
  %v3080 = vpop.f32.mrb[0].mxu0
  %v3081 = vadd.f32 %v2873, %v3080
  %v3082 = vpop.f32.mrb[0].mxu0
  %v3083 = vpop.f32.mrb[0].mxu0
  %v3084 = vpop.f32.mrb[0].mxu0
  %3085 = vdwg.mxu0
  %3086 = vmatprep.subr.bf16.mxu0 0
  %3087 = vmatpush1.bf16.msra.mxu0 %v2494
  %3088 = vmatprep.subr.bf16.mxu0 0
  %3089 = vmatpush1.bf16.msra.mxu0 %v2495
  %3090 = vmatprep.subr.bf16.mxu0 0
  %3091 = vmatpush1.bf16.msra.mxu0 %v2496
  %3092 = vmatprep.subr.bf16.mxu0 0
  %3093 = vmatpush1.bf16.msra.mxu0 %v2497
  %3094 = vmatprep.subr.bf16.mxu0 0
  %3095 = vmatpush1.bf16.msra.mxu0 %v2498
  %3096 = vmatprep.subr.bf16.mxu0 0
  %3097 = vmatpush1.bf16.msra.mxu0 %v2499
  %3098 = vmatprep.subr.bf16.mxu0 0
  %3099 = vmatpush1.bf16.msra.mxu0 %v2500
  %3100 = vmatprep.subr.bf16.mxu0 0
  %3101 = vmatpush1.bf16.msra.mxu0 %v2501
  %3102 = vmatprep.subr.bf16.mxu0 0
  %3103 = vmatpush1.bf16.msra.mxu0 %v2502
  %3104 = vmatprep.subr.bf16.mxu0 0
  %3105 = vmatpush1.bf16.msra.mxu0 %v2503
  %3106 = vmatprep.subr.bf16.mxu0 0
  %3107 = vmatpush1.bf16.msra.mxu0 %v2504
  %3108 = vmatprep.subr.bf16.mxu0 0
  %3109 = vmatpush1.bf16.msra.mxu0 %v2505
  %3110 = vmatprep.subr.bf16.mxu0 0
  %3111 = vmatpush1.bf16.msra.mxu0 %v2506
  %3112 = vmatprep.subr.bf16.mxu0 0
  %3113 = vmatpush1.bf16.msra.mxu0 %v2507
  %3114 = vmatprep.subr.bf16.mxu0 0
  %3115 = vmatpush1.bf16.msra.mxu0 %v2508
  %3116 = vmatprep.subr.bf16.mxu0 0
  %3117 = vmatpush1.bf16.msra.mxu0 %v2509
  %3118 = vmatprep.mubr.bf16.mxu0 %v1479
  %3119 = vmatmul.mubr.bf16.gmra.mrb[0].mxu0 %v1478
  %v3120 = vpop.f32.mrb[0].mxu0
  %v3121 = vadd.f32 %v2913, %v3120
  %v3122 = vpop.f32.mrb[0].mxu0
  %v3123 = vpop.f32.mrb[0].mxu0
  %v3124 = vadd.f32 %v2916, %v3123
  %v3125 = vpop.f32.mrb[0].mxu0
  %3126 = vmatprep.mubr.bf16.mxu0 %v1492
  %3127 = vmatmul.mubr.bf16.gmra.mrb[0].mxu0 %v1491
  %v3128 = vpop.f32.mrb[0].mxu0
  %v3129 = vadd.f32 %v2921, %v3128
  %v3130 = vpop.f32.mrb[0].mxu0
  %v3131 = vpop.f32.mrb[0].mxu0
  %v3132 = vadd.f32 %v2924, %v3131
  %v3133 = vpop.f32.mrb[0].mxu0
  %3134 = vmatprep.mubr.bf16.mxu0 %v1505
  %3135 = vmatmul.mubr.bf16.gmra.mrb[0].mxu0 %v1504
  %v3136 = vpop.f32.mrb[0].mxu0
  %v3137 = vadd.f32 %v2929, %v3136
  %v3138 = vpop.f32.mrb[0].mxu0
  %v3139 = vpop.f32.mrb[0].mxu0
  %v3140 = vadd.f32 %v2932, %v3139
  %v3141 = vpop.f32.mrb[0].mxu0
  %3142 = vmatprep.mubr.bf16.mxu0 %v1518
  %3143 = vmatmul.mubr.bf16.gmra.mrb[0].mxu0 %v1517
  %v3144 = vpop.f32.mrb[0].mxu0
  %v3145 = vadd.f32 %v2937, %v3144
  %v3146 = vpop.f32.mrb[0].mxu0
  %v3147 = vpop.f32.mrb[0].mxu0
  %v3148 = vadd.f32 %v2940, %v3147
  %v3149 = vpop.f32.mrb[0].mxu0
  %3150 = vmatprep.mubr.bf16.mxu0 %v1531
  %3151 = vmatmul.mubr.bf16.gmra.mrb[0].mxu0 %v1530
  %v3152 = vpop.f32.mrb[0].mxu0
  %v3153 = vadd.f32 %v2945, %v3152
  %v3154 = vpop.f32.mrb[0].mxu0
  %v3155 = vpop.f32.mrb[0].mxu0
  %v3156 = vadd.f32 %v2948, %v3155
  %v3157 = vpop.f32.mrb[0].mxu0
  %3158 = vmatprep.mubr.bf16.mxu0 %v1544
  %3159 = vmatmul.mubr.bf16.gmra.mrb[0].mxu0 %v1543
  %v3160 = vpop.f32.mrb[0].mxu0
  %v3161 = vadd.f32 %v2953, %v3160
  %v3162 = vpop.f32.mrb[0].mxu0
  %v3163 = vpop.f32.mrb[0].mxu0
  %v3164 = vadd.f32 %v2956, %v3163
  %v3165 = vpop.f32.mrb[0].mxu0
  %3166 = vmatprep.mubr.bf16.mxu0 %v1557
  %3167 = vmatmul.mubr.bf16.gmra.mrb[0].mxu0 %v1556
  %v3168 = vpop.f32.mrb[0].mxu0
  %v3169 = vadd.f32 %v2961, %v3168
  %v3170 = vpop.f32.mrb[0].mxu0
  %v3171 = vpop.f32.mrb[0].mxu0
  %v3172 = vadd.f32 %v2964, %v3171
  %v3173 = vpop.f32.mrb[0].mxu0
  %3174 = vmatprep.mubr.bf16.mxu0 %v1570
  %3175 = vmatmul.mubr.bf16.gmra.mrb[0].mxu0 %v1569
  %v3176 = vpop.f32.mrb[0].mxu0
  %v3177 = vadd.f32 %v2969, %v3176
  %v3178 = vpop.f32.mrb[0].mxu0
  %v3179 = vpop.f32.mrb[0].mxu0
  %v3180 = vadd.f32 %v2972, %v3179
  %v3181 = vpop.f32.mrb[0].mxu0
  %3182 = vmatprep.mubr.bf16.mxu0 %v1583
  %3183 = vmatmul.mubr.bf16.gmra.mrb[0].mxu0 %v1582
  %v3184 = vpop.f32.mrb[0].mxu0
  %v3185 = vadd.f32 %v2977, %v3184
  %v3186 = vpop.f32.mrb[0].mxu0
  %v3187 = vpop.f32.mrb[0].mxu0
  %v3188 = vadd.f32 %v2980, %v3187
  %v3189 = vpop.f32.mrb[0].mxu0
  %3190 = vmatprep.mubr.bf16.mxu0 %v1596
  %3191 = vmatmul.mubr.bf16.gmra.mrb[0].mxu0 %v1595
  %v3192 = vpop.f32.mrb[0].mxu0
  %v3193 = vadd.f32 %v2985, %v3192
  %v3194 = vpop.f32.mrb[0].mxu0
  %v3195 = vpop.f32.mrb[0].mxu0
  %v3196 = vadd.f32 %v2988, %v3195
  %v3197 = vpop.f32.mrb[0].mxu0
  %3198 = vmatprep.mubr.bf16.mxu0 %v1609
  %3199 = vmatmul.mubr.bf16.gmra.mrb[0].mxu0 %v1608
  %v3200 = vpop.f32.mrb[0].mxu0
  %v3201 = vadd.f32 %v2993, %v3200
  %v3202 = vpop.f32.mrb[0].mxu0
  %v3203 = vpop.f32.mrb[0].mxu0
  %v3204 = vadd.f32 %v2996, %v3203
  %v3205 = vpop.f32.mrb[0].mxu0
  %3206 = vmatprep.mubr.bf16.mxu0 %v1622
  %3207 = vmatmul.mubr.bf16.gmra.mrb[0].mxu0 %v1621
  %v3208 = vpop.f32.mrb[0].mxu0
  %v3209 = vadd.f32 %v3001, %v3208
  %v3210 = vpop.f32.mrb[0].mxu0
  %v3211 = vpop.f32.mrb[0].mxu0
  %v3212 = vadd.f32 %v3004, %v3211
  %v3213 = vpop.f32.mrb[0].mxu0
  %3214 = vmatprep.mubr.bf16.mxu0 %v1635
  %3215 = vmatmul.mubr.bf16.gmra.mrb[0].mxu0 %v1634
  %v3216 = vpop.f32.mrb[0].mxu0
  %v3217 = vadd.f32 %v3009, %v3216
  %v3218 = vpop.f32.mrb[0].mxu0
  %v3219 = vpop.f32.mrb[0].mxu0
  %v3220 = vadd.f32 %v3012, %v3219
  %v3221 = vpop.f32.mrb[0].mxu0
  %3222 = vmatprep.mubr.bf16.mxu0 %v1648
  %3223 = vmatmul.mubr.bf16.gmra.mrb[0].mxu0 %v1647
  %v3224 = vpop.f32.mrb[0].mxu0
  %v3225 = vadd.f32 %v3017, %v3224
  %v3226 = vpop.f32.mrb[0].mxu0
  %v3227 = vpop.f32.mrb[0].mxu0
  %v3228 = vadd.f32 %v3020, %v3227
  %v3229 = vpop.f32.mrb[0].mxu0
  %3230 = vmatprep.mubr.bf16.mxu0 %v1661
  %3231 = vmatmul.mubr.bf16.gmra.mrb[0].mxu0 %v1660
  %v3232 = vpop.f32.mrb[0].mxu0
  %v3233 = vadd.f32 %v3025, %v3232
  %v3234 = vpop.f32.mrb[0].mxu0
  %v3235 = vpop.f32.mrb[0].mxu0
  %v3236 = vadd.f32 %v3028, %v3235
  %v3237 = vpop.f32.mrb[0].mxu0
  %3238 = vmatprep.mubr.bf16.mxu0 %v1674
  %3239 = vmatmul.mubr.bf16.gmra.mrb[0].mxu0 %v1673
  %v3240 = vpop.f32.mrb[0].mxu0
  %v3241 = vadd.f32 %v3033, %v3240
  %v3242 = vpop.f32.mrb[0].mxu0
  %v3243 = vpop.f32.mrb[0].mxu0
  %v3244 = vadd.f32 %v3036, %v3243
  %v3245 = vpop.f32.mrb[0].mxu0
  %3246 = vmatprep.mubr.bf16.mxu0 %v1687
  %3247 = vmatmul.mubr.bf16.gmra.mrb[0].mxu0 %v1686
  %v3248 = vpop.f32.mrb[0].mxu0
  %v3249 = vadd.f32 %v3041, %v3248
  %v3250 = vpop.f32.mrb[0].mxu0
  %v3251 = vpop.f32.mrb[0].mxu0
  %v3252 = vadd.f32 %v3044, %v3251
  %v3253 = vpop.f32.mrb[0].mxu0
  %3254 = vmatprep.mubr.bf16.mxu0 %v1700
  %3255 = vmatmul.mubr.bf16.gmra.mrb[0].mxu0 %v1699
  %v3256 = vpop.f32.mrb[0].mxu0
  %v3257 = vadd.f32 %v3049, %v3256
  %v3258 = vpop.f32.mrb[0].mxu0
  %v3259 = vpop.f32.mrb[0].mxu0
  %v3260 = vadd.f32 %v3052, %v3259
  %v3261 = vpop.f32.mrb[0].mxu0
  %3262 = vmatprep.mubr.bf16.mxu0 %v1713
  %3263 = vmatmul.mubr.bf16.gmra.mrb[0].mxu0 %v1712
  %v3264 = vpop.f32.mrb[0].mxu0
  %v3265 = vadd.f32 %v3057, %v3264
  %v3266 = vpop.f32.mrb[0].mxu0
  %v3267 = vpop.f32.mrb[0].mxu0
  %v3268 = vadd.f32 %v3060, %v3267
  %v3269 = vpop.f32.mrb[0].mxu0
  %3270 = vmatprep.mubr.bf16.mxu0 %v1726
  %3271 = vmatmul.mubr.bf16.gmra.mrb[0].mxu0 %v1725
  %v3272 = vpop.f32.mrb[0].mxu0
  %v3273 = vadd.f32 %v3065, %v3272
  %v3274 = vpop.f32.mrb[0].mxu0
  %v3275 = vpop.f32.mrb[0].mxu0
  %v3276 = vadd.f32 %v3068, %v3275
  %v3277 = vpop.f32.mrb[0].mxu0
  %3278 = vmatprep.mubr.bf16.mxu0 %v1739
  %3279 = vmatmul.mubr.bf16.gmra.mrb[0].mxu0 %v1738
  %v3280 = vpop.f32.mrb[0].mxu0
  %v3281 = vadd.f32 %v3073, %v3280
  %v3282 = vpop.f32.mrb[0].mxu0
  %v3283 = vpop.f32.mrb[0].mxu0
  %v3284 = vadd.f32 %v3076, %v3283
  %v3285 = vpop.f32.mrb[0].mxu0
  %3286 = vmatprep.mubr.bf16.mxu0 %v1752
  %3287 = vmatmul.mubr.bf16.gmra.mrb[0].mxu0 %v1751
  %v3288 = vpop.f32.mrb[0].mxu0
  %v3289 = vadd.f32 %v3081, %v3288
  %v3290 = vpop.f32.mrb[0].mxu0
  %v3291 = vpop.f32.mrb[0].mxu0
  %v3292 = vpop.f32.mrb[0].mxu0
  %3293 = vdwg.mxu0
  %3294 = vmatprep.subr.bf16.mxu0 0
  %3295 = vmatpush1.bf16.msra.mxu0 %v2510
  %3296 = vmatprep.subr.bf16.mxu0 0
  %3297 = vmatpush1.bf16.msra.mxu0 %v2511
  %3298 = vmatprep.subr.bf16.mxu0 0
  %3299 = vmatpush1.bf16.msra.mxu0 %v2512
  %3300 = vmatprep.subr.bf16.mxu0 0
  %3301 = vmatpush1.bf16.msra.mxu0 %v2513
  %3302 = vmatprep.subr.bf16.mxu0 0
  %3303 = vmatpush1.bf16.msra.mxu0 %v2514
  %3304 = vmatprep.subr.bf16.mxu0 0
  %3305 = vmatpush1.bf16.msra.mxu0 %v2515
  %3306 = vmatprep.subr.bf16.mxu0 0
  %3307 = vmatpush1.bf16.msra.mxu0 %v2516
  %3308 = vmatprep.subr.bf16.mxu0 0
  %3309 = vmatpush1.bf16.msra.mxu0 %v2517
  %3310 = vmatprep.subr.bf16.mxu0 0
  %3311 = vmatpush1.bf16.msra.mxu0 %v2518
  %3312 = vmatprep.subr.bf16.mxu0 0
  %3313 = vmatpush1.bf16.msra.mxu0 %v2519
  %3314 = vmatprep.subr.bf16.mxu0 0
  %3315 = vmatpush1.bf16.msra.mxu0 %v2520
  %3316 = vmatprep.subr.bf16.mxu0 0
  %3317 = vmatpush1.bf16.msra.mxu0 %v2521
  %3318 = vmatprep.subr.bf16.mxu0 0
  %3319 = vmatpush1.bf16.msra.mxu0 %v2522
  %3320 = vmatprep.subr.bf16.mxu0 0
  %3321 = vmatpush1.bf16.msra.mxu0 %v2523
  %3322 = vmatprep.subr.bf16.mxu0 0
  %3323 = vmatpush1.bf16.msra.mxu0 %v2524
  %3324 = vmatprep.subr.bf16.mxu0 0
  %3325 = vmatpush1.bf16.msra.mxu0 %v2525
  %3326 = vmatprep.mubr.bf16.mxu0 %v1481
  %3327 = vmatmul.mubr.bf16.gmra.mrb[0].mxu0 %v1480
  %v3328 = vpop.f32.mrb[0].mxu0
  %v3329 = vadd.f32 %v3121, %v3328
  %v3330 = vpop.f32.mrb[0].mxu0
  %v3331 = vpop.f32.mrb[0].mxu0
  %v3332 = vadd.f32 %v3124, %v3331
  %v3333 = vpop.f32.mrb[0].mxu0
  %3334 = vmatprep.mubr.bf16.mxu0 %v1494
  %3335 = vmatmul.mubr.bf16.gmra.mrb[0].mxu0 %v1493
  %v3336 = vpop.f32.mrb[0].mxu0
  %v3337 = vadd.f32 %v3129, %v3336
  %v3338 = vpop.f32.mrb[0].mxu0
  %v3339 = vpop.f32.mrb[0].mxu0
  %v3340 = vadd.f32 %v3132, %v3339
  %v3341 = vpop.f32.mrb[0].mxu0
  %3342 = vmatprep.mubr.bf16.mxu0 %v1507
  %3343 = vmatmul.mubr.bf16.gmra.mrb[0].mxu0 %v1506
  %v3344 = vpop.f32.mrb[0].mxu0
  %v3345 = vadd.f32 %v3137, %v3344
  %v3346 = vpop.f32.mrb[0].mxu0
  %v3347 = vpop.f32.mrb[0].mxu0
  %v3348 = vadd.f32 %v3140, %v3347
  %v3349 = vpop.f32.mrb[0].mxu0
  %3350 = vmatprep.mubr.bf16.mxu0 %v1520
  %3351 = vmatmul.mubr.bf16.gmra.mrb[0].mxu0 %v1519
  %v3352 = vpop.f32.mrb[0].mxu0
  %v3353 = vadd.f32 %v3145, %v3352
  %v3354 = vpop.f32.mrb[0].mxu0
  %v3355 = vpop.f32.mrb[0].mxu0
  %v3356 = vadd.f32 %v3148, %v3355
  %v3357 = vpop.f32.mrb[0].mxu0
  %3358 = vmatprep.mubr.bf16.mxu0 %v1533
  %3359 = vmatmul.mubr.bf16.gmra.mrb[0].mxu0 %v1532
  %v3360 = vpop.f32.mrb[0].mxu0
  %v3361 = vadd.f32 %v3153, %v3360
  %v3362 = vpop.f32.mrb[0].mxu0
  %v3363 = vpop.f32.mrb[0].mxu0
  %v3364 = vadd.f32 %v3156, %v3363
  %v3365 = vpop.f32.mrb[0].mxu0
  %3366 = vmatprep.mubr.bf16.mxu0 %v1546
  %3367 = vmatmul.mubr.bf16.gmra.mrb[0].mxu0 %v1545
  %v3368 = vpop.f32.mrb[0].mxu0
  %v3369 = vadd.f32 %v3161, %v3368
  %v3370 = vpop.f32.mrb[0].mxu0
  %v3371 = vpop.f32.mrb[0].mxu0
  %v3372 = vadd.f32 %v3164, %v3371
  %v3373 = vpop.f32.mrb[0].mxu0
  %3374 = vmatprep.mubr.bf16.mxu0 %v1559
  %3375 = vmatmul.mubr.bf16.gmra.mrb[0].mxu0 %v1558
  %v3376 = vpop.f32.mrb[0].mxu0
  %v3377 = vadd.f32 %v3169, %v3376
  %v3378 = vpop.f32.mrb[0].mxu0
  %v3379 = vpop.f32.mrb[0].mxu0
  %v3380 = vadd.f32 %v3172, %v3379
  %v3381 = vpop.f32.mrb[0].mxu0
  %3382 = vmatprep.mubr.bf16.mxu0 %v1572
  %3383 = vmatmul.mubr.bf16.gmra.mrb[0].mxu0 %v1571
  %v3384 = vpop.f32.mrb[0].mxu0
  %v3385 = vadd.f32 %v3177, %v3384
  %v3386 = vpop.f32.mrb[0].mxu0
  %v3387 = vpop.f32.mrb[0].mxu0
  %v3388 = vadd.f32 %v3180, %v3387
  %v3389 = vpop.f32.mrb[0].mxu0
  %3390 = vmatprep.mubr.bf16.mxu0 %v1585
  %3391 = vmatmul.mubr.bf16.gmra.mrb[0].mxu0 %v1584
  %v3392 = vpop.f32.mrb[0].mxu0
  %v3393 = vadd.f32 %v3185, %v3392
  %v3394 = vpop.f32.mrb[0].mxu0
  %v3395 = vpop.f32.mrb[0].mxu0
  %v3396 = vadd.f32 %v3188, %v3395
  %v3397 = vpop.f32.mrb[0].mxu0
  %3398 = vmatprep.mubr.bf16.mxu0 %v1598
  %3399 = vmatmul.mubr.bf16.gmra.mrb[0].mxu0 %v1597
  %v3400 = vpop.f32.mrb[0].mxu0
  %v3401 = vadd.f32 %v3193, %v3400
  %v3402 = vpop.f32.mrb[0].mxu0
  %v3403 = vpop.f32.mrb[0].mxu0
  %v3404 = vadd.f32 %v3196, %v3403
  %v3405 = vpop.f32.mrb[0].mxu0
  %3406 = vmatprep.mubr.bf16.mxu0 %v1611
  %3407 = vmatmul.mubr.bf16.gmra.mrb[0].mxu0 %v1610
  %v3408 = vpop.f32.mrb[0].mxu0
  %v3409 = vadd.f32 %v3201, %v3408
  %v3410 = vpop.f32.mrb[0].mxu0
  %v3411 = vpop.f32.mrb[0].mxu0
  %v3412 = vadd.f32 %v3204, %v3411
  %v3413 = vpop.f32.mrb[0].mxu0
  %3414 = vmatprep.mubr.bf16.mxu0 %v1624
  %3415 = vmatmul.mubr.bf16.gmra.mrb[0].mxu0 %v1623
  %v3416 = vpop.f32.mrb[0].mxu0
  %v3417 = vadd.f32 %v3209, %v3416
  %v3418 = vpop.f32.mrb[0].mxu0
  %v3419 = vpop.f32.mrb[0].mxu0
  %v3420 = vadd.f32 %v3212, %v3419
  %v3421 = vpop.f32.mrb[0].mxu0
  %3422 = vmatprep.mubr.bf16.mxu0 %v1637
  %3423 = vmatmul.mubr.bf16.gmra.mrb[0].mxu0 %v1636
  %v3424 = vpop.f32.mrb[0].mxu0
  %v3425 = vadd.f32 %v3217, %v3424
  %v3426 = vpop.f32.mrb[0].mxu0
  %v3427 = vpop.f32.mrb[0].mxu0
  %v3428 = vadd.f32 %v3220, %v3427
  %v3429 = vpop.f32.mrb[0].mxu0
  %3430 = vmatprep.mubr.bf16.mxu0 %v1650
  %3431 = vmatmul.mubr.bf16.gmra.mrb[0].mxu0 %v1649
  %v3432 = vpop.f32.mrb[0].mxu0
  %v3433 = vadd.f32 %v3225, %v3432
  %v3434 = vpop.f32.mrb[0].mxu0
  %v3435 = vpop.f32.mrb[0].mxu0
  %v3436 = vadd.f32 %v3228, %v3435
  %v3437 = vpop.f32.mrb[0].mxu0
  %3438 = vmatprep.mubr.bf16.mxu0 %v1663
  %3439 = vmatmul.mubr.bf16.gmra.mrb[0].mxu0 %v1662
  %v3440 = vpop.f32.mrb[0].mxu0
  %v3441 = vadd.f32 %v3233, %v3440
  %v3442 = vpop.f32.mrb[0].mxu0
  %v3443 = vpop.f32.mrb[0].mxu0
  %v3444 = vadd.f32 %v3236, %v3443
  %v3445 = vpop.f32.mrb[0].mxu0
  %3446 = vmatprep.mubr.bf16.mxu0 %v1676
  %3447 = vmatmul.mubr.bf16.gmra.mrb[0].mxu0 %v1675
  %v3448 = vpop.f32.mrb[0].mxu0
  %v3449 = vadd.f32 %v3241, %v3448
  %v3450 = vpop.f32.mrb[0].mxu0
  %v3451 = vpop.f32.mrb[0].mxu0
  %v3452 = vadd.f32 %v3244, %v3451
  %v3453 = vpop.f32.mrb[0].mxu0
  %3454 = vmatprep.mubr.bf16.mxu0 %v1689
  %3455 = vmatmul.mubr.bf16.gmra.mrb[0].mxu0 %v1688
  %v3456 = vpop.f32.mrb[0].mxu0
  %v3457 = vadd.f32 %v3249, %v3456
  %v3458 = vpop.f32.mrb[0].mxu0
  %v3459 = vpop.f32.mrb[0].mxu0
  %v3460 = vadd.f32 %v3252, %v3459
  %v3461 = vpop.f32.mrb[0].mxu0
  %3462 = vmatprep.mubr.bf16.mxu0 %v1702
  %3463 = vmatmul.mubr.bf16.gmra.mrb[0].mxu0 %v1701
  %v3464 = vpop.f32.mrb[0].mxu0
  %v3465 = vadd.f32 %v3257, %v3464
  %v3466 = vpop.f32.mrb[0].mxu0
  %v3467 = vpop.f32.mrb[0].mxu0
  %v3468 = vadd.f32 %v3260, %v3467
  %v3469 = vpop.f32.mrb[0].mxu0
  %3470 = vmatprep.mubr.bf16.mxu0 %v1715
  %3471 = vmatmul.mubr.bf16.gmra.mrb[0].mxu0 %v1714
  %v3472 = vpop.f32.mrb[0].mxu0
  %v3473 = vadd.f32 %v3265, %v3472
  %v3474 = vpop.f32.mrb[0].mxu0
  %v3475 = vpop.f32.mrb[0].mxu0
  %v3476 = vadd.f32 %v3268, %v3475
  %v3477 = vpop.f32.mrb[0].mxu0
  %3478 = vmatprep.mubr.bf16.mxu0 %v1728
  %3479 = vmatmul.mubr.bf16.gmra.mrb[0].mxu0 %v1727
  %v3480 = vpop.f32.mrb[0].mxu0
  %v3481 = vadd.f32 %v3273, %v3480
  %v3482 = vpop.f32.mrb[0].mxu0
  %v3483 = vpop.f32.mrb[0].mxu0
  %v3484 = vadd.f32 %v3276, %v3483
  %v3485 = vpop.f32.mrb[0].mxu0
  %3486 = vmatprep.mubr.bf16.mxu0 %v1741
  %3487 = vmatmul.mubr.bf16.gmra.mrb[0].mxu0 %v1740
  %v3488 = vpop.f32.mrb[0].mxu0
  %v3489 = vadd.f32 %v3281, %v3488
  %v3490 = vpop.f32.mrb[0].mxu0
  %v3491 = vpop.f32.mrb[0].mxu0
  %v3492 = vadd.f32 %v3284, %v3491
  %v3493 = vpop.f32.mrb[0].mxu0
  %3494 = vmatprep.mubr.bf16.mxu0 %v1754
  %3495 = vmatmul.mubr.bf16.gmra.mrb[0].mxu0 %v1753
  %v3496 = vpop.f32.mrb[0].mxu0
  %v3497 = vadd.f32 %v3289, %v3496
  %v3498 = vpop.f32.mrb[0].mxu0
  %v3499 = vpop.f32.mrb[0].mxu0
  %v3500 = vpop.f32.mrb[0].mxu0
  %3501 = vdwg.mxu0
  %3502 = vmatprep.subr.bf16.mxu0 0
  %3503 = vmatpush1.bf16.msra.mxu0 %v2526
  %3504 = vmatprep.subr.bf16.mxu0 0
  %3505 = vmatpush1.bf16.msra.mxu0 %v2527
  %3506 = vmatprep.subr.bf16.mxu0 0
  %3507 = vmatpush1.bf16.msra.mxu0 %v2528
  %3508 = vmatprep.subr.bf16.mxu0 0
  %3509 = vmatpush1.bf16.msra.mxu0 %v2529
  %3510 = vmatprep.subr.bf16.mxu0 0
  %3511 = vmatpush1.bf16.msra.mxu0 %v2530
  %3512 = vmatprep.subr.bf16.mxu0 0
  %3513 = vmatpush1.bf16.msra.mxu0 %v2531
  %3514 = vmatprep.subr.bf16.mxu0 0
  %3515 = vmatpush1.bf16.msra.mxu0 %v2532
  %3516 = vmatprep.subr.bf16.mxu0 0
  %3517 = vmatpush1.bf16.msra.mxu0 %v2533
  %3518 = vmatprep.subr.bf16.mxu0 0
  %3519 = vmatpush1.bf16.msra.mxu0 %v2534
  %3520 = vmatprep.subr.bf16.mxu0 0
  %3521 = vmatpush1.bf16.msra.mxu0 %v2535
  %3522 = vmatprep.subr.bf16.mxu0 0
  %3523 = vmatpush1.bf16.msra.mxu0 %v2536
  %3524 = vmatprep.subr.bf16.mxu0 0
  %3525 = vmatpush1.bf16.msra.mxu0 %v2537
  %3526 = vmatprep.subr.bf16.mxu0 0
  %3527 = vmatpush1.bf16.msra.mxu0 %v2538
  %3528 = vmatprep.subr.bf16.mxu0 0
  %3529 = vmatpush1.bf16.msra.mxu0 %v2539
  %3530 = vmatprep.subr.bf16.mxu0 0
  %3531 = vmatpush1.bf16.msra.mxu0 %v2540
  %3532 = vmatprep.subr.bf16.mxu0 0
  %3533 = vmatpush1.bf16.msra.mxu0 %v2541
  %3534 = vmatprep.mubr.bf16.mxu0 %v1483
  %3535 = vmatmul.mubr.bf16.gmra.mrb[0].mxu0 %v1482
  %v3536 = vpop.f32.mrb[0].mxu0
  %v3537 = vadd.f32 %v3329, %v3536
  %v3538 = vpop.f32.mrb[0].mxu0
  %v3539 = vpop.f32.mrb[0].mxu0
  %v3540 = vadd.f32 %v3332, %v3539
  %v3541 = vpop.f32.mrb[0].mxu0
  %3542 = vmatprep.mubr.bf16.mxu0 %v1496
  %3543 = vmatmul.mubr.bf16.gmra.mrb[0].mxu0 %v1495
  %v3544 = vpop.f32.mrb[0].mxu0
  %v3545 = vadd.f32 %v3337, %v3544
  %v3546 = vpop.f32.mrb[0].mxu0
  %v3547 = vpop.f32.mrb[0].mxu0
  %v3548 = vadd.f32 %v3340, %v3547
  %v3549 = vpop.f32.mrb[0].mxu0
  %3550 = vmatprep.mubr.bf16.mxu0 %v1509
  %3551 = vmatmul.mubr.bf16.gmra.mrb[0].mxu0 %v1508
  %v3552 = vpop.f32.mrb[0].mxu0
  %v3553 = vadd.f32 %v3345, %v3552
  %v3554 = vpop.f32.mrb[0].mxu0
  %v3555 = vpop.f32.mrb[0].mxu0
  %v3556 = vadd.f32 %v3348, %v3555
  %v3557 = vpop.f32.mrb[0].mxu0
  %3558 = vmatprep.mubr.bf16.mxu0 %v1522
  %3559 = vmatmul.mubr.bf16.gmra.mrb[0].mxu0 %v1521
  %v3560 = vpop.f32.mrb[0].mxu0
  %v3561 = vadd.f32 %v3353, %v3560
  %v3562 = vpop.f32.mrb[0].mxu0
  %v3563 = vpop.f32.mrb[0].mxu0
  %v3564 = vadd.f32 %v3356, %v3563
  %v3565 = vpop.f32.mrb[0].mxu0
  %3566 = vmatprep.mubr.bf16.mxu0 %v1535
  %3567 = vmatmul.mubr.bf16.gmra.mrb[0].mxu0 %v1534
  %v3568 = vpop.f32.mrb[0].mxu0
  %v3569 = vadd.f32 %v3361, %v3568
  %v3570 = vpop.f32.mrb[0].mxu0
  %v3571 = vpop.f32.mrb[0].mxu0
  %v3572 = vadd.f32 %v3364, %v3571
  %v3573 = vpop.f32.mrb[0].mxu0
  %3574 = vmatprep.mubr.bf16.mxu0 %v1548
  %3575 = vmatmul.mubr.bf16.gmra.mrb[0].mxu0 %v1547
  %v3576 = vpop.f32.mrb[0].mxu0
  %v3577 = vadd.f32 %v3369, %v3576
  %v3578 = vpop.f32.mrb[0].mxu0
  %v3579 = vpop.f32.mrb[0].mxu0
  %v3580 = vadd.f32 %v3372, %v3579
  %v3581 = vpop.f32.mrb[0].mxu0
  %3582 = vmatprep.mubr.bf16.mxu0 %v1561
  %3583 = vmatmul.mubr.bf16.gmra.mrb[0].mxu0 %v1560
  %v3584 = vpop.f32.mrb[0].mxu0
  %v3585 = vadd.f32 %v3377, %v3584
  %v3586 = vpop.f32.mrb[0].mxu0
  %v3587 = vpop.f32.mrb[0].mxu0
  %v3588 = vadd.f32 %v3380, %v3587
  %v3589 = vpop.f32.mrb[0].mxu0
  %3590 = vmatprep.mubr.bf16.mxu0 %v1574
  %3591 = vmatmul.mubr.bf16.gmra.mrb[0].mxu0 %v1573
  %v3592 = vpop.f32.mrb[0].mxu0
  %v3593 = vadd.f32 %v3385, %v3592
  %v3594 = vpop.f32.mrb[0].mxu0
  %v3595 = vpop.f32.mrb[0].mxu0
  %v3596 = vadd.f32 %v3388, %v3595
  %v3597 = vpop.f32.mrb[0].mxu0
  %3598 = vmatprep.mubr.bf16.mxu0 %v1587
  %3599 = vmatmul.mubr.bf16.gmra.mrb[0].mxu0 %v1586
  %v3600 = vpop.f32.mrb[0].mxu0
  %v3601 = vadd.f32 %v3393, %v3600
  %v3602 = vpop.f32.mrb[0].mxu0
  %v3603 = vpop.f32.mrb[0].mxu0
  %v3604 = vadd.f32 %v3396, %v3603
  %v3605 = vpop.f32.mrb[0].mxu0
  %3606 = vmatprep.mubr.bf16.mxu0 %v1600
  %3607 = vmatmul.mubr.bf16.gmra.mrb[0].mxu0 %v1599
  %v3608 = vpop.f32.mrb[0].mxu0
  %v3609 = vadd.f32 %v3401, %v3608
  %v3610 = vpop.f32.mrb[0].mxu0
  %v3611 = vpop.f32.mrb[0].mxu0
  %v3612 = vadd.f32 %v3404, %v3611
  %v3613 = vpop.f32.mrb[0].mxu0
  %3614 = vmatprep.mubr.bf16.mxu0 %v1613
  %3615 = vmatmul.mubr.bf16.gmra.mrb[0].mxu0 %v1612
  %v3616 = vpop.f32.mrb[0].mxu0
  %v3617 = vadd.f32 %v3409, %v3616
  %v3618 = vpop.f32.mrb[0].mxu0
  %v3619 = vpop.f32.mrb[0].mxu0
  %v3620 = vadd.f32 %v3412, %v3619
  %v3621 = vpop.f32.mrb[0].mxu0
  %3622 = vmatprep.mubr.bf16.mxu0 %v1626
  %3623 = vmatmul.mubr.bf16.gmra.mrb[0].mxu0 %v1625
  %v3624 = vpop.f32.mrb[0].mxu0
  %v3625 = vadd.f32 %v3417, %v3624
  %v3626 = vpop.f32.mrb[0].mxu0
  %v3627 = vpop.f32.mrb[0].mxu0
  %v3628 = vadd.f32 %v3420, %v3627
  %v3629 = vpop.f32.mrb[0].mxu0
  %3630 = vmatprep.mubr.bf16.mxu0 %v1639
  %3631 = vmatmul.mubr.bf16.gmra.mrb[0].mxu0 %v1638
  %v3632 = vpop.f32.mrb[0].mxu0
  %v3633 = vadd.f32 %v3425, %v3632
  %v3634 = vpop.f32.mrb[0].mxu0
  %v3635 = vpop.f32.mrb[0].mxu0
  %v3636 = vadd.f32 %v3428, %v3635
  %v3637 = vpop.f32.mrb[0].mxu0
  %3638 = vmatprep.mubr.bf16.mxu0 %v1652
  %3639 = vmatmul.mubr.bf16.gmra.mrb[0].mxu0 %v1651
  %v3640 = vpop.f32.mrb[0].mxu0
  %v3641 = vadd.f32 %v3433, %v3640
  %v3642 = vpop.f32.mrb[0].mxu0
  %v3643 = vpop.f32.mrb[0].mxu0
  %v3644 = vadd.f32 %v3436, %v3643
  %v3645 = vpop.f32.mrb[0].mxu0
  %3646 = vmatprep.mubr.bf16.mxu0 %v1665
  %3647 = vmatmul.mubr.bf16.gmra.mrb[0].mxu0 %v1664
  %v3648 = vpop.f32.mrb[0].mxu0
  %v3649 = vadd.f32 %v3441, %v3648
  %v3650 = vpop.f32.mrb[0].mxu0
  %v3651 = vpop.f32.mrb[0].mxu0
  %v3652 = vadd.f32 %v3444, %v3651
  %v3653 = vpop.f32.mrb[0].mxu0
  %3654 = vmatprep.mubr.bf16.mxu0 %v1678
  %3655 = vmatmul.mubr.bf16.gmra.mrb[0].mxu0 %v1677
  %v3656 = vpop.f32.mrb[0].mxu0
  %v3657 = vadd.f32 %v3449, %v3656
  %v3658 = vpop.f32.mrb[0].mxu0
  %v3659 = vpop.f32.mrb[0].mxu0
  %v3660 = vadd.f32 %v3452, %v3659
  %v3661 = vpop.f32.mrb[0].mxu0
  %3662 = vmatprep.mubr.bf16.mxu0 %v1691
  %3663 = vmatmul.mubr.bf16.gmra.mrb[0].mxu0 %v1690
  %v3664 = vpop.f32.mrb[0].mxu0
  %v3665 = vadd.f32 %v3457, %v3664
  %v3666 = vpop.f32.mrb[0].mxu0
  %v3667 = vpop.f32.mrb[0].mxu0
  %v3668 = vadd.f32 %v3460, %v3667
  %v3669 = vpop.f32.mrb[0].mxu0
  %3670 = vmatprep.mubr.bf16.mxu0 %v1704
  %3671 = vmatmul.mubr.bf16.gmra.mrb[0].mxu0 %v1703
  %v3672 = vpop.f32.mrb[0].mxu0
  %v3673 = vadd.f32 %v3465, %v3672
  %v3674 = vpop.f32.mrb[0].mxu0
  %v3675 = vpop.f32.mrb[0].mxu0
  %v3676 = vadd.f32 %v3468, %v3675
  %v3677 = vpop.f32.mrb[0].mxu0
  %3678 = vmatprep.mubr.bf16.mxu0 %v1717
  %3679 = vmatmul.mubr.bf16.gmra.mrb[0].mxu0 %v1716
  %v3680 = vpop.f32.mrb[0].mxu0
  %v3681 = vadd.f32 %v3473, %v3680
  %v3682 = vpop.f32.mrb[0].mxu0
  %v3683 = vpop.f32.mrb[0].mxu0
  %v3684 = vadd.f32 %v3476, %v3683
  %v3685 = vpop.f32.mrb[0].mxu0
  %3686 = vmatprep.mubr.bf16.mxu0 %v1730
  %3687 = vmatmul.mubr.bf16.gmra.mrb[0].mxu0 %v1729
  %v3688 = vpop.f32.mrb[0].mxu0
  %v3689 = vadd.f32 %v3481, %v3688
  %v3690 = vpop.f32.mrb[0].mxu0
  %v3691 = vpop.f32.mrb[0].mxu0
  %v3692 = vadd.f32 %v3484, %v3691
  %v3693 = vpop.f32.mrb[0].mxu0
  %3694 = vmatprep.mubr.bf16.mxu0 %v1743
  %3695 = vmatmul.mubr.bf16.gmra.mrb[0].mxu0 %v1742
  %v3696 = vpop.f32.mrb[0].mxu0
  %v3697 = vadd.f32 %v3489, %v3696
  %v3698 = vpop.f32.mrb[0].mxu0
  %v3699 = vpop.f32.mrb[0].mxu0
  %v3700 = vadd.f32 %v3492, %v3699
  %v3701 = vpop.f32.mrb[0].mxu0
  %3702 = vmatprep.mubr.bf16.mxu0 %v1756
  %3703 = vmatmul.mubr.bf16.gmra.mrb[0].mxu0 %v1755
  %v3704 = vpop.f32.mrb[0].mxu0
  %v3705 = vadd.f32 %v3497, %v3704
  %v3706 = vpop.f32.mrb[0].mxu0
  %v3707 = vpop.f32.mrb[0].mxu0
  %v3708 = vpop.f32.mrb[0].mxu0
  %3709 = vdwg.mxu0
  %3710 = vmatprep.subr.bf16.mxu0 0
  %3711 = vmatpush1.bf16.msra.mxu0 %v2542
  %3712 = vmatprep.subr.bf16.mxu0 0
  %3713 = vmatpush1.bf16.msra.mxu0 %v2543
  %3714 = vmatprep.subr.bf16.mxu0 0
  %3715 = vmatpush1.bf16.msra.mxu0 %v2544
  %3716 = vmatprep.subr.bf16.mxu0 0
  %3717 = vmatpush1.bf16.msra.mxu0 %v2545
  %3718 = vmatprep.subr.bf16.mxu0 0
  %3719 = vmatpush1.bf16.msra.mxu0 %v2546
  %3720 = vmatprep.subr.bf16.mxu0 0
  %3721 = vmatpush1.bf16.msra.mxu0 %v2547
  %3722 = vmatprep.subr.bf16.mxu0 0
  %3723 = vmatpush1.bf16.msra.mxu0 %v2548
  %3724 = vmatprep.subr.bf16.mxu0 0
  %3725 = vmatpush1.bf16.msra.mxu0 %v2549
  %3726 = vmatprep.subr.bf16.mxu0 0
  %3727 = vmatpush1.bf16.msra.mxu0 %v2550
  %3728 = vmatprep.subr.bf16.mxu0 0
  %3729 = vmatpush1.bf16.msra.mxu0 %v2551
  %3730 = vmatprep.subr.bf16.mxu0 0
  %3731 = vmatpush1.bf16.msra.mxu0 %v2552
  %3732 = vmatprep.subr.bf16.mxu0 0
  %3733 = vmatpush1.bf16.msra.mxu0 %v2553
  %3734 = vmatprep.subr.bf16.mxu0 0
  %3735 = vmatpush1.bf16.msra.mxu0 %v2554
  %3736 = vmatprep.subr.bf16.mxu0 0
  %3737 = vmatpush1.bf16.msra.mxu0 %v2555
  %3738 = vmatprep.subr.bf16.mxu0 0
  %3739 = vmatpush1.bf16.msra.mxu0 %v2556
  %3740 = vmatprep.subr.bf16.mxu0 0
  %3741 = vmatpush1.bf16.msra.mxu0 %v2557
  %3742 = vmatprep.mubr.bf16.mxu0 %v1485
  %3743 = vmatmul.mubr.bf16.gmra.mrb[0].mxu0 %v1484
  %v3744 = vpop.f32.mrb[0].mxu0
  %v3745 = vadd.f32 %v3537, %v3744
  %v3746 = vpop.f32.mrb[0].mxu0
  %v3747 = vpop.f32.mrb[0].mxu0
  %v3748 = vadd.f32 %v3540, %v3747
  %v3749 = vpop.f32.mrb[0].mxu0
  %3750 = vmatprep.mubr.bf16.mxu0 %v1498
  %3751 = vmatmul.mubr.bf16.gmra.mrb[0].mxu0 %v1497
  %v3752 = vpop.f32.mrb[0].mxu0
  %v3753 = vadd.f32 %v3545, %v3752
  %v3754 = vpop.f32.mrb[0].mxu0
  %v3755 = vpop.f32.mrb[0].mxu0
  %v3756 = vadd.f32 %v3548, %v3755
  %v3757 = vpop.f32.mrb[0].mxu0
  %3758 = vmatprep.mubr.bf16.mxu0 %v1511
  %3759 = vmatmul.mubr.bf16.gmra.mrb[0].mxu0 %v1510
  %v3760 = vpop.f32.mrb[0].mxu0
  %v3761 = vadd.f32 %v3553, %v3760
  %v3762 = vpop.f32.mrb[0].mxu0
  %v3763 = vpop.f32.mrb[0].mxu0
  %v3764 = vadd.f32 %v3556, %v3763
  %v3765 = vpop.f32.mrb[0].mxu0
  %3766 = vmatprep.mubr.bf16.mxu0 %v1524
  %3767 = vmatmul.mubr.bf16.gmra.mrb[0].mxu0 %v1523
  %v3768 = vpop.f32.mrb[0].mxu0
  %v3769 = vadd.f32 %v3561, %v3768
  %v3770 = vpop.f32.mrb[0].mxu0
  %v3771 = vpop.f32.mrb[0].mxu0
  %v3772 = vadd.f32 %v3564, %v3771
  %v3773 = vpop.f32.mrb[0].mxu0
  %3774 = vmatprep.mubr.bf16.mxu0 %v1537
  %3775 = vmatmul.mubr.bf16.gmra.mrb[0].mxu0 %v1536
  %v3776 = vpop.f32.mrb[0].mxu0
  %v3777 = vadd.f32 %v3569, %v3776
  %v3778 = vpop.f32.mrb[0].mxu0
  %v3779 = vpop.f32.mrb[0].mxu0
  %v3780 = vadd.f32 %v3572, %v3779
  %v3781 = vpop.f32.mrb[0].mxu0
  %3782 = vmatprep.mubr.bf16.mxu0 %v1550
  %3783 = vmatmul.mubr.bf16.gmra.mrb[0].mxu0 %v1549
  %v3784 = vpop.f32.mrb[0].mxu0
  %v3785 = vadd.f32 %v3577, %v3784
  %v3786 = vpop.f32.mrb[0].mxu0
  %v3787 = vpop.f32.mrb[0].mxu0
  %v3788 = vadd.f32 %v3580, %v3787
  %v3789 = vpop.f32.mrb[0].mxu0
  %3790 = vmatprep.mubr.bf16.mxu0 %v1563
  %3791 = vmatmul.mubr.bf16.gmra.mrb[0].mxu0 %v1562
  %v3792 = vpop.f32.mrb[0].mxu0
  %v3793 = vadd.f32 %v3585, %v3792
  %v3794 = vpop.f32.mrb[0].mxu0
  %v3795 = vpop.f32.mrb[0].mxu0
  %v3796 = vadd.f32 %v3588, %v3795
  %v3797 = vpop.f32.mrb[0].mxu0
  %3798 = vmatprep.mubr.bf16.mxu0 %v1576
  %3799 = vmatmul.mubr.bf16.gmra.mrb[0].mxu0 %v1575
  %v3800 = vpop.f32.mrb[0].mxu0
  %v3801 = vadd.f32 %v3593, %v3800
  %v3802 = vpop.f32.mrb[0].mxu0
  %v3803 = vpop.f32.mrb[0].mxu0
  %v3804 = vadd.f32 %v3596, %v3803
  %v3805 = vpop.f32.mrb[0].mxu0
  %3806 = vmatprep.mubr.bf16.mxu0 %v1589
  %3807 = vmatmul.mubr.bf16.gmra.mrb[0].mxu0 %v1588
  %v3808 = vpop.f32.mrb[0].mxu0
  %v3809 = vadd.f32 %v3601, %v3808
  %v3810 = vpop.f32.mrb[0].mxu0
  %v3811 = vpop.f32.mrb[0].mxu0
  %v3812 = vadd.f32 %v3604, %v3811
  %v3813 = vpop.f32.mrb[0].mxu0
  %3814 = vmatprep.mubr.bf16.mxu0 %v1602
  %3815 = vmatmul.mubr.bf16.gmra.mrb[0].mxu0 %v1601
  %v3816 = vpop.f32.mrb[0].mxu0
  %v3817 = vadd.f32 %v3609, %v3816
  %v3818 = vpop.f32.mrb[0].mxu0
  %v3819 = vpop.f32.mrb[0].mxu0
  %v3820 = vadd.f32 %v3612, %v3819
  %v3821 = vpop.f32.mrb[0].mxu0
  %3822 = vmatprep.mubr.bf16.mxu0 %v1615
  %3823 = vmatmul.mubr.bf16.gmra.mrb[0].mxu0 %v1614
  %v3824 = vpop.f32.mrb[0].mxu0
  %v3825 = vadd.f32 %v3617, %v3824
  %v3826 = vpop.f32.mrb[0].mxu0
  %v3827 = vpop.f32.mrb[0].mxu0
  %v3828 = vadd.f32 %v3620, %v3827
  %v3829 = vpop.f32.mrb[0].mxu0
  %3830 = vmatprep.mubr.bf16.mxu0 %v1628
  %3831 = vmatmul.mubr.bf16.gmra.mrb[0].mxu0 %v1627
  %v3832 = vpop.f32.mrb[0].mxu0
  %v3833 = vadd.f32 %v3625, %v3832
  %v3834 = vpop.f32.mrb[0].mxu0
  %v3835 = vpop.f32.mrb[0].mxu0
  %v3836 = vadd.f32 %v3628, %v3835
  %v3837 = vpop.f32.mrb[0].mxu0
  %3838 = vmatprep.mubr.bf16.mxu0 %v1641
  %3839 = vmatmul.mubr.bf16.gmra.mrb[0].mxu0 %v1640
  %v3840 = vpop.f32.mrb[0].mxu0
  %v3841 = vadd.f32 %v3633, %v3840
  %v3842 = vpop.f32.mrb[0].mxu0
  %v3843 = vpop.f32.mrb[0].mxu0
  %v3844 = vadd.f32 %v3636, %v3843
  %v3845 = vpop.f32.mrb[0].mxu0
  %3846 = vmatprep.mubr.bf16.mxu0 %v1654
  %3847 = vmatmul.mubr.bf16.gmra.mrb[0].mxu0 %v1653
  %v3848 = vpop.f32.mrb[0].mxu0
  %v3849 = vadd.f32 %v3641, %v3848
  %v3850 = vpop.f32.mrb[0].mxu0
  %v3851 = vpop.f32.mrb[0].mxu0
  %v3852 = vadd.f32 %v3644, %v3851
  %v3853 = vpop.f32.mrb[0].mxu0
  %3854 = vmatprep.mubr.bf16.mxu0 %v1667
  %3855 = vmatmul.mubr.bf16.gmra.mrb[0].mxu0 %v1666
  %v3856 = vpop.f32.mrb[0].mxu0
  %v3857 = vadd.f32 %v3649, %v3856
  %v3858 = vpop.f32.mrb[0].mxu0
  %v3859 = vpop.f32.mrb[0].mxu0
  %v3860 = vadd.f32 %v3652, %v3859
  %v3861 = vpop.f32.mrb[0].mxu0
  %3862 = vmatprep.mubr.bf16.mxu0 %v1680
  %3863 = vmatmul.mubr.bf16.gmra.mrb[0].mxu0 %v1679
  %v3864 = vpop.f32.mrb[0].mxu0
  %v3865 = vadd.f32 %v3657, %v3864
  %v3866 = vpop.f32.mrb[0].mxu0
  %v3867 = vpop.f32.mrb[0].mxu0
  %v3868 = vadd.f32 %v3660, %v3867
  %v3869 = vpop.f32.mrb[0].mxu0
  %3870 = vmatprep.mubr.bf16.mxu0 %v1693
  %3871 = vmatmul.mubr.bf16.gmra.mrb[0].mxu0 %v1692
  %v3872 = vpop.f32.mrb[0].mxu0
  %v3873 = vadd.f32 %v3665, %v3872
  %v3874 = vpop.f32.mrb[0].mxu0
  %v3875 = vpop.f32.mrb[0].mxu0
  %v3876 = vadd.f32 %v3668, %v3875
  %v3877 = vpop.f32.mrb[0].mxu0
  %3878 = vmatprep.mubr.bf16.mxu0 %v1706
  %3879 = vmatmul.mubr.bf16.gmra.mrb[0].mxu0 %v1705
  %v3880 = vpop.f32.mrb[0].mxu0
  %v3881 = vadd.f32 %v3673, %v3880
  %v3882 = vpop.f32.mrb[0].mxu0
  %v3883 = vpop.f32.mrb[0].mxu0
  %v3884 = vadd.f32 %v3676, %v3883
  %v3885 = vpop.f32.mrb[0].mxu0
  %3886 = vmatprep.mubr.bf16.mxu0 %v1719
  %3887 = vmatmul.mubr.bf16.gmra.mrb[0].mxu0 %v1718
  %v3888 = vpop.f32.mrb[0].mxu0
  %v3889 = vadd.f32 %v3681, %v3888
  %v3890 = vpop.f32.mrb[0].mxu0
  %v3891 = vpop.f32.mrb[0].mxu0
  %v3892 = vadd.f32 %v3684, %v3891
  %v3893 = vpop.f32.mrb[0].mxu0
  %3894 = vmatprep.mubr.bf16.mxu0 %v1732
  %3895 = vmatmul.mubr.bf16.gmra.mrb[0].mxu0 %v1731
  %v3896 = vpop.f32.mrb[0].mxu0
  %v3897 = vadd.f32 %v3689, %v3896
  %v3898 = vpop.f32.mrb[0].mxu0
  %v3899 = vpop.f32.mrb[0].mxu0
  %v3900 = vadd.f32 %v3692, %v3899
  %v3901 = vpop.f32.mrb[0].mxu0
  %3902 = vmatprep.mubr.bf16.mxu0 %v1745
  %3903 = vmatmul.mubr.bf16.gmra.mrb[0].mxu0 %v1744
  %v3904 = vpop.f32.mrb[0].mxu0
  %v3905 = vadd.f32 %v3697, %v3904
  %v3906 = vpop.f32.mrb[0].mxu0
  %v3907 = vpop.f32.mrb[0].mxu0
  %v3908 = vadd.f32 %v3700, %v3907
  %v3909 = vpop.f32.mrb[0].mxu0
  %3910 = vmatprep.mubr.bf16.mxu0 %v1758
  %3911 = vmatmul.mubr.bf16.gmra.mrb[0].mxu0 %v1757
  %v3912 = vpop.f32.mrb[0].mxu0
  %v3913 = vadd.f32 %v3705, %v3912
  %v3914 = vpop.f32.mrb[0].mxu0
  %v3915 = vpop.f32.mrb[0].mxu0
  %v3916 = vpop.f32.mrb[0].mxu0
  %3917 = vdwg.mxu0
  %3918 = vmatprep.subr.bf16.mxu0 0
  %3919 = vmatpush1.bf16.msra.mxu0 %v2558
  %3920 = vmatprep.subr.bf16.mxu0 0
  %3921 = vmatpush1.bf16.msra.mxu0 %v2559
  %3922 = vmatprep.subr.bf16.mxu0 0
  %3923 = vmatpush1.bf16.msra.mxu0 %v2560
  %3924 = vmatprep.subr.bf16.mxu0 0
  %3925 = vmatpush1.bf16.msra.mxu0 %v2561
  %3926 = vmatprep.subr.bf16.mxu0 0
  %3927 = vmatpush1.bf16.msra.mxu0 %v2562
  %3928 = vmatprep.subr.bf16.mxu0 0
  %3929 = vmatpush1.bf16.msra.mxu0 %v2563
  %3930 = vmatprep.subr.bf16.mxu0 0
  %3931 = vmatpush1.bf16.msra.mxu0 %v2564
  %3932 = vmatprep.subr.bf16.mxu0 0
  %3933 = vmatpush1.bf16.msra.mxu0 %v2565
  %3934 = vmatprep.subr.bf16.mxu0 0
  %3935 = vmatpush1.bf16.msra.mxu0 0
  %3936 = vmatprep.subr.bf16.mxu0 0
  %3937 = vmatpush1.bf16.msra.mxu0 0
  %3938 = vmatprep.subr.bf16.mxu0 0
  %3939 = vmatpush1.bf16.msra.mxu0 0
  %3940 = vmatprep.subr.bf16.mxu0 0
  %3941 = vmatpush1.bf16.msra.mxu0 0
  %3942 = vmatprep.subr.bf16.mxu0 0
  %3943 = vmatpush1.bf16.msra.mxu0 0
  %3944 = vmatprep.subr.bf16.mxu0 0
  %3945 = vmatpush1.bf16.msra.mxu0 0
  %3946 = vmatprep.subr.bf16.mxu0 0
  %3947 = vmatpush1.bf16.msra.mxu0 0
  %3948 = vmatprep.subr.bf16.mxu0 0
  %3949 = vmatpush1.bf16.msra.mxu0 0
  %3950 = vmatprep.mubr.bf16.mxu0 0
  %3951 = vmatmul.mubr.bf16.gmra.mrb[0].mxu0 %v1486
  %v3952 = vpop.f32.mrb[0].mxu0
  %v3953 = vadd.f32 %v3745, %v3952
  %v3954 = vpop.f32.mrb[0].mxu0
  %v3955 = vpop.f32.mrb[0].mxu0
  %v3956 = vadd.f32 %v3748, %v3955
  %v3957 = vpop.f32.mrb[0].mxu0
  %3958 = vmatprep.mubr.bf16.mxu0 0
  %3959 = vmatmul.mubr.bf16.gmra.mrb[0].mxu0 %v1499
  %v3960 = vpop.f32.mrb[0].mxu0
  %v3961 = vadd.f32 %v3753, %v3960
  %v3962 = vpop.f32.mrb[0].mxu0
  %v3963 = vpop.f32.mrb[0].mxu0
  %v3964 = vadd.f32 %v3756, %v3963
  %v3965 = vpop.f32.mrb[0].mxu0
  %3966 = vmatprep.mubr.bf16.mxu0 0
  %3967 = vmatmul.mubr.bf16.gmra.mrb[0].mxu0 %v1512
  %v3968 = vpop.f32.mrb[0].mxu0
  %v3969 = vadd.f32 %v3761, %v3968
  %v3970 = vpop.f32.mrb[0].mxu0
  %v3971 = vpop.f32.mrb[0].mxu0
  %v3972 = vadd.f32 %v3764, %v3971
  %v3973 = vpop.f32.mrb[0].mxu0
  %3974 = vmatprep.mubr.bf16.mxu0 0
  %3975 = vmatmul.mubr.bf16.gmra.mrb[0].mxu0 %v1525
  %v3976 = vpop.f32.mrb[0].mxu0
  %v3977 = vadd.f32 %v3769, %v3976
  %v3978 = vpop.f32.mrb[0].mxu0
  %v3979 = vpop.f32.mrb[0].mxu0
  %v3980 = vadd.f32 %v3772, %v3979
  %v3981 = vpop.f32.mrb[0].mxu0
  %3982 = vmatprep.mubr.bf16.mxu0 0
  %3983 = vmatmul.mubr.bf16.gmra.mrb[0].mxu0 %v1538
  %v3984 = vpop.f32.mrb[0].mxu0
  %v3985 = vadd.f32 %v3777, %v3984
  %v3986 = vpop.f32.mrb[0].mxu0
  %v3987 = vpop.f32.mrb[0].mxu0
  %v3988 = vadd.f32 %v3780, %v3987
  %v3989 = vpop.f32.mrb[0].mxu0
  %3990 = vmatprep.mubr.bf16.mxu0 0
  %3991 = vmatmul.mubr.bf16.gmra.mrb[0].mxu0 %v1551
  %v3992 = vpop.f32.mrb[0].mxu0
  %v3993 = vadd.f32 %v3785, %v3992
  %v3994 = vpop.f32.mrb[0].mxu0
  %v3995 = vpop.f32.mrb[0].mxu0
  %v3996 = vadd.f32 %v3788, %v3995
  %v3997 = vpop.f32.mrb[0].mxu0
  %3998 = vmatprep.mubr.bf16.mxu0 0
  %3999 = vmatmul.mubr.bf16.gmra.mrb[0].mxu0 %v1564
  %v4000 = vpop.f32.mrb[0].mxu0
  %v4001 = vadd.f32 %v3793, %v4000
  %v4002 = vpop.f32.mrb[0].mxu0
  %v4003 = vpop.f32.mrb[0].mxu0
  %v4004 = vadd.f32 %v3796, %v4003
  %v4005 = vpop.f32.mrb[0].mxu0
  %4006 = vmatprep.mubr.bf16.mxu0 0
  %4007 = vmatmul.mubr.bf16.gmra.mrb[0].mxu0 %v1577
  %v4008 = vpop.f32.mrb[0].mxu0
  %v4009 = vadd.f32 %v3801, %v4008
  %v4010 = vpop.f32.mrb[0].mxu0
  %v4011 = vpop.f32.mrb[0].mxu0
  %v4012 = vadd.f32 %v3804, %v4011
  %v4013 = vpop.f32.mrb[0].mxu0
  %4014 = vmatprep.mubr.bf16.mxu0 0
  %4015 = vmatmul.mubr.bf16.gmra.mrb[0].mxu0 %v1590
  %v4016 = vpop.f32.mrb[0].mxu0
  %v4017 = vadd.f32 %v3809, %v4016
  %v4018 = vpop.f32.mrb[0].mxu0
  %v4019 = vpop.f32.mrb[0].mxu0
  %v4020 = vadd.f32 %v3812, %v4019
  %v4021 = vpop.f32.mrb[0].mxu0
  %4022 = vmatprep.mubr.bf16.mxu0 0
  %4023 = vmatmul.mubr.bf16.gmra.mrb[0].mxu0 %v1603
  %v4024 = vpop.f32.mrb[0].mxu0
  %v4025 = vadd.f32 %v3817, %v4024
  %v4026 = vpop.f32.mrb[0].mxu0
  %v4027 = vpop.f32.mrb[0].mxu0
  %v4028 = vadd.f32 %v3820, %v4027
  %v4029 = vpop.f32.mrb[0].mxu0
  %4030 = vmatprep.mubr.bf16.mxu0 0
  %4031 = vmatmul.mubr.bf16.gmra.mrb[0].mxu0 %v1616
  %v4032 = vpop.f32.mrb[0].mxu0
  %v4033 = vadd.f32 %v3825, %v4032
  %v4034 = vpop.f32.mrb[0].mxu0
  %v4035 = vpop.f32.mrb[0].mxu0
  %v4036 = vadd.f32 %v3828, %v4035
  %v4037 = vpop.f32.mrb[0].mxu0
  %4038 = vmatprep.mubr.bf16.mxu0 0
  %4039 = vmatmul.mubr.bf16.gmra.mrb[0].mxu0 %v1629
  %v4040 = vpop.f32.mrb[0].mxu0
  %v4041 = vadd.f32 %v3833, %v4040
  %v4042 = vpop.f32.mrb[0].mxu0
  %v4043 = vpop.f32.mrb[0].mxu0
  %v4044 = vadd.f32 %v3836, %v4043
  %v4045 = vpop.f32.mrb[0].mxu0
  %4046 = vmatprep.mubr.bf16.mxu0 0
  %4047 = vmatmul.mubr.bf16.gmra.mrb[0].mxu0 %v1642
  %v4048 = vpop.f32.mrb[0].mxu0
  %v4049 = vadd.f32 %v3841, %v4048
  %v4050 = vpop.f32.mrb[0].mxu0
  %v4051 = vpop.f32.mrb[0].mxu0
  %v4052 = vadd.f32 %v3844, %v4051
  %v4053 = vpop.f32.mrb[0].mxu0
  %4054 = vmatprep.mubr.bf16.mxu0 0
  %4055 = vmatmul.mubr.bf16.gmra.mrb[0].mxu0 %v1655
  %v4056 = vpop.f32.mrb[0].mxu0
  %v4057 = vadd.f32 %v3849, %v4056
  %v4058 = vpop.f32.mrb[0].mxu0
  %v4059 = vpop.f32.mrb[0].mxu0
  %v4060 = vadd.f32 %v3852, %v4059
  %v4061 = vpop.f32.mrb[0].mxu0
  %4062 = vmatprep.mubr.bf16.mxu0 0
  %4063 = vmatmul.mubr.bf16.gmra.mrb[0].mxu0 %v1668
  %v4064 = vpop.f32.mrb[0].mxu0
  %v4065 = vadd.f32 %v3857, %v4064
  %v4066 = vpop.f32.mrb[0].mxu0
  %v4067 = vpop.f32.mrb[0].mxu0
  %v4068 = vadd.f32 %v3860, %v4067
  %v4069 = vpop.f32.mrb[0].mxu0
  %4070 = vmatprep.mubr.bf16.mxu0 0
  %4071 = vmatmul.mubr.bf16.gmra.mrb[0].mxu0 %v1681
  %v4072 = vpop.f32.mrb[0].mxu0
  %v4073 = vadd.f32 %v3865, %v4072
  %v4074 = vpop.f32.mrb[0].mxu0
  %v4075 = vpop.f32.mrb[0].mxu0
  %v4076 = vadd.f32 %v3868, %v4075
  %v4077 = vpop.f32.mrb[0].mxu0
  %4078 = vmatprep.mubr.bf16.mxu0 0
  %4079 = vmatmul.mubr.bf16.gmra.mrb[0].mxu0 %v1694
  %v4080 = vpop.f32.mrb[0].mxu0
  %v4081 = vadd.f32 %v3873, %v4080
  %v4082 = vpop.f32.mrb[0].mxu0
  %v4083 = vpop.f32.mrb[0].mxu0
  %v4084 = vadd.f32 %v3876, %v4083
  %v4085 = vpop.f32.mrb[0].mxu0
  %4086 = vmatprep.mubr.bf16.mxu0 0
  %4087 = vmatmul.mubr.bf16.gmra.mrb[0].mxu0 %v1707
  %v4088 = vpop.f32.mrb[0].mxu0
  %v4089 = vadd.f32 %v3881, %v4088
  %v4090 = vpop.f32.mrb[0].mxu0
  %v4091 = vpop.f32.mrb[0].mxu0
  %v4092 = vadd.f32 %v3884, %v4091
  %v4093 = vpop.f32.mrb[0].mxu0
  %4094 = vmatprep.mubr.bf16.mxu0 0
  %4095 = vmatmul.mubr.bf16.gmra.mrb[0].mxu0 %v1720
  %v4096 = vpop.f32.mrb[0].mxu0
  %v4097 = vadd.f32 %v3889, %v4096
  %v4098 = vpop.f32.mrb[0].mxu0
  %v4099 = vpop.f32.mrb[0].mxu0
  %v4100 = vadd.f32 %v3892, %v4099
  %v4101 = vpop.f32.mrb[0].mxu0
  %4102 = vmatprep.mubr.bf16.mxu0 0
  %4103 = vmatmul.mubr.bf16.gmra.mrb[0].mxu0 %v1733
  %v4104 = vpop.f32.mrb[0].mxu0
  %v4105 = vadd.f32 %v3897, %v4104
  %v4106 = vpop.f32.mrb[0].mxu0
  %v4107 = vpop.f32.mrb[0].mxu0
  %v4108 = vadd.f32 %v3900, %v4107
  %v4109 = vpop.f32.mrb[0].mxu0
  %4110 = vmatprep.mubr.bf16.mxu0 0
  %4111 = vmatmul.mubr.bf16.gmra.mrb[0].mxu0 %v1746
  %v4112 = vpop.f32.mrb[0].mxu0
  %v4113 = vadd.f32 %v3905, %v4112
  %v4114 = vpop.f32.mrb[0].mxu0
  %v4115 = vpop.f32.mrb[0].mxu0
  %v4116 = vadd.f32 %v3908, %v4115
  %v4117 = vpop.f32.mrb[0].mxu0
  %4118 = vmatprep.mubr.bf16.mxu0 0
  %4119 = vmatmul.mubr.bf16.gmra.mrb[0].mxu0 %v1759
  %v4120 = vpop.f32.mrb[0].mxu0
  %v4121 = vadd.f32 %v3913, %v4120
  %v4122 = vpop.f32.mrb[0].mxu0
  %v4123 = vpop.f32.mrb[0].mxu0
  %v4124 = vpop.f32.mrb[0].mxu0
  %4125 = vdwg.mxu0
  %v4126 = vadd.f32 %v62, %v3953
  %v4127 = vadd.f32 %v63, %v3956
  %v4128 = vadd.f32 %v64, %v3961
  %v4129 = vadd.f32 %v65, %v3964
  %v4130 = vadd.f32 %v66, %v3969
  %v4131 = vadd.f32 %v67, %v3972
  %v4132 = vadd.f32 %v68, %v3977
  %v4133 = vadd.f32 %v69, %v3980
  %v4134 = vadd.f32 %v70, %v3985
  %v4135 = vadd.f32 %v71, %v3988
  %v4136 = vadd.f32 %v72, %v3993
  %v4137 = vadd.f32 %v73, %v3996
  %v4138 = vadd.f32 %v74, %v4001
  %v4139 = vadd.f32 %v75, %v4004
  %v4140 = vadd.f32 %v76, %v4009
  %v4141 = vadd.f32 %v77, %v4012
  %v4142 = vadd.f32 %v78, %v4017
  %v4143 = vadd.f32 %v79, %v4020
  %v4144 = vadd.f32 %v80, %v4025
  %v4145 = vadd.f32 %v81, %v4028
  %v4146 = vadd.f32 %v82, %v4033
  %v4147 = vadd.f32 %v83, %v4036
  %v4148 = vadd.f32 %v84, %v4041
  %v4149 = vadd.f32 %v85, %v4044
  %v4150 = vadd.f32 %v86, %v4049
  %v4151 = vadd.f32 %v87, %v4052
  %v4152 = vadd.f32 %v88, %v4057
  %v4153 = vadd.f32 %v89, %v4060
  %v4154 = vadd.f32 %v90, %v4065
  %v4155 = vadd.f32 %v91, %v4068
  %v4156 = vadd.f32 %v92, %v4073
  %v4157 = vadd.f32 %v93, %v4076
  %v4158 = vadd.f32 %v94, %v4081
  %v4159 = vadd.f32 %v95, %v4084
  %v4160 = vadd.f32 %v96, %v4089
  %v4161 = vadd.f32 %v97, %v4092
  %v4162 = vadd.f32 %v98, %v4097
  %v4163 = vadd.f32 %v99, %v4100
  %v4164 = vadd.f32 %v100, %v4105
  %v4165 = vadd.f32 %v101, %v4108
  %v4166 = vadd.f32 %v102, %v4113
  %v4167 = vadd.f32 %v103, %v4116
  %v4168 = vadd.f32 %v104, %v4121
  %4169 = vst [vmem:[#allocation2] sm:$0xff] %v4126
  %4170 = vst [vmem:[#allocation2 + $0x8] sm:$0xff] %v4127
  %4171 = vst [vmem:[#allocation2 + $0x10] sm:$0xff] %v4128
  %4172 = vst [vmem:[#allocation2 + $0x18] sm:$0xff] %v4129
  %4173 = vst [vmem:[#allocation2 + $0x20] sm:$0xff] %v4130
  %4174 = vst [vmem:[#allocation2 + $0x28] sm:$0xff] %v4131
  %4175 = vst [vmem:[#allocation2 + $0x30] sm:$0xff] %v4132
  %4176 = vst [vmem:[#allocation2 + $0x38] sm:$0xff] %v4133
  %4177 = vst [vmem:[#allocation2 + $0x40] sm:$0xff] %v4134
  %4178 = vst [vmem:[#allocation2 + $0x48] sm:$0xff] %v4135
  %4179 = vst [vmem:[#allocation2 + $0x50] sm:$0xff] %v4136
  %4180 = vst [vmem:[#allocation2 + $0x58] sm:$0xff] %v4137
  %4181 = vst [vmem:[#allocation2 + $0x60] sm:$0xff] %v4138
  %4182 = vst [vmem:[#allocation2 + $0x68] sm:$0xff] %v4139
  %4183 = vst [vmem:[#allocation2 + $0x70] sm:$0xff] %v4140
  %4184 = vst [vmem:[#allocation2 + $0x78] sm:$0xff] %v4141
  %4185 = vst [vmem:[#allocation2 + $0x80] sm:$0xff] %v4142
  %4186 = vst [vmem:[#allocation2 + $0x88] sm:$0xff] %v4143
  %4187 = vst [vmem:[#allocation2 + $0x90] sm:$0xff] %v4144
  %4188 = vst [vmem:[#allocation2 + $0x98] sm:$0xff] %v4145
  %4189 = vst [vmem:[#allocation2 + $0xa0] sm:$0xff] %v4146
  %4190 = vst [vmem:[#allocation2 + $0xa8] sm:$0xff] %v4147
  %4191 = vst [vmem:[#allocation2 + $0xb0] sm:$0xff] %v4148
  %4192 = vst [vmem:[#allocation2 + $0xb8] sm:$0xff] %v4149
  %4193 = vst [vmem:[#allocation2 + $0xc0] sm:$0xff] %v4150
  %4194 = vst [vmem:[#allocation2 + $0xc8] sm:$0xff] %v4151
  %4195 = vst [vmem:[#allocation2 + $0xd0] sm:$0xff] %v4152
  %4196 = vst [vmem:[#allocation2 + $0xd8] sm:$0xff] %v4153
  %4197 = vst [vmem:[#allocation2 + $0xe0] sm:$0xff] %v4154
  %4198 = vst [vmem:[#allocation2 + $0xe8] sm:$0xff] %v4155
  %4199 = vst [vmem:[#allocation2 + $0xf0] sm:$0xff] %v4156
  %4200 = vst [vmem:[#allocation2 + $0xf8] sm:$0xff] %v4157
  %4201 = vst [vmem:[#allocation2 + $0x100] sm:$0xff] %v4158
  %4202 = vst [vmem:[#allocation2 + $0x108] sm:$0xff] %v4159
  %4203 = vst [vmem:[#allocation2 + $0x110] sm:$0xff] %v4160
  %4204 = vst [vmem:[#allocation2 + $0x118] sm:$0xff] %v4161
  %4205 = vst [vmem:[#allocation2 + $0x120] sm:$0xff] %v4162
  %4206 = vst [vmem:[#allocation2 + $0x128] sm:$0xff] %v4163
  %4207 = vst [vmem:[#allocation2 + $0x130] sm:$0xff] %v4164
  %4208 = vst [vmem:[#allocation2 + $0x138] sm:$0xff] %v4165
  %4209 = vst [vmem:[#allocation2 + $0x140] sm:$0xff] %v4166
  %4210 = vst [vmem:[#allocation2 + $0x148] sm:$0xff] %v4167
  %4211 = vst [vmem:[#allocation2 + $0x150] sm:$0x3] %v4168
  // Predicated region
  $region18: #{image_pair_encoder_v2.5} parent=0 // pred_check
    %p4212 = pneg %p15
  $region19: #{image_pair_encoder_v2.5} parent=0 // pred_check_branch
    %4214 = sbr.rel (%p4212) target = $region21
  $region20: #{image_pair_encoder_v2.5} parent=0 // pred_region
    %v4215 = vld [vmem:[#allocation2] sm:$0xff]
    %v4216 = vld [vmem:[#allocation2 + $0x8] sm:$0xff]
    %v4217 = vld [vmem:[#allocation2 + $0x10] sm:$0xff]
    %v4218 = vld [vmem:[#allocation2 + $0x18] sm:$0xff]
    %v4219 = vld [vmem:[#allocation2 + $0x20] sm:$0xff]
    %v4220 = vld [vmem:[#allocation2 + $0x28] sm:$0xff]
    %v4221 = vld [vmem:[#allocation2 + $0x30] sm:$0xff]
    %v4222 = vld [vmem:[#allocation2 + $0x38] sm:$0xff]
    %v4223 = vld [vmem:[#allocation2 + $0x40] sm:$0xff]
    %v4224 = vld [vmem:[#allocation2 + $0x48] sm:$0xff]
    %v4225 = vld [vmem:[#allocation2 + $0x50] sm:$0xff]
    %v4226 = vld [vmem:[#allocation2 + $0x58] sm:$0xff]
    %v4227 = vld [vmem:[#allocation2 + $0x60] sm:$0xff]
    %v4228 = vld [vmem:[#allocation2 + $0x68] sm:$0xff]
    %v4229 = vld [vmem:[#allocation2 + $0x70] sm:$0xff]
    %v4230 = vld [vmem:[#allocation2 + $0x78] sm:$0xff]
    %v4231 = vld [vmem:[#allocation2 + $0x80] sm:$0xff]
    %v4232 = vld [vmem:[#allocation2 + $0x88] sm:$0xff]
    %v4233 = vld [vmem:[#allocation2 + $0x90] sm:$0xff]
    %v4234 = vld [vmem:[#allocation2 + $0x98] sm:$0xff]
    %v4235 = vld [vmem:[#allocation2 + $0xa0] sm:$0xff]
    %v4236 = vld [vmem:[#allocation2 + $0xa8] sm:$0xff]
    %v4237 = vld [vmem:[#allocation2 + $0xb0] sm:$0xff]
    %v4238 = vld [vmem:[#allocation2 + $0xb8] sm:$0xff]
    %v4239 = vld [vmem:[#allocation2 + $0xc0] sm:$0xff]
    %v4240 = vld [vmem:[#allocation2 + $0xc8] sm:$0xff]
    %v4241 = vld [vmem:[#allocation2 + $0xd0] sm:$0xff]
    %v4242 = vld [vmem:[#allocation2 + $0xd8] sm:$0xff]
    %v4243 = vld [vmem:[#allocation2 + $0xe0] sm:$0xff]
    %v4244 = vld [vmem:[#allocation2 + $0xe8] sm:$0xff]
    %v4245 = vld [vmem:[#allocation2 + $0xf0] sm:$0xff]
    %v4246 = vld [vmem:[#allocation2 + $0xf8] sm:$0xff]
    %v4247 = vld [vmem:[#allocation2 + $0x100] sm:$0xff]
    %v4248 = vld [vmem:[#allocation2 + $0x108] sm:$0xff]
    %v4249 = vld [vmem:[#allocation2 + $0x110] sm:$0xff]
    %v4250 = vld [vmem:[#allocation2 + $0x118] sm:$0xff]
    %v4251 = vld [vmem:[#allocation2 + $0x120] sm:$0xff]
    %v4252 = vld [vmem:[#allocation2 + $0x128] sm:$0xff]
    %v4253 = vld [vmem:[#allocation2 + $0x130] sm:$0xff]
    %v4254 = vld [vmem:[#allocation2 + $0x138] sm:$0xff]
    %v4255 = vld [vmem:[#allocation2 + $0x140] sm:$0xff]
    %v4256 = vld [vmem:[#allocation2 + $0x148] sm:$0xff]
    %v4257 = vld [vmem:[#allocation2 + $0x150] sm:$0x3]
    %v4258 = vld [vmem:[%s2] sm:$0x1]
    %v4260 = vlaneseq
    %v4261 = vshrl.u32 %v4260, 7
    %v4262 = vsub.s32 0, %v4261
    %v4263 = vrot.slane %v4258, %v4262
    %v4265 = vadd.f32 %v4215, %v4263
    %v4266 = vadd.f32 %v4216, %v4263
    %v4267 = vadd.f32 %v4217, %v4263
    %v4268 = vadd.f32 %v4218, %v4263
    %v4269 = vadd.f32 %v4219, %v4263
    %v4270 = vadd.f32 %v4220, %v4263
    %v4271 = vadd.f32 %v4221, %v4263
    %v4272 = vadd.f32 %v4222, %v4263
    %v4273 = vadd.f32 %v4223, %v4263
    %v4274 = vadd.f32 %v4224, %v4263
    %v4275 = vadd.f32 %v4225, %v4263
    %v4276 = vadd.f32 %v4226, %v4263
    %v4277 = vadd.f32 %v4227, %v4263
    %v4278 = vadd.f32 %v4228, %v4263
    %v4279 = vadd.f32 %v4229, %v4263
    %v4280 = vadd.f32 %v4230, %v4263
    %v4281 = vadd.f32 %v4231, %v4263
    %v4282 = vadd.f32 %v4232, %v4263
    %v4283 = vadd.f32 %v4233, %v4263
    %v4284 = vadd.f32 %v4234, %v4263
    %v4285 = vadd.f32 %v4235, %v4263
    %v4286 = vadd.f32 %v4236, %v4263
    %v4287 = vadd.f32 %v4237, %v4263
    %v4288 = vadd.f32 %v4238, %v4263
    %v4289 = vadd.f32 %v4239, %v4263
    %v4290 = vadd.f32 %v4240, %v4263
    %v4291 = vadd.f32 %v4241, %v4263
    %v4292 = vadd.f32 %v4242, %v4263
    %v4293 = vadd.f32 %v4243, %v4263
    %v4294 = vadd.f32 %v4244, %v4263
    %v4295 = vadd.f32 %v4245, %v4263
    %v4296 = vadd.f32 %v4246, %v4263
    %v4297 = vadd.f32 %v4247, %v4263
    %v4298 = vadd.f32 %v4248, %v4263
    %v4299 = vadd.f32 %v4249, %v4263
    %v4300 = vadd.f32 %v4250, %v4263
    %v4301 = vadd.f32 %v4251, %v4263
    %v4302 = vadd.f32 %v4252, %v4263
    %v4303 = vadd.f32 %v4253, %v4263
    %v4304 = vadd.f32 %v4254, %v4263
    %v4305 = vadd.f32 %v4255, %v4263
    %v4306 = vadd.f32 %v4256, %v4263
    %v4307 = vadd.f32 %v4257, %v4263
    %v4308 = vmax.f32 %v4265, 0.0
    %v4309 = vmax.f32 %v4266, 0.0
    %v4310 = vmax.f32 %v4267, 0.0
    %v4311 = vmax.f32 %v4268, 0.0
    %v4312 = vmax.f32 %v4269, 0.0
    %v4313 = vmax.f32 %v4270, 0.0
    %v4314 = vmax.f32 %v4271, 0.0
    %v4315 = vmax.f32 %v4272, 0.0
    %v4316 = vmax.f32 %v4273, 0.0
    %v4317 = vmax.f32 %v4274, 0.0
    %v4318 = vmax.f32 %v4275, 0.0
    %v4319 = vmax.f32 %v4276, 0.0
    %v4320 = vmax.f32 %v4277, 0.0
    %v4321 = vmax.f32 %v4278, 0.0
    %v4322 = vmax.f32 %v4279, 0.0
    %v4323 = vmax.f32 %v4280, 0.0
    %v4324 = vmax.f32 %v4281, 0.0
    %v4325 = vmax.f32 %v4282, 0.0
    %v4326 = vmax.f32 %v4283, 0.0
    %v4327 = vmax.f32 %v4284, 0.0
    %v4328 = vmax.f32 %v4285, 0.0
    %v4329 = vmax.f32 %v4286, 0.0
    %v4330 = vmax.f32 %v4287, 0.0
    %v4331 = vmax.f32 %v4288, 0.0
    %v4332 = vmax.f32 %v4289, 0.0
    %v4333 = vmax.f32 %v4290, 0.0
    %v4334 = vmax.f32 %v4291, 0.0
    %v4335 = vmax.f32 %v4292, 0.0
    %v4336 = vmax.f32 %v4293, 0.0
    %v4337 = vmax.f32 %v4294, 0.0
    %v4338 = vmax.f32 %v4295, 0.0
    %v4339 = vmax.f32 %v4296, 0.0
    %v4340 = vmax.f32 %v4297, 0.0
    %v4341 = vmax.f32 %v4298, 0.0
    %v4342 = vmax.f32 %v4299, 0.0
    %v4343 = vmax.f32 %v4300, 0.0
    %v4344 = vmax.f32 %v4301, 0.0
    %v4345 = vmax.f32 %v4302, 0.0
    %v4346 = vmax.f32 %v4303, 0.0
    %v4347 = vmax.f32 %v4304, 0.0
    %v4348 = vmax.f32 %v4305, 0.0
    %v4349 = vmax.f32 %v4306, 0.0
    %v4350 = vmax.f32 %v4307, 0.0
    %v4351 = vpack.c.bf16 %v4309, %v4308
    %v4352 = vpack.c.bf16 %v4311, %v4310
    %v4353 = vpack.c.bf16 %v4313, %v4312
    %v4354 = vpack.c.bf16 %v4315, %v4314
    %v4355 = vpack.c.bf16 %v4317, %v4316
    %v4356 = vpack.c.bf16 %v4319, %v4318
    %v4357 = vpack.c.bf16 %v4321, %v4320
    %v4358 = vpack.c.bf16 %v4323, %v4322
    %v4359 = vpack.c.bf16 %v4325, %v4324
    %v4360 = vpack.c.bf16 %v4327, %v4326
    %v4361 = vpack.c.bf16 %v4329, %v4328
    %v4362 = vpack.c.bf16 %v4331, %v4330
    %v4363 = vpack.c.bf16 %v4333, %v4332
    %v4364 = vpack.c.bf16 %v4335, %v4334
    %v4365 = vpack.c.bf16 %v4337, %v4336
    %v4366 = vpack.c.bf16 %v4339, %v4338
    %v4367 = vpack.c.bf16 %v4341, %v4340
    %v4368 = vpack.c.bf16 %v4343, %v4342
    %v4369 = vpack.c.bf16 %v4345, %v4344
    %v4370 = vpack.c.bf16 %v4347, %v4346
    %v4371 = vpack.c.bf16 %v4349, %v4348
    %v4372 = vpack.c.bf16 %v4350, %v4350
    %v4395 = vunpack.c.l.b16 %v4351
    %v4396 = vunpack.c.h.b16 %v4351
    %v4397 = vunpack.c.l.b16 %v4352
    %v4398 = vunpack.c.h.b16 %v4352
    %v4399 = vunpack.c.l.b16 %v4353
    %v4400 = vunpack.c.h.b16 %v4353
    %v4401 = vunpack.c.l.b16 %v4354
    %v4402 = vunpack.c.h.b16 %v4354
    %v4403 = vunpack.c.l.b16 %v4355
    %v4404 = vunpack.c.h.b16 %v4355
    %v4405 = vunpack.c.l.b16 %v4356
    %v4406 = vunpack.c.h.b16 %v4356
    %v4407 = vunpack.c.l.b16 %v4357
    %v4408 = vunpack.c.h.b16 %v4357
    %v4409 = vunpack.c.l.b16 %v4358
    %v4410 = vunpack.c.h.b16 %v4358
    %v4411 = vunpack.c.l.b16 %v4359
    %v4412 = vunpack.c.h.b16 %v4359
    %v4413 = vunpack.c.l.b16 %v4360
    %v4414 = vunpack.c.h.b16 %v4360
    %v4415 = vunpack.c.l.b16 %v4361
    %v4416 = vunpack.c.h.b16 %v4361
    %v4417 = vunpack.c.l.b16 %v4362
    %v4418 = vunpack.c.h.b16 %v4362
    %v4419 = vunpack.c.l.b16 %v4363
    %v4420 = vunpack.c.h.b16 %v4363
    %v4421 = vunpack.c.l.b16 %v4364
    %v4422 = vunpack.c.h.b16 %v4364
    %v4423 = vunpack.c.l.b16 %v4365
    %v4424 = vunpack.c.h.b16 %v4365
    %v4425 = vunpack.c.l.b16 %v4366
    %v4426 = vunpack.c.h.b16 %v4366
    %v4427 = vunpack.c.l.b16 %v4367
    %v4428 = vunpack.c.h.b16 %v4367
    %v4429 = vunpack.c.l.b16 %v4368
    %v4430 = vunpack.c.h.b16 %v4368
    %v4431 = vunpack.c.l.b16 %v4369
    %v4432 = vunpack.c.h.b16 %v4369
    %v4433 = vunpack.c.l.b16 %v4370
    %v4434 = vunpack.c.h.b16 %v4370
    %v4435 = vunpack.c.l.b16 %v4371
    %v4436 = vunpack.c.h.b16 %v4371
    %v4437 = vunpack.c.l.b16 %v4372
    %v4438 = vpack.c.b16 %v4395, %v4395
    %v4439 = vpack.c.b16 %v4396, %v4396
    %v4440 = vpack.c.b16 %v4397, %v4397
    %v4441 = vpack.c.b16 %v4398, %v4398
    %v4442 = vpack.c.b16 %v4399, %v4399
    %v4443 = vpack.c.b16 %v4400, %v4400
    %v4444 = vpack.c.b16 %v4401, %v4401
    %v4445 = vpack.c.b16 %v4402, %v4402
    %v4446 = vpack.c.b16 %v4403, %v4403
    %v4447 = vpack.c.b16 %v4404, %v4404
    %v4448 = vpack.c.b16 %v4405, %v4405
    %v4449 = vpack.c.b16 %v4406, %v4406
    %v4450 = vpack.c.b16 %v4407, %v4407
    %v4451 = vpack.c.b16 %v4408, %v4408
    %v4452 = vpack.c.b16 %v4409, %v4409
    %v4453 = vpack.c.b16 %v4410, %v4410
    %v4454 = vpack.c.b16 %v4411, %v4411
    %v4455 = vpack.c.b16 %v4412, %v4412
    %v4456 = vpack.c.b16 %v4413, %v4413
    %v4457 = vpack.c.b16 %v4414, %v4414
    %v4458 = vpack.c.b16 %v4415, %v4415
    %v4459 = vpack.c.b16 %v4416, %v4416
    %v4460 = vpack.c.b16 %v4417, %v4417
    %v4461 = vpack.c.b16 %v4418, %v4418
    %v4462 = vpack.c.b16 %v4419, %v4419
    %v4463 = vpack.c.b16 %v4420, %v4420
    %v4464 = vpack.c.b16 %v4421, %v4421
    %v4465 = vpack.c.b16 %v4422, %v4422
    %v4466 = vpack.c.b16 %v4423, %v4423
    %v4467 = vpack.c.b16 %v4424, %v4424
    %v4468 = vpack.c.b16 %v4425, %v4425
    %v4469 = vpack.c.b16 %v4426, %v4426
    %v4470 = vpack.c.b16 %v4427, %v4427
    %v4471 = vpack.c.b16 %v4428, %v4428
    %v4472 = vpack.c.b16 %v4429, %v4429
    %v4473 = vpack.c.b16 %v4430, %v4430
    %v4474 = vpack.c.b16 %v4431, %v4431
    %v4475 = vpack.c.b16 %v4432, %v4432
    %v4476 = vpack.c.b16 %v4433, %v4433
    %v4477 = vpack.c.b16 %v4434, %v4434
    %v4478 = vpack.c.b16 %v4435, %v4435
    %v4479 = vpack.c.b16 %v4436, %v4436
    %v4480 = vpack.c.b16 %v4437, %v4437
    %4524 = vst [vmem:[%s3] sm:$0xf] %v4438
    %4525 = vst [vmem:[%s3 + $0x4] sm:$0xf] %v4439
    %4526 = vst [vmem:[%s3 + $0x8] sm:$0xf] %v4440
    %4527 = vst [vmem:[%s3 + $0xc] sm:$0xf] %v4441
    %4528 = vst [vmem:[%s3 + $0x10] sm:$0xf] %v4442
    %4529 = vst [vmem:[%s3 + $0x14] sm:$0xf] %v4443
    %4530 = vst [vmem:[%s3 + $0x18] sm:$0xf] %v4444
    %4531 = vst [vmem:[%s3 + $0x1c] sm:$0xf] %v4445
    %4532 = vst [vmem:[%s3 + $0x20] sm:$0xf] %v4446
    %4533 = vst [vmem:[%s3 + $0x24] sm:$0xf] %v4447
    %4534 = vst [vmem:[%s3 + $0x28] sm:$0xf] %v4448
    %4535 = vst [vmem:[%s3 + $0x2c] sm:$0xf] %v4449
    %4536 = vst [vmem:[%s3 + $0x30] sm:$0xf] %v4450
    %4537 = vst [vmem:[%s3 + $0x34] sm:$0xf] %v4451
    %4538 = vst [vmem:[%s3 + $0x38] sm:$0xf] %v4452
    %4539 = vst [vmem:[%s3 + $0x3c] sm:$0xf] %v4453
    %4540 = vst [vmem:[%s3 + $0x40] sm:$0xf] %v4454
    %4541 = vst [vmem:[%s3 + $0x44] sm:$0xf] %v4455
    %4542 = vst [vmem:[%s3 + $0x48] sm:$0xf] %v4456
    %4543 = vst [vmem:[%s3 + $0x4c] sm:$0xf] %v4457
    %4544 = vst [vmem:[%s3 + $0x50] sm:$0xf] %v4458
    %4545 = vst [vmem:[%s3 + $0x54] sm:$0xf] %v4459
    %4546 = vst [vmem:[%s3 + $0x58] sm:$0xf] %v4460
    %4547 = vst [vmem:[%s3 + $0x5c] sm:$0xf] %v4461
    %4548 = vst [vmem:[%s3 + $0x60] sm:$0xf] %v4462
    %4549 = vst [vmem:[%s3 + $0x64] sm:$0xf] %v4463
    %4550 = vst [vmem:[%s3 + $0x68] sm:$0xf] %v4464
    %4551 = vst [vmem:[%s3 + $0x6c] sm:$0xf] %v4465
    %4552 = vst [vmem:[%s3 + $0x70] sm:$0xf] %v4466
    %4553 = vst [vmem:[%s3 + $0x74] sm:$0xf] %v4467
    %4554 = vst [vmem:[%s3 + $0x78] sm:$0xf] %v4468
    %4555 = vst [vmem:[%s3 + $0x7c] sm:$0xf] %v4469
    %4556 = vst [vmem:[%s3 + $0x80] sm:$0xf] %v4470
    %4557 = vst [vmem:[%s3 + $0x84] sm:$0xf] %v4471
    %4558 = vst [vmem:[%s3 + $0x88] sm:$0xf] %v4472
    %4559 = vst [vmem:[%s3 + $0x8c] sm:$0xf] %v4473
    %4560 = vst [vmem:[%s3 + $0x90] sm:$0xf] %v4474
    %4561 = vst [vmem:[%s3 + $0x94] sm:$0xf] %v4475
    %4562 = vst [vmem:[%s3 + $0x98] sm:$0xf] %v4476
    %4563 = vst [vmem:[%s3 + $0x9c] sm:$0xf] %v4477
    %4564 = vst [vmem:[%s3 + $0xa0] sm:$0xf] %v4478
    %4565 = vst [vmem:[%s3 + $0xa4] sm:$0xf] %v4479
    %4566 = vst [vmem:[%s3 + $0xa8] sm:$0x1] %v4480
  $region21: #{image_pair_encoder_v2.5} parent=0 // pred_fallthru
    _
  // Predicated region
  $region22: #{image_pair_encoder_v2.5} parent=0 // pred_check
    _
  $region23: #{image_pair_encoder_v2.5} parent=0 // pred_check_branch
    %4568 = sbr.rel (0) target = $region25
  $region24: #{image_pair_encoder_v2.5} parent=0 // pred_region
    _
  $region25: #{image_pair_encoder_v2.5} parent=0 // pred_fallthru
    _
  // Predicated region
  $region26: #{image_pair_encoder_v2.5} parent=0 // pred_check
    _
  $region27: #{image_pair_encoder_v2.5} parent=0 // pred_check_branch
    %4570 = sbr.rel (0) target = $region29
  $region28: #{image_pair_encoder_v2.5} parent=0 // pred_region
    _
  $region29: #{image_pair_encoder_v2.5} parent=0 // pred_fallthru
    _

// kernel: image_pair_encoder_v2.7
$region0: #{image_pair_encoder_v2.7}
  #allocation0 [shape = 'u32[]', space=smem, size = 0x4, offset = 0x4, fixed_abs, tag = 'smem constant byte address 0x4 - core index']
  #allocation1 [shape = 'u32[144,128]{1,0:T(1,128)}', space=vmem, size = 0x12000, scoped, tag = 'internal scratch']
  #allocation2 [shape = 'f32[2,256]{1,0:T(2,128)}', space=vmem, size = 0x800, scoped, tag = 'scratch operand']
  %s0 = inlined_call_operand.vmem [shape: bf16[2,6400], index: 0, kind: input, shape index: {}]
  %s1 = inlined_call_operand.vmem [shape: bf16[6400,512], index: 1, kind: input, shape index: {}]
  %s2 = inlined_call_operand.vmem [shape: f32[1,512], index: 2, kind: input, shape index: {}]
  %s3 = inlined_call_operand.hbm [shape: f32[2,512], index: 3, kind: output, shape index: {}]
  %s4 = sld [smem:[#allocation0]]
  $region91: #{image_pair_encoder_v2.7} parent=0
    _
  %s6 = ssub.s32 1, %s4
  %s7 = scalar_select 0, %s6, %s4
  $region1: #{image_pair_encoder_v2.7} parent=0
    #allocation3 [shape = 'u8[1310720]{0}', space=vmem, size = 0x140000, scoped, tag = 'input window, operand 1']
    #allocation4 [shape = 'u8[4096]{0}', space=vmem, size = 0x1000, scoped, tag = 'output window, operand 0']
    #allocation5 [shape = 's32[2]{0}', space=sflag, size = 0x8, scoped, tag = 'scoped memory for image_pair_encoder_v2.7']
    %8 = vsyncpa [#allocation5], 0
    %s9 = scalar_lea.sflag [#allocation5], 1
    %10 = vsyncpa %s9, 0
    loop: start=0, step=1, limit=12
    $region2: #{image_pair_encoder_v2.7} parent=1 // loop_pre_header
      _
    $region3: #{image_pair_encoder_v2.7} parent=1 // loop_header
      %s12 = sphi 0, %s16
      %p13 = scmp.ge.s32.totalorder %s12, 12
      %s19 = sphi 0, %s38
      %s20 = sphi 0, %s34
      %s21 = sphi 0, %s30
      %s22 = sphi 0, %s19
      %s23 = sphi 0, %s20
      %s24 = sphi 0, %s21
      %s25 = sphi 0, %s22
      %s26 = sphi 0, %s23
      %s27 = sphi 0, %s24
      %s43 = sphi 0, %s45
      %s46 = sphi 0, %s43
      %s47 = sphi 0, %s46
      %s63 = sphi 0, %s47
      %s71 = sphi 0, %s73
      %s74 = sphi 0, %s71
      %s75 = sphi 0, %s74
      %s91 = sphi 0, %s75
      %s97 = sphi 0, %s99
      %s100 = sphi 0, %s97
      %s101 = sphi 0, %s100
      %s117 = sphi 0, %s101
      %s125 = sphi 0, %s127
      %s128 = sphi 0, %s125
      %s129 = sphi 0, %s128
      %s145 = sphi 0, %s129
    $region4: #{image_pair_encoder_v2.7} parent=1 // loop_header_branch
      %15 = sbr.rel (%p13) target = $region8
    $region5: #{image_pair_encoder_v2.7} parent=1 // loop_body
      %s17 = ssub.s32 %s12, 1
      %s18 = ssub.s32 %s12, 2
      %s28 = sadd.s32 1, %s21
      %p29 = scmp.ge.s32.totalorder %s28, 5
      %s30 = scalar_select %p29, 0, %s28
      %s31 = sadd.s32 1, %s20
      %s32 = scalar_select %p29, %s31, %s20
      %p33 = scmp.ge.s32.totalorder %s32, 2
      %s34 = scalar_select %p33, 0, %s32
      %s35 = sadd.s32 1, %s19
      %s36 = scalar_select %p33, %s35, %s19
      %p37 = scmp.ge.s32.totalorder %s36, 1
      %s38 = scalar_select %p37, 0, %s36
      %s39 = ssub.s32 %s19, %s38
      %s40 = ssub.s32 %s21, %s30
      %s41 = sor.u32 %s39, %s40
      %p42 = scmp.eq.s32.totalorder %s41, 0
      %s44 = sadd.s32 %s43, 1
      %s45 = scalar_select %p42, %s43, %s44
      %p48 = pneg %p42
      %p49 = scmp.eq.s32.totalorder %s12, 9
      %p50 = por %p48, %p49
      %p51 = scmp.ne.s32.totalorder %s43, %s46
      %p52 = scmp.eq.s32.totalorder %s12, 0
      %p53 = por %p51, %p52
      %p54 = scmp.ne.s32.totalorder %s43, %s46
      %p55 = scmp.eq.s32.totalorder %s17, 9
      %p56 = por %p54, %p55
      %p57 = scmp.ne.s32.totalorder %s46, %s47
      %p58 = scmp.eq.s32.totalorder %s17, 0
      %p59 = por %p57, %p58
      %p60 = scmp.ne.s32.totalorder %s46, %s47
      %p61 = scmp.eq.s32.totalorder %s18, 9
      %p62 = por %p60, %p61
      %p64 = scmp.ne.s32.totalorder %s47, %s63
      %p65 = scmp.eq.s32.totalorder %s18, 0
      %p66 = por %p64, %p65
      %s67 = ssub.s32 %s21, %s30
      %s68 = ssub.s32 %s20, %s34
      %s69 = sor.u32 %s67, %s68
      %p70 = scmp.eq.s32.totalorder %s69, 0
      %s72 = sadd.s32 %s71, 1
      %s73 = scalar_select %p70, %s71, %s72
      %p76 = pneg %p70
      %p77 = scmp.eq.s32.totalorder %s12, 9
      %p78 = por %p76, %p77
      %p79 = scmp.ne.s32.totalorder %s71, %s74
      %p80 = scmp.eq.s32.totalorder %s12, 0
      %p81 = por %p79, %p80
      %p82 = scmp.ne.s32.totalorder %s71, %s74
      %p83 = scmp.eq.s32.totalorder %s17, 9
      %p84 = por %p82, %p83
      %p85 = scmp.ne.s32.totalorder %s74, %s75
      %p86 = scmp.eq.s32.totalorder %s17, 0
      %p87 = por %p85, %p86
      %p88 = scmp.ne.s32.totalorder %s74, %s75
      %p89 = scmp.eq.s32.totalorder %s18, 9
      %p90 = por %p88, %p89
      %p92 = scmp.ne.s32.totalorder %s75, %s91
      %p93 = scmp.eq.s32.totalorder %s18, 0
      %p94 = por %p92, %p93
      %s95 = ssub.s32 %s20, %s34
      %p96 = scmp.eq.s32.totalorder %s95, 0
      %s98 = sadd.s32 %s97, 1
      %s99 = scalar_select %p96, %s97, %s98
      %p102 = pneg %p96
      %p103 = scmp.eq.s32.totalorder %s12, 9
      %p104 = por %p102, %p103
      %p105 = scmp.ne.s32.totalorder %s97, %s100
      %p106 = scmp.eq.s32.totalorder %s12, 0
      %p107 = por %p105, %p106
      %p108 = scmp.ne.s32.totalorder %s97, %s100
      %p109 = scmp.eq.s32.totalorder %s17, 9
      %p110 = por %p108, %p109
      %p111 = scmp.ne.s32.totalorder %s100, %s101
      %p112 = scmp.eq.s32.totalorder %s17, 0
      %p113 = por %p111, %p112
      %p114 = scmp.ne.s32.totalorder %s100, %s101
      %p115 = scmp.eq.s32.totalorder %s18, 9
      %p116 = por %p114, %p115
      %p118 = scmp.ne.s32.totalorder %s101, %s117
      %p119 = scmp.eq.s32.totalorder %s18, 0
      %p120 = por %p118, %p119
      %s121 = ssub.s32 %s19, %s38
      %s122 = ssub.s32 %s20, %s34
      %s123 = sor.u32 %s121, %s122
      %p124 = scmp.eq.s32.totalorder %s123, 0
      %s126 = sadd.s32 %s125, 1
      %s127 = scalar_select %p124, %s125, %s126
      %p130 = pneg %p124
      %p131 = scmp.eq.s32.totalorder %s12, 9
      %p132 = por %p130, %p131
      %p133 = scmp.ne.s32.totalorder %s125, %s128
      %p134 = scmp.eq.s32.totalorder %s12, 0
      %p135 = por %p133, %p134
      %p136 = scmp.ne.s32.totalorder %s125, %s128
      %p137 = scmp.eq.s32.totalorder %s17, 9
      %p138 = por %p136, %p137
      %p139 = scmp.ne.s32.totalorder %s128, %s129
      %p140 = scmp.eq.s32.totalorder %s17, 0
      %p141 = por %p139, %p140
      %p142 = scmp.ne.s32.totalorder %s128, %s129
      %p143 = scmp.eq.s32.totalorder %s18, 9
      %p144 = por %p142, %p143
      %p146 = scmp.ne.s32.totalorder %s129, %s145
      %p147 = scmp.eq.s32.totalorder %s18, 0
      %p148 = por %p146, %p147
      %p149 = scmp.le.s32.totalorder 1, %s12
      %p150 = scmp.lt.s32.totalorder %s12, 11
      %p151 = pnand %p149, %p150
      %p152 = pneg %p151
      // Predicated region
      $region9: #{image_pair_encoder_v2.7} parent=5 // pred_check
        _
      $region10: #{image_pair_encoder_v2.7} parent=5 // pred_check_branch
        %154 = sbr.rel (%p151) target = $region12
      $region11: #{image_pair_encoder_v2.7} parent=5 // pred_region
        %s155 = ssub.s32 %s12, 1
      $region12: #{image_pair_encoder_v2.7} parent=5 // pred_fallthru
        _
      %p156 = scmp.lt.s32.totalorder %s12, 10
      // Predicated region
      $region13: #{image_pair_encoder_v2.7} parent=5 // pred_check
        %p157 = pneg %p156
      $region14: #{image_pair_encoder_v2.7} parent=5 // pred_check_branch
        %159 = sbr.rel (%p157) target = $region16
      $region15: #{image_pair_encoder_v2.7} parent=5 // pred_region
        // Predicated region
        $region17: #{image_pair_encoder_v2.7} parent=15 // pred_check
          %p160 = pneg %p53
        $region18: #{image_pair_encoder_v2.7} parent=15 // pred_check_branch
          %162 = sbr.rel (%p160) target = $region20
        $region19: #{image_pair_encoder_v2.7} parent=15 // pred_region
          %s163 = smul.u32 10, %s21
          %p164 = scmp.lt.s32.totalorder %s19, 0
          %s165 = scalar_select %p164, %s19, 0
          %p166 = scmp.lt.s32.totalorder %s163, 49
          %s167 = scalar_select %p166, %s163, 49
          %s168 = smul.addr %s165, 50
          %s169 = sadd.s32 %s167, %s168
          %s170 = scalar_lea.vmem %s0, %s169
          %s171 = smul.u32 10, %s21
        $region20: #{image_pair_encoder_v2.7} parent=15 // pred_fallthru
          _
        // Predicated region
        $region21: #{image_pair_encoder_v2.7} parent=15 // pred_check
          %p172 = pneg %p81
        $region22: #{image_pair_encoder_v2.7} parent=15 // pred_check_branch
          %174 = sbr.rel (%p172) target = $region24
        $region23: #{image_pair_encoder_v2.7} parent=15 // pred_region
          %s175 = sand.u32 %s71, 1
          %s176 = sand.u32 %s71, 1
          %s177 = smul.addr %s176, 1280
          %s178 = scalar_lea.vmem [#allocation3], %s177
          %s179 = smul.u32 160, %s21
          %s180 = smul.u32 2, %s20
          %s181 = smul.addr %s179, 4
          %s182 = sadd.s32 %s180, %s181
          %s183 = smul.addr %s182, 4
          %s184 = scalar_lea.vmem %s1, %s183
          // Predicated region
          $region25: #{image_pair_encoder_v2.7} parent=23 // pred_check
            _
          $region26: #{image_pair_encoder_v2.7} parent=23 // pred_check_branch
            %186 = sbr.rel (0) target = $region28
          $region27: #{image_pair_encoder_v2.7} parent=23 // pred_region
            // Predicated region
            $region29: #{image_pair_encoder_v2.7} parent=27 // pred_check
              _
            $region30: #{image_pair_encoder_v2.7} parent=27 // pred_check_branch
              %188 = sbr.rel (0) target = $region32
            $region31: #{image_pair_encoder_v2.7} parent=27 // pred_region
              // Predicated region
              $region44: #{image_pair_encoder_v2.7} parent=31 // pred_check
                _
              $region45: #{image_pair_encoder_v2.7} parent=31 // pred_check_branch
                %521 = sbr.rel (0) target = $region47
              $region46: #{image_pair_encoder_v2.7} parent=31 // pred_region
                loop: start=0, step=1, limit=1
                $region48: #{image_pair_encoder_v2.7} parent=46 // loop_pre_header
                  _
                $region49: #{image_pair_encoder_v2.7} parent=46 // loop_header
                  %s523 = sphi 0, %s527
                  %p524 = scmp.ge.s32.totalorder %s523, 1
                  %s528 = sphi %s184, %s184
                  %s529 = sphi %s178, %s178
                $region50: #{image_pair_encoder_v2.7} parent=46 // loop_header_branch
                  %526 = sbr.rel (%p524) target = $region54
                $region51: #{image_pair_encoder_v2.7} parent=46 // loop_body
                  %v530 = vld [vmem:[%s528] sm:$0xff]
                  %531 = vst [vmem:[%s529] sm:$0xff] %v530
                  %v532 = vld [vmem:[%s528 + $0x10] sm:$0xff]
                  %533 = vst [vmem:[%s529 + $0x8] sm:$0xff] %v532
                  %v534 = vld [vmem:[%s528 + $0x20] sm:$0xff]
                  %535 = vst [vmem:[%s529 + $0x10] sm:$0xff] %v534
                  %v536 = vld [vmem:[%s528 + $0x30] sm:$0xff]
                  %537 = vst [vmem:[%s529 + $0x18] sm:$0xff] %v536
                  %v538 = vld [vmem:[%s528 + $0x40] sm:$0xff]
                  %539 = vst [vmem:[%s529 + $0x20] sm:$0xff] %v538
                  %v540 = vld [vmem:[%s528 + $0x50] sm:$0xff]
                  %541 = vst [vmem:[%s529 + $0x28] sm:$0xff] %v540
                  %v542 = vld [vmem:[%s528 + $0x60] sm:$0xff]
                  %543 = vst [vmem:[%s529 + $0x30] sm:$0xff] %v542
                  %v544 = vld [vmem:[%s528 + $0x70] sm:$0xff]
                  %545 = vst [vmem:[%s529 + $0x38] sm:$0xff] %v544
                  %v546 = vld [vmem:[%s528 + $0x80] sm:$0xff]
                  %547 = vst [vmem:[%s529 + $0x40] sm:$0xff] %v546
                  %v548 = vld [vmem:[%s528 + $0x90] sm:$0xff]
                  %549 = vst [vmem:[%s529 + $0x48] sm:$0xff] %v548
                  %v550 = vld [vmem:[%s528 + $0xa0] sm:$0xff]
                  %551 = vst [vmem:[%s529 + $0x50] sm:$0xff] %v550
                  %v552 = vld [vmem:[%s528 + $0xb0] sm:$0xff]
                  %553 = vst [vmem:[%s529 + $0x58] sm:$0xff] %v552
                  %v554 = vld [vmem:[%s528 + $0xc0] sm:$0xff]
                  %555 = vst [vmem:[%s529 + $0x60] sm:$0xff] %v554
                  %v556 = vld [vmem:[%s528 + $0xd0] sm:$0xff]
                  %557 = vst [vmem:[%s529 + $0x68] sm:$0xff] %v556
                  %v558 = vld [vmem:[%s528 + $0xe0] sm:$0xff]
                  %559 = vst [vmem:[%s529 + $0x70] sm:$0xff] %v558
                  %v560 = vld [vmem:[%s528 + $0xf0] sm:$0xff]
                  %561 = vst [vmem:[%s529 + $0x78] sm:$0xff] %v560
                  %v562 = vld [vmem:[%s528 + $0x100] sm:$0xff]
                  %563 = vst [vmem:[%s529 + $0x80] sm:$0xff] %v562
                  %v564 = vld [vmem:[%s528 + $0x110] sm:$0xff]
                  %565 = vst [vmem:[%s529 + $0x88] sm:$0xff] %v564
                  %v566 = vld [vmem:[%s528 + $0x120] sm:$0xff]
                  %567 = vst [vmem:[%s529 + $0x90] sm:$0xff] %v566
                  %v568 = vld [vmem:[%s528 + $0x130] sm:$0xff]
                  %569 = vst [vmem:[%s529 + $0x98] sm:$0xff] %v568
                  %v570 = vld [vmem:[%s528 + $0x140] sm:$0xff]
                  %571 = vst [vmem:[%s529 + $0xa0] sm:$0xff] %v570
                  %v572 = vld [vmem:[%s528 + $0x150] sm:$0xff]
                  %573 = vst [vmem:[%s529 + $0xa8] sm:$0xff] %v572
                  %v574 = vld [vmem:[%s528 + $0x160] sm:$0xff]
                  %575 = vst [vmem:[%s529 + $0xb0] sm:$0xff] %v574
                  %v576 = vld [vmem:[%s528 + $0x170] sm:$0xff]
                  %577 = vst [vmem:[%s529 + $0xb8] sm:$0xff] %v576
                  %v578 = vld [vmem:[%s528 + $0x180] sm:$0xff]
                  %579 = vst [vmem:[%s529 + $0xc0] sm:$0xff] %v578
                  %v580 = vld [vmem:[%s528 + $0x190] sm:$0xff]
                  %581 = vst [vmem:[%s529 + $0xc8] sm:$0xff] %v580
                  %v582 = vld [vmem:[%s528 + $0x1a0] sm:$0xff]
                  %583 = vst [vmem:[%s529 + $0xd0] sm:$0xff] %v582
                  %v584 = vld [vmem:[%s528 + $0x1b0] sm:$0xff]
                  %585 = vst [vmem:[%s529 + $0xd8] sm:$0xff] %v584
                  %v586 = vld [vmem:[%s528 + $0x1c0] sm:$0xff]
                  %587 = vst [vmem:[%s529 + $0xe0] sm:$0xff] %v586
                  %v588 = vld [vmem:[%s528 + $0x1d0] sm:$0xff]
                  %589 = vst [vmem:[%s529 + $0xe8] sm:$0xff] %v588
                  %v590 = vld [vmem:[%s528 + $0x1e0] sm:$0xff]
                  %591 = vst [vmem:[%s529 + $0xf0] sm:$0xff] %v590
                  %v592 = vld [vmem:[%s528 + $0x1f0] sm:$0xff]
                  %593 = vst [vmem:[%s529 + $0xf8] sm:$0xff] %v592
                  %v594 = vld [vmem:[%s528 + $0x200] sm:$0xff]
                  %595 = vst [vmem:[%s529 + $0x100] sm:$0xff] %v594
                  %v596 = vld [vmem:[%s528 + $0x210] sm:$0xff]
                  %597 = vst [vmem:[%s529 + $0x108] sm:$0xff] %v596
                  %v598 = vld [vmem:[%s528 + $0x220] sm:$0xff]
                  %599 = vst [vmem:[%s529 + $0x110] sm:$0xff] %v598
                  %v600 = vld [vmem:[%s528 + $0x230] sm:$0xff]
                  %601 = vst [vmem:[%s529 + $0x118] sm:$0xff] %v600
                  %v602 = vld [vmem:[%s528 + $0x240] sm:$0xff]
                  %603 = vst [vmem:[%s529 + $0x120] sm:$0xff] %v602
                  %v604 = vld [vmem:[%s528 + $0x250] sm:$0xff]
                  %605 = vst [vmem:[%s529 + $0x128] sm:$0xff] %v604
                  %v606 = vld [vmem:[%s528 + $0x260] sm:$0xff]
                  %607 = vst [vmem:[%s529 + $0x130] sm:$0xff] %v606
                  %v608 = vld [vmem:[%s528 + $0x270] sm:$0xff]
                  %609 = vst [vmem:[%s529 + $0x138] sm:$0xff] %v608
                  %v610 = vld [vmem:[%s528 + $0x280] sm:$0xff]
                  %611 = vst [vmem:[%s529 + $0x140] sm:$0xff] %v610
                  %v612 = vld [vmem:[%s528 + $0x290] sm:$0xff]
                  %613 = vst [vmem:[%s529 + $0x148] sm:$0xff] %v612
                  %v614 = vld [vmem:[%s528 + $0x2a0] sm:$0xff]
                  %615 = vst [vmem:[%s529 + $0x150] sm:$0xff] %v614
                  %v616 = vld [vmem:[%s528 + $0x2b0] sm:$0xff]
                  %617 = vst [vmem:[%s529 + $0x158] sm:$0xff] %v616
                  %v618 = vld [vmem:[%s528 + $0x2c0] sm:$0xff]
                  %619 = vst [vmem:[%s529 + $0x160] sm:$0xff] %v618
                  %v620 = vld [vmem:[%s528 + $0x2d0] sm:$0xff]
                  %621 = vst [vmem:[%s529 + $0x168] sm:$0xff] %v620
                  %v622 = vld [vmem:[%s528 + $0x2e0] sm:$0xff]
                  %623 = vst [vmem:[%s529 + $0x170] sm:$0xff] %v622
                  %v624 = vld [vmem:[%s528 + $0x2f0] sm:$0xff]
                  %625 = vst [vmem:[%s529 + $0x178] sm:$0xff] %v624
                  %v626 = vld [vmem:[%s528 + $0x300] sm:$0xff]
                  %627 = vst [vmem:[%s529 + $0x180] sm:$0xff] %v626
                  %v628 = vld [vmem:[%s528 + $0x310] sm:$0xff]
                  %629 = vst [vmem:[%s529 + $0x188] sm:$0xff] %v628
                  %v630 = vld [vmem:[%s528 + $0x320] sm:$0xff]
                  %631 = vst [vmem:[%s529 + $0x190] sm:$0xff] %v630
                  %v632 = vld [vmem:[%s528 + $0x330] sm:$0xff]
                  %633 = vst [vmem:[%s529 + $0x198] sm:$0xff] %v632
                  %v634 = vld [vmem:[%s528 + $0x340] sm:$0xff]
                  %635 = vst [vmem:[%s529 + $0x1a0] sm:$0xff] %v634
                  %v636 = vld [vmem:[%s528 + $0x350] sm:$0xff]
                  %637 = vst [vmem:[%s529 + $0x1a8] sm:$0xff] %v636
                  %v638 = vld [vmem:[%s528 + $0x360] sm:$0xff]
                  %639 = vst [vmem:[%s529 + $0x1b0] sm:$0xff] %v638
                  %v640 = vld [vmem:[%s528 + $0x370] sm:$0xff]
                  %641 = vst [vmem:[%s529 + $0x1b8] sm:$0xff] %v640
                  %v642 = vld [vmem:[%s528 + $0x380] sm:$0xff]
                  %643 = vst [vmem:[%s529 + $0x1c0] sm:$0xff] %v642
                  %v644 = vld [vmem:[%s528 + $0x390] sm:$0xff]
                  %645 = vst [vmem:[%s529 + $0x1c8] sm:$0xff] %v644
                  %v646 = vld [vmem:[%s528 + $0x3a0] sm:$0xff]
                  %647 = vst [vmem:[%s529 + $0x1d0] sm:$0xff] %v646
                  %v648 = vld [vmem:[%s528 + $0x3b0] sm:$0xff]
                  %649 = vst [vmem:[%s529 + $0x1d8] sm:$0xff] %v648
                  %v650 = vld [vmem:[%s528 + $0x3c0] sm:$0xff]
                  %651 = vst [vmem:[%s529 + $0x1e0] sm:$0xff] %v650
                  %v652 = vld [vmem:[%s528 + $0x3d0] sm:$0xff]
                  %653 = vst [vmem:[%s529 + $0x1e8] sm:$0xff] %v652
                  %v654 = vld [vmem:[%s528 + $0x3e0] sm:$0xff]
                  %655 = vst [vmem:[%s529 + $0x1f0] sm:$0xff] %v654
                  %v656 = vld [vmem:[%s528 + $0x3f0] sm:$0xff]
                  %657 = vst [vmem:[%s529 + $0x1f8] sm:$0xff] %v656
                  %v658 = vld [vmem:[%s528 + $0x400] sm:$0xff]
                  %659 = vst [vmem:[%s529 + $0x200] sm:$0xff] %v658
                  %v660 = vld [vmem:[%s528 + $0x410] sm:$0xff]
                  %661 = vst [vmem:[%s529 + $0x208] sm:$0xff] %v660
                  %v662 = vld [vmem:[%s528 + $0x420] sm:$0xff]
                  %663 = vst [vmem:[%s529 + $0x210] sm:$0xff] %v662
                  %v664 = vld [vmem:[%s528 + $0x430] sm:$0xff]
                  %665 = vst [vmem:[%s529 + $0x218] sm:$0xff] %v664
                  %v666 = vld [vmem:[%s528 + $0x440] sm:$0xff]
                  %667 = vst [vmem:[%s529 + $0x220] sm:$0xff] %v666
                  %v668 = vld [vmem:[%s528 + $0x450] sm:$0xff]
                  %669 = vst [vmem:[%s529 + $0x228] sm:$0xff] %v668
                  %v670 = vld [vmem:[%s528 + $0x460] sm:$0xff]
                  %671 = vst [vmem:[%s529 + $0x230] sm:$0xff] %v670
                  %v672 = vld [vmem:[%s528 + $0x470] sm:$0xff]
                  %673 = vst [vmem:[%s529 + $0x238] sm:$0xff] %v672
                  %v674 = vld [vmem:[%s528 + $0x480] sm:$0xff]
                  %675 = vst [vmem:[%s529 + $0x240] sm:$0xff] %v674
                  %v676 = vld [vmem:[%s528 + $0x490] sm:$0xff]
                  %677 = vst [vmem:[%s529 + $0x248] sm:$0xff] %v676
                  %v678 = vld [vmem:[%s528 + $0x4a0] sm:$0xff]
                  %679 = vst [vmem:[%s529 + $0x250] sm:$0xff] %v678
                  %v680 = vld [vmem:[%s528 + $0x4b0] sm:$0xff]
                  %681 = vst [vmem:[%s529 + $0x258] sm:$0xff] %v680
                  %v682 = vld [vmem:[%s528 + $0x4c0] sm:$0xff]
                  %683 = vst [vmem:[%s529 + $0x260] sm:$0xff] %v682
                  %v684 = vld [vmem:[%s528 + $0x4d0] sm:$0xff]
                  %685 = vst [vmem:[%s529 + $0x268] sm:$0xff] %v684
                  %v686 = vld [vmem:[%s528 + $0x4e0] sm:$0xff]
                  %687 = vst [vmem:[%s529 + $0x270] sm:$0xff] %v686
                  %v688 = vld [vmem:[%s528 + $0x4f0] sm:$0xff]
                  %689 = vst [vmem:[%s529 + $0x278] sm:$0xff] %v688
                  %v690 = vld [vmem:[%s528 + $0x500] sm:$0xff]
                  %691 = vst [vmem:[%s529 + $0x280] sm:$0xff] %v690
                  %v692 = vld [vmem:[%s528 + $0x510] sm:$0xff]
                  %693 = vst [vmem:[%s529 + $0x288] sm:$0xff] %v692
                  %v694 = vld [vmem:[%s528 + $0x520] sm:$0xff]
                  %695 = vst [vmem:[%s529 + $0x290] sm:$0xff] %v694
                  %v696 = vld [vmem:[%s528 + $0x530] sm:$0xff]
                  %697 = vst [vmem:[%s529 + $0x298] sm:$0xff] %v696
                  %v698 = vld [vmem:[%s528 + $0x540] sm:$0xff]
                  %699 = vst [vmem:[%s529 + $0x2a0] sm:$0xff] %v698
                  %v700 = vld [vmem:[%s528 + $0x550] sm:$0xff]
                  %701 = vst [vmem:[%s529 + $0x2a8] sm:$0xff] %v700
                  %v702 = vld [vmem:[%s528 + $0x560] sm:$0xff]
                  %703 = vst [vmem:[%s529 + $0x2b0] sm:$0xff] %v702
                  %v704 = vld [vmem:[%s528 + $0x570] sm:$0xff]
                  %705 = vst [vmem:[%s529 + $0x2b8] sm:$0xff] %v704
                  %v706 = vld [vmem:[%s528 + $0x580] sm:$0xff]
                  %707 = vst [vmem:[%s529 + $0x2c0] sm:$0xff] %v706
                  %v708 = vld [vmem:[%s528 + $0x590] sm:$0xff]
                  %709 = vst [vmem:[%s529 + $0x2c8] sm:$0xff] %v708
                  %v710 = vld [vmem:[%s528 + $0x5a0] sm:$0xff]
                  %711 = vst [vmem:[%s529 + $0x2d0] sm:$0xff] %v710
                  %v712 = vld [vmem:[%s528 + $0x5b0] sm:$0xff]
                  %713 = vst [vmem:[%s529 + $0x2d8] sm:$0xff] %v712
                  %v714 = vld [vmem:[%s528 + $0x5c0] sm:$0xff]
                  %715 = vst [vmem:[%s529 + $0x2e0] sm:$0xff] %v714
                  %v716 = vld [vmem:[%s528 + $0x5d0] sm:$0xff]
                  %717 = vst [vmem:[%s529 + $0x2e8] sm:$0xff] %v716
                  %v718 = vld [vmem:[%s528 + $0x5e0] sm:$0xff]
                  %719 = vst [vmem:[%s529 + $0x2f0] sm:$0xff] %v718
                  %v720 = vld [vmem:[%s528 + $0x5f0] sm:$0xff]
                  %721 = vst [vmem:[%s529 + $0x2f8] sm:$0xff] %v720
                  %v722 = vld [vmem:[%s528 + $0x600] sm:$0xff]
                  %723 = vst [vmem:[%s529 + $0x300] sm:$0xff] %v722
                  %v724 = vld [vmem:[%s528 + $0x610] sm:$0xff]
                  %725 = vst [vmem:[%s529 + $0x308] sm:$0xff] %v724
                  %v726 = vld [vmem:[%s528 + $0x620] sm:$0xff]
                  %727 = vst [vmem:[%s529 + $0x310] sm:$0xff] %v726
                  %v728 = vld [vmem:[%s528 + $0x630] sm:$0xff]
                  %729 = vst [vmem:[%s529 + $0x318] sm:$0xff] %v728
                  %v730 = vld [vmem:[%s528 + $0x640] sm:$0xff]
                  %731 = vst [vmem:[%s529 + $0x320] sm:$0xff] %v730
                  %v732 = vld [vmem:[%s528 + $0x650] sm:$0xff]
                  %733 = vst [vmem:[%s529 + $0x328] sm:$0xff] %v732
                  %v734 = vld [vmem:[%s528 + $0x660] sm:$0xff]
                  %735 = vst [vmem:[%s529 + $0x330] sm:$0xff] %v734
                  %v736 = vld [vmem:[%s528 + $0x670] sm:$0xff]
                  %737 = vst [vmem:[%s529 + $0x338] sm:$0xff] %v736
                  %v738 = vld [vmem:[%s528 + $0x680] sm:$0xff]
                  %739 = vst [vmem:[%s529 + $0x340] sm:$0xff] %v738
                  %v740 = vld [vmem:[%s528 + $0x690] sm:$0xff]
                  %741 = vst [vmem:[%s529 + $0x348] sm:$0xff] %v740
                  %v742 = vld [vmem:[%s528 + $0x6a0] sm:$0xff]
                  %743 = vst [vmem:[%s529 + $0x350] sm:$0xff] %v742
                  %v744 = vld [vmem:[%s528 + $0x6b0] sm:$0xff]
                  %745 = vst [vmem:[%s529 + $0x358] sm:$0xff] %v744
                  %v746 = vld [vmem:[%s528 + $0x6c0] sm:$0xff]
                  %747 = vst [vmem:[%s529 + $0x360] sm:$0xff] %v746
                  %v748 = vld [vmem:[%s528 + $0x6d0] sm:$0xff]
                  %749 = vst [vmem:[%s529 + $0x368] sm:$0xff] %v748
                  %v750 = vld [vmem:[%s528 + $0x6e0] sm:$0xff]
                  %751 = vst [vmem:[%s529 + $0x370] sm:$0xff] %v750
                  %v752 = vld [vmem:[%s528 + $0x6f0] sm:$0xff]
                  %753 = vst [vmem:[%s529 + $0x378] sm:$0xff] %v752
                  %v754 = vld [vmem:[%s528 + $0x700] sm:$0xff]
                  %755 = vst [vmem:[%s529 + $0x380] sm:$0xff] %v754
                  %v756 = vld [vmem:[%s528 + $0x710] sm:$0xff]
                  %757 = vst [vmem:[%s529 + $0x388] sm:$0xff] %v756
                  %v758 = vld [vmem:[%s528 + $0x720] sm:$0xff]
                  %759 = vst [vmem:[%s529 + $0x390] sm:$0xff] %v758
                  %v760 = vld [vmem:[%s528 + $0x730] sm:$0xff]
                  %761 = vst [vmem:[%s529 + $0x398] sm:$0xff] %v760
                  %v762 = vld [vmem:[%s528 + $0x740] sm:$0xff]
                  %763 = vst [vmem:[%s529 + $0x3a0] sm:$0xff] %v762
                  %v764 = vld [vmem:[%s528 + $0x750] sm:$0xff]
                  %765 = vst [vmem:[%s529 + $0x3a8] sm:$0xff] %v764
                  %v766 = vld [vmem:[%s528 + $0x760] sm:$0xff]
                  %767 = vst [vmem:[%s529 + $0x3b0] sm:$0xff] %v766
                  %v768 = vld [vmem:[%s528 + $0x770] sm:$0xff]
                  %769 = vst [vmem:[%s529 + $0x3b8] sm:$0xff] %v768
                  %v770 = vld [vmem:[%s528 + $0x780] sm:$0xff]
                  %771 = vst [vmem:[%s529 + $0x3c0] sm:$0xff] %v770
                  %v772 = vld [vmem:[%s528 + $0x790] sm:$0xff]
                  %773 = vst [vmem:[%s529 + $0x3c8] sm:$0xff] %v772
                  %v774 = vld [vmem:[%s528 + $0x7a0] sm:$0xff]
                  %775 = vst [vmem:[%s529 + $0x3d0] sm:$0xff] %v774
                  %v776 = vld [vmem:[%s528 + $0x7b0] sm:$0xff]
                  %777 = vst [vmem:[%s529 + $0x3d8] sm:$0xff] %v776
                  %v778 = vld [vmem:[%s528 + $0x7c0] sm:$0xff]
                  %779 = vst [vmem:[%s529 + $0x3e0] sm:$0xff] %v778
                  %v780 = vld [vmem:[%s528 + $0x7d0] sm:$0xff]
                  %781 = vst [vmem:[%s529 + $0x3e8] sm:$0xff] %v780
                  %v782 = vld [vmem:[%s528 + $0x7e0] sm:$0xff]
                  %783 = vst [vmem:[%s529 + $0x3f0] sm:$0xff] %v782
                  %v784 = vld [vmem:[%s528 + $0x7f0] sm:$0xff]
                  %785 = vst [vmem:[%s529 + $0x3f8] sm:$0xff] %v784
                  %v786 = vld [vmem:[%s528 + $0x800] sm:$0xff]
                  %787 = vst [vmem:[%s529 + $0x400] sm:$0xff] %v786
                  %v788 = vld [vmem:[%s528 + $0x810] sm:$0xff]
                  %789 = vst [vmem:[%s529 + $0x408] sm:$0xff] %v788
                  %v790 = vld [vmem:[%s528 + $0x820] sm:$0xff]
                  %791 = vst [vmem:[%s529 + $0x410] sm:$0xff] %v790
                  %v792 = vld [vmem:[%s528 + $0x830] sm:$0xff]
                  %793 = vst [vmem:[%s529 + $0x418] sm:$0xff] %v792
                  %v794 = vld [vmem:[%s528 + $0x840] sm:$0xff]
                  %795 = vst [vmem:[%s529 + $0x420] sm:$0xff] %v794
                  %v796 = vld [vmem:[%s528 + $0x850] sm:$0xff]
                  %797 = vst [vmem:[%s529 + $0x428] sm:$0xff] %v796
                  %v798 = vld [vmem:[%s528 + $0x860] sm:$0xff]
                  %799 = vst [vmem:[%s529 + $0x430] sm:$0xff] %v798
                  %v800 = vld [vmem:[%s528 + $0x870] sm:$0xff]
                  %801 = vst [vmem:[%s529 + $0x438] sm:$0xff] %v800
                  %v802 = vld [vmem:[%s528 + $0x880] sm:$0xff]
                  %803 = vst [vmem:[%s529 + $0x440] sm:$0xff] %v802
                  %v804 = vld [vmem:[%s528 + $0x890] sm:$0xff]
                  %805 = vst [vmem:[%s529 + $0x448] sm:$0xff] %v804
                  %v806 = vld [vmem:[%s528 + $0x8a0] sm:$0xff]
                  %807 = vst [vmem:[%s529 + $0x450] sm:$0xff] %v806
                  %v808 = vld [vmem:[%s528 + $0x8b0] sm:$0xff]
                  %809 = vst [vmem:[%s529 + $0x458] sm:$0xff] %v808
                  %v810 = vld [vmem:[%s528 + $0x8c0] sm:$0xff]
                  %811 = vst [vmem:[%s529 + $0x460] sm:$0xff] %v810
                  %v812 = vld [vmem:[%s528 + $0x8d0] sm:$0xff]
                  %813 = vst [vmem:[%s529 + $0x468] sm:$0xff] %v812
                  %v814 = vld [vmem:[%s528 + $0x8e0] sm:$0xff]
                  %815 = vst [vmem:[%s529 + $0x470] sm:$0xff] %v814
                  %v816 = vld [vmem:[%s528 + $0x8f0] sm:$0xff]
                  %817 = vst [vmem:[%s529 + $0x478] sm:$0xff] %v816
                  %v818 = vld [vmem:[%s528 + $0x900] sm:$0xff]
                  %819 = vst [vmem:[%s529 + $0x480] sm:$0xff] %v818
                  %v820 = vld [vmem:[%s528 + $0x910] sm:$0xff]
                  %821 = vst [vmem:[%s529 + $0x488] sm:$0xff] %v820
                  %v822 = vld [vmem:[%s528 + $0x920] sm:$0xff]
                  %823 = vst [vmem:[%s529 + $0x490] sm:$0xff] %v822
                  %v824 = vld [vmem:[%s528 + $0x930] sm:$0xff]
                  %825 = vst [vmem:[%s529 + $0x498] sm:$0xff] %v824
                  %v826 = vld [vmem:[%s528 + $0x940] sm:$0xff]
                  %827 = vst [vmem:[%s529 + $0x4a0] sm:$0xff] %v826
                  %v828 = vld [vmem:[%s528 + $0x950] sm:$0xff]
                  %829 = vst [vmem:[%s529 + $0x4a8] sm:$0xff] %v828
                  %v830 = vld [vmem:[%s528 + $0x960] sm:$0xff]
                  %831 = vst [vmem:[%s529 + $0x4b0] sm:$0xff] %v830
                  %v832 = vld [vmem:[%s528 + $0x970] sm:$0xff]
                  %833 = vst [vmem:[%s529 + $0x4b8] sm:$0xff] %v832
                  %v834 = vld [vmem:[%s528 + $0x980] sm:$0xff]
                  %835 = vst [vmem:[%s529 + $0x4c0] sm:$0xff] %v834
                  %v836 = vld [vmem:[%s528 + $0x990] sm:$0xff]
                  %837 = vst [vmem:[%s529 + $0x4c8] sm:$0xff] %v836
                  %v838 = vld [vmem:[%s528 + $0x9a0] sm:$0xff]
                  %839 = vst [vmem:[%s529 + $0x4d0] sm:$0xff] %v838
                  %v840 = vld [vmem:[%s528 + $0x9b0] sm:$0xff]
                  %841 = vst [vmem:[%s529 + $0x4d8] sm:$0xff] %v840
                  %v842 = vld [vmem:[%s528 + $0x9c0] sm:$0xff]
                  %843 = vst [vmem:[%s529 + $0x4e0] sm:$0xff] %v842
                  %v844 = vld [vmem:[%s528 + $0x9d0] sm:$0xff]
                  %845 = vst [vmem:[%s529 + $0x4e8] sm:$0xff] %v844
                  %v846 = vld [vmem:[%s528 + $0x9e0] sm:$0xff]
                  %847 = vst [vmem:[%s529 + $0x4f0] sm:$0xff] %v846
                  %v848 = vld [vmem:[%s528 + $0x9f0] sm:$0xff]
                  %849 = vst [vmem:[%s529 + $0x4f8] sm:$0xff] %v848
                $region52: #{image_pair_encoder_v2.7} parent=46 // loop_footer
                  %s527 = sadd.s32 1, %s523
                $region53: #{image_pair_encoder_v2.7} parent=46 // loop_footer_branch
                  %522 = sbr.rel target = $region49
                $region54: #{image_pair_encoder_v2.7} parent=46 // loop_exit
                  _
              $region47: #{image_pair_encoder_v2.7} parent=31 // pred_fallthru
                _
              // Predicated region
              $region55: #{image_pair_encoder_v2.7} parent=31 // pred_check
                _
              $region56: #{image_pair_encoder_v2.7} parent=31 // pred_check_branch
                %851 = sbr.rel target = $region58
              $region57: #{image_pair_encoder_v2.7} parent=31 // pred_region
                _
              $region58: #{image_pair_encoder_v2.7} parent=31 // pred_fallthru
                _
            $region32: #{image_pair_encoder_v2.7} parent=27 // pred_fallthru
              _
            // Predicated region
            $region33: #{image_pair_encoder_v2.7} parent=27 // pred_check
              _
            $region34: #{image_pair_encoder_v2.7} parent=27 // pred_check_branch
              %190 = sbr.rel target = $region36
            $region35: #{image_pair_encoder_v2.7} parent=27 // pred_region
              loop: start=0, step=1, limit=1
              $region37: #{image_pair_encoder_v2.7} parent=35 // loop_pre_header
                _
              $region38: #{image_pair_encoder_v2.7} parent=35 // loop_header
                %s193 = sphi 0, %s197
                %p194 = scmp.ge.s32.totalorder %s193, 1
                %s198 = sphi %s184, %s184
                %s199 = sphi %s178, %s178
              $region39: #{image_pair_encoder_v2.7} parent=35 // loop_header_branch
                %196 = sbr.rel (%p194) target = $region43
              $region40: #{image_pair_encoder_v2.7} parent=35 // loop_body
                %v200 = vld [vmem:[%s198] sm:$0xff]
                %201 = vst [vmem:[%s199] sm:$0xff] %v200
                %v202 = vld [vmem:[%s198 + $0x10] sm:$0xff]
                %203 = vst [vmem:[%s199 + $0x8] sm:$0xff] %v202
                %v204 = vld [vmem:[%s198 + $0x20] sm:$0xff]
                %205 = vst [vmem:[%s199 + $0x10] sm:$0xff] %v204
                %v206 = vld [vmem:[%s198 + $0x30] sm:$0xff]
                %207 = vst [vmem:[%s199 + $0x18] sm:$0xff] %v206
                %v208 = vld [vmem:[%s198 + $0x40] sm:$0xff]
                %209 = vst [vmem:[%s199 + $0x20] sm:$0xff] %v208
                %v210 = vld [vmem:[%s198 + $0x50] sm:$0xff]
                %211 = vst [vmem:[%s199 + $0x28] sm:$0xff] %v210
                %v212 = vld [vmem:[%s198 + $0x60] sm:$0xff]
                %213 = vst [vmem:[%s199 + $0x30] sm:$0xff] %v212
                %v214 = vld [vmem:[%s198 + $0x70] sm:$0xff]
                %215 = vst [vmem:[%s199 + $0x38] sm:$0xff] %v214
                %v216 = vld [vmem:[%s198 + $0x80] sm:$0xff]
                %217 = vst [vmem:[%s199 + $0x40] sm:$0xff] %v216
                %v218 = vld [vmem:[%s198 + $0x90] sm:$0xff]
                %219 = vst [vmem:[%s199 + $0x48] sm:$0xff] %v218
                %v220 = vld [vmem:[%s198 + $0xa0] sm:$0xff]
                %221 = vst [vmem:[%s199 + $0x50] sm:$0xff] %v220
                %v222 = vld [vmem:[%s198 + $0xb0] sm:$0xff]
                %223 = vst [vmem:[%s199 + $0x58] sm:$0xff] %v222
                %v224 = vld [vmem:[%s198 + $0xc0] sm:$0xff]
                %225 = vst [vmem:[%s199 + $0x60] sm:$0xff] %v224
                %v226 = vld [vmem:[%s198 + $0xd0] sm:$0xff]
                %227 = vst [vmem:[%s199 + $0x68] sm:$0xff] %v226
                %v228 = vld [vmem:[%s198 + $0xe0] sm:$0xff]
                %229 = vst [vmem:[%s199 + $0x70] sm:$0xff] %v228
                %v230 = vld [vmem:[%s198 + $0xf0] sm:$0xff]
                %231 = vst [vmem:[%s199 + $0x78] sm:$0xff] %v230
                %v232 = vld [vmem:[%s198 + $0x100] sm:$0xff]
                %233 = vst [vmem:[%s199 + $0x80] sm:$0xff] %v232
                %v234 = vld [vmem:[%s198 + $0x110] sm:$0xff]
                %235 = vst [vmem:[%s199 + $0x88] sm:$0xff] %v234
                %v236 = vld [vmem:[%s198 + $0x120] sm:$0xff]
                %237 = vst [vmem:[%s199 + $0x90] sm:$0xff] %v236
                %v238 = vld [vmem:[%s198 + $0x130] sm:$0xff]
                %239 = vst [vmem:[%s199 + $0x98] sm:$0xff] %v238
                %v240 = vld [vmem:[%s198 + $0x140] sm:$0xff]
                %241 = vst [vmem:[%s199 + $0xa0] sm:$0xff] %v240
                %v242 = vld [vmem:[%s198 + $0x150] sm:$0xff]
                %243 = vst [vmem:[%s199 + $0xa8] sm:$0xff] %v242
                %v244 = vld [vmem:[%s198 + $0x160] sm:$0xff]
                %245 = vst [vmem:[%s199 + $0xb0] sm:$0xff] %v244
                %v246 = vld [vmem:[%s198 + $0x170] sm:$0xff]
                %247 = vst [vmem:[%s199 + $0xb8] sm:$0xff] %v246
                %v248 = vld [vmem:[%s198 + $0x180] sm:$0xff]
                %249 = vst [vmem:[%s199 + $0xc0] sm:$0xff] %v248
                %v250 = vld [vmem:[%s198 + $0x190] sm:$0xff]
                %251 = vst [vmem:[%s199 + $0xc8] sm:$0xff] %v250
                %v252 = vld [vmem:[%s198 + $0x1a0] sm:$0xff]
                %253 = vst [vmem:[%s199 + $0xd0] sm:$0xff] %v252
                %v254 = vld [vmem:[%s198 + $0x1b0] sm:$0xff]
                %255 = vst [vmem:[%s199 + $0xd8] sm:$0xff] %v254
                %v256 = vld [vmem:[%s198 + $0x1c0] sm:$0xff]
                %257 = vst [vmem:[%s199 + $0xe0] sm:$0xff] %v256
                %v258 = vld [vmem:[%s198 + $0x1d0] sm:$0xff]
                %259 = vst [vmem:[%s199 + $0xe8] sm:$0xff] %v258
                %v260 = vld [vmem:[%s198 + $0x1e0] sm:$0xff]
                %261 = vst [vmem:[%s199 + $0xf0] sm:$0xff] %v260
                %v262 = vld [vmem:[%s198 + $0x1f0] sm:$0xff]
                %263 = vst [vmem:[%s199 + $0xf8] sm:$0xff] %v262
                %v264 = vld [vmem:[%s198 + $0x200] sm:$0xff]
                %265 = vst [vmem:[%s199 + $0x100] sm:$0xff] %v264
                %v266 = vld [vmem:[%s198 + $0x210] sm:$0xff]
                %267 = vst [vmem:[%s199 + $0x108] sm:$0xff] %v266
                %v268 = vld [vmem:[%s198 + $0x220] sm:$0xff]
                %269 = vst [vmem:[%s199 + $0x110] sm:$0xff] %v268
                %v270 = vld [vmem:[%s198 + $0x230] sm:$0xff]
                %271 = vst [vmem:[%s199 + $0x118] sm:$0xff] %v270
                %v272 = vld [vmem:[%s198 + $0x240] sm:$0xff]
                %273 = vst [vmem:[%s199 + $0x120] sm:$0xff] %v272
                %v274 = vld [vmem:[%s198 + $0x250] sm:$0xff]
                %275 = vst [vmem:[%s199 + $0x128] sm:$0xff] %v274
                %v276 = vld [vmem:[%s198 + $0x260] sm:$0xff]
                %277 = vst [vmem:[%s199 + $0x130] sm:$0xff] %v276
                %v278 = vld [vmem:[%s198 + $0x270] sm:$0xff]
                %279 = vst [vmem:[%s199 + $0x138] sm:$0xff] %v278
                %v280 = vld [vmem:[%s198 + $0x280] sm:$0xff]
                %281 = vst [vmem:[%s199 + $0x140] sm:$0xff] %v280
                %v282 = vld [vmem:[%s198 + $0x290] sm:$0xff]
                %283 = vst [vmem:[%s199 + $0x148] sm:$0xff] %v282
                %v284 = vld [vmem:[%s198 + $0x2a0] sm:$0xff]
                %285 = vst [vmem:[%s199 + $0x150] sm:$0xff] %v284
                %v286 = vld [vmem:[%s198 + $0x2b0] sm:$0xff]
                %287 = vst [vmem:[%s199 + $0x158] sm:$0xff] %v286
                %v288 = vld [vmem:[%s198 + $0x2c0] sm:$0xff]
                %289 = vst [vmem:[%s199 + $0x160] sm:$0xff] %v288
                %v290 = vld [vmem:[%s198 + $0x2d0] sm:$0xff]
                %291 = vst [vmem:[%s199 + $0x168] sm:$0xff] %v290
                %v292 = vld [vmem:[%s198 + $0x2e0] sm:$0xff]
                %293 = vst [vmem:[%s199 + $0x170] sm:$0xff] %v292
                %v294 = vld [vmem:[%s198 + $0x2f0] sm:$0xff]
                %295 = vst [vmem:[%s199 + $0x178] sm:$0xff] %v294
                %v296 = vld [vmem:[%s198 + $0x300] sm:$0xff]
                %297 = vst [vmem:[%s199 + $0x180] sm:$0xff] %v296
                %v298 = vld [vmem:[%s198 + $0x310] sm:$0xff]
                %299 = vst [vmem:[%s199 + $0x188] sm:$0xff] %v298
                %v300 = vld [vmem:[%s198 + $0x320] sm:$0xff]
                %301 = vst [vmem:[%s199 + $0x190] sm:$0xff] %v300
                %v302 = vld [vmem:[%s198 + $0x330] sm:$0xff]
                %303 = vst [vmem:[%s199 + $0x198] sm:$0xff] %v302
                %v304 = vld [vmem:[%s198 + $0x340] sm:$0xff]
                %305 = vst [vmem:[%s199 + $0x1a0] sm:$0xff] %v304
                %v306 = vld [vmem:[%s198 + $0x350] sm:$0xff]
                %307 = vst [vmem:[%s199 + $0x1a8] sm:$0xff] %v306
                %v308 = vld [vmem:[%s198 + $0x360] sm:$0xff]
                %309 = vst [vmem:[%s199 + $0x1b0] sm:$0xff] %v308
                %v310 = vld [vmem:[%s198 + $0x370] sm:$0xff]
                %311 = vst [vmem:[%s199 + $0x1b8] sm:$0xff] %v310
                %v312 = vld [vmem:[%s198 + $0x380] sm:$0xff]
                %313 = vst [vmem:[%s199 + $0x1c0] sm:$0xff] %v312
                %v314 = vld [vmem:[%s198 + $0x390] sm:$0xff]
                %315 = vst [vmem:[%s199 + $0x1c8] sm:$0xff] %v314
                %v316 = vld [vmem:[%s198 + $0x3a0] sm:$0xff]
                %317 = vst [vmem:[%s199 + $0x1d0] sm:$0xff] %v316
                %v318 = vld [vmem:[%s198 + $0x3b0] sm:$0xff]
                %319 = vst [vmem:[%s199 + $0x1d8] sm:$0xff] %v318
                %v320 = vld [vmem:[%s198 + $0x3c0] sm:$0xff]
                %321 = vst [vmem:[%s199 + $0x1e0] sm:$0xff] %v320
                %v322 = vld [vmem:[%s198 + $0x3d0] sm:$0xff]
                %323 = vst [vmem:[%s199 + $0x1e8] sm:$0xff] %v322
                %v324 = vld [vmem:[%s198 + $0x3e0] sm:$0xff]
                %325 = vst [vmem:[%s199 + $0x1f0] sm:$0xff] %v324
                %v326 = vld [vmem:[%s198 + $0x3f0] sm:$0xff]
                %327 = vst [vmem:[%s199 + $0x1f8] sm:$0xff] %v326
                %v328 = vld [vmem:[%s198 + $0x400] sm:$0xff]
                %329 = vst [vmem:[%s199 + $0x200] sm:$0xff] %v328
                %v330 = vld [vmem:[%s198 + $0x410] sm:$0xff]
                %331 = vst [vmem:[%s199 + $0x208] sm:$0xff] %v330
                %v332 = vld [vmem:[%s198 + $0x420] sm:$0xff]
                %333 = vst [vmem:[%s199 + $0x210] sm:$0xff] %v332
                %v334 = vld [vmem:[%s198 + $0x430] sm:$0xff]
                %335 = vst [vmem:[%s199 + $0x218] sm:$0xff] %v334
                %v336 = vld [vmem:[%s198 + $0x440] sm:$0xff]
                %337 = vst [vmem:[%s199 + $0x220] sm:$0xff] %v336
                %v338 = vld [vmem:[%s198 + $0x450] sm:$0xff]
                %339 = vst [vmem:[%s199 + $0x228] sm:$0xff] %v338
                %v340 = vld [vmem:[%s198 + $0x460] sm:$0xff]
                %341 = vst [vmem:[%s199 + $0x230] sm:$0xff] %v340
                %v342 = vld [vmem:[%s198 + $0x470] sm:$0xff]
                %343 = vst [vmem:[%s199 + $0x238] sm:$0xff] %v342
                %v344 = vld [vmem:[%s198 + $0x480] sm:$0xff]
                %345 = vst [vmem:[%s199 + $0x240] sm:$0xff] %v344
                %v346 = vld [vmem:[%s198 + $0x490] sm:$0xff]
                %347 = vst [vmem:[%s199 + $0x248] sm:$0xff] %v346
                %v348 = vld [vmem:[%s198 + $0x4a0] sm:$0xff]
                %349 = vst [vmem:[%s199 + $0x250] sm:$0xff] %v348
                %v350 = vld [vmem:[%s198 + $0x4b0] sm:$0xff]
                %351 = vst [vmem:[%s199 + $0x258] sm:$0xff] %v350
                %v352 = vld [vmem:[%s198 + $0x4c0] sm:$0xff]
                %353 = vst [vmem:[%s199 + $0x260] sm:$0xff] %v352
                %v354 = vld [vmem:[%s198 + $0x4d0] sm:$0xff]
                %355 = vst [vmem:[%s199 + $0x268] sm:$0xff] %v354
                %v356 = vld [vmem:[%s198 + $0x4e0] sm:$0xff]
                %357 = vst [vmem:[%s199 + $0x270] sm:$0xff] %v356
                %v358 = vld [vmem:[%s198 + $0x4f0] sm:$0xff]
                %359 = vst [vmem:[%s199 + $0x278] sm:$0xff] %v358
                %v360 = vld [vmem:[%s198 + $0x500] sm:$0xff]
                %361 = vst [vmem:[%s199 + $0x280] sm:$0xff] %v360
                %v362 = vld [vmem:[%s198 + $0x510] sm:$0xff]
                %363 = vst [vmem:[%s199 + $0x288] sm:$0xff] %v362
                %v364 = vld [vmem:[%s198 + $0x520] sm:$0xff]
                %365 = vst [vmem:[%s199 + $0x290] sm:$0xff] %v364
                %v366 = vld [vmem:[%s198 + $0x530] sm:$0xff]
                %367 = vst [vmem:[%s199 + $0x298] sm:$0xff] %v366
                %v368 = vld [vmem:[%s198 + $0x540] sm:$0xff]
                %369 = vst [vmem:[%s199 + $0x2a0] sm:$0xff] %v368
                %v370 = vld [vmem:[%s198 + $0x550] sm:$0xff]
                %371 = vst [vmem:[%s199 + $0x2a8] sm:$0xff] %v370
                %v372 = vld [vmem:[%s198 + $0x560] sm:$0xff]
                %373 = vst [vmem:[%s199 + $0x2b0] sm:$0xff] %v372
                %v374 = vld [vmem:[%s198 + $0x570] sm:$0xff]
                %375 = vst [vmem:[%s199 + $0x2b8] sm:$0xff] %v374
                %v376 = vld [vmem:[%s198 + $0x580] sm:$0xff]
                %377 = vst [vmem:[%s199 + $0x2c0] sm:$0xff] %v376
                %v378 = vld [vmem:[%s198 + $0x590] sm:$0xff]
                %379 = vst [vmem:[%s199 + $0x2c8] sm:$0xff] %v378
                %v380 = vld [vmem:[%s198 + $0x5a0] sm:$0xff]
                %381 = vst [vmem:[%s199 + $0x2d0] sm:$0xff] %v380
                %v382 = vld [vmem:[%s198 + $0x5b0] sm:$0xff]
                %383 = vst [vmem:[%s199 + $0x2d8] sm:$0xff] %v382
                %v384 = vld [vmem:[%s198 + $0x5c0] sm:$0xff]
                %385 = vst [vmem:[%s199 + $0x2e0] sm:$0xff] %v384
                %v386 = vld [vmem:[%s198 + $0x5d0] sm:$0xff]
                %387 = vst [vmem:[%s199 + $0x2e8] sm:$0xff] %v386
                %v388 = vld [vmem:[%s198 + $0x5e0] sm:$0xff]
                %389 = vst [vmem:[%s199 + $0x2f0] sm:$0xff] %v388
                %v390 = vld [vmem:[%s198 + $0x5f0] sm:$0xff]
                %391 = vst [vmem:[%s199 + $0x2f8] sm:$0xff] %v390
                %v392 = vld [vmem:[%s198 + $0x600] sm:$0xff]
                %393 = vst [vmem:[%s199 + $0x300] sm:$0xff] %v392
                %v394 = vld [vmem:[%s198 + $0x610] sm:$0xff]
                %395 = vst [vmem:[%s199 + $0x308] sm:$0xff] %v394
                %v396 = vld [vmem:[%s198 + $0x620] sm:$0xff]
                %397 = vst [vmem:[%s199 + $0x310] sm:$0xff] %v396
                %v398 = vld [vmem:[%s198 + $0x630] sm:$0xff]
                %399 = vst [vmem:[%s199 + $0x318] sm:$0xff] %v398
                %v400 = vld [vmem:[%s198 + $0x640] sm:$0xff]
                %401 = vst [vmem:[%s199 + $0x320] sm:$0xff] %v400
                %v402 = vld [vmem:[%s198 + $0x650] sm:$0xff]
                %403 = vst [vmem:[%s199 + $0x328] sm:$0xff] %v402
                %v404 = vld [vmem:[%s198 + $0x660] sm:$0xff]
                %405 = vst [vmem:[%s199 + $0x330] sm:$0xff] %v404
                %v406 = vld [vmem:[%s198 + $0x670] sm:$0xff]
                %407 = vst [vmem:[%s199 + $0x338] sm:$0xff] %v406
                %v408 = vld [vmem:[%s198 + $0x680] sm:$0xff]
                %409 = vst [vmem:[%s199 + $0x340] sm:$0xff] %v408
                %v410 = vld [vmem:[%s198 + $0x690] sm:$0xff]
                %411 = vst [vmem:[%s199 + $0x348] sm:$0xff] %v410
                %v412 = vld [vmem:[%s198 + $0x6a0] sm:$0xff]
                %413 = vst [vmem:[%s199 + $0x350] sm:$0xff] %v412
                %v414 = vld [vmem:[%s198 + $0x6b0] sm:$0xff]
                %415 = vst [vmem:[%s199 + $0x358] sm:$0xff] %v414
                %v416 = vld [vmem:[%s198 + $0x6c0] sm:$0xff]
                %417 = vst [vmem:[%s199 + $0x360] sm:$0xff] %v416
                %v418 = vld [vmem:[%s198 + $0x6d0] sm:$0xff]
                %419 = vst [vmem:[%s199 + $0x368] sm:$0xff] %v418
                %v420 = vld [vmem:[%s198 + $0x6e0] sm:$0xff]
                %421 = vst [vmem:[%s199 + $0x370] sm:$0xff] %v420
                %v422 = vld [vmem:[%s198 + $0x6f0] sm:$0xff]
                %423 = vst [vmem:[%s199 + $0x378] sm:$0xff] %v422
                %v424 = vld [vmem:[%s198 + $0x700] sm:$0xff]
                %425 = vst [vmem:[%s199 + $0x380] sm:$0xff] %v424
                %v426 = vld [vmem:[%s198 + $0x710] sm:$0xff]
                %427 = vst [vmem:[%s199 + $0x388] sm:$0xff] %v426
                %v428 = vld [vmem:[%s198 + $0x720] sm:$0xff]
                %429 = vst [vmem:[%s199 + $0x390] sm:$0xff] %v428
                %v430 = vld [vmem:[%s198 + $0x730] sm:$0xff]
                %431 = vst [vmem:[%s199 + $0x398] sm:$0xff] %v430
                %v432 = vld [vmem:[%s198 + $0x740] sm:$0xff]
                %433 = vst [vmem:[%s199 + $0x3a0] sm:$0xff] %v432
                %v434 = vld [vmem:[%s198 + $0x750] sm:$0xff]
                %435 = vst [vmem:[%s199 + $0x3a8] sm:$0xff] %v434
                %v436 = vld [vmem:[%s198 + $0x760] sm:$0xff]
                %437 = vst [vmem:[%s199 + $0x3b0] sm:$0xff] %v436
                %v438 = vld [vmem:[%s198 + $0x770] sm:$0xff]
                %439 = vst [vmem:[%s199 + $0x3b8] sm:$0xff] %v438
                %v440 = vld [vmem:[%s198 + $0x780] sm:$0xff]
                %441 = vst [vmem:[%s199 + $0x3c0] sm:$0xff] %v440
                %v442 = vld [vmem:[%s198 + $0x790] sm:$0xff]
                %443 = vst [vmem:[%s199 + $0x3c8] sm:$0xff] %v442
                %v444 = vld [vmem:[%s198 + $0x7a0] sm:$0xff]
                %445 = vst [vmem:[%s199 + $0x3d0] sm:$0xff] %v444
                %v446 = vld [vmem:[%s198 + $0x7b0] sm:$0xff]
                %447 = vst [vmem:[%s199 + $0x3d8] sm:$0xff] %v446
                %v448 = vld [vmem:[%s198 + $0x7c0] sm:$0xff]
                %449 = vst [vmem:[%s199 + $0x3e0] sm:$0xff] %v448
                %v450 = vld [vmem:[%s198 + $0x7d0] sm:$0xff]
                %451 = vst [vmem:[%s199 + $0x3e8] sm:$0xff] %v450
                %v452 = vld [vmem:[%s198 + $0x7e0] sm:$0xff]
                %453 = vst [vmem:[%s199 + $0x3f0] sm:$0xff] %v452
                %v454 = vld [vmem:[%s198 + $0x7f0] sm:$0xff]
                %455 = vst [vmem:[%s199 + $0x3f8] sm:$0xff] %v454
                %v456 = vld [vmem:[%s198 + $0x800] sm:$0xff]
                %457 = vst [vmem:[%s199 + $0x400] sm:$0xff] %v456
                %v458 = vld [vmem:[%s198 + $0x810] sm:$0xff]
                %459 = vst [vmem:[%s199 + $0x408] sm:$0xff] %v458
                %v460 = vld [vmem:[%s198 + $0x820] sm:$0xff]
                %461 = vst [vmem:[%s199 + $0x410] sm:$0xff] %v460
                %v462 = vld [vmem:[%s198 + $0x830] sm:$0xff]
                %463 = vst [vmem:[%s199 + $0x418] sm:$0xff] %v462
                %v464 = vld [vmem:[%s198 + $0x840] sm:$0xff]
                %465 = vst [vmem:[%s199 + $0x420] sm:$0xff] %v464
                %v466 = vld [vmem:[%s198 + $0x850] sm:$0xff]
                %467 = vst [vmem:[%s199 + $0x428] sm:$0xff] %v466
                %v468 = vld [vmem:[%s198 + $0x860] sm:$0xff]
                %469 = vst [vmem:[%s199 + $0x430] sm:$0xff] %v468
                %v470 = vld [vmem:[%s198 + $0x870] sm:$0xff]
                %471 = vst [vmem:[%s199 + $0x438] sm:$0xff] %v470
                %v472 = vld [vmem:[%s198 + $0x880] sm:$0xff]
                %473 = vst [vmem:[%s199 + $0x440] sm:$0xff] %v472
                %v474 = vld [vmem:[%s198 + $0x890] sm:$0xff]
                %475 = vst [vmem:[%s199 + $0x448] sm:$0xff] %v474
                %v476 = vld [vmem:[%s198 + $0x8a0] sm:$0xff]
                %477 = vst [vmem:[%s199 + $0x450] sm:$0xff] %v476
                %v478 = vld [vmem:[%s198 + $0x8b0] sm:$0xff]
                %479 = vst [vmem:[%s199 + $0x458] sm:$0xff] %v478
                %v480 = vld [vmem:[%s198 + $0x8c0] sm:$0xff]
                %481 = vst [vmem:[%s199 + $0x460] sm:$0xff] %v480
                %v482 = vld [vmem:[%s198 + $0x8d0] sm:$0xff]
                %483 = vst [vmem:[%s199 + $0x468] sm:$0xff] %v482
                %v484 = vld [vmem:[%s198 + $0x8e0] sm:$0xff]
                %485 = vst [vmem:[%s199 + $0x470] sm:$0xff] %v484
                %v486 = vld [vmem:[%s198 + $0x8f0] sm:$0xff]
                %487 = vst [vmem:[%s199 + $0x478] sm:$0xff] %v486
                %v488 = vld [vmem:[%s198 + $0x900] sm:$0xff]
                %489 = vst [vmem:[%s199 + $0x480] sm:$0xff] %v488
                %v490 = vld [vmem:[%s198 + $0x910] sm:$0xff]
                %491 = vst [vmem:[%s199 + $0x488] sm:$0xff] %v490
                %v492 = vld [vmem:[%s198 + $0x920] sm:$0xff]
                %493 = vst [vmem:[%s199 + $0x490] sm:$0xff] %v492
                %v494 = vld [vmem:[%s198 + $0x930] sm:$0xff]
                %495 = vst [vmem:[%s199 + $0x498] sm:$0xff] %v494
                %v496 = vld [vmem:[%s198 + $0x940] sm:$0xff]
                %497 = vst [vmem:[%s199 + $0x4a0] sm:$0xff] %v496
                %v498 = vld [vmem:[%s198 + $0x950] sm:$0xff]
                %499 = vst [vmem:[%s199 + $0x4a8] sm:$0xff] %v498
                %v500 = vld [vmem:[%s198 + $0x960] sm:$0xff]
                %501 = vst [vmem:[%s199 + $0x4b0] sm:$0xff] %v500
                %v502 = vld [vmem:[%s198 + $0x970] sm:$0xff]
                %503 = vst [vmem:[%s199 + $0x4b8] sm:$0xff] %v502
                %v504 = vld [vmem:[%s198 + $0x980] sm:$0xff]
                %505 = vst [vmem:[%s199 + $0x4c0] sm:$0xff] %v504
                %v506 = vld [vmem:[%s198 + $0x990] sm:$0xff]
                %507 = vst [vmem:[%s199 + $0x4c8] sm:$0xff] %v506
                %v508 = vld [vmem:[%s198 + $0x9a0] sm:$0xff]
                %509 = vst [vmem:[%s199 + $0x4d0] sm:$0xff] %v508
                %v510 = vld [vmem:[%s198 + $0x9b0] sm:$0xff]
                %511 = vst [vmem:[%s199 + $0x4d8] sm:$0xff] %v510
                %v512 = vld [vmem:[%s198 + $0x9c0] sm:$0xff]
                %513 = vst [vmem:[%s199 + $0x4e0] sm:$0xff] %v512
                %v514 = vld [vmem:[%s198 + $0x9d0] sm:$0xff]
                %515 = vst [vmem:[%s199 + $0x4e8] sm:$0xff] %v514
                %v516 = vld [vmem:[%s198 + $0x9e0] sm:$0xff]
                %517 = vst [vmem:[%s199 + $0x4f0] sm:$0xff] %v516
                %v518 = vld [vmem:[%s198 + $0x9f0] sm:$0xff]
                %519 = vst [vmem:[%s199 + $0x4f8] sm:$0xff] %v518
              $region41: #{image_pair_encoder_v2.7} parent=35 // loop_footer
                %s197 = sadd.s32 1, %s193
              $region42: #{image_pair_encoder_v2.7} parent=35 // loop_footer_branch
                %192 = sbr.rel target = $region38
              $region43: #{image_pair_encoder_v2.7} parent=35 // loop_exit
                _
            $region36: #{image_pair_encoder_v2.7} parent=27 // pred_fallthru
              _
          $region28: #{image_pair_encoder_v2.7} parent=23 // pred_fallthru
            _
          %852 = vnop
        $region24: #{image_pair_encoder_v2.7} parent=15 // pred_fallthru
          _
        // Predicated region
        $region59: #{image_pair_encoder_v2.7} parent=15 // pred_check
          %p853 = pneg %p107
        $region60: #{image_pair_encoder_v2.7} parent=15 // pred_check_branch
          %855 = sbr.rel (%p853) target = $region62
        $region61: #{image_pair_encoder_v2.7} parent=15 // pred_region
          %s856 = smul.u32 2, %s20
          %p857 = scmp.lt.s32.totalorder %s856, 3
          %s858 = scalar_select %p857, %s856, 3
          %s859 = scalar_lea.vmem %s2, %s858
          %s860 = smul.u32 2, %s20
        $region62: #{image_pair_encoder_v2.7} parent=15 // pred_fallthru
          _
      $region16: #{image_pair_encoder_v2.7} parent=5 // pred_fallthru
        _
      %p861 = scmp.le.s32.totalorder 1, %s12
      %p862 = scmp.lt.s32.totalorder %s12, 11
      %p863 = pnand %p861, %p862
      %p864 = pneg %p863
      // Predicated region
      $region63: #{image_pair_encoder_v2.7} parent=5 // pred_check
        _
      $region64: #{image_pair_encoder_v2.7} parent=5 // pred_check_branch
        %866 = sbr.rel (%p863) target = $region66
      $region65: #{image_pair_encoder_v2.7} parent=5 // pred_region
        %s867 = ssub.s32 %s12, 1
        %s868 = sand.u32 %s74, 1
        %s869 = sand.u32 %s74, 1
        %s870 = smul.addr %s869, 1280
        %s871 = scalar_lea.vmem [#allocation3], %s870
        // Predicated region
        $region67: #{image_pair_encoder_v2.7} parent=65 // pred_check
          %p872 = pneg %p87
        $region68: #{image_pair_encoder_v2.7} parent=65 // pred_check_branch
          %874 = sbr.rel (%p872) target = $region70
        $region69: #{image_pair_encoder_v2.7} parent=65 // pred_region
          _
        $region70: #{image_pair_encoder_v2.7} parent=65 // pred_fallthru
          _
        %s875 = smul.u32 10, %s24
        %p876 = scmp.lt.s32.totalorder %s22, 0
        %s877 = scalar_select %p876, %s22, 0
        %p878 = scmp.lt.s32.totalorder %s875, 49
        %s879 = scalar_select %p878, %s875, 49
        %s880 = smul.addr %s877, 50
        %s881 = sadd.s32 %s879, %s880
        %s882 = scalar_lea.vmem %s0, %s881
        %p883 = pneg %p59
        %p884 = pneg %p56
        %s885 = sand.u32 %s74, 1
        %s886 = sand.u32 %s74, 1
        %s887 = smul.addr %s886, 1280
        %s888 = scalar_lea.vmem [#allocation3], %s887
        %p889 = pneg %p87
        %p890 = pneg %p84
        %s891 = smul.u32 2, %s23
        %p892 = scmp.lt.s32.totalorder %s891, 3
        %s893 = scalar_select %p892, %s891, 3
        %s894 = scalar_lea.vmem %s2, %s893
        %p895 = pneg %p113
        %p896 = pneg %p110
        %p897 = pneg %p141
        %p898 = pneg %p138
        %s899 = sand.u32 %s128, 1
        %s900 = scalar_lea.sflag [#allocation5], %s899
        %s901 = sand.u32 %s128, 1
        %s902 = smul.addr %s901, 4
        %s903 = scalar_lea.vmem [#allocation4], %s902
        %s904 = smul.u32 10, %s24
        %p905 = scmp.lt.s32.totalorder %s22, 0
        %s906 = scalar_select %p905, %s22, 0
        %p907 = scmp.lt.s32.totalorder %s904, 49
        %s908 = scalar_select %p907, %s904, 49
        %s909 = smul.addr %s906, 50
        %s910 = sadd.s32 %s908, %s909
        %s911 = scalar_lea.vmem %s0, %s910
        %s912 = smul.u32 10, %s24
        %s913 = smul.u32 160, %s24
        %s914 = smul.u32 2, %s23
        %s915 = smul.u32 2, %s23
        %p916 = scmp.lt.s32.totalorder %s915, 3
        %s917 = scalar_select %p916, %s915, 3
        %s918 = scalar_lea.vmem %s2, %s917
        %s919 = smul.u32 2, %s23
        %s920 = smul.u32 2, %s23
        %p921 = scmp.eq.s32.totalorder %s24, 0
        // Predicated region
        $region71: #{image_pair_encoder_v2.7} parent=65 // pred_check
          %p922 = pneg %p921
        $region72: #{image_pair_encoder_v2.7} parent=65 // pred_check_branch
          %924 = sbr.rel (%p922) target = $region74
        $region73: #{image_pair_encoder_v2.7} parent=65 // pred_region
          %925 = vst [vmem:[#allocation2] sm:$0xf] 0.0
        $region74: #{image_pair_encoder_v2.7} parent=65 // pred_fallthru
          _
        %v926 = vld [vmem:[#allocation2] sm:$0xf]
        %v927 = vld [vmem:[%s911] sm:$0xff]
        %v928 = vld [vmem:[%s911 + $0x8] sm:$0x3]
        %v929 = vld [vmem:[%s871] sm:$0xff]
        %v930 = vld [vmem:[%s871 + $0x8] sm:$0xff]
        %v931 = vld [vmem:[%s871 + $0x10] sm:$0xff]
        %v932 = vld [vmem:[%s871 + $0x18] sm:$0xff]
        %v933 = vld [vmem:[%s871 + $0x20] sm:$0xff]
        %v934 = vld [vmem:[%s871 + $0x28] sm:$0xff]
        %v935 = vld [vmem:[%s871 + $0x30] sm:$0xff]
        %v936 = vld [vmem:[%s871 + $0x38] sm:$0xff]
        %v937 = vld [vmem:[%s871 + $0x40] sm:$0xff]
        %v938 = vld [vmem:[%s871 + $0x48] sm:$0xff]
        %v939 = vld [vmem:[%s871 + $0x50] sm:$0xff]
        %v940 = vld [vmem:[%s871 + $0x58] sm:$0xff]
        %v941 = vld [vmem:[%s871 + $0x60] sm:$0xff]
        %v942 = vld [vmem:[%s871 + $0x68] sm:$0xff]
        %v943 = vld [vmem:[%s871 + $0x70] sm:$0xff]
        %v944 = vld [vmem:[%s871 + $0x78] sm:$0xff]
        %v945 = vld [vmem:[%s871 + $0x80] sm:$0xff]
        %v946 = vld [vmem:[%s871 + $0x88] sm:$0xff]
        %v947 = vld [vmem:[%s871 + $0x90] sm:$0xff]
        %v948 = vld [vmem:[%s871 + $0x98] sm:$0xff]
        %v949 = vld [vmem:[%s871 + $0xa0] sm:$0xff]
        %v950 = vld [vmem:[%s871 + $0xa8] sm:$0xff]
        %v951 = vld [vmem:[%s871 + $0xb0] sm:$0xff]
        %v952 = vld [vmem:[%s871 + $0xb8] sm:$0xff]
        %v953 = vld [vmem:[%s871 + $0xc0] sm:$0xff]
        %v954 = vld [vmem:[%s871 + $0xc8] sm:$0xff]
        %v955 = vld [vmem:[%s871 + $0xd0] sm:$0xff]
        %v956 = vld [vmem:[%s871 + $0xd8] sm:$0xff]
        %v957 = vld [vmem:[%s871 + $0xe0] sm:$0xff]
        %v958 = vld [vmem:[%s871 + $0xe8] sm:$0xff]
        %v959 = vld [vmem:[%s871 + $0xf0] sm:$0xff]
        %v960 = vld [vmem:[%s871 + $0xf8] sm:$0xff]
        %v961 = vld [vmem:[%s871 + $0x100] sm:$0xff]
        %v962 = vld [vmem:[%s871 + $0x108] sm:$0xff]
        %v963 = vld [vmem:[%s871 + $0x110] sm:$0xff]
        %v964 = vld [vmem:[%s871 + $0x118] sm:$0xff]
        %v965 = vld [vmem:[%s871 + $0x120] sm:$0xff]
        %v966 = vld [vmem:[%s871 + $0x128] sm:$0xff]
        %v967 = vld [vmem:[%s871 + $0x130] sm:$0xff]
        %v968 = vld [vmem:[%s871 + $0x138] sm:$0xff]
        %v969 = vld [vmem:[%s871 + $0x140] sm:$0xff]
        %v970 = vld [vmem:[%s871 + $0x148] sm:$0xff]
        %v971 = vld [vmem:[%s871 + $0x150] sm:$0xff]
        %v972 = vld [vmem:[%s871 + $0x158] sm:$0xff]
        %v973 = vld [vmem:[%s871 + $0x160] sm:$0xff]
        %v974 = vld [vmem:[%s871 + $0x168] sm:$0xff]
        %v975 = vld [vmem:[%s871 + $0x170] sm:$0xff]
        %v976 = vld [vmem:[%s871 + $0x178] sm:$0xff]
        %v977 = vld [vmem:[%s871 + $0x180] sm:$0xff]
        %v978 = vld [vmem:[%s871 + $0x188] sm:$0xff]
        %v979 = vld [vmem:[%s871 + $0x190] sm:$0xff]
        %v980 = vld [vmem:[%s871 + $0x198] sm:$0xff]
        %v981 = vld [vmem:[%s871 + $0x1a0] sm:$0xff]
        %v982 = vld [vmem:[%s871 + $0x1a8] sm:$0xff]
        %v983 = vld [vmem:[%s871 + $0x1b0] sm:$0xff]
        %v984 = vld [vmem:[%s871 + $0x1b8] sm:$0xff]
        %v985 = vld [vmem:[%s871 + $0x1c0] sm:$0xff]
        %v986 = vld [vmem:[%s871 + $0x1c8] sm:$0xff]
        %v987 = vld [vmem:[%s871 + $0x1d0] sm:$0xff]
        %v988 = vld [vmem:[%s871 + $0x1d8] sm:$0xff]
        %v989 = vld [vmem:[%s871 + $0x1e0] sm:$0xff]
        %v990 = vld [vmem:[%s871 + $0x1e8] sm:$0xff]
        %v991 = vld [vmem:[%s871 + $0x1f0] sm:$0xff]
        %v992 = vld [vmem:[%s871 + $0x1f8] sm:$0xff]
        %v993 = vld [vmem:[%s871 + $0x200] sm:$0xff]
        %v994 = vld [vmem:[%s871 + $0x208] sm:$0xff]
        %v995 = vld [vmem:[%s871 + $0x210] sm:$0xff]
        %v996 = vld [vmem:[%s871 + $0x218] sm:$0xff]
        %v997 = vld [vmem:[%s871 + $0x220] sm:$0xff]
        %v998 = vld [vmem:[%s871 + $0x228] sm:$0xff]
        %v999 = vld [vmem:[%s871 + $0x230] sm:$0xff]
        %v1000 = vld [vmem:[%s871 + $0x238] sm:$0xff]
        %v1001 = vld [vmem:[%s871 + $0x240] sm:$0xff]
        %v1002 = vld [vmem:[%s871 + $0x248] sm:$0xff]
        %v1003 = vld [vmem:[%s871 + $0x250] sm:$0xff]
        %v1004 = vld [vmem:[%s871 + $0x258] sm:$0xff]
        %v1005 = vld [vmem:[%s871 + $0x260] sm:$0xff]
        %v1006 = vld [vmem:[%s871 + $0x268] sm:$0xff]
        %v1007 = vld [vmem:[%s871 + $0x270] sm:$0xff]
        %v1008 = vld [vmem:[%s871 + $0x278] sm:$0xff]
        %v1009 = vld [vmem:[%s871 + $0x280] sm:$0xff]
        %v1010 = vld [vmem:[%s871 + $0x288] sm:$0xff]
        %v1011 = vld [vmem:[%s871 + $0x290] sm:$0xff]
        %v1012 = vld [vmem:[%s871 + $0x298] sm:$0xff]
        %v1013 = vld [vmem:[%s871 + $0x2a0] sm:$0xff]
        %v1014 = vld [vmem:[%s871 + $0x2a8] sm:$0xff]
        %v1015 = vld [vmem:[%s871 + $0x2b0] sm:$0xff]
        %v1016 = vld [vmem:[%s871 + $0x2b8] sm:$0xff]
        %v1017 = vld [vmem:[%s871 + $0x2c0] sm:$0xff]
        %v1018 = vld [vmem:[%s871 + $0x2c8] sm:$0xff]
        %v1019 = vld [vmem:[%s871 + $0x2d0] sm:$0xff]
        %v1020 = vld [vmem:[%s871 + $0x2d8] sm:$0xff]
        %v1021 = vld [vmem:[%s871 + $0x2e0] sm:$0xff]
        %v1022 = vld [vmem:[%s871 + $0x2e8] sm:$0xff]
        %v1023 = vld [vmem:[%s871 + $0x2f0] sm:$0xff]
        %v1024 = vld [vmem:[%s871 + $0x2f8] sm:$0xff]
        %v1025 = vld [vmem:[%s871 + $0x300] sm:$0xff]
        %v1026 = vld [vmem:[%s871 + $0x308] sm:$0xff]
        %v1027 = vld [vmem:[%s871 + $0x310] sm:$0xff]
        %v1028 = vld [vmem:[%s871 + $0x318] sm:$0xff]
        %v1029 = vld [vmem:[%s871 + $0x320] sm:$0xff]
        %v1030 = vld [vmem:[%s871 + $0x328] sm:$0xff]
        %v1031 = vld [vmem:[%s871 + $0x330] sm:$0xff]
        %v1032 = vld [vmem:[%s871 + $0x338] sm:$0xff]
        %v1033 = vld [vmem:[%s871 + $0x340] sm:$0xff]
        %v1034 = vld [vmem:[%s871 + $0x348] sm:$0xff]
        %v1035 = vld [vmem:[%s871 + $0x350] sm:$0xff]
        %v1036 = vld [vmem:[%s871 + $0x358] sm:$0xff]
        %v1037 = vld [vmem:[%s871 + $0x360] sm:$0xff]
        %v1038 = vld [vmem:[%s871 + $0x368] sm:$0xff]
        %v1039 = vld [vmem:[%s871 + $0x370] sm:$0xff]
        %v1040 = vld [vmem:[%s871 + $0x378] sm:$0xff]
        %v1041 = vld [vmem:[%s871 + $0x380] sm:$0xff]
        %v1042 = vld [vmem:[%s871 + $0x388] sm:$0xff]
        %v1043 = vld [vmem:[%s871 + $0x390] sm:$0xff]
        %v1044 = vld [vmem:[%s871 + $0x398] sm:$0xff]
        %v1045 = vld [vmem:[%s871 + $0x3a0] sm:$0xff]
        %v1046 = vld [vmem:[%s871 + $0x3a8] sm:$0xff]
        %v1047 = vld [vmem:[%s871 + $0x3b0] sm:$0xff]
        %v1048 = vld [vmem:[%s871 + $0x3b8] sm:$0xff]
        %v1049 = vld [vmem:[%s871 + $0x3c0] sm:$0xff]
        %v1050 = vld [vmem:[%s871 + $0x3c8] sm:$0xff]
        %v1051 = vld [vmem:[%s871 + $0x3d0] sm:$0xff]
        %v1052 = vld [vmem:[%s871 + $0x3d8] sm:$0xff]
        %v1053 = vld [vmem:[%s871 + $0x3e0] sm:$0xff]
        %v1054 = vld [vmem:[%s871 + $0x3e8] sm:$0xff]
        %v1055 = vld [vmem:[%s871 + $0x3f0] sm:$0xff]
        %v1056 = vld [vmem:[%s871 + $0x3f8] sm:$0xff]
        %v1057 = vld [vmem:[%s871 + $0x400] sm:$0xff]
        %v1058 = vld [vmem:[%s871 + $0x408] sm:$0xff]
        %v1059 = vld [vmem:[%s871 + $0x410] sm:$0xff]
        %v1060 = vld [vmem:[%s871 + $0x418] sm:$0xff]
        %v1061 = vld [vmem:[%s871 + $0x420] sm:$0xff]
        %v1062 = vld [vmem:[%s871 + $0x428] sm:$0xff]
        %v1063 = vld [vmem:[%s871 + $0x430] sm:$0xff]
        %v1064 = vld [vmem:[%s871 + $0x438] sm:$0xff]
        %v1065 = vld [vmem:[%s871 + $0x440] sm:$0xff]
        %v1066 = vld [vmem:[%s871 + $0x448] sm:$0xff]
        %v1067 = vld [vmem:[%s871 + $0x450] sm:$0xff]
        %v1068 = vld [vmem:[%s871 + $0x458] sm:$0xff]
        %v1069 = vld [vmem:[%s871 + $0x460] sm:$0xff]
        %v1070 = vld [vmem:[%s871 + $0x468] sm:$0xff]
        %v1071 = vld [vmem:[%s871 + $0x470] sm:$0xff]
        %v1072 = vld [vmem:[%s871 + $0x478] sm:$0xff]
        %v1073 = vld [vmem:[%s871 + $0x480] sm:$0xff]
        %v1074 = vld [vmem:[%s871 + $0x488] sm:$0xff]
        %v1075 = vld [vmem:[%s871 + $0x490] sm:$0xff]
        %v1076 = vld [vmem:[%s871 + $0x498] sm:$0xff]
        %v1077 = vld [vmem:[%s871 + $0x4a0] sm:$0xff]
        %v1078 = vld [vmem:[%s871 + $0x4a8] sm:$0xff]
        %v1079 = vld [vmem:[%s871 + $0x4b0] sm:$0xff]
        %v1080 = vld [vmem:[%s871 + $0x4b8] sm:$0xff]
        %v1081 = vld [vmem:[%s871 + $0x4c0] sm:$0xff]
        %v1082 = vld [vmem:[%s871 + $0x4c8] sm:$0xff]
        %v1083 = vld [vmem:[%s871 + $0x4d0] sm:$0xff]
        %v1084 = vld [vmem:[%s871 + $0x4d8] sm:$0xff]
        %v1085 = vld [vmem:[%s871 + $0x4e0] sm:$0xff]
        %v1086 = vld [vmem:[%s871 + $0x4e8] sm:$0xff]
        %v1087 = vld [vmem:[%s871 + $0x4f0] sm:$0xff]
        %v1088 = vld [vmem:[%s871 + $0x4f8] sm:$0xff]
        %v1091 = vcombine.high %v927, %v927
        %v1093 = vunpack.c.l.s4 1966171168
        %v1094 = vunpack.c.0.s8 %v1093
        %v1095 = vlaneseq
        %v1096 = vshrl.u32 %v1095, 7
        %v1097 = vsub.s32 %v1094, %v1096
        %v1098 = vrot.slane %v927, %v1097
        %v1100 = vunpack.c.l.s4 1966171168
        %v1101 = vunpack.c.0.s8 %v1100
        %v1102 = vlaneseq
        %v1103 = vshrl.u32 %v1102, 7
        %v1104 = vsub.s32 %v1101, %v1103
        %v1105 = vrot.slane %v1091, %v1104
        %v1106 = vcombine.high %v1098, %v1098
        %v1107 = vcombine.high %v1105, %v1105
        %v1109 = vunpack.c.l.s4 1966171168
        %v1110 = vunpack.c.0.s8 %v1109
        %v1111 = vlaneseq
        %v1112 = vshrl.u32 %v1111, 7
        %v1113 = vsub.s32 %v1110, %v1112
        %v1114 = vrot.slane %v1098, %v1113
        %v1116 = vunpack.c.l.s4 1966171168
        %v1117 = vunpack.c.0.s8 %v1116
        %v1118 = vlaneseq
        %v1119 = vshrl.u32 %v1118, 7
        %v1120 = vsub.s32 %v1117, %v1119
        %v1121 = vrot.slane %v1105, %v1120
        %v1123 = vunpack.c.l.s4 1966171168
        %v1124 = vunpack.c.0.s8 %v1123
        %v1125 = vlaneseq
        %v1126 = vshrl.u32 %v1125, 7
        %v1127 = vsub.s32 %v1124, %v1126
        %v1128 = vrot.slane %v1106, %v1127
        %v1130 = vunpack.c.l.s4 1966171168
        %v1131 = vunpack.c.0.s8 %v1130
        %v1132 = vlaneseq
        %v1133 = vshrl.u32 %v1132, 7
        %v1134 = vsub.s32 %v1131, %v1133
        %v1135 = vrot.slane %v1107, %v1134
        %v1136 = vcombine.high %v1114, %v1114
        %v1137 = vcombine.high %v1121, %v1121
        %v1138 = vcombine.high %v1128, %v1128
        %v1139 = vcombine.high %v1135, %v1135
        %v1141 = vunpack.c.l.s4 1966171168
        %v1142 = vunpack.c.0.s8 %v1141
        %v1143 = vlaneseq
        %v1144 = vshrl.u32 %v1143, 7
        %v1145 = vsub.s32 %v1142, %v1144
        %v1146 = vrot.slane %v928, %v1145
        %v1147 = vcombine.high %v1146, %v1146
        %v1149 = vunpack.c.l.s4 1966171168
        %v1150 = vunpack.c.0.s8 %v1149
        %v1151 = vlaneseq
        %v1152 = vshrl.u32 %v1151, 7
        %v1153 = vsub.s32 %v1150, %v1152
        %v1154 = vrot.slane %v1146, %v1153
        %v1156 = vunpack.c.l.s4 1966171168
        %v1157 = vunpack.c.0.s8 %v1156
        %v1158 = vlaneseq
        %v1159 = vshrl.u32 %v1158, 7
        %v1160 = vsub.s32 %v1157, %v1159
        %v1161 = vrot.slane %v1147, %v1160
        %v1332 = vunpack.c.l.b16 %v929
        %v1333 = vunpack.c.h.b16 %v929
        %v1334 = vunpack.c.l.b16 %v930
        %v1335 = vunpack.c.h.b16 %v930
        %v1336 = vunpack.c.l.b16 %v931
        %v1337 = vunpack.c.h.b16 %v931
        %v1338 = vunpack.c.l.b16 %v932
        %v1339 = vunpack.c.h.b16 %v932
        %v1340 = vunpack.c.l.b16 %v933
        %v1341 = vunpack.c.h.b16 %v933
        %v1342 = vunpack.c.l.b16 %v934
        %v1343 = vunpack.c.h.b16 %v934
        %v1344 = vunpack.c.l.b16 %v935
        %v1345 = vunpack.c.h.b16 %v935
        %v1346 = vunpack.c.l.b16 %v936
        %v1347 = vunpack.c.h.b16 %v936
        %v1348 = vunpack.c.l.b16 %v937
        %v1349 = vunpack.c.h.b16 %v937
        %v1350 = vunpack.c.l.b16 %v938
        %v1351 = vunpack.c.h.b16 %v938
        %v1352 = vunpack.c.l.b16 %v939
        %v1353 = vunpack.c.h.b16 %v939
        %v1354 = vunpack.c.l.b16 %v940
        %v1355 = vunpack.c.h.b16 %v940
        %v1356 = vunpack.c.l.b16 %v941
        %v1357 = vunpack.c.h.b16 %v941
        %v1358 = vunpack.c.l.b16 %v942
        %v1359 = vunpack.c.h.b16 %v942
        %v1360 = vunpack.c.l.b16 %v943
        %v1361 = vunpack.c.h.b16 %v943
        %v1362 = vunpack.c.l.b16 %v944
        %v1363 = vunpack.c.h.b16 %v944
        %v1364 = vunpack.c.l.b16 %v945
        %v1365 = vunpack.c.h.b16 %v945
        %v1366 = vunpack.c.l.b16 %v946
        %v1367 = vunpack.c.h.b16 %v946
        %v1368 = vunpack.c.l.b16 %v947
        %v1369 = vunpack.c.h.b16 %v947
        %v1370 = vunpack.c.l.b16 %v948
        %v1371 = vunpack.c.h.b16 %v948
        %v1372 = vunpack.c.l.b16 %v949
        %v1373 = vunpack.c.h.b16 %v949
        %v1374 = vunpack.c.l.b16 %v950
        %v1375 = vunpack.c.h.b16 %v950
        %v1376 = vunpack.c.l.b16 %v951
        %v1377 = vunpack.c.h.b16 %v951
        %v1378 = vunpack.c.l.b16 %v952
        %v1379 = vunpack.c.h.b16 %v952
        %v1380 = vunpack.c.l.b16 %v953
        %v1381 = vunpack.c.h.b16 %v953
        %v1382 = vunpack.c.l.b16 %v954
        %v1383 = vunpack.c.h.b16 %v954
        %v1384 = vunpack.c.l.b16 %v955
        %v1385 = vunpack.c.h.b16 %v955
        %v1386 = vunpack.c.l.b16 %v956
        %v1387 = vunpack.c.h.b16 %v956
        %v1388 = vunpack.c.l.b16 %v957
        %v1389 = vunpack.c.h.b16 %v957
        %v1390 = vunpack.c.l.b16 %v958
        %v1391 = vunpack.c.h.b16 %v958
        %v1392 = vunpack.c.l.b16 %v959
        %v1393 = vunpack.c.h.b16 %v959
        %v1394 = vunpack.c.l.b16 %v960
        %v1395 = vunpack.c.h.b16 %v960
        %v1396 = vunpack.c.l.b16 %v961
        %v1397 = vunpack.c.h.b16 %v961
        %v1398 = vunpack.c.l.b16 %v962
        %v1399 = vunpack.c.h.b16 %v962
        %v1400 = vunpack.c.l.b16 %v963
        %v1401 = vunpack.c.h.b16 %v963
        %v1402 = vunpack.c.l.b16 %v964
        %v1403 = vunpack.c.h.b16 %v964
        %v1404 = vunpack.c.l.b16 %v965
        %v1405 = vunpack.c.h.b16 %v965
        %v1406 = vunpack.c.l.b16 %v966
        %v1407 = vunpack.c.h.b16 %v966
        %v1408 = vunpack.c.l.b16 %v967
        %v1409 = vunpack.c.h.b16 %v967
        %v1410 = vunpack.c.l.b16 %v968
        %v1411 = vunpack.c.h.b16 %v968
        %v1412 = vunpack.c.l.b16 %v969
        %v1413 = vunpack.c.h.b16 %v969
        %v1414 = vunpack.c.l.b16 %v970
        %v1415 = vunpack.c.h.b16 %v970
        %v1416 = vunpack.c.l.b16 %v971
        %v1417 = vunpack.c.h.b16 %v971
        %v1418 = vunpack.c.l.b16 %v972
        %v1419 = vunpack.c.h.b16 %v972
        %v1420 = vunpack.c.l.b16 %v973
        %v1421 = vunpack.c.h.b16 %v973
        %v1422 = vunpack.c.l.b16 %v974
        %v1423 = vunpack.c.h.b16 %v974
        %v1424 = vunpack.c.l.b16 %v975
        %v1425 = vunpack.c.h.b16 %v975
        %v1426 = vunpack.c.l.b16 %v976
        %v1427 = vunpack.c.h.b16 %v976
        %v1428 = vunpack.c.l.b16 %v977
        %v1429 = vunpack.c.h.b16 %v977
        %v1430 = vunpack.c.l.b16 %v978
        %v1431 = vunpack.c.h.b16 %v978
        %v1432 = vunpack.c.l.b16 %v979
        %v1433 = vunpack.c.h.b16 %v979
        %v1434 = vunpack.c.l.b16 %v980
        %v1435 = vunpack.c.h.b16 %v980
        %v1436 = vunpack.c.l.b16 %v981
        %v1437 = vunpack.c.h.b16 %v981
        %v1438 = vunpack.c.l.b16 %v982
        %v1439 = vunpack.c.h.b16 %v982
        %v1440 = vunpack.c.l.b16 %v983
        %v1441 = vunpack.c.h.b16 %v983
        %v1442 = vunpack.c.l.b16 %v984
        %v1443 = vunpack.c.h.b16 %v984
        %v1444 = vunpack.c.l.b16 %v985
        %v1445 = vunpack.c.h.b16 %v985
        %v1446 = vunpack.c.l.b16 %v986
        %v1447 = vunpack.c.h.b16 %v986
        %v1448 = vunpack.c.l.b16 %v987
        %v1449 = vunpack.c.h.b16 %v987
        %v1450 = vunpack.c.l.b16 %v988
        %v1451 = vunpack.c.h.b16 %v988
        %v1452 = vunpack.c.l.b16 %v989
        %v1453 = vunpack.c.h.b16 %v989
        %v1454 = vunpack.c.l.b16 %v990
        %v1455 = vunpack.c.h.b16 %v990
        %v1456 = vunpack.c.l.b16 %v991
        %v1457 = vunpack.c.h.b16 %v991
        %v1458 = vunpack.c.l.b16 %v992
        %v1459 = vunpack.c.h.b16 %v992
        %v1460 = vunpack.c.l.b16 %v993
        %v1461 = vunpack.c.h.b16 %v993
        %v1462 = vunpack.c.l.b16 %v994
        %v1463 = vunpack.c.h.b16 %v994
        %v1464 = vunpack.c.l.b16 %v995
        %v1465 = vunpack.c.h.b16 %v995
        %v1466 = vunpack.c.l.b16 %v996
        %v1467 = vunpack.c.h.b16 %v996
        %v1468 = vunpack.c.l.b16 %v997
        %v1469 = vunpack.c.h.b16 %v997
        %v1470 = vunpack.c.l.b16 %v998
        %v1471 = vunpack.c.h.b16 %v998
        %v1472 = vunpack.c.l.b16 %v999
        %v1473 = vunpack.c.h.b16 %v999
        %v1474 = vunpack.c.l.b16 %v1000
        %v1475 = vunpack.c.h.b16 %v1000
        %v1476 = vunpack.c.l.b16 %v1001
        %v1477 = vunpack.c.h.b16 %v1001
        %v1478 = vunpack.c.l.b16 %v1002
        %v1479 = vunpack.c.h.b16 %v1002
        %v1480 = vunpack.c.l.b16 %v1003
        %v1481 = vunpack.c.h.b16 %v1003
        %v1482 = vunpack.c.l.b16 %v1004
        %v1483 = vunpack.c.h.b16 %v1004
        %v1484 = vunpack.c.l.b16 %v1005
        %v1485 = vunpack.c.h.b16 %v1005
        %v1486 = vunpack.c.l.b16 %v1006
        %v1487 = vunpack.c.h.b16 %v1006
        %v1488 = vunpack.c.l.b16 %v1007
        %v1489 = vunpack.c.h.b16 %v1007
        %v1490 = vunpack.c.l.b16 %v1008
        %v1491 = vunpack.c.h.b16 %v1008
        %v1492 = vunpack.c.l.b16 %v1009
        %v1493 = vunpack.c.h.b16 %v1009
        %v1494 = vunpack.c.l.b16 %v1010
        %v1495 = vunpack.c.h.b16 %v1010
        %v1496 = vunpack.c.l.b16 %v1011
        %v1497 = vunpack.c.h.b16 %v1011
        %v1498 = vunpack.c.l.b16 %v1012
        %v1499 = vunpack.c.h.b16 %v1012
        %v1500 = vunpack.c.l.b16 %v1013
        %v1501 = vunpack.c.h.b16 %v1013
        %v1502 = vunpack.c.l.b16 %v1014
        %v1503 = vunpack.c.h.b16 %v1014
        %v1504 = vunpack.c.l.b16 %v1015
        %v1505 = vunpack.c.h.b16 %v1015
        %v1506 = vunpack.c.l.b16 %v1016
        %v1507 = vunpack.c.h.b16 %v1016
        %v1508 = vunpack.c.l.b16 %v1017
        %v1509 = vunpack.c.h.b16 %v1017
        %v1510 = vunpack.c.l.b16 %v1018
        %v1511 = vunpack.c.h.b16 %v1018
        %v1512 = vunpack.c.l.b16 %v1019
        %v1513 = vunpack.c.h.b16 %v1019
        %v1514 = vunpack.c.l.b16 %v1020
        %v1515 = vunpack.c.h.b16 %v1020
        %v1516 = vunpack.c.l.b16 %v1021
        %v1517 = vunpack.c.h.b16 %v1021
        %v1518 = vunpack.c.l.b16 %v1022
        %v1519 = vunpack.c.h.b16 %v1022
        %v1520 = vunpack.c.l.b16 %v1023
        %v1521 = vunpack.c.h.b16 %v1023
        %v1522 = vunpack.c.l.b16 %v1024
        %v1523 = vunpack.c.h.b16 %v1024
        %v1524 = vunpack.c.l.b16 %v1025
        %v1525 = vunpack.c.h.b16 %v1025
        %v1526 = vunpack.c.l.b16 %v1026
        %v1527 = vunpack.c.h.b16 %v1026
        %v1528 = vunpack.c.l.b16 %v1027
        %v1529 = vunpack.c.h.b16 %v1027
        %v1530 = vunpack.c.l.b16 %v1028
        %v1531 = vunpack.c.h.b16 %v1028
        %v1532 = vunpack.c.l.b16 %v1029
        %v1533 = vunpack.c.h.b16 %v1029
        %v1534 = vunpack.c.l.b16 %v1030
        %v1535 = vunpack.c.h.b16 %v1030
        %v1536 = vunpack.c.l.b16 %v1031
        %v1537 = vunpack.c.h.b16 %v1031
        %v1538 = vunpack.c.l.b16 %v1032
        %v1539 = vunpack.c.h.b16 %v1032
        %v1540 = vunpack.c.l.b16 %v1033
        %v1541 = vunpack.c.h.b16 %v1033
        %v1542 = vunpack.c.l.b16 %v1034
        %v1543 = vunpack.c.h.b16 %v1034
        %v1544 = vunpack.c.l.b16 %v1035
        %v1545 = vunpack.c.h.b16 %v1035
        %v1546 = vunpack.c.l.b16 %v1036
        %v1547 = vunpack.c.h.b16 %v1036
        %v1548 = vunpack.c.l.b16 %v1037
        %v1549 = vunpack.c.h.b16 %v1037
        %v1550 = vunpack.c.l.b16 %v1038
        %v1551 = vunpack.c.h.b16 %v1038
        %v1552 = vunpack.c.l.b16 %v1039
        %v1553 = vunpack.c.h.b16 %v1039
        %v1554 = vunpack.c.l.b16 %v1040
        %v1555 = vunpack.c.h.b16 %v1040
        %v1556 = vunpack.c.l.b16 %v1041
        %v1557 = vunpack.c.h.b16 %v1041
        %v1558 = vunpack.c.l.b16 %v1042
        %v1559 = vunpack.c.h.b16 %v1042
        %v1560 = vunpack.c.l.b16 %v1043
        %v1561 = vunpack.c.h.b16 %v1043
        %v1562 = vunpack.c.l.b16 %v1044
        %v1563 = vunpack.c.h.b16 %v1044
        %v1564 = vunpack.c.l.b16 %v1045
        %v1565 = vunpack.c.h.b16 %v1045
        %v1566 = vunpack.c.l.b16 %v1046
        %v1567 = vunpack.c.h.b16 %v1046
        %v1568 = vunpack.c.l.b16 %v1047
        %v1569 = vunpack.c.h.b16 %v1047
        %v1570 = vunpack.c.l.b16 %v1048
        %v1571 = vunpack.c.h.b16 %v1048
        %v1572 = vunpack.c.l.b16 %v1049
        %v1573 = vunpack.c.h.b16 %v1049
        %v1574 = vunpack.c.l.b16 %v1050
        %v1575 = vunpack.c.h.b16 %v1050
        %v1576 = vunpack.c.l.b16 %v1051
        %v1577 = vunpack.c.h.b16 %v1051
        %v1578 = vunpack.c.l.b16 %v1052
        %v1579 = vunpack.c.h.b16 %v1052
        %v1580 = vunpack.c.l.b16 %v1053
        %v1581 = vunpack.c.h.b16 %v1053
        %v1582 = vunpack.c.l.b16 %v1054
        %v1583 = vunpack.c.h.b16 %v1054
        %v1584 = vunpack.c.l.b16 %v1055
        %v1585 = vunpack.c.h.b16 %v1055
        %v1586 = vunpack.c.l.b16 %v1056
        %v1587 = vunpack.c.h.b16 %v1056
        %v1588 = vunpack.c.l.b16 %v1057
        %v1589 = vunpack.c.h.b16 %v1057
        %v1590 = vunpack.c.l.b16 %v1058
        %v1591 = vunpack.c.h.b16 %v1058
        %v1592 = vunpack.c.l.b16 %v1059
        %v1593 = vunpack.c.h.b16 %v1059
        %v1594 = vunpack.c.l.b16 %v1060
        %v1595 = vunpack.c.h.b16 %v1060
        %v1596 = vunpack.c.l.b16 %v1061
        %v1597 = vunpack.c.h.b16 %v1061
        %v1598 = vunpack.c.l.b16 %v1062
        %v1599 = vunpack.c.h.b16 %v1062
        %v1600 = vunpack.c.l.b16 %v1063
        %v1601 = vunpack.c.h.b16 %v1063
        %v1602 = vunpack.c.l.b16 %v1064
        %v1603 = vunpack.c.h.b16 %v1064
        %v1604 = vunpack.c.l.b16 %v1065
        %v1605 = vunpack.c.h.b16 %v1065
        %v1606 = vunpack.c.l.b16 %v1066
        %v1607 = vunpack.c.h.b16 %v1066
        %v1608 = vunpack.c.l.b16 %v1067
        %v1609 = vunpack.c.h.b16 %v1067
        %v1610 = vunpack.c.l.b16 %v1068
        %v1611 = vunpack.c.h.b16 %v1068
        %v1612 = vunpack.c.l.b16 %v1069
        %v1613 = vunpack.c.h.b16 %v1069
        %v1614 = vunpack.c.l.b16 %v1070
        %v1615 = vunpack.c.h.b16 %v1070
        %v1616 = vunpack.c.l.b16 %v1071
        %v1617 = vunpack.c.h.b16 %v1071
        %v1618 = vunpack.c.l.b16 %v1072
        %v1619 = vunpack.c.h.b16 %v1072
        %v1620 = vunpack.c.l.b16 %v1073
        %v1621 = vunpack.c.h.b16 %v1073
        %v1622 = vunpack.c.l.b16 %v1074
        %v1623 = vunpack.c.h.b16 %v1074
        %v1624 = vunpack.c.l.b16 %v1075
        %v1625 = vunpack.c.h.b16 %v1075
        %v1626 = vunpack.c.l.b16 %v1076
        %v1627 = vunpack.c.h.b16 %v1076
        %v1628 = vunpack.c.l.b16 %v1077
        %v1629 = vunpack.c.h.b16 %v1077
        %v1630 = vunpack.c.l.b16 %v1078
        %v1631 = vunpack.c.h.b16 %v1078
        %v1632 = vunpack.c.l.b16 %v1079
        %v1633 = vunpack.c.h.b16 %v1079
        %v1634 = vunpack.c.l.b16 %v1080
        %v1635 = vunpack.c.h.b16 %v1080
        %v1636 = vunpack.c.l.b16 %v1081
        %v1637 = vunpack.c.h.b16 %v1081
        %v1638 = vunpack.c.l.b16 %v1082
        %v1639 = vunpack.c.h.b16 %v1082
        %v1640 = vunpack.c.l.b16 %v1083
        %v1641 = vunpack.c.h.b16 %v1083
        %v1642 = vunpack.c.l.b16 %v1084
        %v1643 = vunpack.c.h.b16 %v1084
        %v1644 = vunpack.c.l.b16 %v1085
        %v1645 = vunpack.c.h.b16 %v1085
        %v1646 = vunpack.c.l.b16 %v1086
        %v1647 = vunpack.c.h.b16 %v1086
        %v1648 = vunpack.c.l.b16 %v1087
        %v1649 = vunpack.c.h.b16 %v1087
        %v1650 = vunpack.c.l.b16 %v1088
        %v1651 = vunpack.c.h.b16 %v1088
        %v1652 = vpack.c.b16 %v1334, %v1332
        %v1653 = vpack.c.b16 %v1335, %v1333
        %v1654 = vpack.c.b16 %v1338, %v1336
        %v1655 = vpack.c.b16 %v1339, %v1337
        %v1656 = vpack.c.b16 %v1342, %v1340
        %v1657 = vpack.c.b16 %v1343, %v1341
        %v1658 = vpack.c.b16 %v1346, %v1344
        %v1659 = vpack.c.b16 %v1347, %v1345
        %v1660 = vpack.c.b16 %v1350, %v1348
        %v1661 = vpack.c.b16 %v1351, %v1349
        %v1662 = vpack.c.b16 %v1354, %v1352
        %v1663 = vpack.c.b16 %v1355, %v1353
        %v1664 = vpack.c.b16 %v1358, %v1356
        %v1665 = vpack.c.b16 %v1359, %v1357
        %v1666 = vpack.c.b16 %v1362, %v1360
        %v1667 = vpack.c.b16 %v1363, %v1361
        %v1668 = vpack.c.b16 %v1366, %v1364
        %v1669 = vpack.c.b16 %v1367, %v1365
        %v1670 = vpack.c.b16 %v1370, %v1368
        %v1671 = vpack.c.b16 %v1371, %v1369
        %v1672 = vpack.c.b16 %v1374, %v1372
        %v1673 = vpack.c.b16 %v1375, %v1373
        %v1674 = vpack.c.b16 %v1378, %v1376
        %v1675 = vpack.c.b16 %v1379, %v1377
        %v1676 = vpack.c.b16 %v1382, %v1380
        %v1677 = vpack.c.b16 %v1383, %v1381
        %v1678 = vpack.c.b16 %v1386, %v1384
        %v1679 = vpack.c.b16 %v1387, %v1385
        %v1680 = vpack.c.b16 %v1390, %v1388
        %v1681 = vpack.c.b16 %v1391, %v1389
        %v1682 = vpack.c.b16 %v1394, %v1392
        %v1683 = vpack.c.b16 %v1395, %v1393
        %v1684 = vpack.c.b16 %v1398, %v1396
        %v1685 = vpack.c.b16 %v1399, %v1397
        %v1686 = vpack.c.b16 %v1402, %v1400
        %v1687 = vpack.c.b16 %v1403, %v1401
        %v1688 = vpack.c.b16 %v1406, %v1404
        %v1689 = vpack.c.b16 %v1407, %v1405
        %v1690 = vpack.c.b16 %v1410, %v1408
        %v1691 = vpack.c.b16 %v1411, %v1409
        %v1692 = vpack.c.b16 %v1414, %v1412
        %v1693 = vpack.c.b16 %v1415, %v1413
        %v1694 = vpack.c.b16 %v1418, %v1416
        %v1695 = vpack.c.b16 %v1419, %v1417
        %v1696 = vpack.c.b16 %v1422, %v1420
        %v1697 = vpack.c.b16 %v1423, %v1421
        %v1698 = vpack.c.b16 %v1426, %v1424
        %v1699 = vpack.c.b16 %v1427, %v1425
        %v1700 = vpack.c.b16 %v1430, %v1428
        %v1701 = vpack.c.b16 %v1431, %v1429
        %v1702 = vpack.c.b16 %v1434, %v1432
        %v1703 = vpack.c.b16 %v1435, %v1433
        %v1704 = vpack.c.b16 %v1438, %v1436
        %v1705 = vpack.c.b16 %v1439, %v1437
        %v1706 = vpack.c.b16 %v1442, %v1440
        %v1707 = vpack.c.b16 %v1443, %v1441
        %v1708 = vpack.c.b16 %v1446, %v1444
        %v1709 = vpack.c.b16 %v1447, %v1445
        %v1710 = vpack.c.b16 %v1450, %v1448
        %v1711 = vpack.c.b16 %v1451, %v1449
        %v1712 = vpack.c.b16 %v1454, %v1452
        %v1713 = vpack.c.b16 %v1455, %v1453
        %v1714 = vpack.c.b16 %v1458, %v1456
        %v1715 = vpack.c.b16 %v1459, %v1457
        %v1716 = vpack.c.b16 %v1462, %v1460
        %v1717 = vpack.c.b16 %v1463, %v1461
        %v1718 = vpack.c.b16 %v1466, %v1464
        %v1719 = vpack.c.b16 %v1467, %v1465
        %v1720 = vpack.c.b16 %v1470, %v1468
        %v1721 = vpack.c.b16 %v1471, %v1469
        %v1722 = vpack.c.b16 %v1474, %v1472
        %v1723 = vpack.c.b16 %v1475, %v1473
        %v1724 = vpack.c.b16 %v1478, %v1476
        %v1725 = vpack.c.b16 %v1479, %v1477
        %v1726 = vpack.c.b16 %v1482, %v1480
        %v1727 = vpack.c.b16 %v1483, %v1481
        %v1728 = vpack.c.b16 %v1486, %v1484
        %v1729 = vpack.c.b16 %v1487, %v1485
        %v1730 = vpack.c.b16 %v1490, %v1488
        %v1731 = vpack.c.b16 %v1491, %v1489
        %v1732 = vpack.c.b16 %v1494, %v1492
        %v1733 = vpack.c.b16 %v1495, %v1493
        %v1734 = vpack.c.b16 %v1498, %v1496
        %v1735 = vpack.c.b16 %v1499, %v1497
        %v1736 = vpack.c.b16 %v1502, %v1500
        %v1737 = vpack.c.b16 %v1503, %v1501
        %v1738 = vpack.c.b16 %v1506, %v1504
        %v1739 = vpack.c.b16 %v1507, %v1505
        %v1740 = vpack.c.b16 %v1510, %v1508
        %v1741 = vpack.c.b16 %v1511, %v1509
        %v1742 = vpack.c.b16 %v1514, %v1512
        %v1743 = vpack.c.b16 %v1515, %v1513
        %v1744 = vpack.c.b16 %v1518, %v1516
        %v1745 = vpack.c.b16 %v1519, %v1517
        %v1746 = vpack.c.b16 %v1522, %v1520
        %v1747 = vpack.c.b16 %v1523, %v1521
        %v1748 = vpack.c.b16 %v1526, %v1524
        %v1749 = vpack.c.b16 %v1527, %v1525
        %v1750 = vpack.c.b16 %v1530, %v1528
        %v1751 = vpack.c.b16 %v1531, %v1529
        %v1752 = vpack.c.b16 %v1534, %v1532
        %v1753 = vpack.c.b16 %v1535, %v1533
        %v1754 = vpack.c.b16 %v1538, %v1536
        %v1755 = vpack.c.b16 %v1539, %v1537
        %v1756 = vpack.c.b16 %v1542, %v1540
        %v1757 = vpack.c.b16 %v1543, %v1541
        %v1758 = vpack.c.b16 %v1546, %v1544
        %v1759 = vpack.c.b16 %v1547, %v1545
        %v1760 = vpack.c.b16 %v1550, %v1548
        %v1761 = vpack.c.b16 %v1551, %v1549
        %v1762 = vpack.c.b16 %v1554, %v1552
        %v1763 = vpack.c.b16 %v1555, %v1553
        %v1764 = vpack.c.b16 %v1558, %v1556
        %v1765 = vpack.c.b16 %v1559, %v1557
        %v1766 = vpack.c.b16 %v1562, %v1560
        %v1767 = vpack.c.b16 %v1563, %v1561
        %v1768 = vpack.c.b16 %v1566, %v1564
        %v1769 = vpack.c.b16 %v1567, %v1565
        %v1770 = vpack.c.b16 %v1570, %v1568
        %v1771 = vpack.c.b16 %v1571, %v1569
        %v1772 = vpack.c.b16 %v1574, %v1572
        %v1773 = vpack.c.b16 %v1575, %v1573
        %v1774 = vpack.c.b16 %v1578, %v1576
        %v1775 = vpack.c.b16 %v1579, %v1577
        %v1776 = vpack.c.b16 %v1582, %v1580
        %v1777 = vpack.c.b16 %v1583, %v1581
        %v1778 = vpack.c.b16 %v1586, %v1584
        %v1779 = vpack.c.b16 %v1587, %v1585
        %v1780 = vpack.c.b16 %v1590, %v1588
        %v1781 = vpack.c.b16 %v1591, %v1589
        %v1782 = vpack.c.b16 %v1594, %v1592
        %v1783 = vpack.c.b16 %v1595, %v1593
        %v1784 = vpack.c.b16 %v1598, %v1596
        %v1785 = vpack.c.b16 %v1599, %v1597
        %v1786 = vpack.c.b16 %v1602, %v1600
        %v1787 = vpack.c.b16 %v1603, %v1601
        %v1788 = vpack.c.b16 %v1606, %v1604
        %v1789 = vpack.c.b16 %v1607, %v1605
        %v1790 = vpack.c.b16 %v1610, %v1608
        %v1791 = vpack.c.b16 %v1611, %v1609
        %v1792 = vpack.c.b16 %v1614, %v1612
        %v1793 = vpack.c.b16 %v1615, %v1613
        %v1794 = vpack.c.b16 %v1618, %v1616
        %v1795 = vpack.c.b16 %v1619, %v1617
        %v1796 = vpack.c.b16 %v1622, %v1620
        %v1797 = vpack.c.b16 %v1623, %v1621
        %v1798 = vpack.c.b16 %v1626, %v1624
        %v1799 = vpack.c.b16 %v1627, %v1625
        %v1800 = vpack.c.b16 %v1630, %v1628
        %v1801 = vpack.c.b16 %v1631, %v1629
        %v1802 = vpack.c.b16 %v1634, %v1632
        %v1803 = vpack.c.b16 %v1635, %v1633
        %v1804 = vpack.c.b16 %v1638, %v1636
        %v1805 = vpack.c.b16 %v1639, %v1637
        %v1806 = vpack.c.b16 %v1642, %v1640
        %v1807 = vpack.c.b16 %v1643, %v1641
        %v1808 = vpack.c.b16 %v1646, %v1644
        %v1809 = vpack.c.b16 %v1647, %v1645
        %v1810 = vpack.c.b16 %v1650, %v1648
        %v1811 = vpack.c.b16 %v1651, %v1649
        %1972 = vmatprep.subr.bf16.mxu0 %v1653
        %1973 = vmatpush1.bf16.msra.mxu0 %v1652
        %1974 = vmatprep.subr.bf16.mxu0 %v1655
        %1975 = vmatpush1.bf16.msra.mxu0 %v1654
        %1976 = vmatprep.subr.bf16.mxu0 %v1657
        %1977 = vmatpush1.bf16.msra.mxu0 %v1656
        %1978 = vmatprep.subr.bf16.mxu0 %v1659
        %1979 = vmatpush1.bf16.msra.mxu0 %v1658
        %1980 = vmatprep.subr.bf16.mxu0 %v1661
        %1981 = vmatpush1.bf16.msra.mxu0 %v1660
        %1982 = vmatprep.subr.bf16.mxu0 %v1663
        %1983 = vmatpush1.bf16.msra.mxu0 %v1662
        %1984 = vmatprep.subr.bf16.mxu0 %v1665
        %1985 = vmatpush1.bf16.msra.mxu0 %v1664
        %1986 = vmatprep.subr.bf16.mxu0 %v1667
        %1987 = vmatpush1.bf16.msra.mxu0 %v1666
        %1988 = vmatprep.subr.bf16.mxu0 %v1669
        %1989 = vmatpush1.bf16.msra.mxu0 %v1668
        %1990 = vmatprep.subr.bf16.mxu0 %v1671
        %1991 = vmatpush1.bf16.msra.mxu0 %v1670
        %1992 = vmatprep.subr.bf16.mxu0 %v1673
        %1993 = vmatpush1.bf16.msra.mxu0 %v1672
        %1994 = vmatprep.subr.bf16.mxu0 %v1675
        %1995 = vmatpush1.bf16.msra.mxu0 %v1674
        %1996 = vmatprep.subr.bf16.mxu0 %v1677
        %1997 = vmatpush1.bf16.msra.mxu0 %v1676
        %1998 = vmatprep.subr.bf16.mxu0 %v1679
        %1999 = vmatpush1.bf16.msra.mxu0 %v1678
        %2000 = vmatprep.subr.bf16.mxu0 %v1681
        %2001 = vmatpush1.bf16.msra.mxu0 %v1680
        %2002 = vmatprep.subr.bf16.mxu0 %v1683
        %2003 = vmatpush1.bf16.msra.mxu0 %v1682
        %2004 = vmatprep.mubr.bf16.mxu0 %v1128
        %2005 = vmatmul.mubr.bf16.gmra.mrb[0].mxu0 %v1114
        %v2006 = vpop.f32.mrb[0].mxu0
        %v2007 = vadd.f32 0.0, %v2006
        %v2008 = vpop.f32.mrb[0].mxu0
        %v2009 = vadd.f32 0.0, %v2008
        %v2010 = vpop.f32.mrb[0].mxu0
        %v2011 = vpop.f32.mrb[0].mxu0
        %2012 = vdwg.mxu0
        %2013 = vmatprep.subr.bf16.mxu0 %v1685
        %2014 = vmatpush1.bf16.msra.mxu0 %v1684
        %2015 = vmatprep.subr.bf16.mxu0 %v1687
        %2016 = vmatpush1.bf16.msra.mxu0 %v1686
        %2017 = vmatprep.subr.bf16.mxu0 %v1689
        %2018 = vmatpush1.bf16.msra.mxu0 %v1688
        %2019 = vmatprep.subr.bf16.mxu0 %v1691
        %2020 = vmatpush1.bf16.msra.mxu0 %v1690
        %2021 = vmatprep.subr.bf16.mxu0 %v1693
        %2022 = vmatpush1.bf16.msra.mxu0 %v1692
        %2023 = vmatprep.subr.bf16.mxu0 %v1695
        %2024 = vmatpush1.bf16.msra.mxu0 %v1694
        %2025 = vmatprep.subr.bf16.mxu0 %v1697
        %2026 = vmatpush1.bf16.msra.mxu0 %v1696
        %2027 = vmatprep.subr.bf16.mxu0 %v1699
        %2028 = vmatpush1.bf16.msra.mxu0 %v1698
        %2029 = vmatprep.subr.bf16.mxu0 %v1701
        %2030 = vmatpush1.bf16.msra.mxu0 %v1700
        %2031 = vmatprep.subr.bf16.mxu0 %v1703
        %2032 = vmatpush1.bf16.msra.mxu0 %v1702
        %2033 = vmatprep.subr.bf16.mxu0 %v1705
        %2034 = vmatpush1.bf16.msra.mxu0 %v1704
        %2035 = vmatprep.subr.bf16.mxu0 %v1707
        %2036 = vmatpush1.bf16.msra.mxu0 %v1706
        %2037 = vmatprep.subr.bf16.mxu0 %v1709
        %2038 = vmatpush1.bf16.msra.mxu0 %v1708
        %2039 = vmatprep.subr.bf16.mxu0 %v1711
        %2040 = vmatpush1.bf16.msra.mxu0 %v1710
        %2041 = vmatprep.subr.bf16.mxu0 %v1713
        %2042 = vmatpush1.bf16.msra.mxu0 %v1712
        %2043 = vmatprep.subr.bf16.mxu0 %v1715
        %2044 = vmatpush1.bf16.msra.mxu0 %v1714
        %2045 = vmatprep.mubr.bf16.mxu0 %v1138
        %2046 = vmatmul.mubr.bf16.gmra.mrb[0].mxu0 %v1136
        %v2047 = vpop.f32.mrb[0].mxu0
        %v2048 = vadd.f32 %v2007, %v2047
        %v2049 = vpop.f32.mrb[0].mxu0
        %v2050 = vadd.f32 %v2009, %v2049
        %v2051 = vpop.f32.mrb[0].mxu0
        %v2052 = vpop.f32.mrb[0].mxu0
        %2053 = vdwg.mxu0
        %2054 = vmatprep.subr.bf16.mxu0 %v1717
        %2055 = vmatpush1.bf16.msra.mxu0 %v1716
        %2056 = vmatprep.subr.bf16.mxu0 %v1719
        %2057 = vmatpush1.bf16.msra.mxu0 %v1718
        %2058 = vmatprep.subr.bf16.mxu0 %v1721
        %2059 = vmatpush1.bf16.msra.mxu0 %v1720
        %2060 = vmatprep.subr.bf16.mxu0 %v1723
        %2061 = vmatpush1.bf16.msra.mxu0 %v1722
        %2062 = vmatprep.subr.bf16.mxu0 %v1725
        %2063 = vmatpush1.bf16.msra.mxu0 %v1724
        %2064 = vmatprep.subr.bf16.mxu0 %v1727
        %2065 = vmatpush1.bf16.msra.mxu0 %v1726
        %2066 = vmatprep.subr.bf16.mxu0 %v1729
        %2067 = vmatpush1.bf16.msra.mxu0 %v1728
        %2068 = vmatprep.subr.bf16.mxu0 %v1731
        %2069 = vmatpush1.bf16.msra.mxu0 %v1730
        %2070 = vmatprep.subr.bf16.mxu0 %v1733
        %2071 = vmatpush1.bf16.msra.mxu0 %v1732
        %2072 = vmatprep.subr.bf16.mxu0 %v1735
        %2073 = vmatpush1.bf16.msra.mxu0 %v1734
        %2074 = vmatprep.subr.bf16.mxu0 %v1737
        %2075 = vmatpush1.bf16.msra.mxu0 %v1736
        %2076 = vmatprep.subr.bf16.mxu0 %v1739
        %2077 = vmatpush1.bf16.msra.mxu0 %v1738
        %2078 = vmatprep.subr.bf16.mxu0 %v1741
        %2079 = vmatpush1.bf16.msra.mxu0 %v1740
        %2080 = vmatprep.subr.bf16.mxu0 %v1743
        %2081 = vmatpush1.bf16.msra.mxu0 %v1742
        %2082 = vmatprep.subr.bf16.mxu0 %v1745
        %2083 = vmatpush1.bf16.msra.mxu0 %v1744
        %2084 = vmatprep.subr.bf16.mxu0 %v1747
        %2085 = vmatpush1.bf16.msra.mxu0 %v1746
        %2086 = vmatprep.mubr.bf16.mxu0 %v1135
        %2087 = vmatmul.mubr.bf16.gmra.mrb[0].mxu0 %v1121
        %v2088 = vpop.f32.mrb[0].mxu0
        %v2089 = vadd.f32 %v2048, %v2088
        %v2090 = vpop.f32.mrb[0].mxu0
        %v2091 = vadd.f32 %v2050, %v2090
        %v2092 = vpop.f32.mrb[0].mxu0
        %v2093 = vpop.f32.mrb[0].mxu0
        %2094 = vdwg.mxu0
        %2095 = vmatprep.subr.bf16.mxu0 %v1749
        %2096 = vmatpush1.bf16.msra.mxu0 %v1748
        %2097 = vmatprep.subr.bf16.mxu0 %v1751
        %2098 = vmatpush1.bf16.msra.mxu0 %v1750
        %2099 = vmatprep.subr.bf16.mxu0 %v1753
        %2100 = vmatpush1.bf16.msra.mxu0 %v1752
        %2101 = vmatprep.subr.bf16.mxu0 %v1755
        %2102 = vmatpush1.bf16.msra.mxu0 %v1754
        %2103 = vmatprep.subr.bf16.mxu0 %v1757
        %2104 = vmatpush1.bf16.msra.mxu0 %v1756
        %2105 = vmatprep.subr.bf16.mxu0 %v1759
        %2106 = vmatpush1.bf16.msra.mxu0 %v1758
        %2107 = vmatprep.subr.bf16.mxu0 %v1761
        %2108 = vmatpush1.bf16.msra.mxu0 %v1760
        %2109 = vmatprep.subr.bf16.mxu0 %v1763
        %2110 = vmatpush1.bf16.msra.mxu0 %v1762
        %2111 = vmatprep.subr.bf16.mxu0 %v1765
        %2112 = vmatpush1.bf16.msra.mxu0 %v1764
        %2113 = vmatprep.subr.bf16.mxu0 %v1767
        %2114 = vmatpush1.bf16.msra.mxu0 %v1766
        %2115 = vmatprep.subr.bf16.mxu0 %v1769
        %2116 = vmatpush1.bf16.msra.mxu0 %v1768
        %2117 = vmatprep.subr.bf16.mxu0 %v1771
        %2118 = vmatpush1.bf16.msra.mxu0 %v1770
        %2119 = vmatprep.subr.bf16.mxu0 %v1773
        %2120 = vmatpush1.bf16.msra.mxu0 %v1772
        %2121 = vmatprep.subr.bf16.mxu0 %v1775
        %2122 = vmatpush1.bf16.msra.mxu0 %v1774
        %2123 = vmatprep.subr.bf16.mxu0 %v1777
        %2124 = vmatpush1.bf16.msra.mxu0 %v1776
        %2125 = vmatprep.subr.bf16.mxu0 %v1779
        %2126 = vmatpush1.bf16.msra.mxu0 %v1778
        %2127 = vmatprep.mubr.bf16.mxu0 %v1139
        %2128 = vmatmul.mubr.bf16.gmra.mrb[0].mxu0 %v1137
        %v2129 = vpop.f32.mrb[0].mxu0
        %v2130 = vadd.f32 %v2089, %v2129
        %v2131 = vpop.f32.mrb[0].mxu0
        %v2132 = vadd.f32 %v2091, %v2131
        %v2133 = vpop.f32.mrb[0].mxu0
        %v2134 = vpop.f32.mrb[0].mxu0
        %2135 = vdwg.mxu0
        %2136 = vmatprep.subr.bf16.mxu0 %v1781
        %2137 = vmatpush1.bf16.msra.mxu0 %v1780
        %2138 = vmatprep.subr.bf16.mxu0 %v1783
        %2139 = vmatpush1.bf16.msra.mxu0 %v1782
        %2140 = vmatprep.subr.bf16.mxu0 %v1785
        %2141 = vmatpush1.bf16.msra.mxu0 %v1784
        %2142 = vmatprep.subr.bf16.mxu0 %v1787
        %2143 = vmatpush1.bf16.msra.mxu0 %v1786
        %2144 = vmatprep.subr.bf16.mxu0 %v1789
        %2145 = vmatpush1.bf16.msra.mxu0 %v1788
        %2146 = vmatprep.subr.bf16.mxu0 %v1791
        %2147 = vmatpush1.bf16.msra.mxu0 %v1790
        %2148 = vmatprep.subr.bf16.mxu0 %v1793
        %2149 = vmatpush1.bf16.msra.mxu0 %v1792
        %2150 = vmatprep.subr.bf16.mxu0 %v1795
        %2151 = vmatpush1.bf16.msra.mxu0 %v1794
        %2152 = vmatprep.subr.bf16.mxu0 %v1797
        %2153 = vmatpush1.bf16.msra.mxu0 %v1796
        %2154 = vmatprep.subr.bf16.mxu0 %v1799
        %2155 = vmatpush1.bf16.msra.mxu0 %v1798
        %2156 = vmatprep.subr.bf16.mxu0 %v1801
        %2157 = vmatpush1.bf16.msra.mxu0 %v1800
        %2158 = vmatprep.subr.bf16.mxu0 %v1803
        %2159 = vmatpush1.bf16.msra.mxu0 %v1802
        %2160 = vmatprep.subr.bf16.mxu0 %v1805
        %2161 = vmatpush1.bf16.msra.mxu0 %v1804
        %2162 = vmatprep.subr.bf16.mxu0 %v1807
        %2163 = vmatpush1.bf16.msra.mxu0 %v1806
        %2164 = vmatprep.subr.bf16.mxu0 %v1809
        %2165 = vmatpush1.bf16.msra.mxu0 %v1808
        %2166 = vmatprep.subr.bf16.mxu0 %v1811
        %2167 = vmatpush1.bf16.msra.mxu0 %v1810
        %2168 = vmatprep.mubr.bf16.mxu0 %v1161
        %2169 = vmatmul.mubr.bf16.gmra.mrb[0].mxu0 %v1154
        %v2170 = vpop.f32.mrb[0].mxu0
        %v2171 = vadd.f32 %v2130, %v2170
        %v2172 = vpop.f32.mrb[0].mxu0
        %v2173 = vadd.f32 %v2132, %v2172
        %v2174 = vpop.f32.mrb[0].mxu0
        %v2175 = vpop.f32.mrb[0].mxu0
        %2176 = vdwg.mxu0
        %v2179 = vcombine.low %v2171, %v2173
        %v2181 = vunpack.c.l.s4 1983009808
        %v2182 = vunpack.c.0.s8 %v2181
        %v2183 = vlaneseq
        %v2184 = vshrl.u32 %v2183, 7
        %v2185 = vsub.s32 %v2182, %v2184
        %v2186 = vrot.slane %v2179, %v2185
        %v2188 = vadd.f32 %v926, %v2186
        %2189 = vst [vmem:[#allocation2] sm:$0xf] %v2188
        %p2190 = scmp.eq.s32.totalorder %s24, 4
        // Predicated region
        $region75: #{image_pair_encoder_v2.7} parent=65 // pred_check
          %p2191 = pneg %p2190
        $region76: #{image_pair_encoder_v2.7} parent=65 // pred_check_branch
          %2193 = sbr.rel (%p2191) target = $region78
        $region77: #{image_pair_encoder_v2.7} parent=65 // pred_region
          %v2194 = vld [vmem:[#allocation2] sm:$0xf]
          %v2195 = vld [vmem:[%s918] sm:$0x3]
          %v2197 = vlaneseq
          %v2198 = vshrl.u32 %v2197, 7
          %v2199 = vsub.s32 0, %v2198
          %v2200 = vrot.slane %v2195, %v2199
          %v2201 = vlaneseq
          %v2202 = vshrl.u32 %v2201, 7
          %v2203 = vsub.s32 1, %v2202
          %v2204 = vrot.slane %v2195, %v2203
          %v2205 = vcombine.low %v2200, %v2204
          %v2207 = vunpack.c.l.s4 1983009808
          %v2208 = vunpack.c.0.s8 %v2207
          %v2209 = vlaneseq
          %v2210 = vshrl.u32 %v2209, 7
          %v2211 = vsub.s32 %v2208, %v2210
          %v2212 = vrot.slane %v2205, %v2211
          %v2214 = vadd.f32 %v2194, %v2212
          %v2215 = vmax.f32 %v2214, 0.0
          %2216 = vst [vmem:[%s903] sm:$0xf] %v2215
        $region78: #{image_pair_encoder_v2.7} parent=65 // pred_fallthru
          _
        %s2217 = sand.u32 %s128, 1
        %s2218 = scalar_lea.sflag [#allocation5], %s2217
        %s2219 = sand.u32 %s128, 1
        %s2220 = smul.addr %s2219, 4
        %s2221 = scalar_lea.vmem [#allocation4], %s2220
        // Predicated region
        $region79: #{image_pair_encoder_v2.7} parent=65 // pred_check
          %p2222 = pneg %p138
        $region80: #{image_pair_encoder_v2.7} parent=65 // pred_check_branch
          %2224 = sbr.rel (%p2222) target = $region82
        $region81: #{image_pair_encoder_v2.7} parent=65 // pred_region
          %s2225 = smul.u32 2, %s23
          %s2227 = ssub.s32 64, 64
          %2228 = vsyncadd %s2218, %s2227
          %s2229 = smul.addr %s22, 4
          %s2230 = sadd.s32 %s2225, %s2229
          %s2231 = smul.addr %s2230, 32
          %s2232 = scalar_lea.hbm %s3, %s2231
          %s2234 = sshll.u32 %s2221, 4
          %s2235 = int_to_ptr.vmem [resolvable:$true] %s2234
          %2237 = dma.vmem_to_hbm [thread:$0]  %s2235, 64, %s2232, %s2218
        $region82: #{image_pair_encoder_v2.7} parent=65 // pred_fallthru
          _
      $region66: #{image_pair_encoder_v2.7} parent=5 // pred_fallthru
        _
      %p2238 = scmp.le.s32.totalorder 2, %s12
      // Predicated region
      $region83: #{image_pair_encoder_v2.7} parent=5 // pred_check
        %p2239 = pneg %p2238
      $region84: #{image_pair_encoder_v2.7} parent=5 // pred_check_branch
        %2241 = sbr.rel (%p2239) target = $region86
      $region85: #{image_pair_encoder_v2.7} parent=5 // pred_region
        %s2242 = ssub.s32 %s12, 2
        // Predicated region
        $region87: #{image_pair_encoder_v2.7} parent=85 // pred_check
          %p2243 = pneg %p144
        $region88: #{image_pair_encoder_v2.7} parent=85 // pred_check_branch
          %2245 = sbr.rel (%p2243) target = $region90
        $region89: #{image_pair_encoder_v2.7} parent=85 // pred_region
          %s2246 = sand.u32 %s129, 1
          %s2247 = scalar_lea.sflag [#allocation5], %s2246
          %s2248 = sand.u32 %s129, 1
          %s2249 = smul.addr %s2248, 4
          %s2250 = scalar_lea.vmem [#allocation4], %s2249
          %2251 = dma.done %s2247, 64
        $region90: #{image_pair_encoder_v2.7} parent=85 // pred_fallthru
          _
      $region86: #{image_pair_encoder_v2.7} parent=5 // pred_fallthru
        _
    $region6: #{image_pair_encoder_v2.7} parent=1 // loop_footer
      %s16 = sadd.s32 1, %s12
    $region7: #{image_pair_encoder_v2.7} parent=1 // loop_footer_branch
      %11 = sbr.rel target = $region3
    $region8: #{image_pair_encoder_v2.7} parent=1 // loop_exit
      _
    %2252 = vsyncpa [#allocation5], 1
    %s2253 = scalar_lea.sflag [#allocation5], 1
    %2254 = vsyncpa %s2253, 1

// kernel: image_pair_encoder_v2.6
$region0: #{image_pair_encoder_v2.6}
  #allocation0 [shape = 'u32[]', space=smem, size = 0x4, offset = 0x4, fixed_abs, tag = 'smem constant byte address 0x4 - core index']
  #allocation1 [shape = 'u32[144,128]{1,0:T(1,128)}', space=vmem, size = 0x12000, scoped, tag = 'internal scratch']
  #allocation2 [shape = 'f32[50,256]{1,0:T(8,128)}', space=vmem, size = 0xe000, scoped, tag = 'scratch operand']
  %s0 = inlined_call_operand.vmem [shape: bf16[50,3200], index: 0, kind: input, shape index: {}]
  %s1 = inlined_call_operand.vmem [shape: bf16[3200,256], index: 1, kind: input, shape index: {}]
  %s2 = inlined_call_operand.vmem [shape: f32[1,256], index: 2, kind: input, shape index: {}]
  %s3 = inlined_call_operand.vmem [shape: bf16[50,256], index: 3, kind: output, shape index: {}]
  %s4 = sld [smem:[#allocation0]]
  $region79: #{image_pair_encoder_v2.6} parent=0
    _
  %s6 = ssub.s32 1, %s4
  %s7 = scalar_select 0, %s6, %s4
  $region1: #{image_pair_encoder_v2.6} parent=0
    #allocation3 [shape = 'u8[143360]{0}', space=vmem, size = 0x23000, scoped, tag = 'input window, operand 0']
    loop: start=0, step=1, limit=7
    $region2: #{image_pair_encoder_v2.6} parent=1 // loop_pre_header
      _
    $region3: #{image_pair_encoder_v2.6} parent=1 // loop_header
      %s9 = sphi 0, %s13
      %p10 = scmp.ge.s32.totalorder %s9, 7
      %s16 = sphi 0, %s35
      %s17 = sphi 0, %s31
      %s18 = sphi 0, %s27
      %s19 = sphi 0, %s16
      %s20 = sphi 0, %s17
      %s21 = sphi 0, %s18
      %s22 = sphi 0, %s19
      %s23 = sphi 0, %s20
      %s24 = sphi 0, %s21
      %s40 = sphi 0, %s42
      %s43 = sphi 0, %s40
      %s44 = sphi 0, %s43
      %s60 = sphi 0, %s44
      %s68 = sphi 0, %s70
      %s71 = sphi 0, %s68
      %s72 = sphi 0, %s71
      %s88 = sphi 0, %s72
      %s94 = sphi 0, %s96
      %s97 = sphi 0, %s94
      %s98 = sphi 0, %s97
      %s114 = sphi 0, %s98
      %s122 = sphi 0, %s124
      %s125 = sphi 0, %s122
      %s126 = sphi 0, %s125
      %s142 = sphi 0, %s126
    $region4: #{image_pair_encoder_v2.6} parent=1 // loop_header_branch
      %12 = sbr.rel (%p10) target = $region8
    $region5: #{image_pair_encoder_v2.6} parent=1 // loop_body
      %s14 = ssub.s32 %s9, 1
      %s15 = ssub.s32 %s9, 2
      %s25 = sadd.s32 1, %s18
      %p26 = scmp.ge.s32.totalorder %s25, 5
      %s27 = scalar_select %p26, 0, %s25
      %s28 = sadd.s32 1, %s17
      %s29 = scalar_select %p26, %s28, %s17
      %p30 = scmp.ge.s32.totalorder %s29, 1
      %s31 = scalar_select %p30, 0, %s29
      %s32 = sadd.s32 1, %s16
      %s33 = scalar_select %p30, %s32, %s16
      %p34 = scmp.ge.s32.totalorder %s33, 1
      %s35 = scalar_select %p34, 0, %s33
      %s36 = ssub.s32 %s16, %s35
      %s37 = ssub.s32 %s18, %s27
      %s38 = sor.u32 %s36, %s37
      %p39 = scmp.eq.s32.totalorder %s38, 0
      %s41 = sadd.s32 %s40, 1
      %s42 = scalar_select %p39, %s40, %s41
      %p45 = pneg %p39
      %p46 = scmp.eq.s32.totalorder %s9, 4
      %p47 = por %p45, %p46
      %p48 = scmp.ne.s32.totalorder %s40, %s43
      %p49 = scmp.eq.s32.totalorder %s9, 0
      %p50 = por %p48, %p49
      %p51 = scmp.ne.s32.totalorder %s40, %s43
      %p52 = scmp.eq.s32.totalorder %s14, 4
      %p53 = por %p51, %p52
      %p54 = scmp.ne.s32.totalorder %s43, %s44
      %p55 = scmp.eq.s32.totalorder %s14, 0
      %p56 = por %p54, %p55
      %p57 = scmp.ne.s32.totalorder %s43, %s44
      %p58 = scmp.eq.s32.totalorder %s15, 4
      %p59 = por %p57, %p58
      %p61 = scmp.ne.s32.totalorder %s44, %s60
      %p62 = scmp.eq.s32.totalorder %s15, 0
      %p63 = por %p61, %p62
      %s64 = ssub.s32 %s18, %s27
      %s65 = ssub.s32 %s17, %s31
      %s66 = sor.u32 %s64, %s65
      %p67 = scmp.eq.s32.totalorder %s66, 0
      %s69 = sadd.s32 %s68, 1
      %s70 = scalar_select %p67, %s68, %s69
      %p73 = pneg %p67
      %p74 = scmp.eq.s32.totalorder %s9, 4
      %p75 = por %p73, %p74
      %p76 = scmp.ne.s32.totalorder %s68, %s71
      %p77 = scmp.eq.s32.totalorder %s9, 0
      %p78 = por %p76, %p77
      %p79 = scmp.ne.s32.totalorder %s68, %s71
      %p80 = scmp.eq.s32.totalorder %s14, 4
      %p81 = por %p79, %p80
      %p82 = scmp.ne.s32.totalorder %s71, %s72
      %p83 = scmp.eq.s32.totalorder %s14, 0
      %p84 = por %p82, %p83
      %p85 = scmp.ne.s32.totalorder %s71, %s72
      %p86 = scmp.eq.s32.totalorder %s15, 4
      %p87 = por %p85, %p86
      %p89 = scmp.ne.s32.totalorder %s72, %s88
      %p90 = scmp.eq.s32.totalorder %s15, 0
      %p91 = por %p89, %p90
      %s92 = ssub.s32 %s17, %s31
      %p93 = scmp.eq.s32.totalorder %s92, 0
      %s95 = sadd.s32 %s94, 1
      %s96 = scalar_select %p93, %s94, %s95
      %p99 = pneg %p93
      %p100 = scmp.eq.s32.totalorder %s9, 4
      %p101 = por %p99, %p100
      %p102 = scmp.ne.s32.totalorder %s94, %s97
      %p103 = scmp.eq.s32.totalorder %s9, 0
      %p104 = por %p102, %p103
      %p105 = scmp.ne.s32.totalorder %s94, %s97
      %p106 = scmp.eq.s32.totalorder %s14, 4
      %p107 = por %p105, %p106
      %p108 = scmp.ne.s32.totalorder %s97, %s98
      %p109 = scmp.eq.s32.totalorder %s14, 0
      %p110 = por %p108, %p109
      %p111 = scmp.ne.s32.totalorder %s97, %s98
      %p112 = scmp.eq.s32.totalorder %s15, 4
      %p113 = por %p111, %p112
      %p115 = scmp.ne.s32.totalorder %s98, %s114
      %p116 = scmp.eq.s32.totalorder %s15, 0
      %p117 = por %p115, %p116
      %s118 = ssub.s32 %s16, %s35
      %s119 = ssub.s32 %s17, %s31
      %s120 = sor.u32 %s118, %s119
      %p121 = scmp.eq.s32.totalorder %s120, 0
      %s123 = sadd.s32 %s122, 1
      %s124 = scalar_select %p121, %s122, %s123
      %p127 = pneg %p121
      %p128 = scmp.eq.s32.totalorder %s9, 4
      %p129 = por %p127, %p128
      %p130 = scmp.ne.s32.totalorder %s122, %s125
      %p131 = scmp.eq.s32.totalorder %s9, 0
      %p132 = por %p130, %p131
      %p133 = scmp.ne.s32.totalorder %s122, %s125
      %p134 = scmp.eq.s32.totalorder %s14, 4
      %p135 = por %p133, %p134
      %p136 = scmp.ne.s32.totalorder %s125, %s126
      %p137 = scmp.eq.s32.totalorder %s14, 0
      %p138 = por %p136, %p137
      %p139 = scmp.ne.s32.totalorder %s125, %s126
      %p140 = scmp.eq.s32.totalorder %s15, 4
      %p141 = por %p139, %p140
      %p143 = scmp.ne.s32.totalorder %s126, %s142
      %p144 = scmp.eq.s32.totalorder %s15, 0
      %p145 = por %p143, %p144
      %p146 = scmp.le.s32.totalorder 1, %s9
      %p147 = scmp.lt.s32.totalorder %s9, 6
      %p148 = pnand %p146, %p147
      %p149 = pneg %p148
      // Predicated region
      $region9: #{image_pair_encoder_v2.6} parent=5 // pred_check
        _
      $region10: #{image_pair_encoder_v2.6} parent=5 // pred_check_branch
        %151 = sbr.rel (%p148) target = $region12
      $region11: #{image_pair_encoder_v2.6} parent=5 // pred_region
        %s152 = ssub.s32 %s9, 1
        // Predicated region
        $region13: #{image_pair_encoder_v2.6} parent=11 // pred_check
          %p153 = pneg %p110
        $region14: #{image_pair_encoder_v2.6} parent=11 // pred_check_branch
          %155 = sbr.rel (%p153) target = $region16
        $region15: #{image_pair_encoder_v2.6} parent=11 // pred_region
          %s156 = smul.u32 2, %s20
          %p157 = scmp.lt.s32.totalorder %s156, 1
          %s158 = scalar_select %p157, %s156, 1
          %s159 = scalar_lea.vmem %s2, %s158
          %s160 = smul.u32 2, %s20
        $region16: #{image_pair_encoder_v2.6} parent=11 // pred_fallthru
          _
      $region12: #{image_pair_encoder_v2.6} parent=5 // pred_fallthru
        _
      %p161 = scmp.lt.s32.totalorder %s9, 5
      // Predicated region
      $region17: #{image_pair_encoder_v2.6} parent=5 // pred_check
        %p162 = pneg %p161
      $region18: #{image_pair_encoder_v2.6} parent=5 // pred_check_branch
        %164 = sbr.rel (%p162) target = $region20
      $region19: #{image_pair_encoder_v2.6} parent=5 // pred_region
        // Predicated region
        $region21: #{image_pair_encoder_v2.6} parent=19 // pred_check
          %p165 = pneg %p50
        $region22: #{image_pair_encoder_v2.6} parent=19 // pred_check_branch
          %167 = sbr.rel (%p165) target = $region24
        $region23: #{image_pair_encoder_v2.6} parent=19 // pred_region
          %s168 = sand.u32 %s40, 1
          %s169 = sand.u32 %s40, 1
          %s170 = smul.addr %s169, 140
          %s171 = scalar_lea.vmem [#allocation3], %s170
          %s172 = smul.u32 7, %s16
          %s173 = smul.u32 5, %s18
          %s174 = smul.addr %s172, 25
          %s175 = sadd.s32 %s173, %s174
          %s176 = smul.addr %s175, 4
          %s177 = scalar_lea.vmem %s0, %s176
          // Predicated region
          $region25: #{image_pair_encoder_v2.6} parent=23 // pred_check
            _
          $region26: #{image_pair_encoder_v2.6} parent=23 // pred_check_branch
            %179 = sbr.rel (0) target = $region28
          $region27: #{image_pair_encoder_v2.6} parent=23 // pred_region
            // Predicated region
            $region29: #{image_pair_encoder_v2.6} parent=27 // pred_check
              _
            $region30: #{image_pair_encoder_v2.6} parent=27 // pred_check_branch
              %181 = sbr.rel (0) target = $region32
            $region31: #{image_pair_encoder_v2.6} parent=27 // pred_region
              %s182 = scalar_lea.vmem %s177, 16
              %s183 = scalar_lea.vmem %s171, 16 [#allocation3]
              loop: start=0, step=1, limit=1
              $region33: #{image_pair_encoder_v2.6} parent=31 // loop_pre_header
                _
              $region34: #{image_pair_encoder_v2.6} parent=31 // loop_header
                %s185 = sphi 0, %s189
                %p186 = scmp.ge.s32.totalorder %s185, 1
                %s190 = sphi %s177, %s177
                %s191 = sphi %s171, %s171
              $region35: #{image_pair_encoder_v2.6} parent=31 // loop_header_branch
                %188 = sbr.rel (%p186) target = $region39
              $region36: #{image_pair_encoder_v2.6} parent=31 // loop_body
                %v192 = vld [vmem:[%s190] sm:$0xff]
                %193 = vst [vmem:[%s191] sm:$0xff] %v192
                %v194 = vld [vmem:[%s190 + $0x8] sm:$0xff]
                %195 = vst [vmem:[%s191 + $0x8] sm:$0xff] %v194
                %v196 = vld [vmem:[%s190 + $0x64] sm:$0xff]
                %197 = vst [vmem:[%s191 + $0x14] sm:$0xff] %v196
                %v198 = vld [vmem:[%s190 + $0x6c] sm:$0xff]
                %199 = vst [vmem:[%s191 + $0x1c] sm:$0xff] %v198
                %v200 = vld [vmem:[%s190 + $0xc8] sm:$0xff]
                %201 = vst [vmem:[%s191 + $0x28] sm:$0xff] %v200
                %v202 = vld [vmem:[%s190 + $0xd0] sm:$0xff]
                %203 = vst [vmem:[%s191 + $0x30] sm:$0xff] %v202
                %v204 = vld [vmem:[%s190 + $0x12c] sm:$0xff]
                %205 = vst [vmem:[%s191 + $0x3c] sm:$0xff] %v204
                %v206 = vld [vmem:[%s190 + $0x134] sm:$0xff]
                %207 = vst [vmem:[%s191 + $0x44] sm:$0xff] %v206
                %v208 = vld [vmem:[%s190 + $0x190] sm:$0xff]
                %209 = vst [vmem:[%s191 + $0x50] sm:$0xff] %v208
                %v210 = vld [vmem:[%s190 + $0x198] sm:$0xff]
                %211 = vst [vmem:[%s191 + $0x58] sm:$0xff] %v210
                %v212 = vld [vmem:[%s190 + $0x1f4] sm:$0xff]
                %213 = vst [vmem:[%s191 + $0x64] sm:$0xff] %v212
                %v214 = vld [vmem:[%s190 + $0x1fc] sm:$0xff]
                %215 = vst [vmem:[%s191 + $0x6c] sm:$0xff] %v214
                %v216 = vld [vmem:[%s190 + $0x258] sm:$0xff]
                %217 = vst [vmem:[%s191 + $0x78] sm:$0xff] %v216
                %v218 = vld [vmem:[%s190 + $0x260] sm:$0xff]
                %219 = vst [vmem:[%s191 + $0x80] sm:$0xff] %v218
              $region37: #{image_pair_encoder_v2.6} parent=31 // loop_footer
                %s189 = sadd.s32 1, %s185
              $region38: #{image_pair_encoder_v2.6} parent=31 // loop_footer_branch
                %184 = sbr.rel target = $region34
              $region39: #{image_pair_encoder_v2.6} parent=31 // loop_exit
                _
              loop: start=0, step=1, limit=1
              $region40: #{image_pair_encoder_v2.6} parent=31 // loop_pre_header
                _
              $region41: #{image_pair_encoder_v2.6} parent=31 // loop_header
                %s222 = sphi 0, %s226
                %p223 = scmp.ge.s32.totalorder %s222, 1
                %s227 = sphi %s182, %s182
                %s228 = sphi %s183, %s183
              $region42: #{image_pair_encoder_v2.6} parent=31 // loop_header_branch
                %225 = sbr.rel (%p223) target = $region46
              $region43: #{image_pair_encoder_v2.6} parent=31 // loop_body
                %v229 = vld [vmem:[%s227] sm:$0xf]
                %230 = vst [vmem:[%s228] sm:$0xf] %v229
                %v231 = vld [vmem:[%s227 + $0x64] sm:$0xf]
                %232 = vst [vmem:[%s228 + $0x14] sm:$0xf] %v231
                %v233 = vld [vmem:[%s227 + $0xc8] sm:$0xf]
                %234 = vst [vmem:[%s228 + $0x28] sm:$0xf] %v233
                %v235 = vld [vmem:[%s227 + $0x12c] sm:$0xf]
                %236 = vst [vmem:[%s228 + $0x3c] sm:$0xf] %v235
                %v237 = vld [vmem:[%s227 + $0x190] sm:$0xf]
                %238 = vst [vmem:[%s228 + $0x50] sm:$0xf] %v237
                %v239 = vld [vmem:[%s227 + $0x1f4] sm:$0xf]
                %240 = vst [vmem:[%s228 + $0x64] sm:$0xf] %v239
                %v241 = vld [vmem:[%s227 + $0x258] sm:$0xf]
                %242 = vst [vmem:[%s228 + $0x78] sm:$0xf] %v241
              $region44: #{image_pair_encoder_v2.6} parent=31 // loop_footer
                %s226 = sadd.s32 1, %s222
              $region45: #{image_pair_encoder_v2.6} parent=31 // loop_footer_branch
                %221 = sbr.rel target = $region41
              $region46: #{image_pair_encoder_v2.6} parent=31 // loop_exit
                _
            $region32: #{image_pair_encoder_v2.6} parent=27 // pred_fallthru
              _
          $region28: #{image_pair_encoder_v2.6} parent=23 // pred_fallthru
            _
          %243 = vnop
        $region24: #{image_pair_encoder_v2.6} parent=19 // pred_fallthru
          _
        // Predicated region
        $region47: #{image_pair_encoder_v2.6} parent=19 // pred_check
          %p244 = pneg %p78
        $region48: #{image_pair_encoder_v2.6} parent=19 // pred_check_branch
          %246 = sbr.rel (%p244) target = $region50
        $region49: #{image_pair_encoder_v2.6} parent=19 // pred_region
          %s247 = smul.u32 80, %s18
          %s248 = smul.u32 2, %s17
          %p249 = scmp.lt.s32.totalorder %s247, 399
          %s250 = scalar_select %p249, %s247, 399
          %p251 = scmp.lt.s32.totalorder %s248, 1
          %s252 = scalar_select %p251, %s248, 1
          %s253 = smul.addr %s250, 2
          %s254 = sadd.s32 %s252, %s253
          %s255 = smul.addr %s254, 4
          %s256 = scalar_lea.vmem %s1, %s255
          %s257 = smul.u32 80, %s18
          %s258 = smul.u32 2, %s17
        $region50: #{image_pair_encoder_v2.6} parent=19 // pred_fallthru
          _
      $region20: #{image_pair_encoder_v2.6} parent=5 // pred_fallthru
        _
      %p259 = scmp.le.s32.totalorder 1, %s9
      %p260 = scmp.lt.s32.totalorder %s9, 6
      %p261 = pnand %p259, %p260
      %p262 = pneg %p261
      // Predicated region
      $region51: #{image_pair_encoder_v2.6} parent=5 // pred_check
        _
      $region52: #{image_pair_encoder_v2.6} parent=5 // pred_check_branch
        %264 = sbr.rel (%p261) target = $region54
      $region53: #{image_pair_encoder_v2.6} parent=5 // pred_region
        %s265 = ssub.s32 %s9, 1
        %s266 = sand.u32 %s43, 1
        %s267 = sand.u32 %s43, 1
        %s268 = smul.addr %s267, 140
        %s269 = scalar_lea.vmem [#allocation3], %s268
        // Predicated region
        $region55: #{image_pair_encoder_v2.6} parent=53 // pred_check
          %p270 = pneg %p56
        $region56: #{image_pair_encoder_v2.6} parent=53 // pred_check_branch
          %272 = sbr.rel (%p270) target = $region58
        $region57: #{image_pair_encoder_v2.6} parent=53 // pred_region
          _
        $region58: #{image_pair_encoder_v2.6} parent=53 // pred_fallthru
          _
        %s273 = sand.u32 %s43, 1
        %s274 = sand.u32 %s43, 1
        %s275 = smul.addr %s274, 140
        %s276 = scalar_lea.vmem [#allocation3], %s275
        %p277 = pneg %p56
        %p278 = pneg %p53
        %s279 = smul.u32 80, %s21
        %s280 = smul.u32 2, %s20
        %p281 = scmp.lt.s32.totalorder %s279, 399
        %s282 = scalar_select %p281, %s279, 399
        %p283 = scmp.lt.s32.totalorder %s280, 1
        %s284 = scalar_select %p283, %s280, 1
        %s285 = smul.addr %s282, 2
        %s286 = sadd.s32 %s284, %s285
        %s287 = smul.addr %s286, 4
        %s288 = scalar_lea.vmem %s1, %s287
        %p289 = pneg %p84
        %p290 = pneg %p81
        %s291 = smul.u32 2, %s20
        %p292 = scmp.lt.s32.totalorder %s291, 1
        %s293 = scalar_select %p292, %s291, 1
        %s294 = scalar_lea.vmem %s2, %s293
        %p295 = pneg %p110
        %p296 = pneg %p107
        %p297 = pneg %p138
        %p298 = pneg %p135
        %s299 = smul.u32 7, %s19
        %s300 = smul.u32 2, %s20
        %p301 = scmp.lt.s32.totalorder %s299, 6
        %s302 = scalar_select %p301, %s299, 6
        %p303 = scmp.lt.s32.totalorder %s300, 1
        %s304 = scalar_select %p303, %s300, 1
        %s305 = smul.addr %s302, 2
        %s306 = sadd.s32 %s304, %s305
        %s307 = smul.addr %s306, 4
        %s308 = scalar_lea.vmem %s3, %s307
        %s309 = smul.u32 7, %s19
        %s310 = smul.u32 5, %s21
        %s311 = smul.u32 80, %s21
        %s312 = smul.u32 2, %s20
        %p313 = scmp.lt.s32.totalorder %s311, 399
        %s314 = scalar_select %p313, %s311, 399
        %p315 = scmp.lt.s32.totalorder %s312, 1
        %s316 = scalar_select %p315, %s312, 1
        %s317 = smul.addr %s314, 2
        %s318 = sadd.s32 %s316, %s317
        %s319 = smul.addr %s318, 4
        %s320 = scalar_lea.vmem %s1, %s319
        %s321 = smul.u32 80, %s21
        %s322 = smul.u32 2, %s20
        %s323 = smul.u32 2, %s20
        %p324 = scmp.lt.s32.totalorder %s323, 1
        %s325 = scalar_select %p324, %s323, 1
        %s326 = scalar_lea.vmem %s2, %s325
        %s327 = smul.u32 2, %s20
        %s328 = smul.u32 7, %s19
        %s329 = smul.u32 2, %s20
        %p330 = scmp.lt.s32.totalorder %s328, 6
        %s331 = scalar_select %p330, %s328, 6
        %p332 = scmp.lt.s32.totalorder %s329, 1
        %s333 = scalar_select %p332, %s329, 1
        %s334 = smul.addr %s331, 2
        %s335 = sadd.s32 %s333, %s334
        %s336 = smul.addr %s335, 4
        %s337 = scalar_lea.vmem %s3, %s336
        %s338 = smul.u32 7, %s19
        %s339 = smul.u32 2, %s20
        %p341 = scmp.eq.s32.totalorder %s21, 0
        // Predicated region
        $region59: #{image_pair_encoder_v2.6} parent=53 // pred_check
          %p342 = pneg %p341
        $region60: #{image_pair_encoder_v2.6} parent=53 // pred_check_branch
          %344 = sbr.rel (%p342) target = $region62
        $region61: #{image_pair_encoder_v2.6} parent=53 // pred_region
          %345 = vst [vmem:[#allocation2] sm:$0xff] 0.0
          %346 = vst [vmem:[#allocation2 + $0x8] sm:$0xff] 0.0
          %347 = vst [vmem:[#allocation2 + $0x10] sm:$0xff] 0.0
          %348 = vst [vmem:[#allocation2 + $0x18] sm:$0xff] 0.0
          %349 = vst [vmem:[#allocation2 + $0x20] sm:$0xff] 0.0
          %350 = vst [vmem:[#allocation2 + $0x28] sm:$0xff] 0.0
          %351 = vst [vmem:[#allocation2 + $0x30] sm:$0xff] 0.0
          %352 = vst [vmem:[#allocation2 + $0x38] sm:$0xff] 0.0
          %353 = vst [vmem:[#allocation2 + $0x40] sm:$0xff] 0.0
          %354 = vst [vmem:[#allocation2 + $0x48] sm:$0xff] 0.0
          %355 = vst [vmem:[#allocation2 + $0x50] sm:$0xff] 0.0
          %356 = vst [vmem:[#allocation2 + $0x58] sm:$0xff] 0.0
          %357 = vst [vmem:[#allocation2 + $0x60] sm:$0x3] 0.0
          %358 = vst [vmem:[#allocation2 + $0x68] sm:$0x3] 0.0
        $region62: #{image_pair_encoder_v2.6} parent=53 // pred_fallthru
          _
        %v359 = vld [vmem:[#allocation2] sm:$0xff]
        %v360 = vld [vmem:[#allocation2 + $0x8] sm:$0xff]
        %v361 = vld [vmem:[#allocation2 + $0x10] sm:$0xff]
        %v362 = vld [vmem:[#allocation2 + $0x18] sm:$0xff]
        %v363 = vld [vmem:[#allocation2 + $0x20] sm:$0xff]
        %v364 = vld [vmem:[#allocation2 + $0x28] sm:$0xff]
        %v365 = vld [vmem:[#allocation2 + $0x30] sm:$0xff]
        %v366 = vld [vmem:[#allocation2 + $0x38] sm:$0xff]
        %v367 = vld [vmem:[#allocation2 + $0x40] sm:$0xff]
        %v368 = vld [vmem:[#allocation2 + $0x48] sm:$0xff]
        %v369 = vld [vmem:[#allocation2 + $0x50] sm:$0xff]
        %v370 = vld [vmem:[#allocation2 + $0x58] sm:$0xff]
        %v371 = vld [vmem:[#allocation2 + $0x60] sm:$0x3]
        %v372 = vld [vmem:[#allocation2 + $0x68] sm:$0x3]
        %v373 = vld [vmem:[%s269] sm:$0xff]
        %v374 = vld [vmem:[%s269 + $0x8] sm:$0xff]
        %v375 = vld [vmem:[%s269 + $0x10] sm:$0xf]
        %v376 = vld [vmem:[%s269 + $0x14] sm:$0xff]
        %v377 = vld [vmem:[%s269 + $0x1c] sm:$0xff]
        %v378 = vld [vmem:[%s269 + $0x24] sm:$0xf]
        %v379 = vld [vmem:[%s269 + $0x28] sm:$0xff]
        %v380 = vld [vmem:[%s269 + $0x30] sm:$0xff]
        %v381 = vld [vmem:[%s269 + $0x38] sm:$0xf]
        %v382 = vld [vmem:[%s269 + $0x3c] sm:$0xff]
        %v383 = vld [vmem:[%s269 + $0x44] sm:$0xff]
        %v384 = vld [vmem:[%s269 + $0x4c] sm:$0xf]
        %v385 = vld [vmem:[%s269 + $0x50] sm:$0xff]
        %v386 = vld [vmem:[%s269 + $0x58] sm:$0xff]
        %v387 = vld [vmem:[%s269 + $0x60] sm:$0xf]
        %v388 = vld [vmem:[%s269 + $0x64] sm:$0xff]
        %v389 = vld [vmem:[%s269 + $0x6c] sm:$0xff]
        %v390 = vld [vmem:[%s269 + $0x74] sm:$0xf]
        %v391 = vld [vmem:[%s269 + $0x78] sm:$0x11]
        %v392 = vld [vmem:[%s269 + $0x80] sm:$0x11]
        %v393 = vld [vmem:[%s269 + $0x88] sm:$0x1]
        %v394 = vld [vmem:[%s320] sm:$0xff]
        %v395 = vld [vmem:[%s320 + $0x8] sm:$0xff]
        %v396 = vld [vmem:[%s320 + $0x10] sm:$0xff]
        %v397 = vld [vmem:[%s320 + $0x18] sm:$0xff]
        %v398 = vld [vmem:[%s320 + $0x20] sm:$0xff]
        %v399 = vld [vmem:[%s320 + $0x28] sm:$0xff]
        %v400 = vld [vmem:[%s320 + $0x30] sm:$0xff]
        %v401 = vld [vmem:[%s320 + $0x38] sm:$0xff]
        %v402 = vld [vmem:[%s320 + $0x40] sm:$0xff]
        %v403 = vld [vmem:[%s320 + $0x48] sm:$0xff]
        %v404 = vld [vmem:[%s320 + $0x50] sm:$0xff]
        %v405 = vld [vmem:[%s320 + $0x58] sm:$0xff]
        %v406 = vld [vmem:[%s320 + $0x60] sm:$0xff]
        %v407 = vld [vmem:[%s320 + $0x68] sm:$0xff]
        %v408 = vld [vmem:[%s320 + $0x70] sm:$0xff]
        %v409 = vld [vmem:[%s320 + $0x78] sm:$0xff]
        %v410 = vld [vmem:[%s320 + $0x80] sm:$0xff]
        %v411 = vld [vmem:[%s320 + $0x88] sm:$0xff]
        %v412 = vld [vmem:[%s320 + $0x90] sm:$0xff]
        %v413 = vld [vmem:[%s320 + $0x98] sm:$0xff]
        %v414 = vld [vmem:[%s320 + $0xa0] sm:$0xff]
        %v415 = vld [vmem:[%s320 + $0xa8] sm:$0xff]
        %v416 = vld [vmem:[%s320 + $0xb0] sm:$0xff]
        %v417 = vld [vmem:[%s320 + $0xb8] sm:$0xff]
        %v418 = vld [vmem:[%s320 + $0xc0] sm:$0xff]
        %v419 = vld [vmem:[%s320 + $0xc8] sm:$0xff]
        %v420 = vld [vmem:[%s320 + $0xd0] sm:$0xff]
        %v421 = vld [vmem:[%s320 + $0xd8] sm:$0xff]
        %v422 = vld [vmem:[%s320 + $0xe0] sm:$0xff]
        %v423 = vld [vmem:[%s320 + $0xe8] sm:$0xff]
        %v424 = vld [vmem:[%s320 + $0xf0] sm:$0xff]
        %v425 = vld [vmem:[%s320 + $0xf8] sm:$0xff]
        %v426 = vld [vmem:[%s320 + $0x100] sm:$0xff]
        %v427 = vld [vmem:[%s320 + $0x108] sm:$0xff]
        %v428 = vld [vmem:[%s320 + $0x110] sm:$0xff]
        %v429 = vld [vmem:[%s320 + $0x118] sm:$0xff]
        %v430 = vld [vmem:[%s320 + $0x120] sm:$0xff]
        %v431 = vld [vmem:[%s320 + $0x128] sm:$0xff]
        %v432 = vld [vmem:[%s320 + $0x130] sm:$0xff]
        %v433 = vld [vmem:[%s320 + $0x138] sm:$0xff]
        %v434 = vld [vmem:[%s320 + $0x140] sm:$0xff]
        %v435 = vld [vmem:[%s320 + $0x148] sm:$0xff]
        %v436 = vld [vmem:[%s320 + $0x150] sm:$0xff]
        %v437 = vld [vmem:[%s320 + $0x158] sm:$0xff]
        %v438 = vld [vmem:[%s320 + $0x160] sm:$0xff]
        %v439 = vld [vmem:[%s320 + $0x168] sm:$0xff]
        %v440 = vld [vmem:[%s320 + $0x170] sm:$0xff]
        %v441 = vld [vmem:[%s320 + $0x178] sm:$0xff]
        %v442 = vld [vmem:[%s320 + $0x180] sm:$0xff]
        %v443 = vld [vmem:[%s320 + $0x188] sm:$0xff]
        %v444 = vld [vmem:[%s320 + $0x190] sm:$0xff]
        %v445 = vld [vmem:[%s320 + $0x198] sm:$0xff]
        %v446 = vld [vmem:[%s320 + $0x1a0] sm:$0xff]
        %v447 = vld [vmem:[%s320 + $0x1a8] sm:$0xff]
        %v448 = vld [vmem:[%s320 + $0x1b0] sm:$0xff]
        %v449 = vld [vmem:[%s320 + $0x1b8] sm:$0xff]
        %v450 = vld [vmem:[%s320 + $0x1c0] sm:$0xff]
        %v451 = vld [vmem:[%s320 + $0x1c8] sm:$0xff]
        %v452 = vld [vmem:[%s320 + $0x1d0] sm:$0xff]
        %v453 = vld [vmem:[%s320 + $0x1d8] sm:$0xff]
        %v454 = vld [vmem:[%s320 + $0x1e0] sm:$0xff]
        %v455 = vld [vmem:[%s320 + $0x1e8] sm:$0xff]
        %v456 = vld [vmem:[%s320 + $0x1f0] sm:$0xff]
        %v457 = vld [vmem:[%s320 + $0x1f8] sm:$0xff]
        %v458 = vld [vmem:[%s320 + $0x200] sm:$0xff]
        %v459 = vld [vmem:[%s320 + $0x208] sm:$0xff]
        %v460 = vld [vmem:[%s320 + $0x210] sm:$0xff]
        %v461 = vld [vmem:[%s320 + $0x218] sm:$0xff]
        %v462 = vld [vmem:[%s320 + $0x220] sm:$0xff]
        %v463 = vld [vmem:[%s320 + $0x228] sm:$0xff]
        %v464 = vld [vmem:[%s320 + $0x230] sm:$0xff]
        %v465 = vld [vmem:[%s320 + $0x238] sm:$0xff]
        %v466 = vld [vmem:[%s320 + $0x240] sm:$0xff]
        %v467 = vld [vmem:[%s320 + $0x248] sm:$0xff]
        %v468 = vld [vmem:[%s320 + $0x250] sm:$0xff]
        %v469 = vld [vmem:[%s320 + $0x258] sm:$0xff]
        %v470 = vld [vmem:[%s320 + $0x260] sm:$0xff]
        %v471 = vld [vmem:[%s320 + $0x268] sm:$0xff]
        %v472 = vld [vmem:[%s320 + $0x270] sm:$0xff]
        %v473 = vld [vmem:[%s320 + $0x278] sm:$0xff]
        %v495 = vunpack.c.l.b16 %v373
        %v496 = vunpack.c.h.b16 %v373
        %v497 = vunpack.c.l.b16 %v374
        %v498 = vunpack.c.h.b16 %v374
        %v499 = vunpack.c.l.b16 %v375
        %v500 = vunpack.c.l.b16 %v376
        %v501 = vunpack.c.h.b16 %v376
        %v502 = vunpack.c.l.b16 %v377
        %v503 = vunpack.c.h.b16 %v377
        %v504 = vunpack.c.l.b16 %v378
        %v505 = vunpack.c.l.b16 %v379
        %v506 = vunpack.c.h.b16 %v379
        %v507 = vunpack.c.l.b16 %v380
        %v508 = vunpack.c.h.b16 %v380
        %v509 = vunpack.c.l.b16 %v381
        %v510 = vunpack.c.l.b16 %v382
        %v511 = vunpack.c.h.b16 %v382
        %v512 = vunpack.c.l.b16 %v383
        %v513 = vunpack.c.h.b16 %v383
        %v514 = vunpack.c.l.b16 %v384
        %v515 = vunpack.c.l.b16 %v385
        %v516 = vunpack.c.h.b16 %v385
        %v517 = vunpack.c.l.b16 %v386
        %v518 = vunpack.c.h.b16 %v386
        %v519 = vunpack.c.l.b16 %v387
        %v520 = vunpack.c.l.b16 %v388
        %v521 = vunpack.c.h.b16 %v388
        %v522 = vunpack.c.l.b16 %v389
        %v523 = vunpack.c.h.b16 %v389
        %v524 = vunpack.c.l.b16 %v390
        %v525 = vunpack.c.l.b16 %v391
        %v526 = vunpack.c.h.b16 %v391
        %v527 = vunpack.c.l.b16 %v392
        %v528 = vunpack.c.h.b16 %v392
        %v529 = vunpack.c.l.b16 %v393
        %v530 = vpack.c.b16 %v500, %v495
        %v531 = vpack.c.b16 %v501, %v496
        %v532 = vpack.c.b16 %v502, %v497
        %v533 = vpack.c.b16 %v503, %v498
        %v534 = vpack.c.b16 %v504, %v499
        %v535 = vpack.c.b16 %v510, %v505
        %v536 = vpack.c.b16 %v511, %v506
        %v537 = vpack.c.b16 %v512, %v507
        %v538 = vpack.c.b16 %v513, %v508
        %v539 = vpack.c.b16 %v514, %v509
        %v540 = vpack.c.b16 %v520, %v515
        %v541 = vpack.c.b16 %v521, %v516
        %v542 = vpack.c.b16 %v522, %v517
        %v543 = vpack.c.b16 %v523, %v518
        %v544 = vpack.c.b16 %v524, %v519
        %v545 = vpack.c.b16 %v525, %v525
        %v546 = vpack.c.b16 %v526, %v526
        %v547 = vpack.c.b16 %v527, %v527
        %v548 = vpack.c.b16 %v528, %v528
        %v549 = vpack.c.b16 %v529, %v529
        %v650 = vunpack.c.l.b16 %v394
        %v651 = vunpack.c.h.b16 %v394
        %v652 = vunpack.c.l.b16 %v395
        %v653 = vunpack.c.h.b16 %v395
        %v654 = vunpack.c.l.b16 %v396
        %v655 = vunpack.c.h.b16 %v396
        %v656 = vunpack.c.l.b16 %v397
        %v657 = vunpack.c.h.b16 %v397
        %v658 = vunpack.c.l.b16 %v398
        %v659 = vunpack.c.h.b16 %v398
        %v660 = vunpack.c.l.b16 %v399
        %v661 = vunpack.c.h.b16 %v399
        %v662 = vunpack.c.l.b16 %v400
        %v663 = vunpack.c.h.b16 %v400
        %v664 = vunpack.c.l.b16 %v401
        %v665 = vunpack.c.h.b16 %v401
        %v666 = vunpack.c.l.b16 %v402
        %v667 = vunpack.c.h.b16 %v402
        %v668 = vunpack.c.l.b16 %v403
        %v669 = vunpack.c.h.b16 %v403
        %v670 = vunpack.c.l.b16 %v404
        %v671 = vunpack.c.h.b16 %v404
        %v672 = vunpack.c.l.b16 %v405
        %v673 = vunpack.c.h.b16 %v405
        %v674 = vunpack.c.l.b16 %v406
        %v675 = vunpack.c.h.b16 %v406
        %v676 = vunpack.c.l.b16 %v407
        %v677 = vunpack.c.h.b16 %v407
        %v678 = vunpack.c.l.b16 %v408
        %v679 = vunpack.c.h.b16 %v408
        %v680 = vunpack.c.l.b16 %v409
        %v681 = vunpack.c.h.b16 %v409
        %v682 = vunpack.c.l.b16 %v410
        %v683 = vunpack.c.h.b16 %v410
        %v684 = vunpack.c.l.b16 %v411
        %v685 = vunpack.c.h.b16 %v411
        %v686 = vunpack.c.l.b16 %v412
        %v687 = vunpack.c.h.b16 %v412
        %v688 = vunpack.c.l.b16 %v413
        %v689 = vunpack.c.h.b16 %v413
        %v690 = vunpack.c.l.b16 %v414
        %v691 = vunpack.c.h.b16 %v414
        %v692 = vunpack.c.l.b16 %v415
        %v693 = vunpack.c.h.b16 %v415
        %v694 = vunpack.c.l.b16 %v416
        %v695 = vunpack.c.h.b16 %v416
        %v696 = vunpack.c.l.b16 %v417
        %v697 = vunpack.c.h.b16 %v417
        %v698 = vunpack.c.l.b16 %v418
        %v699 = vunpack.c.h.b16 %v418
        %v700 = vunpack.c.l.b16 %v419
        %v701 = vunpack.c.h.b16 %v419
        %v702 = vunpack.c.l.b16 %v420
        %v703 = vunpack.c.h.b16 %v420
        %v704 = vunpack.c.l.b16 %v421
        %v705 = vunpack.c.h.b16 %v421
        %v706 = vunpack.c.l.b16 %v422
        %v707 = vunpack.c.h.b16 %v422
        %v708 = vunpack.c.l.b16 %v423
        %v709 = vunpack.c.h.b16 %v423
        %v710 = vunpack.c.l.b16 %v424
        %v711 = vunpack.c.h.b16 %v424
        %v712 = vunpack.c.l.b16 %v425
        %v713 = vunpack.c.h.b16 %v425
        %v714 = vunpack.c.l.b16 %v426
        %v715 = vunpack.c.h.b16 %v426
        %v716 = vunpack.c.l.b16 %v427
        %v717 = vunpack.c.h.b16 %v427
        %v718 = vunpack.c.l.b16 %v428
        %v719 = vunpack.c.h.b16 %v428
        %v720 = vunpack.c.l.b16 %v429
        %v721 = vunpack.c.h.b16 %v429
        %v722 = vunpack.c.l.b16 %v430
        %v723 = vunpack.c.h.b16 %v430
        %v724 = vunpack.c.l.b16 %v431
        %v725 = vunpack.c.h.b16 %v431
        %v726 = vunpack.c.l.b16 %v432
        %v727 = vunpack.c.h.b16 %v432
        %v728 = vunpack.c.l.b16 %v433
        %v729 = vunpack.c.h.b16 %v433
        %v730 = vunpack.c.l.b16 %v434
        %v731 = vunpack.c.h.b16 %v434
        %v732 = vunpack.c.l.b16 %v435
        %v733 = vunpack.c.h.b16 %v435
        %v734 = vunpack.c.l.b16 %v436
        %v735 = vunpack.c.h.b16 %v436
        %v736 = vunpack.c.l.b16 %v437
        %v737 = vunpack.c.h.b16 %v437
        %v738 = vunpack.c.l.b16 %v438
        %v739 = vunpack.c.h.b16 %v438
        %v740 = vunpack.c.l.b16 %v439
        %v741 = vunpack.c.h.b16 %v439
        %v742 = vunpack.c.l.b16 %v440
        %v743 = vunpack.c.h.b16 %v440
        %v744 = vunpack.c.l.b16 %v441
        %v745 = vunpack.c.h.b16 %v441
        %v746 = vunpack.c.l.b16 %v442
        %v747 = vunpack.c.h.b16 %v442
        %v748 = vunpack.c.l.b16 %v443
        %v749 = vunpack.c.h.b16 %v443
        %v750 = vunpack.c.l.b16 %v444
        %v751 = vunpack.c.h.b16 %v444
        %v752 = vunpack.c.l.b16 %v445
        %v753 = vunpack.c.h.b16 %v445
        %v754 = vunpack.c.l.b16 %v446
        %v755 = vunpack.c.h.b16 %v446
        %v756 = vunpack.c.l.b16 %v447
        %v757 = vunpack.c.h.b16 %v447
        %v758 = vunpack.c.l.b16 %v448
        %v759 = vunpack.c.h.b16 %v448
        %v760 = vunpack.c.l.b16 %v449
        %v761 = vunpack.c.h.b16 %v449
        %v762 = vunpack.c.l.b16 %v450
        %v763 = vunpack.c.h.b16 %v450
        %v764 = vunpack.c.l.b16 %v451
        %v765 = vunpack.c.h.b16 %v451
        %v766 = vunpack.c.l.b16 %v452
        %v767 = vunpack.c.h.b16 %v452
        %v768 = vunpack.c.l.b16 %v453
        %v769 = vunpack.c.h.b16 %v453
        %v770 = vunpack.c.l.b16 %v454
        %v771 = vunpack.c.h.b16 %v454
        %v772 = vunpack.c.l.b16 %v455
        %v773 = vunpack.c.h.b16 %v455
        %v774 = vunpack.c.l.b16 %v456
        %v775 = vunpack.c.h.b16 %v456
        %v776 = vunpack.c.l.b16 %v457
        %v777 = vunpack.c.h.b16 %v457
        %v778 = vunpack.c.l.b16 %v458
        %v779 = vunpack.c.h.b16 %v458
        %v780 = vunpack.c.l.b16 %v459
        %v781 = vunpack.c.h.b16 %v459
        %v782 = vunpack.c.l.b16 %v460
        %v783 = vunpack.c.h.b16 %v460
        %v784 = vunpack.c.l.b16 %v461
        %v785 = vunpack.c.h.b16 %v461
        %v786 = vunpack.c.l.b16 %v462
        %v787 = vunpack.c.h.b16 %v462
        %v788 = vunpack.c.l.b16 %v463
        %v789 = vunpack.c.h.b16 %v463
        %v790 = vunpack.c.l.b16 %v464
        %v791 = vunpack.c.h.b16 %v464
        %v792 = vunpack.c.l.b16 %v465
        %v793 = vunpack.c.h.b16 %v465
        %v794 = vunpack.c.l.b16 %v466
        %v795 = vunpack.c.h.b16 %v466
        %v796 = vunpack.c.l.b16 %v467
        %v797 = vunpack.c.h.b16 %v467
        %v798 = vunpack.c.l.b16 %v468
        %v799 = vunpack.c.h.b16 %v468
        %v800 = vunpack.c.l.b16 %v469
        %v801 = vunpack.c.h.b16 %v469
        %v802 = vunpack.c.l.b16 %v470
        %v803 = vunpack.c.h.b16 %v470
        %v804 = vunpack.c.l.b16 %v471
        %v805 = vunpack.c.h.b16 %v471
        %v806 = vunpack.c.l.b16 %v472
        %v807 = vunpack.c.h.b16 %v472
        %v808 = vunpack.c.l.b16 %v473
        %v809 = vunpack.c.h.b16 %v473
        %v810 = vpack.c.b16 %v652, %v650
        %v811 = vpack.c.b16 %v653, %v651
        %v812 = vpack.c.b16 %v656, %v654
        %v813 = vpack.c.b16 %v657, %v655
        %v814 = vpack.c.b16 %v660, %v658
        %v815 = vpack.c.b16 %v661, %v659
        %v816 = vpack.c.b16 %v664, %v662
        %v817 = vpack.c.b16 %v665, %v663
        %v818 = vpack.c.b16 %v668, %v666
        %v819 = vpack.c.b16 %v669, %v667
        %v820 = vpack.c.b16 %v672, %v670
        %v821 = vpack.c.b16 %v673, %v671
        %v822 = vpack.c.b16 %v676, %v674
        %v823 = vpack.c.b16 %v677, %v675
        %v824 = vpack.c.b16 %v680, %v678
        %v825 = vpack.c.b16 %v681, %v679
        %v826 = vpack.c.b16 %v684, %v682
        %v827 = vpack.c.b16 %v685, %v683
        %v828 = vpack.c.b16 %v688, %v686
        %v829 = vpack.c.b16 %v689, %v687
        %v830 = vpack.c.b16 %v692, %v690
        %v831 = vpack.c.b16 %v693, %v691
        %v832 = vpack.c.b16 %v696, %v694
        %v833 = vpack.c.b16 %v697, %v695
        %v834 = vpack.c.b16 %v700, %v698
        %v835 = vpack.c.b16 %v701, %v699
        %v836 = vpack.c.b16 %v704, %v702
        %v837 = vpack.c.b16 %v705, %v703
        %v838 = vpack.c.b16 %v708, %v706
        %v839 = vpack.c.b16 %v709, %v707
        %v840 = vpack.c.b16 %v712, %v710
        %v841 = vpack.c.b16 %v713, %v711
        %v842 = vpack.c.b16 %v716, %v714
        %v843 = vpack.c.b16 %v717, %v715
        %v844 = vpack.c.b16 %v720, %v718
        %v845 = vpack.c.b16 %v721, %v719
        %v846 = vpack.c.b16 %v724, %v722
        %v847 = vpack.c.b16 %v725, %v723
        %v848 = vpack.c.b16 %v728, %v726
        %v849 = vpack.c.b16 %v729, %v727
        %v850 = vpack.c.b16 %v732, %v730
        %v851 = vpack.c.b16 %v733, %v731
        %v852 = vpack.c.b16 %v736, %v734
        %v853 = vpack.c.b16 %v737, %v735
        %v854 = vpack.c.b16 %v740, %v738
        %v855 = vpack.c.b16 %v741, %v739
        %v856 = vpack.c.b16 %v744, %v742
        %v857 = vpack.c.b16 %v745, %v743
        %v858 = vpack.c.b16 %v748, %v746
        %v859 = vpack.c.b16 %v749, %v747
        %v860 = vpack.c.b16 %v752, %v750
        %v861 = vpack.c.b16 %v753, %v751
        %v862 = vpack.c.b16 %v756, %v754
        %v863 = vpack.c.b16 %v757, %v755
        %v864 = vpack.c.b16 %v760, %v758
        %v865 = vpack.c.b16 %v761, %v759
        %v866 = vpack.c.b16 %v764, %v762
        %v867 = vpack.c.b16 %v765, %v763
        %v868 = vpack.c.b16 %v768, %v766
        %v869 = vpack.c.b16 %v769, %v767
        %v870 = vpack.c.b16 %v772, %v770
        %v871 = vpack.c.b16 %v773, %v771
        %v872 = vpack.c.b16 %v776, %v774
        %v873 = vpack.c.b16 %v777, %v775
        %v874 = vpack.c.b16 %v780, %v778
        %v875 = vpack.c.b16 %v781, %v779
        %v876 = vpack.c.b16 %v784, %v782
        %v877 = vpack.c.b16 %v785, %v783
        %v878 = vpack.c.b16 %v788, %v786
        %v879 = vpack.c.b16 %v789, %v787
        %v880 = vpack.c.b16 %v792, %v790
        %v881 = vpack.c.b16 %v793, %v791
        %v882 = vpack.c.b16 %v796, %v794
        %v883 = vpack.c.b16 %v797, %v795
        %v884 = vpack.c.b16 %v800, %v798
        %v885 = vpack.c.b16 %v801, %v799
        %v886 = vpack.c.b16 %v804, %v802
        %v887 = vpack.c.b16 %v805, %v803
        %v888 = vpack.c.b16 %v808, %v806
        %v889 = vpack.c.b16 %v809, %v807
        %970 = vmatprep.subr.bf16.mxu0 %v811
        %971 = vmatpush1.bf16.msra.mxu0 %v810
        %972 = vmatprep.subr.bf16.mxu0 %v813
        %973 = vmatpush1.bf16.msra.mxu0 %v812
        %974 = vmatprep.subr.bf16.mxu0 %v815
        %975 = vmatpush1.bf16.msra.mxu0 %v814
        %976 = vmatprep.subr.bf16.mxu0 %v817
        %977 = vmatpush1.bf16.msra.mxu0 %v816
        %978 = vmatprep.subr.bf16.mxu0 %v819
        %979 = vmatpush1.bf16.msra.mxu0 %v818
        %980 = vmatprep.subr.bf16.mxu0 %v821
        %981 = vmatpush1.bf16.msra.mxu0 %v820
        %982 = vmatprep.subr.bf16.mxu0 %v823
        %983 = vmatpush1.bf16.msra.mxu0 %v822
        %984 = vmatprep.subr.bf16.mxu0 %v825
        %985 = vmatpush1.bf16.msra.mxu0 %v824
        %986 = vmatprep.subr.bf16.mxu0 %v827
        %987 = vmatpush1.bf16.msra.mxu0 %v826
        %988 = vmatprep.subr.bf16.mxu0 %v829
        %989 = vmatpush1.bf16.msra.mxu0 %v828
        %990 = vmatprep.subr.bf16.mxu0 %v831
        %991 = vmatpush1.bf16.msra.mxu0 %v830
        %992 = vmatprep.subr.bf16.mxu0 %v833
        %993 = vmatpush1.bf16.msra.mxu0 %v832
        %994 = vmatprep.subr.bf16.mxu0 %v835
        %995 = vmatpush1.bf16.msra.mxu0 %v834
        %996 = vmatprep.subr.bf16.mxu0 %v837
        %997 = vmatpush1.bf16.msra.mxu0 %v836
        %998 = vmatprep.subr.bf16.mxu0 %v839
        %999 = vmatpush1.bf16.msra.mxu0 %v838
        %1000 = vmatprep.subr.bf16.mxu0 %v841
        %1001 = vmatpush1.bf16.msra.mxu0 %v840
        %1002 = vmatprep.mubr.bf16.mxu0 %v531
        %1003 = vmatmul.mubr.bf16.gmra.mrb[0].mxu0 %v530
        %v1004 = vpop.f32.mrb[0].mxu0
        %v1005 = vadd.f32 0.0, %v1004
        %v1006 = vpop.f32.mrb[0].mxu0
        %v1007 = vadd.f32 0.0, %v1006
        %v1008 = vpop.f32.mrb[0].mxu0
        %v1009 = vadd.f32 0.0, %v1008
        %v1010 = vpop.f32.mrb[0].mxu0
        %v1011 = vadd.f32 0.0, %v1010
        %1012 = vmatprep.mubr.bf16.mxu0 %v536
        %1013 = vmatmul.mubr.bf16.gmra.mrb[0].mxu0 %v535
        %v1014 = vpop.f32.mrb[0].mxu0
        %v1015 = vadd.f32 0.0, %v1014
        %v1016 = vpop.f32.mrb[0].mxu0
        %v1017 = vadd.f32 0.0, %v1016
        %v1018 = vpop.f32.mrb[0].mxu0
        %v1019 = vadd.f32 0.0, %v1018
        %v1020 = vpop.f32.mrb[0].mxu0
        %v1021 = vadd.f32 0.0, %v1020
        %1022 = vmatprep.mubr.bf16.mxu0 %v541
        %1023 = vmatmul.mubr.bf16.gmra.mrb[0].mxu0 %v540
        %v1024 = vpop.f32.mrb[0].mxu0
        %v1025 = vadd.f32 0.0, %v1024
        %v1026 = vpop.f32.mrb[0].mxu0
        %v1027 = vadd.f32 0.0, %v1026
        %v1028 = vpop.f32.mrb[0].mxu0
        %v1029 = vadd.f32 0.0, %v1028
        %v1030 = vpop.f32.mrb[0].mxu0
        %v1031 = vadd.f32 0.0, %v1030
        %1032 = vmatprep.mubr.bf16.mxu0 %v546
        %1033 = vmatmul.mubr.bf16.gmra.mrb[0].mxu0 %v545
        %v1034 = vpop.f32.mrb[0].mxu0
        %v1035 = vadd.f32 0.0, %v1034
        %v1036 = vpop.f32.mrb[0].mxu0
        %v1037 = vadd.f32 0.0, %v1036
        %v1038 = vpop.f32.mrb[0].mxu0
        %v1039 = vpop.f32.mrb[0].mxu0
        %1040 = vdwg.mxu0
        %1041 = vmatprep.subr.bf16.mxu0 %v843
        %1042 = vmatpush1.bf16.msra.mxu0 %v842
        %1043 = vmatprep.subr.bf16.mxu0 %v845
        %1044 = vmatpush1.bf16.msra.mxu0 %v844
        %1045 = vmatprep.subr.bf16.mxu0 %v847
        %1046 = vmatpush1.bf16.msra.mxu0 %v846
        %1047 = vmatprep.subr.bf16.mxu0 %v849
        %1048 = vmatpush1.bf16.msra.mxu0 %v848
        %1049 = vmatprep.subr.bf16.mxu0 %v851
        %1050 = vmatpush1.bf16.msra.mxu0 %v850
        %1051 = vmatprep.subr.bf16.mxu0 %v853
        %1052 = vmatpush1.bf16.msra.mxu0 %v852
        %1053 = vmatprep.subr.bf16.mxu0 %v855
        %1054 = vmatpush1.bf16.msra.mxu0 %v854
        %1055 = vmatprep.subr.bf16.mxu0 %v857
        %1056 = vmatpush1.bf16.msra.mxu0 %v856
        %1057 = vmatprep.subr.bf16.mxu0 %v859
        %1058 = vmatpush1.bf16.msra.mxu0 %v858
        %1059 = vmatprep.subr.bf16.mxu0 %v861
        %1060 = vmatpush1.bf16.msra.mxu0 %v860
        %1061 = vmatprep.subr.bf16.mxu0 %v863
        %1062 = vmatpush1.bf16.msra.mxu0 %v862
        %1063 = vmatprep.subr.bf16.mxu0 %v865
        %1064 = vmatpush1.bf16.msra.mxu0 %v864
        %1065 = vmatprep.subr.bf16.mxu0 %v867
        %1066 = vmatpush1.bf16.msra.mxu0 %v866
        %1067 = vmatprep.subr.bf16.mxu0 %v869
        %1068 = vmatpush1.bf16.msra.mxu0 %v868
        %1069 = vmatprep.subr.bf16.mxu0 %v871
        %1070 = vmatpush1.bf16.msra.mxu0 %v870
        %1071 = vmatprep.subr.bf16.mxu0 %v873
        %1072 = vmatpush1.bf16.msra.mxu0 %v872
        %1073 = vmatprep.mubr.bf16.mxu0 %v533
        %1074 = vmatmul.mubr.bf16.gmra.mrb[0].mxu0 %v532
        %v1075 = vpop.f32.mrb[0].mxu0
        %v1076 = vadd.f32 %v1005, %v1075
        %v1077 = vpop.f32.mrb[0].mxu0
        %v1078 = vadd.f32 %v1007, %v1077
        %v1079 = vpop.f32.mrb[0].mxu0
        %v1080 = vadd.f32 %v1009, %v1079
        %v1081 = vpop.f32.mrb[0].mxu0
        %v1082 = vadd.f32 %v1011, %v1081
        %1083 = vmatprep.mubr.bf16.mxu0 %v538
        %1084 = vmatmul.mubr.bf16.gmra.mrb[0].mxu0 %v537
        %v1085 = vpop.f32.mrb[0].mxu0
        %v1086 = vadd.f32 %v1015, %v1085
        %v1087 = vpop.f32.mrb[0].mxu0
        %v1088 = vadd.f32 %v1017, %v1087
        %v1089 = vpop.f32.mrb[0].mxu0
        %v1090 = vadd.f32 %v1019, %v1089
        %v1091 = vpop.f32.mrb[0].mxu0
        %v1092 = vadd.f32 %v1021, %v1091
        %1093 = vmatprep.mubr.bf16.mxu0 %v543
        %1094 = vmatmul.mubr.bf16.gmra.mrb[0].mxu0 %v542
        %v1095 = vpop.f32.mrb[0].mxu0
        %v1096 = vadd.f32 %v1025, %v1095
        %v1097 = vpop.f32.mrb[0].mxu0
        %v1098 = vadd.f32 %v1027, %v1097
        %v1099 = vpop.f32.mrb[0].mxu0
        %v1100 = vadd.f32 %v1029, %v1099
        %v1101 = vpop.f32.mrb[0].mxu0
        %v1102 = vadd.f32 %v1031, %v1101
        %1103 = vmatprep.mubr.bf16.mxu0 %v548
        %1104 = vmatmul.mubr.bf16.gmra.mrb[0].mxu0 %v547
        %v1105 = vpop.f32.mrb[0].mxu0
        %v1106 = vadd.f32 %v1035, %v1105
        %v1107 = vpop.f32.mrb[0].mxu0
        %v1108 = vadd.f32 %v1037, %v1107
        %v1109 = vpop.f32.mrb[0].mxu0
        %v1110 = vpop.f32.mrb[0].mxu0
        %1111 = vdwg.mxu0
        %1112 = vmatprep.subr.bf16.mxu0 %v875
        %1113 = vmatpush1.bf16.msra.mxu0 %v874
        %1114 = vmatprep.subr.bf16.mxu0 %v877
        %1115 = vmatpush1.bf16.msra.mxu0 %v876
        %1116 = vmatprep.subr.bf16.mxu0 %v879
        %1117 = vmatpush1.bf16.msra.mxu0 %v878
        %1118 = vmatprep.subr.bf16.mxu0 %v881
        %1119 = vmatpush1.bf16.msra.mxu0 %v880
        %1120 = vmatprep.subr.bf16.mxu0 %v883
        %1121 = vmatpush1.bf16.msra.mxu0 %v882
        %1122 = vmatprep.subr.bf16.mxu0 %v885
        %1123 = vmatpush1.bf16.msra.mxu0 %v884
        %1124 = vmatprep.subr.bf16.mxu0 %v887
        %1125 = vmatpush1.bf16.msra.mxu0 %v886
        %1126 = vmatprep.subr.bf16.mxu0 %v889
        %1127 = vmatpush1.bf16.msra.mxu0 %v888
        %1128 = vmatprep.subr.bf16.mxu0 0
        %1129 = vmatpush1.bf16.msra.mxu0 0
        %1130 = vmatprep.subr.bf16.mxu0 0
        %1131 = vmatpush1.bf16.msra.mxu0 0
        %1132 = vmatprep.subr.bf16.mxu0 0
        %1133 = vmatpush1.bf16.msra.mxu0 0
        %1134 = vmatprep.subr.bf16.mxu0 0
        %1135 = vmatpush1.bf16.msra.mxu0 0
        %1136 = vmatprep.subr.bf16.mxu0 0
        %1137 = vmatpush1.bf16.msra.mxu0 0
        %1138 = vmatprep.subr.bf16.mxu0 0
        %1139 = vmatpush1.bf16.msra.mxu0 0
        %1140 = vmatprep.subr.bf16.mxu0 0
        %1141 = vmatpush1.bf16.msra.mxu0 0
        %1142 = vmatprep.subr.bf16.mxu0 0
        %1143 = vmatpush1.bf16.msra.mxu0 0
        %1144 = vmatprep.mubr.bf16.mxu0 0
        %1145 = vmatmul.mubr.bf16.gmra.mrb[0].mxu0 %v534
        %v1146 = vpop.f32.mrb[0].mxu0
        %v1147 = vadd.f32 %v1076, %v1146
        %v1148 = vpop.f32.mrb[0].mxu0
        %v1149 = vadd.f32 %v1078, %v1148
        %v1150 = vpop.f32.mrb[0].mxu0
        %v1151 = vadd.f32 %v1080, %v1150
        %v1152 = vpop.f32.mrb[0].mxu0
        %v1153 = vadd.f32 %v1082, %v1152
        %1154 = vmatprep.mubr.bf16.mxu0 0
        %1155 = vmatmul.mubr.bf16.gmra.mrb[0].mxu0 %v539
        %v1156 = vpop.f32.mrb[0].mxu0
        %v1157 = vadd.f32 %v1086, %v1156
        %v1158 = vpop.f32.mrb[0].mxu0
        %v1159 = vadd.f32 %v1088, %v1158
        %v1160 = vpop.f32.mrb[0].mxu0
        %v1161 = vadd.f32 %v1090, %v1160
        %v1162 = vpop.f32.mrb[0].mxu0
        %v1163 = vadd.f32 %v1092, %v1162
        %1164 = vmatprep.mubr.bf16.mxu0 0
        %1165 = vmatmul.mubr.bf16.gmra.mrb[0].mxu0 %v544
        %v1166 = vpop.f32.mrb[0].mxu0
        %v1167 = vadd.f32 %v1096, %v1166
        %v1168 = vpop.f32.mrb[0].mxu0
        %v1169 = vadd.f32 %v1098, %v1168
        %v1170 = vpop.f32.mrb[0].mxu0
        %v1171 = vadd.f32 %v1100, %v1170
        %v1172 = vpop.f32.mrb[0].mxu0
        %v1173 = vadd.f32 %v1102, %v1172
        %1174 = vmatprep.mubr.bf16.mxu0 0
        %1175 = vmatmul.mubr.bf16.gmra.mrb[0].mxu0 %v549
        %v1176 = vpop.f32.mrb[0].mxu0
        %v1177 = vadd.f32 %v1106, %v1176
        %v1178 = vpop.f32.mrb[0].mxu0
        %v1179 = vadd.f32 %v1108, %v1178
        %v1180 = vpop.f32.mrb[0].mxu0
        %v1181 = vpop.f32.mrb[0].mxu0
        %1182 = vdwg.mxu0
        %v1183 = vadd.f32 %v359, %v1147
        %v1184 = vadd.f32 %v360, %v1149
        %v1185 = vadd.f32 %v361, %v1151
        %v1186 = vadd.f32 %v362, %v1153
        %v1187 = vadd.f32 %v363, %v1157
        %v1188 = vadd.f32 %v364, %v1159
        %v1189 = vadd.f32 %v365, %v1161
        %v1190 = vadd.f32 %v366, %v1163
        %v1191 = vadd.f32 %v367, %v1167
        %v1192 = vadd.f32 %v368, %v1169
        %v1193 = vadd.f32 %v369, %v1171
        %v1194 = vadd.f32 %v370, %v1173
        %v1195 = vadd.f32 %v371, %v1177
        %v1196 = vadd.f32 %v372, %v1179
        %1197 = vst [vmem:[#allocation2] sm:$0xff] %v1183
        %1198 = vst [vmem:[#allocation2 + $0x8] sm:$0xff] %v1184
        %1199 = vst [vmem:[#allocation2 + $0x10] sm:$0xff] %v1185
        %1200 = vst [vmem:[#allocation2 + $0x18] sm:$0xff] %v1186
        %1201 = vst [vmem:[#allocation2 + $0x20] sm:$0xff] %v1187
        %1202 = vst [vmem:[#allocation2 + $0x28] sm:$0xff] %v1188
        %1203 = vst [vmem:[#allocation2 + $0x30] sm:$0xff] %v1189
        %1204 = vst [vmem:[#allocation2 + $0x38] sm:$0xff] %v1190
        %1205 = vst [vmem:[#allocation2 + $0x40] sm:$0xff] %v1191
        %1206 = vst [vmem:[#allocation2 + $0x48] sm:$0xff] %v1192
        %1207 = vst [vmem:[#allocation2 + $0x50] sm:$0xff] %v1193
        %1208 = vst [vmem:[#allocation2 + $0x58] sm:$0xff] %v1194
        %1209 = vst [vmem:[#allocation2 + $0x60] sm:$0x3] %v1195
        %1210 = vst [vmem:[#allocation2 + $0x68] sm:$0x3] %v1196
        %p1211 = scmp.eq.s32.totalorder %s21, 4
        // Predicated region
        $region63: #{image_pair_encoder_v2.6} parent=53 // pred_check
          %p1212 = pneg %p1211
        $region64: #{image_pair_encoder_v2.6} parent=53 // pred_check_branch
          %1214 = sbr.rel (%p1212) target = $region66
        $region65: #{image_pair_encoder_v2.6} parent=53 // pred_region
          %v1215 = vld [vmem:[#allocation2] sm:$0xff]
          %v1216 = vld [vmem:[#allocation2 + $0x8] sm:$0xff]
          %v1217 = vld [vmem:[#allocation2 + $0x10] sm:$0xff]
          %v1218 = vld [vmem:[#allocation2 + $0x18] sm:$0xff]
          %v1219 = vld [vmem:[#allocation2 + $0x20] sm:$0xff]
          %v1220 = vld [vmem:[#allocation2 + $0x28] sm:$0xff]
          %v1221 = vld [vmem:[#allocation2 + $0x30] sm:$0xff]
          %v1222 = vld [vmem:[#allocation2 + $0x38] sm:$0xff]
          %v1223 = vld [vmem:[#allocation2 + $0x40] sm:$0xff]
          %v1224 = vld [vmem:[#allocation2 + $0x48] sm:$0xff]
          %v1225 = vld [vmem:[#allocation2 + $0x50] sm:$0xff]
          %v1226 = vld [vmem:[#allocation2 + $0x58] sm:$0xff]
          %v1227 = vld [vmem:[#allocation2 + $0x60] sm:$0x3]
          %v1228 = vld [vmem:[#allocation2 + $0x68] sm:$0x3]
          %v1229 = vld [vmem:[%s326] sm:$0x3]
          %v1231 = vlaneseq
          %v1232 = vshrl.u32 %v1231, 7
          %v1233 = vsub.s32 0, %v1232
          %v1234 = vrot.slane %v1229, %v1233
          %v1235 = vlaneseq
          %v1236 = vshrl.u32 %v1235, 7
          %v1237 = vsub.s32 1, %v1236
          %v1238 = vrot.slane %v1229, %v1237
          %v1241 = vadd.f32 %v1215, %v1234
          %v1242 = vadd.f32 %v1216, %v1238
          %v1243 = vadd.f32 %v1217, %v1234
          %v1244 = vadd.f32 %v1218, %v1238
          %v1245 = vadd.f32 %v1219, %v1234
          %v1246 = vadd.f32 %v1220, %v1238
          %v1247 = vadd.f32 %v1221, %v1234
          %v1248 = vadd.f32 %v1222, %v1238
          %v1249 = vadd.f32 %v1223, %v1234
          %v1250 = vadd.f32 %v1224, %v1238
          %v1251 = vadd.f32 %v1225, %v1234
          %v1252 = vadd.f32 %v1226, %v1238
          %v1253 = vadd.f32 %v1227, %v1234
          %v1254 = vadd.f32 %v1228, %v1238
          %v1255 = vmax.f32 %v1241, 0.0
          %v1256 = vmax.f32 %v1242, 0.0
          %v1257 = vmax.f32 %v1243, 0.0
          %v1258 = vmax.f32 %v1244, 0.0
          %v1259 = vmax.f32 %v1245, 0.0
          %v1260 = vmax.f32 %v1246, 0.0
          %v1261 = vmax.f32 %v1247, 0.0
          %v1262 = vmax.f32 %v1248, 0.0
          %v1263 = vmax.f32 %v1249, 0.0
          %v1264 = vmax.f32 %v1250, 0.0
          %v1265 = vmax.f32 %v1251, 0.0
          %v1266 = vmax.f32 %v1252, 0.0
          %v1267 = vmax.f32 %v1253, 0.0
          %v1268 = vmax.f32 %v1254, 0.0
          %v1269 = vpack.c.bf16 %v1257, %v1255
          %v1270 = vpack.c.bf16 %v1258, %v1256
          %v1271 = vpack.c.bf16 %v1261, %v1259
          %v1272 = vpack.c.bf16 %v1262, %v1260
          %v1273 = vpack.c.bf16 %v1265, %v1263
          %v1274 = vpack.c.bf16 %v1266, %v1264
          %v1275 = vpack.c.bf16 %v1267, %v1267
          %v1276 = vpack.c.bf16 %v1268, %v1268
          %v1285 = vunpack.c.l.b16 %v1269
          %v1286 = vunpack.c.l.b16 %v1270
          %v1287 = vunpack.c.h.b16 %v1269
          %v1288 = vunpack.c.h.b16 %v1270
          %v1289 = vunpack.c.l.b16 %v1271
          %v1290 = vunpack.c.l.b16 %v1272
          %v1291 = vunpack.c.h.b16 %v1271
          %v1292 = vunpack.c.h.b16 %v1272
          %v1293 = vunpack.c.l.b16 %v1273
          %v1294 = vunpack.c.l.b16 %v1274
          %v1295 = vunpack.c.h.b16 %v1273
          %v1296 = vunpack.c.h.b16 %v1274
          %v1297 = vunpack.c.l.b16 %v1275
          %v1298 = vunpack.c.l.b16 %v1276
          %v1299 = vpack.c.b16 %v1286, %v1285
          %v1300 = vpack.c.b16 %v1288, %v1287
          %v1301 = vpack.c.b16 %v1290, %v1289
          %v1302 = vpack.c.b16 %v1292, %v1291
          %v1303 = vpack.c.b16 %v1294, %v1293
          %v1304 = vpack.c.b16 %v1296, %v1295
          %v1305 = vpack.c.b16 %v1298, %v1297
          %1313 = vst [vmem:[%s337] sm:$0xff] %v1299
          %1314 = vst [vmem:[%s337 + $0x8] sm:$0xff] %v1300
          %1315 = vst [vmem:[%s337 + $0x10] sm:$0xff] %v1301
          %1316 = vst [vmem:[%s337 + $0x18] sm:$0xff] %v1302
          %1317 = vst [vmem:[%s337 + $0x20] sm:$0xff] %v1303
          %1318 = vst [vmem:[%s337 + $0x28] sm:$0xff] %v1304
          %1319 = vst [vmem:[%s337 + $0x30] sm:$0x11] %v1305
        $region66: #{image_pair_encoder_v2.6} parent=53 // pred_fallthru
          _
        %s1320 = smul.u32 7, %s19
        %s1321 = smul.u32 2, %s20
        %p1322 = scmp.lt.s32.totalorder %s1320, 6
        %s1323 = scalar_select %p1322, %s1320, 6
        %p1324 = scmp.lt.s32.totalorder %s1321, 1
        %s1325 = scalar_select %p1324, %s1321, 1
        %s1326 = smul.addr %s1323, 2
        %s1327 = sadd.s32 %s1325, %s1326
        %s1328 = smul.addr %s1327, 4
        %s1329 = scalar_lea.vmem %s3, %s1328
        // Predicated region
        $region67: #{image_pair_encoder_v2.6} parent=53 // pred_check
          %p1330 = pneg %p135
        $region68: #{image_pair_encoder_v2.6} parent=53 // pred_check_branch
          %1332 = sbr.rel (%p1330) target = $region70
        $region69: #{image_pair_encoder_v2.6} parent=53 // pred_region
          %s1333 = smul.u32 7, %s19
          %s1334 = smul.u32 2, %s20
        $region70: #{image_pair_encoder_v2.6} parent=53 // pred_fallthru
          _
        // Predicated region
        $region71: #{image_pair_encoder_v2.6} parent=53 // pred_check
          %p1335 = pneg %p135
        $region72: #{image_pair_encoder_v2.6} parent=53 // pred_check_branch
          %1337 = sbr.rel (%p1335) target = $region74
        $region73: #{image_pair_encoder_v2.6} parent=53 // pred_region
          %s1338 = smul.u32 7, %s19
          %s1339 = smul.u32 2, %s20
          %p1340 = scmp.lt.s32.totalorder %s1338, 6
          %s1341 = scalar_select %p1340, %s1338, 6
          %p1342 = scmp.lt.s32.totalorder %s1339, 1
          %s1343 = scalar_select %p1342, %s1339, 1
          %s1344 = smul.addr %s1341, 2
          %s1345 = sadd.s32 %s1343, %s1344
          %s1346 = smul.addr %s1345, 4
          %s1347 = scalar_lea.vmem %s3, %s1346
        $region74: #{image_pair_encoder_v2.6} parent=53 // pred_fallthru
          _
      $region54: #{image_pair_encoder_v2.6} parent=5 // pred_fallthru
        _
      %p1348 = scmp.le.s32.totalorder 2, %s9
      // Predicated region
      $region75: #{image_pair_encoder_v2.6} parent=5 // pred_check
        %p1349 = pneg %p1348
      $region76: #{image_pair_encoder_v2.6} parent=5 // pred_check_branch
        %1351 = sbr.rel (%p1349) target = $region78
      $region77: #{image_pair_encoder_v2.6} parent=5 // pred_region
        %s1352 = ssub.s32 %s9, 2
      $region78: #{image_pair_encoder_v2.6} parent=5 // pred_fallthru
        _
    $region6: #{image_pair_encoder_v2.6} parent=1 // loop_footer
      %s13 = sadd.s32 1, %s9
    $region7: #{image_pair_encoder_v2.6} parent=1 // loop_footer_branch
      %8 = sbr.rel target = $region3
    $region8: #{image_pair_encoder_v2.6} parent=1 // loop_exit
      _

</llo_original>
